<compile_context>
chip_gen: v6e
topology: v6e:2x2x1
jax: 0.10.0
libtpu: 0.0.40
codegen_flags: <defaults>
</compile_context>

<pallas_src>
import functools

import numpy as np
import jax
import jax.numpy as jnp
from jax.experimental import pallas as pl
from jax.experimental.pallas import tpu as pltpu


_G = 128  # output-time lanes per sub-channel block (= vreg lane width)


# ----------------------------------------------------------------------------
# Pure-JAX reference (mirrors the torch loop).  Used only for verification.
# ----------------------------------------------------------------------------
def dwt_ref(x, multiple):
    n, c, t = x.shape
    sqrt2 = jnp.sqrt(jnp.float32(2.0))
    for _ in range(multiple):
        even = x[:, :, 0::2]
        odd = x[:, :, 1::2]
        s = (even + odd) / sqrt2
        d = (even - odd) / sqrt2
        x = jnp.stack([s, d], axis=2).reshape(n, c * 2, t // 2)
        c, t = c * 2, t // 2
    return x


def _haar_matrix(multiple):
    """H[j, k]: weight of input sample k (within a group of L = 2**multiple)
    in output sub-channel j of the composed multi-level Haar transform."""
    L = 2 ** multiple
    x = np.eye(L, dtype=np.float64).reshape(L, 1, L)  # batch=impulse k, C=1, T=L
    c, t = 1, L
    for _ in range(multiple):
        even = x[:, :, 0::2]
        odd = x[:, :, 1::2]
        s = (even + odd) / np.sqrt(2.0)
        d = (even - odd) / np.sqrt(2.0)
        x = np.stack([s, d], axis=2).reshape(L, c * 2, t // 2)
        c, t = c * 2, t // 2
    return np.asarray(x[:, :, 0].T, dtype=np.float32)  # (L, L), H[j, k]


@functools.lru_cache(maxsize=None)
def _dwt_weight(multiple):
    """Block-structured (K, K) weight, K = L*128:
       W[g*L + k, j*128 + g] = H[j, k], zero elsewhere."""
    L = 2 ** multiple
    H = _haar_matrix(multiple)
    eye = np.eye(_G, dtype=np.float32)
    W = np.einsum("jk,gh->gkjh", H, eye).reshape(L * _G, L * _G)
    return np.ascontiguousarray(W)


def _vmem_cap_bytes():
    """Per-chip scoped-VMEM ceiling (v7x: 64 MiB total, v5e/v6e: 128 MiB)."""
    try:
        phys = int(pltpu.get_tpu_info().vmem_capacity_bytes)
    except Exception:
        phys = 64 << 20  # assume the smallest (v7x) part if the query fails
    return max(32 << 20, min(int(phys * 0.85), 112 << 20))


def _w_block_spec(K, w_map):
    """Resident-weight spec, single-buffered when the JAX version supports it."""
    if hasattr(pl, "Buffered"):
        try:
            return pl.BlockSpec((K, K), w_map, pipeline_mode=pl.Buffered(1))
        except Exception:
            pass
    return pl.BlockSpec((K, K), w_map)


# ----------------------------------------------------------------------------
# Pallas wrapper
# ----------------------------------------------------------------------------
def dwt_pallas(x, multiple, *, out_dtype=jnp.float32):
    assert x.ndim == 3, "In DWT layer, input tensor should be in N,C,T format"
    assert 1 <= multiple <= 4, (
        "fast path keeps the (L*128)^2 Haar weight resident in VMEM; "
        "multiple > 4 needs a level-by-level kernel")
    # TODO(synk): for multiple > 4 (and for multiple == 4 on v5e/v7x, where even
    # bf16 leaves the dense Kronecker matmul compute-bound) a two-stage
    # L = La x Lb in-VMEM factorization would cut issued FLOPs per element.

    N, C, T = x.shape
    L = 2 ** multiple
    G = _G
    K = L * G
    R = N * C

    # MXU dtype: bf16 x / bf16 W when the input is bf16 (full-rate MXU, half
    # the HBM + VMEM traffic, no in-kernel upcast); f32 otherwise (torch-exact).
    if x.dtype == jnp.bfloat16:
        compute_dtype = jnp.bfloat16
    else:
        compute_dtype = jnp.float32
        if x.dtype != jnp.float32:
            x = x.astype(jnp.float32)

    Tq = -(-T // L)                  # torch output length  ceil(T / L)
    PT = -(-Tq // G)                 # number of K-sample "p-rows" per channel

    x_bytes = jnp.dtype(compute_dtype).itemsize
    o_bytes = jnp.dtype(out_dtype).itemsize

    # ---- tile sizes: target ~4 MiB of f32-equivalent output per grid step ----
    TARGET = 4 << 20
    if PT >= 8:
        pb_cap = max(64, min(1024, ((TARGET // (K * 4)) // 8) * 8))
        PB = min(pb_cap, (PT // 8) * 8)      # multiple of 8 -> free fused reshape
        RB = max(1, min(R, TARGET // (PB * K * 4)))
    else:
        PB = PT                              # tiny-time edge case: full extent
        RB = min(R, 8)                       # small static per-row unroll

    # ---- keep the (conservative) VMEM footprint under the per-chip cap ------
    vmem_cap = _vmem_cap_bytes()

    def est_vmem(rb, pb):
        blk = rb * pb * K
        return (2 * K * K * x_bytes          # weight (counted double-buffered)
                + 2 * blk * x_bytes          # input tile, double-buffered
                + 2 * blk * o_bytes          # output tile, double-buffered
                + blk * (4 + o_bytes)        # f32 matmul result + cast temp
                + (6 << 20))                 # slack

    while est_vmem(RB, PB) > vmem_cap and (RB > 1 or PB >= 16):
        if RB > 1:
            RB = max(1, RB // 2)
        else:
            PB = max(8, ((PB // 2) // 8) * 8)

    vmem_limit = int(min(max(est_vmem(RB, PB), 32 << 20), vmem_cap))

    # ---- pad (only if needed) and free row-major reshape to (R, PT, K) ------
    Tp = PT * K
    if Tp != T:
        # TODO(synk): this zero pad (and the final crop) cost one extra HBM pass
        # each; they vanish when T is a multiple of L*128.  A fully ragged
        # in-kernel tail conflicts with the free (R, L, PT, 128) -> (N, C*L, Tq)
        # output reshape used here.
        x = jnp.pad(x, ((0, 0), (0, 0), (0, Tp - T)))
    xr = x.reshape(R, PT, K)

    W = jnp.asarray(_dwt_weight(multiple), dtype=compute_dtype)

    fuse = (RB == 1) or (PB % 8 == 0)

    def kernel(w_ref, x_ref, o_ref):
        w = w_ref[...]                                          # (K, K) resident
        if fuse:
            xv = x_ref[...].reshape(RB * PB, K)                 # free reshape
            y = jnp.dot(xv, w, preferred_element_type=jnp.float32)
            y = y.astype(o_ref.dtype).reshape(RB, PB, K)
            for j in range(L):                                  # 128-lane slabs
                o_ref[:, j, :, :] = y[:, :, j * G:(j + 1) * G]
        else:                                                   # tiny-PT path
            for rb in range(RB):
                y = jnp.dot(x_ref[rb], w, preferred_element_type=jnp.float32)
                y = y.astype(o_ref.dtype)
                for j in range(L):
                    o_ref[rb, j, :, :] = y[:, j * G:(j + 1) * G]

    # ---- grid: cdiv + masked edge blocks (no divisor cliffs); larger axis ---
    # ---- first so megacore has a splittable leading "parallel" dimension ----
    grid_r = -(-R // RB)
    grid_t = -(-PT // PB)
    if grid_t >= grid_r:
        grid = (grid_t, grid_r)
        w_map = lambda t, r: (0, 0)
        x_map = lambda t, r: (r, t, 0)
        o_map = lambda t, r: (r, 0, t, 0)
    else:
        grid = (grid_r, grid_t)
        w_map = lambda r, t: (0, 0)
        x_map = lambda r, t: (r, t, 0)
        o_map = lambda r, t: (r, 0, t, 0)

    def _call(single_buffer_w):
        w_spec = (_w_block_spec(K, w_map) if single_buffer_w
                  else pl.BlockSpec((K, K), w_map))
        return pl.pallas_call(
            kernel,
            out_shape=jax.ShapeDtypeStruct((R, L, PT, G), out_dtype),
            grid_spec=pltpu.PrefetchScalarGridSpec(
                num_scalar_prefetch=0,
                grid=grid,
                in_specs=[w_spec,
                          pl.BlockSpec((RB, PB, K), x_map)],
                out_specs=pl.BlockSpec((RB, L, PB, G), o_map),
            ),
            compiler_params=pltpu.CompilerParams(
                dimension_semantics=("parallel", "parallel"),
                vmem_limit_bytes=vmem_limit,
            ),
        )(W, xr)

    try:
        out = _call(True)
    except Exception:
        # pipeline_mode=pl.Buffered(1) not supported on this JAX build ->
        # fall back to the default double-buffered resident weight.
        out = _call(False)

    # Free row-major reshape to the torch channel ordering c*L + j.
    y = out.reshape(N, C * L, PT * G)
    if PT * G != Tq:
        y = y[:, :, :Tq]
    return y


if __name__ == "__main__":
    multiple = 2                  # L = 4
    L = 2 ** multiple

    # Case 1: f32 input, T not a multiple of L -> exercises the zero-pad path
    # and the tiny-PT (per-row unrolled) kernel variant.
    N, C, T = 2, 4, 18
    x = jax.random.normal(jax.random.PRNGKey(0), (N, C, T), dtype=jnp.float32)
    y = jax.block_until_ready(dwt_pallas(x, multiple))
    pad = (-T) % L
    y_ref = dwt_ref(jnp.pad(x, ((0, 0), (0, 0), (0, pad))), multiple)
    assert y.shape == (N, C * L, (T + pad) // L), y.shape
    assert y.dtype == jnp.float32
    err = float(jnp.max(jnp.abs(y - y_ref)))
    assert err < 1e-4, f"max abs error {err}"

    # Case 2: bf16 input -> bf16 MXU path (bf16 x, bf16 W, f32 accumulation).
    # Tolerance covers the bf16 quantization of the 1/sqrt(2) weight factors.
    T2 = 1024
    x2 = jax.random.normal(jax.random.PRNGKey(1), (N, C, T2), dtype=jnp.bfloat16)
    y2 = jax.block_until_ready(dwt_pallas(x2, multiple))
    y2_ref = dwt_ref(x2.astype(jnp.float32), multiple)
    assert y2.shape == (N, C * L, T2 // L), y2.shape
    assert y2.dtype == jnp.float32
    err2 = float(jnp.max(jnp.abs(y2 - y2_ref)))
    assert err2 < 5e-2, f"max abs error {err2}"

    # Case 2b: optional bf16 output variant (halves output HBM traffic).
    y2b = jax.block_until_ready(dwt_pallas(x2, multiple, out_dtype=jnp.bfloat16))
    assert y2b.dtype == jnp.bfloat16
    err2b = float(jnp.max(jnp.abs(y2b.astype(jnp.float32) - y2_ref)))
    assert err2b < 5e-2, f"max abs error {err2b}"

    # Case 3: larger f32 input -> fused (RB*PB, K) matmul path with a partial
    # (masked) tail time block and a time-major megacore grid.
    N3, C3, T3 = 2, 3, 5157
    x3 = jax.random.normal(jax.random.PRNGKey(2), (N3, C3, T3), dtype=jnp.float32)
    y3 = jax.block_until_ready(dwt_pallas(x3, multiple))
    pad3 = (-T3) % L
    y3_ref = dwt_ref(jnp.pad(x3, ((0, 0), (0, 0), (0, pad3))), multiple)
    assert y3.shape == (N3, C3 * L, (T3 + pad3) // L), y3.shape
    err3 = float(jnp.max(jnp.abs(y3 - y3_ref)))
    assert err3 < 1e-4, f"max abs error {err3}"

    print("KERNEL_OK")
</pallas_src>

<mosaic_0001>
module attributes {stable_mosaic.version = 11 : i64} {
  func.func @kernel(%arg0: i32, %arg1: i32, %arg2: memref<512x512xf32, #tpu.memory_space<vmem>>, %arg3: memref<8x1x512xf32, #tpu.memory_space<vmem>>, %arg4: memref<8x4x1x128xf32, #tpu.memory_space<vmem>>) attributes {dimension_semantics = [#tpu.dimension_semantics<parallel>, #tpu.dimension_semantics<parallel>], iteration_bounds = array<i64: 1, 1>, scalar_prefetch = 0 : i64, scratch_operands = 0 : i64, tpu.core_type = #tpu.core_type<tc>, window_params = [{pipeline_mode = #tpu.pipeline_mode<synchronous>, transform_indices = @transform_0, window_bounds = array<i64: 512, 512>}, {transform_indices = @transform_1, window_bounds = array<i64: 8, 1, 512>}, {transform_indices = @transform_2, window_bounds = array<i64: 8, 4, 1, 128>}]} {
    %c0 = arith.constant 0 : index
    %c0_0 = arith.constant 0 : index
    %0 = vector.load %arg2[%c0, %c0_0] : memref<512x512xf32, #tpu.memory_space<vmem>>, vector<512x512xf32>
    %c0_1 = arith.constant 0 : index
    %c0_2 = arith.constant 0 : index
    %c0_3 = arith.constant 0 : index
    %1 = vector.load %arg3[%c0_1, %c0_2, %c0_3] : memref<8x1x512xf32, #tpu.memory_space<vmem>>, vector<1x1x512xf32>
    %2 = vector.shape_cast %1 : vector<1x1x512xf32> to vector<1x512xf32>
    %cst = arith.constant dense<0.000000e+00> : vector<1x512xf32>
    %3 = tpu.matmul %2, %0, %cst {dimension_numbers = #tpu.dot_dimension_numbers<[1], [0], [0], [1], [0, 0, 1, 1], [], []>} : vector<1x512xf32>, vector<512x512xf32>, vector<1x512xf32> -> vector<1x512xf32>
    %4 = vector.extract_strided_slice %3 {offsets = [0, 0], sizes = [1, 128], strides = [1, 1]} : vector<1x512xf32> to vector<1x128xf32>
    %c0_4 = arith.constant 0 : index
    %c0_5 = arith.constant 0 : index
    %c0_6 = arith.constant 0 : index
    %c0_7 = arith.constant 0 : index
    %5 = vector.load %arg4[%c0_4, %c0_5, %c0_6, %c0_7] : memref<8x4x1x128xf32, #tpu.memory_space<vmem>>, vector<1x1x1x128xf32>
    %6 = vector.shape_cast %5 : vector<1x1x1x128xf32> to vector<1x128xf32>
    %7 = vector.shape_cast %4 : vector<1x128xf32> to vector<1x1x1x128xf32>
    tpu.vector_store %arg4[%c0_4, %c0_5, %c0_6, %c0_7], %7 {strides = array<i32>} : memref<8x4x1x128xf32, #tpu.memory_space<vmem>>, vector<1x1x1x128xf32>,
    %8 = vector.extract_strided_slice %3 {offsets = [0, 128], sizes = [1, 128], strides = [1, 1]} : vector<1x512xf32> to vector<1x128xf32>
    %c0_8 = arith.constant 0 : index
    %c1 = arith.constant 1 : index
    %c0_9 = arith.constant 0 : index
    %c0_10 = arith.constant 0 : index
    %9 = vector.load %arg4[%c0_8, %c1, %c0_9, %c0_10] : memref<8x4x1x128xf32, #tpu.memory_space<vmem>>, vector<1x1x1x128xf32>
    %10 = vector.shape_cast %9 : vector<1x1x1x128xf32> to vector<1x128xf32>
    %11 = vector.shape_cast %8 : vector<1x128xf32> to vector<1x1x1x128xf32>
    tpu.vector_store %arg4[%c0_8, %c1, %c0_9, %c0_10], %11 {strides = array<i32>} : memref<8x4x1x128xf32, #tpu.memory_space<vmem>>, vector<1x1x1x128xf32>,
    %12 = vector.extract_strided_slice %3 {offsets = [0, 256], sizes = [1, 128], strides = [1, 1]} : vector<1x512xf32> to vector<1x128xf32>
    %c0_11 = arith.constant 0 : index
    %c2 = arith.constant 2 : index
    %c0_12 = arith.constant 0 : index
    %c0_13 = arith.constant 0 : index
    %13 = vector.load %arg4[%c0_11, %c2, %c0_12, %c0_13] : memref<8x4x1x128xf32, #tpu.memory_space<vmem>>, vector<1x1x1x128xf32>
    %14 = vector.shape_cast %13 : vector<1x1x1x128xf32> to vector<1x128xf32>
    %15 = vector.shape_cast %12 : vector<1x128xf32> to vector<1x1x1x128xf32>
    tpu.vector_store %arg4[%c0_11, %c2, %c0_12, %c0_13], %15 {strides = array<i32>} : memref<8x4x1x128xf32, #tpu.memory_space<vmem>>, vector<1x1x1x128xf32>,
    %16 = vector.extract_strided_slice %3 {offsets = [0, 384], sizes = [1, 128], strides = [1, 1]} : vector<1x512xf32> to vector<1x128xf32>
    %c0_14 = arith.constant 0 : index
    %c3 = arith.constant 3 : index
    %c0_15 = arith.constant 0 : index
    %c0_16 = arith.constant 0 : index
    %17 = vector.load %arg4[%c0_14, %c3, %c0_15, %c0_16] : memref<8x4x1x128xf32, #tpu.memory_space<vmem>>, vector<1x1x1x128xf32>
    %18 = vector.shape_cast %17 : vector<1x1x1x128xf32> to vector<1x128xf32>
    %19 = vector.shape_cast %16 : vector<1x128xf32> to vector<1x1x1x128xf32>
    tpu.vector_store %arg4[%c0_14, %c3, %c0_15, %c0_16], %19 {strides = array<i32>} : memref<8x4x1x128xf32, #tpu.memory_space<vmem>>, vector<1x1x1x128xf32>,
    %c1_17 = arith.constant 1 : index
    %c0_18 = arith.constant 0 : index
    %c0_19 = arith.constant 0 : index
    %20 = vector.load %arg3[%c1_17, %c0_18, %c0_19] : memref<8x1x512xf32, #tpu.memory_space<vmem>>, vector<1x1x512xf32>
    %21 = vector.shape_cast %20 : vector<1x1x512xf32> to vector<1x512xf32>
    %cst_20 = arith.constant dense<0.000000e+00> : vector<1x512xf32>
    %22 = tpu.matmul %21, %0, %cst_20 {dimension_numbers = #tpu.dot_dimension_numbers<[1], [0], [0], [1], [0, 0, 1, 1], [], []>} : vector<1x512xf32>, vector<512x512xf32>, vector<1x512xf32> -> vector<1x512xf32>
    %23 = vector.extract_strided_slice %22 {offsets = [0, 0], sizes = [1, 128], strides = [1, 1]} : vector<1x512xf32> to vector<1x128xf32>
    %c1_21 = arith.constant 1 : index
    %c0_22 = arith.constant 0 : index
    %c0_23 = arith.constant 0 : index
    %c0_24 = arith.constant 0 : index
    %24 = vector.load %arg4[%c1_21, %c0_22, %c0_23, %c0_24] : memref<8x4x1x128xf32, #tpu.memory_space<vmem>>, vector<1x1x1x128xf32>
    %25 = vector.shape_cast %24 : vector<1x1x1x128xf32> to vector<1x128xf32>
    %26 = vector.shape_cast %23 : vector<1x128xf32> to vector<1x1x1x128xf32>
    tpu.vector_store %arg4[%c1_21, %c0_22, %c0_23, %c0_24], %26 {strides = array<i32>} : memref<8x4x1x128xf32, #tpu.memory_space<vmem>>, vector<1x1x1x128xf32>,
    %27 = vector.extract_strided_slice %22 {offsets = [0, 128], sizes = [1, 128], strides = [1, 1]} : vector<1x512xf32> to vector<1x128xf32>
    %c1_25 = arith.constant 1 : index
    %c1_26 = arith.constant 1 : index
    %c0_27 = arith.constant 0 : index
    %c0_28 = arith.constant 0 : index
    %28 = vector.load %arg4[%c1_25, %c1_26, %c0_27, %c0_28] : memref<8x4x1x128xf32, #tpu.memory_space<vmem>>, vector<1x1x1x128xf32>
    %29 = vector.shape_cast %28 : vector<1x1x1x128xf32> to vector<1x128xf32>
    %30 = vector.shape_cast %27 : vector<1x128xf32> to vector<1x1x1x128xf32>
    tpu.vector_store %arg4[%c1_25, %c1_26, %c0_27, %c0_28], %30 {strides = array<i32>} : memref<8x4x1x128xf32, #tpu.memory_space<vmem>>, vector<1x1x1x128xf32>,
    %31 = vector.extract_strided_slice %22 {offsets = [0, 256], sizes = [1, 128], strides = [1, 1]} : vector<1x512xf32> to vector<1x128xf32>
    %c1_29 = arith.constant 1 : index
    %c2_30 = arith.constant 2 : index
    %c0_31 = arith.constant 0 : index
    %c0_32 = arith.constant 0 : index
    %32 = vector.load %arg4[%c1_29, %c2_30, %c0_31, %c0_32] : memref<8x4x1x128xf32, #tpu.memory_space<vmem>>, vector<1x1x1x128xf32>
    %33 = vector.shape_cast %32 : vector<1x1x1x128xf32> to vector<1x128xf32>
    %34 = vector.shape_cast %31 : vector<1x128xf32> to vector<1x1x1x128xf32>
    tpu.vector_store %arg4[%c1_29, %c2_30, %c0_31, %c0_32], %34 {strides = array<i32>} : memref<8x4x1x128xf32, #tpu.memory_space<vmem>>, vector<1x1x1x128xf32>,
    %35 = vector.extract_strided_slice %22 {offsets = [0, 384], sizes = [1, 128], strides = [1, 1]} : vector<1x512xf32> to vector<1x128xf32>
    %c1_33 = arith.constant 1 : index
    %c3_34 = arith.constant 3 : index
    %c0_35 = arith.constant 0 : index
    %c0_36 = arith.constant 0 : index
    %36 = vector.load %arg4[%c1_33, %c3_34, %c0_35, %c0_36] : memref<8x4x1x128xf32, #tpu.memory_space<vmem>>, vector<1x1x1x128xf32>
    %37 = vector.shape_cast %36 : vector<1x1x1x128xf32> to vector<1x128xf32>
    %38 = vector.shape_cast %35 : vector<1x128xf32> to vector<1x1x1x128xf32>
    tpu.vector_store %arg4[%c1_33, %c3_34, %c0_35, %c0_36], %38 {strides = array<i32>} : memref<8x4x1x128xf32, #tpu.memory_space<vmem>>, vector<1x1x1x128xf32>,
    %c2_37 = arith.constant 2 : index
    %c0_38 = arith.constant 0 : index
    %c0_39 = arith.constant 0 : index
    %39 = vector.load %arg3[%c2_37, %c0_38, %c0_39] : memref<8x1x512xf32, #tpu.memory_space<vmem>>, vector<1x1x512xf32>
    %40 = vector.shape_cast %39 : vector<1x1x512xf32> to vector<1x512xf32>
    %cst_40 = arith.constant dense<0.000000e+00> : vector<1x512xf32>
    %41 = tpu.matmul %40, %0, %cst_40 {dimension_numbers = #tpu.dot_dimension_numbers<[1], [0], [0], [1], [0, 0, 1, 1], [], []>} : vector<1x512xf32>, vector<512x512xf32>, vector<1x512xf32> -> vector<1x512xf32>
    %42 = vector.extract_strided_slice %41 {offsets = [0, 0], sizes = [1, 128], strides = [1, 1]} : vector<1x512xf32> to vector<1x128xf32>
    %c2_41 = arith.constant 2 : index
    %c0_42 = arith.constant 0 : index
    %c0_43 = arith.constant 0 : index
    %c0_44 = arith.constant 0 : index
    %43 = vector.load %arg4[%c2_41, %c0_42, %c0_43, %c0_44] : memref<8x4x1x128xf32, #tpu.memory_space<vmem>>, vector<1x1x1x128xf32>
    %44 = vector.shape_cast %43 : vector<1x1x1x128xf32> to vector<1x128xf32>
    %45 = vector.shape_cast %42 : vector<1x128xf32> to vector<1x1x1x128xf32>
    tpu.vector_store %arg4[%c2_41, %c0_42, %c0_43, %c0_44], %45 {strides = array<i32>} : memref<8x4x1x128xf32, #tpu.memory_space<vmem>>, vector<1x1x1x128xf32>,
    %46 = vector.extract_strided_slice %41 {offsets = [0, 128], sizes = [1, 128], strides = [1, 1]} : vector<1x512xf32> to vector<1x128xf32>
    %c2_45 = arith.constant 2 : index
    %c1_46 = arith.constant 1 : index
    %c0_47 = arith.constant 0 : index
    %c0_48 = arith.constant 0 : index
    %47 = vector.load %arg4[%c2_45, %c1_46, %c0_47, %c0_48] : memref<8x4x1x128xf32, #tpu.memory_space<vmem>>, vector<1x1x1x128xf32>
    %48 = vector.shape_cast %47 : vector<1x1x1x128xf32> to vector<1x128xf32>
    %49 = vector.shape_cast %46 : vector<1x128xf32> to vector<1x1x1x128xf32>
    tpu.vector_store %arg4[%c2_45, %c1_46, %c0_47, %c0_48], %49 {strides = array<i32>} : memref<8x4x1x128xf32, #tpu.memory_space<vmem>>, vector<1x1x1x128xf32>,
    %50 = vector.extract_strided_slice %41 {offsets = [0, 256], sizes = [1, 128], strides = [1, 1]} : vector<1x512xf32> to vector<1x128xf32>
    %c2_49 = arith.constant 2 : index
    %c2_50 = arith.constant 2 : index
    %c0_51 = arith.constant 0 : index
    %c0_52 = arith.constant 0 : index
    %51 = vector.load %arg4[%c2_49, %c2_50, %c0_51, %c0_52] : memref<8x4x1x128xf32, #tpu.memory_space<vmem>>, vector<1x1x1x128xf32>
    %52 = vector.shape_cast %51 : vector<1x1x1x128xf32> to vector<1x128xf32>
    %53 = vector.shape_cast %50 : vector<1x128xf32> to vector<1x1x1x128xf32>
    tpu.vector_store %arg4[%c2_49, %c2_50, %c0_51, %c0_52], %53 {strides = array<i32>} : memref<8x4x1x128xf32, #tpu.memory_space<vmem>>, vector<1x1x1x128xf32>,
    %54 = vector.extract_strided_slice %41 {offsets = [0, 384], sizes = [1, 128], strides = [1, 1]} : vector<1x512xf32> to vector<1x128xf32>
    %c2_53 = arith.constant 2 : index
    %c3_54 = arith.constant 3 : index
    %c0_55 = arith.constant 0 : index
    %c0_56 = arith.constant 0 : index
    %55 = vector.load %arg4[%c2_53, %c3_54, %c0_55, %c0_56] : memref<8x4x1x128xf32, #tpu.memory_space<vmem>>, vector<1x1x1x128xf32>
    %56 = vector.shape_cast %55 : vector<1x1x1x128xf32> to vector<1x128xf32>
    %57 = vector.shape_cast %54 : vector<1x128xf32> to vector<1x1x1x128xf32>
    tpu.vector_store %arg4[%c2_53, %c3_54, %c0_55, %c0_56], %57 {strides = array<i32>} : memref<8x4x1x128xf32, #tpu.memory_space<vmem>>, vector<1x1x1x128xf32>,
    %c3_57 = arith.constant 3 : index
    %c0_58 = arith.constant 0 : index
    %c0_59 = arith.constant 0 : index
    %58 = vector.load %arg3[%c3_57, %c0_58, %c0_59] : memref<8x1x512xf32, #tpu.memory_space<vmem>>, vector<1x1x512xf32>
    %59 = vector.shape_cast %58 : vector<1x1x512xf32> to vector<1x512xf32>
    %cst_60 = arith.constant dense<0.000000e+00> : vector<1x512xf32>
    %60 = tpu.matmul %59, %0, %cst_60 {dimension_numbers = #tpu.dot_dimension_numbers<[1], [0], [0], [1], [0, 0, 1, 1], [], []>} : vector<1x512xf32>, vector<512x512xf32>, vector<1x512xf32> -> vector<1x512xf32>
    %61 = vector.extract_strided_slice %60 {offsets = [0, 0], sizes = [1, 128], strides = [1, 1]} : vector<1x512xf32> to vector<1x128xf32>
    %c3_61 = arith.constant 3 : index
    %c0_62 = arith.constant 0 : index
    %c0_63 = arith.constant 0 : index
    %c0_64 = arith.constant 0 : index
    %62 = vector.load %arg4[%c3_61, %c0_62, %c0_63, %c0_64] : memref<8x4x1x128xf32, #tpu.memory_space<vmem>>, vector<1x1x1x128xf32>
    %63 = vector.shape_cast %62 : vector<1x1x1x128xf32> to vector<1x128xf32>
    %64 = vector.shape_cast %61 : vector<1x128xf32> to vector<1x1x1x128xf32>
    tpu.vector_store %arg4[%c3_61, %c0_62, %c0_63, %c0_64], %64 {strides = array<i32>} : memref<8x4x1x128xf32, #tpu.memory_space<vmem>>, vector<1x1x1x128xf32>,
    %65 = vector.extract_strided_slice %60 {offsets = [0, 128], sizes = [1, 128], strides = [1, 1]} : vector<1x512xf32> to vector<1x128xf32>
    %c3_65 = arith.constant 3 : index
    %c1_66 = arith.constant 1 : index
    %c0_67 = arith.constant 0 : index
    %c0_68 = arith.constant 0 : index
    %66 = vector.load %arg4[%c3_65, %c1_66, %c0_67, %c0_68] : memref<8x4x1x128xf32, #tpu.memory_space<vmem>>, vector<1x1x1x128xf32>
    %67 = vector.shape_cast %66 : vector<1x1x1x128xf32> to vector<1x128xf32>
    %68 = vector.shape_cast %65 : vector<1x128xf32> to vector<1x1x1x128xf32>
    tpu.vector_store %arg4[%c3_65, %c1_66, %c0_67, %c0_68], %68 {strides = array<i32>} : memref<8x4x1x128xf32, #tpu.memory_space<vmem>>, vector<1x1x1x128xf32>,
    %69 = vector.extract_strided_slice %60 {offsets = [0, 256], sizes = [1, 128], strides = [1, 1]} : vector<1x512xf32> to vector<1x128xf32>
    %c3_69 = arith.constant 3 : index
    %c2_70 = arith.constant 2 : index
    %c0_71 = arith.constant 0 : index
    %c0_72 = arith.constant 0 : index
    %70 = vector.load %arg4[%c3_69, %c2_70, %c0_71, %c0_72] : memref<8x4x1x128xf32, #tpu.memory_space<vmem>>, vector<1x1x1x128xf32>
    %71 = vector.shape_cast %70 : vector<1x1x1x128xf32> to vector<1x128xf32>
    %72 = vector.shape_cast %69 : vector<1x128xf32> to vector<1x1x1x128xf32>
    tpu.vector_store %arg4[%c3_69, %c2_70, %c0_71, %c0_72], %72 {strides = array<i32>} : memref<8x4x1x128xf32, #tpu.memory_space<vmem>>, vector<1x1x1x128xf32>,
    %73 = vector.extract_strided_slice %60 {offsets = [0, 384], sizes = [1, 128], strides = [1, 1]} : vector<1x512xf32> to vector<1x128xf32>
    %c3_73 = arith.constant 3 : index
    %c3_74 = arith.constant 3 : index
    %c0_75 = arith.constant 0 : index
    %c0_76 = arith.constant 0 : index
    %74 = vector.load %arg4[%c3_73, %c3_74, %c0_75, %c0_76] : memref<8x4x1x128xf32, #tpu.memory_space<vmem>>, vector<1x1x1x128xf32>
    %75 = vector.shape_cast %74 : vector<1x1x1x128xf32> to vector<1x128xf32>
    %76 = vector.shape_cast %73 : vector<1x128xf32> to vector<1x1x1x128xf32>
    tpu.vector_store %arg4[%c3_73, %c3_74, %c0_75, %c0_76], %76 {strides = array<i32>} : memref<8x4x1x128xf32, #tpu.memory_space<vmem>>, vector<1x1x1x128xf32>,
    %c4 = arith.constant 4 : index
    %c0_77 = arith.constant 0 : index
    %c0_78 = arith.constant 0 : index
    %77 = vector.load %arg3[%c4, %c0_77, %c0_78] : memref<8x1x512xf32, #tpu.memory_space<vmem>>, vector<1x1x512xf32>
    %78 = vector.shape_cast %77 : vector<1x1x512xf32> to vector<1x512xf32>
    %cst_79 = arith.constant dense<0.000000e+00> : vector<1x512xf32>
    %79 = tpu.matmul %78, %0, %cst_79 {dimension_numbers = #tpu.dot_dimension_numbers<[1], [0], [0], [1], [0, 0, 1, 1], [], []>} : vector<1x512xf32>, vector<512x512xf32>, vector<1x512xf32> -> vector<1x512xf32>
    %80 = vector.extract_strided_slice %79 {offsets = [0, 0], sizes = [1, 128], strides = [1, 1]} : vector<1x512xf32> to vector<1x128xf32>
    %c4_80 = arith.constant 4 : index
    %c0_81 = arith.constant 0 : index
    %c0_82 = arith.constant 0 : index
    %c0_83 = arith.constant 0 : index
    %81 = vector.load %arg4[%c4_80, %c0_81, %c0_82, %c0_83] : memref<8x4x1x128xf32, #tpu.memory_space<vmem>>, vector<1x1x1x128xf32>
    %82 = vector.shape_cast %81 : vector<1x1x1x128xf32> to vector<1x128xf32>
    %83 = vector.shape_cast %80 : vector<1x128xf32> to vector<1x1x1x128xf32>
    tpu.vector_store %arg4[%c4_80, %c0_81, %c0_82, %c0_83], %83 {strides = array<i32>} : memref<8x4x1x128xf32, #tpu.memory_space<vmem>>, vector<1x1x1x128xf32>,
    %84 = vector.extract_strided_slice %79 {offsets = [0, 128], sizes = [1, 128], strides = [1, 1]} : vector<1x512xf32> to vector<1x128xf32>
    %c4_84 = arith.constant 4 : index
    %c1_85 = arith.constant 1 : index
    %c0_86 = arith.constant 0 : index
    %c0_87 = arith.constant 0 : index
    %85 = vector.load %arg4[%c4_84, %c1_85, %c0_86, %c0_87] : memref<8x4x1x128xf32, #tpu.memory_space<vmem>>, vector<1x1x1x128xf32>
    %86 = vector.shape_cast %85 : vector<1x1x1x128xf32> to vector<1x128xf32>
    %87 = vector.shape_cast %84 : vector<1x128xf32> to vector<1x1x1x128xf32>
    tpu.vector_store %arg4[%c4_84, %c1_85, %c0_86, %c0_87], %87 {strides = array<i32>} : memref<8x4x1x128xf32, #tpu.memory_space<vmem>>, vector<1x1x1x128xf32>,
    %88 = vector.extract_strided_slice %79 {offsets = [0, 256], sizes = [1, 128], strides = [1, 1]} : vector<1x512xf32> to vector<1x128xf32>
    %c4_88 = arith.constant 4 : index
    %c2_89 = arith.constant 2 : index
    %c0_90 = arith.constant 0 : index
    %c0_91 = arith.constant 0 : index
    %89 = vector.load %arg4[%c4_88, %c2_89, %c0_90, %c0_91] : memref<8x4x1x128xf32, #tpu.memory_space<vmem>>, vector<1x1x1x128xf32>
    %90 = vector.shape_cast %89 : vector<1x1x1x128xf32> to vector<1x128xf32>
    %91 = vector.shape_cast %88 : vector<1x128xf32> to vector<1x1x1x128xf32>
    tpu.vector_store %arg4[%c4_88, %c2_89, %c0_90, %c0_91], %91 {strides = array<i32>} : memref<8x4x1x128xf32, #tpu.memory_space<vmem>>, vector<1x1x1x128xf32>,
    %92 = vector.extract_strided_slice %79 {offsets = [0, 384], sizes = [1, 128], strides = [1, 1]} : vector<1x512xf32> to vector<1x128xf32>
    %c4_92 = arith.constant 4 : index
    %c3_93 = arith.constant 3 : index
    %c0_94 = arith.constant 0 : index
    %c0_95 = arith.constant 0 : index
    %93 = vector.load %arg4[%c4_92, %c3_93, %c0_94, %c0_95] : memref<8x4x1x128xf32, #tpu.memory_space<vmem>>, vector<1x1x1x128xf32>
    %94 = vector.shape_cast %93 : vector<1x1x1x128xf32> to vector<1x128xf32>
    %95 = vector.shape_cast %92 : vector<1x128xf32> to vector<1x1x1x128xf32>
    tpu.vector_store %arg4[%c4_92, %c3_93, %c0_94, %c0_95], %95 {strides = array<i32>} : memref<8x4x1x128xf32, #tpu.memory_space<vmem>>, vector<1x1x1x128xf32>,
    %c5 = arith.constant 5 : index
    %c0_96 = arith.constant 0 : index
    %c0_97 = arith.constant 0 : index
    %96 = vector.load %arg3[%c5, %c0_96, %c0_97] : memref<8x1x512xf32, #tpu.memory_space<vmem>>, vector<1x1x512xf32>
    %97 = vector.shape_cast %96 : vector<1x1x512xf32> to vector<1x512xf32>
    %cst_98 = arith.constant dense<0.000000e+00> : vector<1x512xf32>
    %98 = tpu.matmul %97, %0, %cst_98 {dimension_numbers = #tpu.dot_dimension_numbers<[1], [0], [0], [1], [0, 0, 1, 1], [], []>} : vector<1x512xf32>, vector<512x512xf32>, vector<1x512xf32> -> vector<1x512xf32>
    %99 = vector.extract_strided_slice %98 {offsets = [0, 0], sizes = [1, 128], strides = [1, 1]} : vector<1x512xf32> to vector<1x128xf32>
    %c5_99 = arith.constant 5 : index
    %c0_100 = arith.constant 0 : index
    %c0_101 = arith.constant 0 : index
    %c0_102 = arith.constant 0 : index
    %100 = vector.load %arg4[%c5_99, %c0_100, %c0_101, %c0_102] : memref<8x4x1x128xf32, #tpu.memory_space<vmem>>, vector<1x1x1x128xf32>
    %101 = vector.shape_cast %100 : vector<1x1x1x128xf32> to vector<1x128xf32>
    %102 = vector.shape_cast %99 : vector<1x128xf32> to vector<1x1x1x128xf32>
    tpu.vector_store %arg4[%c5_99, %c0_100, %c0_101, %c0_102], %102 {strides = array<i32>} : memref<8x4x1x128xf32, #tpu.memory_space<vmem>>, vector<1x1x1x128xf32>,
    %103 = vector.extract_strided_slice %98 {offsets = [0, 128], sizes = [1, 128], strides = [1, 1]} : vector<1x512xf32> to vector<1x128xf32>
    %c5_103 = arith.constant 5 : index
    %c1_104 = arith.constant 1 : index
    %c0_105 = arith.constant 0 : index
    %c0_106 = arith.constant 0 : index
    %104 = vector.load %arg4[%c5_103, %c1_104, %c0_105, %c0_106] : memref<8x4x1x128xf32, #tpu.memory_space<vmem>>, vector<1x1x1x128xf32>
    %105 = vector.shape_cast %104 : vector<1x1x1x128xf32> to vector<1x128xf32>
    %106 = vector.shape_cast %103 : vector<1x128xf32> to vector<1x1x1x128xf32>
    tpu.vector_store %arg4[%c5_103, %c1_104, %c0_105, %c0_106], %106 {strides = array<i32>} : memref<8x4x1x128xf32, #tpu.memory_space<vmem>>, vector<1x1x1x128xf32>,
    %107 = vector.extract_strided_slice %98 {offsets = [0, 256], sizes = [1, 128], strides = [1, 1]} : vector<1x512xf32> to vector<1x128xf32>
    %c5_107 = arith.constant 5 : index
    %c2_108 = arith.constant 2 : index
    %c0_109 = arith.constant 0 : index
    %c0_110 = arith.constant 0 : index
    %108 = vector.load %arg4[%c5_107, %c2_108, %c0_109, %c0_110] : memref<8x4x1x128xf32, #tpu.memory_space<vmem>>, vector<1x1x1x128xf32>
    %109 = vector.shape_cast %108 : vector<1x1x1x128xf32> to vector<1x128xf32>
    %110 = vector.shape_cast %107 : vector<1x128xf32> to vector<1x1x1x128xf32>
    tpu.vector_store %arg4[%c5_107, %c2_108, %c0_109, %c0_110], %110 {strides = array<i32>} : memref<8x4x1x128xf32, #tpu.memory_space<vmem>>, vector<1x1x1x128xf32>,
    %111 = vector.extract_strided_slice %98 {offsets = [0, 384], sizes = [1, 128], strides = [1, 1]} : vector<1x512xf32> to vector<1x128xf32>
    %c5_111 = arith.constant 5 : index
    %c3_112 = arith.constant 3 : index
    %c0_113 = arith.constant 0 : index
    %c0_114 = arith.constant 0 : index
    %112 = vector.load %arg4[%c5_111, %c3_112, %c0_113, %c0_114] : memref<8x4x1x128xf32, #tpu.memory_space<vmem>>, vector<1x1x1x128xf32>
    %113 = vector.shape_cast %112 : vector<1x1x1x128xf32> to vector<1x128xf32>
    %114 = vector.shape_cast %111 : vector<1x128xf32> to vector<1x1x1x128xf32>
    tpu.vector_store %arg4[%c5_111, %c3_112, %c0_113, %c0_114], %114 {strides = array<i32>} : memref<8x4x1x128xf32, #tpu.memory_space<vmem>>, vector<1x1x1x128xf32>,
    %c6 = arith.constant 6 : index
    %c0_115 = arith.constant 0 : index
    %c0_116 = arith.constant 0 : index
    %115 = vector.load %arg3[%c6, %c0_115, %c0_116] : memref<8x1x512xf32, #tpu.memory_space<vmem>>, vector<1x1x512xf32>
    %116 = vector.shape_cast %115 : vector<1x1x512xf32> to vector<1x512xf32>
    %cst_117 = arith.constant dense<0.000000e+00> : vector<1x512xf32>
    %117 = tpu.matmul %116, %0, %cst_117 {dimension_numbers = #tpu.dot_dimension_numbers<[1], [0], [0], [1], [0, 0, 1, 1], [], []>} : vector<1x512xf32>, vector<512x512xf32>, vector<1x512xf32> -> vector<1x512xf32>
    %118 = vector.extract_strided_slice %117 {offsets = [0, 0], sizes = [1, 128], strides = [1, 1]} : vector<1x512xf32> to vector<1x128xf32>
    %c6_118 = arith.constant 6 : index
    %c0_119 = arith.constant 0 : index
    %c0_120 = arith.constant 0 : index
    %c0_121 = arith.constant 0 : index
    %119 = vector.load %arg4[%c6_118, %c0_119, %c0_120, %c0_121] : memref<8x4x1x128xf32, #tpu.memory_space<vmem>>, vector<1x1x1x128xf32>
    %120 = vector.shape_cast %119 : vector<1x1x1x128xf32> to vector<1x128xf32>
    %121 = vector.shape_cast %118 : vector<1x128xf32> to vector<1x1x1x128xf32>
    tpu.vector_store %arg4[%c6_118, %c0_119, %c0_120, %c0_121], %121 {strides = array<i32>} : memref<8x4x1x128xf32, #tpu.memory_space<vmem>>, vector<1x1x1x128xf32>,
    %122 = vector.extract_strided_slice %117 {offsets = [0, 128], sizes = [1, 128], strides = [1, 1]} : vector<1x512xf32> to vector<1x128xf32>
    %c6_122 = arith.constant 6 : index
    %c1_123 = arith.constant 1 : index
    %c0_124 = arith.constant 0 : index
    %c0_125 = arith.constant 0 : index
    %123 = vector.load %arg4[%c6_122, %c1_123, %c0_124, %c0_125] : memref<8x4x1x128xf32, #tpu.memory_space<vmem>>, vector<1x1x1x128xf32>
    %124 = vector.shape_cast %123 : vector<1x1x1x128xf32> to vector<1x128xf32>
    %125 = vector.shape_cast %122 : vector<1x128xf32> to vector<1x1x1x128xf32>
    tpu.vector_store %arg4[%c6_122, %c1_123, %c0_124, %c0_125], %125 {strides = array<i32>} : memref<8x4x1x128xf32, #tpu.memory_space<vmem>>, vector<1x1x1x128xf32>,
    %126 = vector.extract_strided_slice %117 {offsets = [0, 256], sizes = [1, 128], strides = [1, 1]} : vector<1x512xf32> to vector<1x128xf32>
    %c6_126 = arith.constant 6 : index
    %c2_127 = arith.constant 2 : index
    %c0_128 = arith.constant 0 : index
    %c0_129 = arith.constant 0 : index
    %127 = vector.load %arg4[%c6_126, %c2_127, %c0_128, %c0_129] : memref<8x4x1x128xf32, #tpu.memory_space<vmem>>, vector<1x1x1x128xf32>
    %128 = vector.shape_cast %127 : vector<1x1x1x128xf32> to vector<1x128xf32>
    %129 = vector.shape_cast %126 : vector<1x128xf32> to vector<1x1x1x128xf32>
    tpu.vector_store %arg4[%c6_126, %c2_127, %c0_128, %c0_129], %129 {strides = array<i32>} : memref<8x4x1x128xf32, #tpu.memory_space<vmem>>, vector<1x1x1x128xf32>,
    %130 = vector.extract_strided_slice %117 {offsets = [0, 384], sizes = [1, 128], strides = [1, 1]} : vector<1x512xf32> to vector<1x128xf32>
    %c6_130 = arith.constant 6 : index
    %c3_131 = arith.constant 3 : index
    %c0_132 = arith.constant 0 : index
    %c0_133 = arith.constant 0 : index
    %131 = vector.load %arg4[%c6_130, %c3_131, %c0_132, %c0_133] : memref<8x4x1x128xf32, #tpu.memory_space<vmem>>, vector<1x1x1x128xf32>
    %132 = vector.shape_cast %131 : vector<1x1x1x128xf32> to vector<1x128xf32>
    %133 = vector.shape_cast %130 : vector<1x128xf32> to vector<1x1x1x128xf32>
    tpu.vector_store %arg4[%c6_130, %c3_131, %c0_132, %c0_133], %133 {strides = array<i32>} : memref<8x4x1x128xf32, #tpu.memory_space<vmem>>, vector<1x1x1x128xf32>,
    %c7 = arith.constant 7 : index
    %c0_134 = arith.constant 0 : index
    %c0_135 = arith.constant 0 : index
    %134 = vector.load %arg3[%c7, %c0_134, %c0_135] : memref<8x1x512xf32, #tpu.memory_space<vmem>>, vector<1x1x512xf32>
    %135 = vector.shape_cast %134 : vector<1x1x512xf32> to vector<1x512xf32>
    %cst_136 = arith.constant dense<0.000000e+00> : vector<1x512xf32>
    %136 = tpu.matmul %135, %0, %cst_136 {dimension_numbers = #tpu.dot_dimension_numbers<[1], [0], [0], [1], [0, 0, 1, 1], [], []>} : vector<1x512xf32>, vector<512x512xf32>, vector<1x512xf32> -> vector<1x512xf32>
    %137 = vector.extract_strided_slice %136 {offsets = [0, 0], sizes = [1, 128], strides = [1, 1]} : vector<1x512xf32> to vector<1x128xf32>
    %c7_137 = arith.constant 7 : index
    %c0_138 = arith.constant 0 : index
    %c0_139 = arith.constant 0 : index
    %c0_140 = arith.constant 0 : index
    %138 = vector.load %arg4[%c7_137, %c0_138, %c0_139, %c0_140] : memref<8x4x1x128xf32, #tpu.memory_space<vmem>>, vector<1x1x1x128xf32>
    %139 = vector.shape_cast %138 : vector<1x1x1x128xf32> to vector<1x128xf32>
    %140 = vector.shape_cast %137 : vector<1x128xf32> to vector<1x1x1x128xf32>
    tpu.vector_store %arg4[%c7_137, %c0_138, %c0_139, %c0_140], %140 {strides = array<i32>} : memref<8x4x1x128xf32, #tpu.memory_space<vmem>>, vector<1x1x1x128xf32>,
    %141 = vector.extract_strided_slice %136 {offsets = [0, 128], sizes = [1, 128], strides = [1, 1]} : vector<1x512xf32> to vector<1x128xf32>
    %c7_141 = arith.constant 7 : index
    %c1_142 = arith.constant 1 : index
    %c0_143 = arith.constant 0 : index
    %c0_144 = arith.constant 0 : index
    %142 = vector.load %arg4[%c7_141, %c1_142, %c0_143, %c0_144] : memref<8x4x1x128xf32, #tpu.memory_space<vmem>>, vector<1x1x1x128xf32>
    %143 = vector.shape_cast %142 : vector<1x1x1x128xf32> to vector<1x128xf32>
    %144 = vector.shape_cast %141 : vector<1x128xf32> to vector<1x1x1x128xf32>
    tpu.vector_store %arg4[%c7_141, %c1_142, %c0_143, %c0_144], %144 {strides = array<i32>} : memref<8x4x1x128xf32, #tpu.memory_space<vmem>>, vector<1x1x1x128xf32>,
    %145 = vector.extract_strided_slice %136 {offsets = [0, 256], sizes = [1, 128], strides = [1, 1]} : vector<1x512xf32> to vector<1x128xf32>
    %c7_145 = arith.constant 7 : index
    %c2_146 = arith.constant 2 : index
    %c0_147 = arith.constant 0 : index
    %c0_148 = arith.constant 0 : index
    %146 = vector.load %arg4[%c7_145, %c2_146, %c0_147, %c0_148] : memref<8x4x1x128xf32, #tpu.memory_space<vmem>>, vector<1x1x1x128xf32>
    %147 = vector.shape_cast %146 : vector<1x1x1x128xf32> to vector<1x128xf32>
    %148 = vector.shape_cast %145 : vector<1x128xf32> to vector<1x1x1x128xf32>
    tpu.vector_store %arg4[%c7_145, %c2_146, %c0_147, %c0_148], %148 {strides = array<i32>} : memref<8x4x1x128xf32, #tpu.memory_space<vmem>>, vector<1x1x1x128xf32>,
    %149 = vector.extract_strided_slice %136 {offsets = [0, 384], sizes = [1, 128], strides = [1, 1]} : vector<1x512xf32> to vector<1x128xf32>
    %c7_149 = arith.constant 7 : index
    %c3_150 = arith.constant 3 : index
    %c0_151 = arith.constant 0 : index
    %c0_152 = arith.constant 0 : index
    %150 = vector.load %arg4[%c7_149, %c3_150, %c0_151, %c0_152] : memref<8x4x1x128xf32, #tpu.memory_space<vmem>>, vector<1x1x1x128xf32>
    %151 = vector.shape_cast %150 : vector<1x1x1x128xf32> to vector<1x128xf32>
    %152 = vector.shape_cast %149 : vector<1x128xf32> to vector<1x1x1x128xf32>
    tpu.vector_store %arg4[%c7_149, %c3_150, %c0_151, %c0_152], %152 {strides = array<i32>} : memref<8x4x1x128xf32, #tpu.memory_space<vmem>>, vector<1x1x1x128xf32>,
    return
  }
  func.func @transform_0(%arg0: i32, %arg1: i32) -> (i32, i32) {
    %c0_i32 = arith.constant 0 : i32
    %c0_i32_0 = arith.constant 0 : i32
    %c0_i32_1 = arith.constant 0 : i32
    return %c0_i32, %c0_i32_0 : i32, i32
  }
  func.func @transform_1(%arg0: i32, %arg1: i32) -> (i32, i32, i32) {
    %c0_i32 = arith.constant 0 : i32
    %c0_i32_0 = arith.constant 0 : i32
    return %arg1, %arg0, %c0_i32 : i32, i32, i32
  }
  func.func @transform_2(%arg0: i32, %arg1: i32) -> (i32, i32, i32, i32) {
    %c0_i32 = arith.constant 0 : i32
    %c0_i32_0 = arith.constant 0 : i32
    %c0_i32_1 = arith.constant 0 : i32
    return %arg1, %c0_i32, %arg0, %c0_i32_0 : i32, i32, i32, i32
  }
}

module attributes {stable_mosaic.version = 11 : i64} {
  func.func @kernel(%arg0: i32, %arg1: i32, %arg2: memref<512x512xf32, #tpu.memory_space<vmem>>, %arg3: memref<8x1x512xf32, #tpu.memory_space<vmem>>, %arg4: memref<8x4x1x128xf32, #tpu.memory_space<vmem>>) attributes {dimension_semantics = [#tpu.dimension_semantics<parallel>, #tpu.dimension_semantics<parallel>], iteration_bounds = array<i64: 1, 1>, scalar_prefetch = 0 : i64, scratch_operands = 0 : i64, tpu.core_type = #tpu.core_type<tc>, window_params = [{pipeline_mode = #tpu.pipeline_mode<synchronous>, transform_indices = @transform_0, window_bounds = array<i64: 512, 512>}, {transform_indices = @transform_1, window_bounds = array<i64: 8, 1, 512>}, {transform_indices = @transform_2, window_bounds = array<i64: 8, 4, 1, 128>}]} {
    %c0 = arith.constant 0 : index
    %c0_0 = arith.constant 0 : index
    %0 = vector.load %arg2[%c0, %c0_0] : memref<512x512xf32, #tpu.memory_space<vmem>>, vector<512x512xf32>
    %c0_1 = arith.constant 0 : index
    %c0_2 = arith.constant 0 : index
    %c0_3 = arith.constant 0 : index
    %1 = vector.load %arg3[%c0_1, %c0_2, %c0_3] : memref<8x1x512xf32, #tpu.memory_space<vmem>>, vector<1x1x512xf32>
    %2 = vector.shape_cast %1 : vector<1x1x512xf32> to vector<1x512xf32>
    %cst = arith.constant dense<0.000000e+00> : vector<1x512xf32>
    %3 = tpu.matmul %2, %0, %cst {dimension_numbers = #tpu.dot_dimension_numbers<[1], [0], [0], [1], [0, 0, 1, 1], [], []>} : vector<1x512xf32>, vector<512x512xf32>, vector<1x512xf32> -> vector<1x512xf32>
    %4 = vector.extract_strided_slice %3 {offsets = [0, 0], sizes = [1, 128], strides = [1, 1]} : vector<1x512xf32> to vector<1x128xf32>
    %c0_4 = arith.constant 0 : index
    %c0_5 = arith.constant 0 : index
    %c0_6 = arith.constant 0 : index
    %c0_7 = arith.constant 0 : index
    %5 = vector.load %arg4[%c0_4, %c0_5, %c0_6, %c0_7] : memref<8x4x1x128xf32, #tpu.memory_space<vmem>>, vector<1x1x1x128xf32>
    %6 = vector.shape_cast %5 : vector<1x1x1x128xf32> to vector<1x128xf32>
    %7 = vector.shape_cast %4 : vector<1x128xf32> to vector<1x1x1x128xf32>
    tpu.vector_store %arg4[%c0_4, %c0_5, %c0_6, %c0_7], %7 {strides = array<i32>} : memref<8x4x1x128xf32, #tpu.memory_space<vmem>>, vector<1x1x1x128xf32>,
    %8 = vector.extract_strided_slice %3 {offsets = [0, 128], sizes = [1, 128], strides = [1, 1]} : vector<1x512xf32> to vector<1x128xf32>
    %c0_8 = arith.constant 0 : index
    %c1 = arith.constant 1 : index
    %c0_9 = arith.constant 0 : index
    %c0_10 = arith.constant 0 : index
    %9 = vector.load %arg4[%c0_8, %c1, %c0_9, %c0_10] : memref<8x4x1x128xf32, #tpu.memory_space<vmem>>, vector<1x1x1x128xf32>
    %10 = vector.shape_cast %9 : vector<1x1x1x128xf32> to vector<1x128xf32>
    %11 = vector.shape_cast %8 : vector<1x128xf32> to vector<1x1x1x128xf32>
    tpu.vector_store %arg4[%c0_8, %c1, %c0_9, %c0_10], %11 {strides = array<i32>} : memref<8x4x1x128xf32, #tpu.memory_space<vmem>>, vector<1x1x1x128xf32>,
    %12 = vector.extract_strided_slice %3 {offsets = [0, 256], sizes = [1, 128], strides = [1, 1]} : vector<1x512xf32> to vector<1x128xf32>
    %c0_11 = arith.constant 0 : index
    %c2 = arith.constant 2 : index
    %c0_12 = arith.constant 0 : index
    %c0_13 = arith.constant 0 : index
    %13 = vector.load %arg4[%c0_11, %c2, %c0_12, %c0_13] : memref<8x4x1x128xf32, #tpu.memory_space<vmem>>, vector<1x1x1x128xf32>
    %14 = vector.shape_cast %13 : vector<1x1x1x128xf32> to vector<1x128xf32>
    %15 = vector.shape_cast %12 : vector<1x128xf32> to vector<1x1x1x128xf32>
    tpu.vector_store %arg4[%c0_11, %c2, %c0_12, %c0_13], %15 {strides = array<i32>} : memref<8x4x1x128xf32, #tpu.memory_space<vmem>>, vector<1x1x1x128xf32>,
    %16 = vector.extract_strided_slice %3 {offsets = [0, 384], sizes = [1, 128], strides = [1, 1]} : vector<1x512xf32> to vector<1x128xf32>
    %c0_14 = arith.constant 0 : index
    %c3 = arith.constant 3 : index
    %c0_15 = arith.constant 0 : index
    %c0_16 = arith.constant 0 : index
    %17 = vector.load %arg4[%c0_14, %c3, %c0_15, %c0_16] : memref<8x4x1x128xf32, #tpu.memory_space<vmem>>, vector<1x1x1x128xf32>
    %18 = vector.shape_cast %17 : vector<1x1x1x128xf32> to vector<1x128xf32>
    %19 = vector.shape_cast %16 : vector<1x128xf32> to vector<1x1x1x128xf32>
    tpu.vector_store %arg4[%c0_14, %c3, %c0_15, %c0_16], %19 {strides = array<i32>} : memref<8x4x1x128xf32, #tpu.memory_space<vmem>>, vector<1x1x1x128xf32>,
    %c1_17 = arith.constant 1 : index
    %c0_18 = arith.constant 0 : index
    %c0_19 = arith.constant 0 : index
    %20 = vector.load %arg3[%c1_17, %c0_18, %c0_19] : memref<8x1x512xf32, #tpu.memory_space<vmem>>, vector<1x1x512xf32>
    %21 = vector.shape_cast %20 : vector<1x1x512xf32> to vector<1x512xf32>
    %cst_20 = arith.constant dense<0.000000e+00> : vector<1x512xf32>
    %22 = tpu.matmul %21, %0, %cst_20 {dimension_numbers = #tpu.dot_dimension_numbers<[1], [0], [0], [1], [0, 0, 1, 1], [], []>} : vector<1x512xf32>, vector<512x512xf32>, vector<1x512xf32> -> vector<1x512xf32>
    %23 = vector.extract_strided_slice %22 {offsets = [0, 0], sizes = [1, 128], strides = [1, 1]} : vector<1x512xf32> to vector<1x128xf32>
    %c1_21 = arith.constant 1 : index
    %c0_22 = arith.constant 0 : index
    %c0_23 = arith.constant 0 : index
    %c0_24 = arith.constant 0 : index
    %24 = vector.load %arg4[%c1_21, %c0_22, %c0_23, %c0_24] : memref<8x4x1x128xf32, #tpu.memory_space<vmem>>, vector<1x1x1x128xf32>
    %25 = vector.shape_cast %24 : vector<1x1x1x128xf32> to vector<1x128xf32>
    %26 = vector.shape_cast %23 : vector<1x128xf32> to vector<1x1x1x128xf32>
    tpu.vector_store %arg4[%c1_21, %c0_22, %c0_23, %c0_24], %26 {strides = array<i32>} : memref<8x4x1x128xf32, #tpu.memory_space<vmem>>, vector<1x1x1x128xf32>,
    %27 = vector.extract_strided_slice %22 {offsets = [0, 128], sizes = [1, 128], strides = [1, 1]} : vector<1x512xf32> to vector<1x128xf32>
    %c1_25 = arith.constant 1 : index
    %c1_26 = arith.constant 1 : index
    %c0_27 = arith.constant 0 : index
    %c0_28 = arith.constant 0 : index
    %28 = vector.load %arg4[%c1_25, %c1_26, %c0_27, %c0_28] : memref<8x4x1x128xf32, #tpu.memory_space<vmem>>, vector<1x1x1x128xf32>
    %29 = vector.shape_cast %28 : vector<1x1x1x128xf32> to vector<1x128xf32>
    %30 = vector.shape_cast %27 : vector<1x128xf32> to vector<1x1x1x128xf32>
    tpu.vector_store %arg4[%c1_25, %c1_26, %c0_27, %c0_28], %30 {strides = array<i32>} : memref<8x4x1x128xf32, #tpu.memory_space<vmem>>, vector<1x1x1x128xf32>,
    %31 = vector.extract_strided_slice %22 {offsets = [0, 256], sizes = [1, 128], strides = [1, 1]} : vector<1x512xf32> to vector<1x128xf32>
    %c1_29 = arith.constant 1 : index
    %c2_30 = arith.constant 2 : index
    %c0_31 = arith.constant 0 : index
    %c0_32 = arith.constant 0 : index
    %32 = vector.load %arg4[%c1_29, %c2_30, %c0_31, %c0_32] : memref<8x4x1x128xf32, #tpu.memory_space<vmem>>, vector<1x1x1x128xf32>
    %33 = vector.shape_cast %32 : vector<1x1x1x128xf32> to vector<1x128xf32>
    %34 = vector.shape_cast %31 : vector<1x128xf32> to vector<1x1x1x128xf32>
    tpu.vector_store %arg4[%c1_29, %c2_30, %c0_31, %c0_32], %34 {strides = array<i32>} : memref<8x4x1x128xf32, #tpu.memory_space<vmem>>, vector<1x1x1x128xf32>,
    %35 = vector.extract_strided_slice %22 {offsets = [0, 384], sizes = [1, 128], strides = [1, 1]} : vector<1x512xf32> to vector<1x128xf32>
    %c1_33 = arith.constant 1 : index
    %c3_34 = arith.constant 3 : index
    %c0_35 = arith.constant 0 : index
    %c0_36 = arith.constant 0 : index
    %36 = vector.load %arg4[%c1_33, %c3_34, %c0_35, %c0_36] : memref<8x4x1x128xf32, #tpu.memory_space<vmem>>, vector<1x1x1x128xf32>
    %37 = vector.shape_cast %36 : vector<1x1x1x128xf32> to vector<1x128xf32>
    %38 = vector.shape_cast %35 : vector<1x128xf32> to vector<1x1x1x128xf32>
    tpu.vector_store %arg4[%c1_33, %c3_34, %c0_35, %c0_36], %38 {strides = array<i32>} : memref<8x4x1x128xf32, #tpu.memory_space<vmem>>, vector<1x1x1x128xf32>,
    %c2_37 = arith.constant 2 : index
    %c0_38 = arith.constant 0 : index
    %c0_39 = arith.constant 0 : index
    %39 = vector.load %arg3[%c2_37, %c0_38, %c0_39] : memref<8x1x512xf32, #tpu.memory_space<vmem>>, vector<1x1x512xf32>
    %40 = vector.shape_cast %39 : vector<1x1x512xf32> to vector<1x512xf32>
    %cst_40 = arith.constant dense<0.000000e+00> : vector<1x512xf32>
    %41 = tpu.matmul %40, %0, %cst_40 {dimension_numbers = #tpu.dot_dimension_numbers<[1], [0], [0], [1], [0, 0, 1, 1], [], []>} : vector<1x512xf32>, vector<512x512xf32>, vector<1x512xf32> -> vector<1x512xf32>
    %42 = vector.extract_strided_slice %41 {offsets = [0, 0], sizes = [1, 128], strides = [1, 1]} : vector<1x512xf32> to vector<1x128xf32>
    %c2_41 = arith.constant 2 : index
    %c0_42 = arith.constant 0 : index
    %c0_43 = arith.constant 0 : index
    %c0_44 = arith.constant 0 : index
    %43 = vector.load %arg4[%c2_41, %c0_42, %c0_43, %c0_44] : memref<8x4x1x128xf32, #tpu.memory_space<vmem>>, vector<1x1x1x128xf32>
    %44 = vector.shape_cast %43 : vector<1x1x1x128xf32> to vector<1x128xf32>
    %45 = vector.shape_cast %42 : vector<1x128xf32> to vector<1x1x1x128xf32>
    tpu.vector_store %arg4[%c2_41, %c0_42, %c0_43, %c0_44], %45 {strides = array<i32>} : memref<8x4x1x128xf32, #tpu.memory_space<vmem>>, vector<1x1x1x128xf32>,
    %46 = vector.extract_strided_slice %41 {offsets = [0, 128], sizes = [1, 128], strides = [1, 1]} : vector<1x512xf32> to vector<1x128xf32>
    %c2_45 = arith.constant 2 : index
    %c1_46 = arith.constant 1 : index
    %c0_47 = arith.constant 0 : index
    %c0_48 = arith.constant 0 : index
    %47 = vector.load %arg4[%c2_45, %c1_46, %c0_47, %c0_48] : memref<8x4x1x128xf32, #tpu.memory_space<vmem>>, vector<1x1x1x128xf32>
    %48 = vector.shape_cast %47 : vector<1x1x1x128xf32> to vector<1x128xf32>
    %49 = vector.shape_cast %46 : vector<1x128xf32> to vector<1x1x1x128xf32>
    tpu.vector_store %arg4[%c2_45, %c1_46, %c0_47, %c0_48], %49 {strides = array<i32>} : memref<8x4x1x128xf32, #tpu.memory_space<vmem>>, vector<1x1x1x128xf32>,
    %50 = vector.extract_strided_slice %41 {offsets = [0, 256], sizes = [1, 128], strides = [1, 1]} : vector<1x512xf32> to vector<1x128xf32>
    %c2_49 = arith.constant 2 : index
    %c2_50 = arith.constant 2 : index
    %c0_51 = arith.constant 0 : index
    %c0_52 = arith.constant 0 : index
    %51 = vector.load %arg4[%c2_49, %c2_50, %c0_51, %c0_52] : memref<8x4x1x128xf32, #tpu.memory_space<vmem>>, vector<1x1x1x128xf32>
    %52 = vector.shape_cast %51 : vector<1x1x1x128xf32> to vector<1x128xf32>
    %53 = vector.shape_cast %50 : vector<1x128xf32> to vector<1x1x1x128xf32>
    tpu.vector_store %arg4[%c2_49, %c2_50, %c0_51, %c0_52], %53 {strides = array<i32>} : memref<8x4x1x128xf32, #tpu.memory_space<vmem>>, vector<1x1x1x128xf32>,
    %54 = vector.extract_strided_slice %41 {offsets = [0, 384], sizes = [1, 128], strides = [1, 1]} : vector<1x512xf32> to vector<1x128xf32>
    %c2_53 = arith.constant 2 : index
    %c3_54 = arith.constant 3 : index
    %c0_55 = arith.constant 0 : index
    %c0_56 = arith.constant 0 : index
    %55 = vector.load %arg4[%c2_53, %c3_54, %c0_55, %c0_56] : memref<8x4x1x128xf32, #tpu.memory_space<vmem>>, vector<1x1x1x128xf32>
    %56 = vector.shape_cast %55 : vector<1x1x1x128xf32> to vector<1x128xf32>
    %57 = vector.shape_cast %54 : vector<1x128xf32> to vector<1x1x1x128xf32>
    tpu.vector_store %arg4[%c2_53, %c3_54, %c0_55, %c0_56], %57 {strides = array<i32>} : memref<8x4x1x128xf32, #tpu.memory_space<vmem>>, vector<1x1x1x128xf32>,
    %c3_57 = arith.constant 3 : index
    %c0_58 = arith.constant 0 : index
    %c0_59 = arith.constant 0 : index
    %58 = vector.load %arg3[%c3_57, %c0_58, %c0_59] : memref<8x1x512xf32, #tpu.memory_space<vmem>>, vector<1x1x512xf32>
    %59 = vector.shape_cast %58 : vector<1x1x512xf32> to vector<1x512xf32>
    %cst_60 = arith.constant dense<0.000000e+00> : vector<1x512xf32>
    %60 = tpu.matmul %59, %0, %cst_60 {dimension_numbers = #tpu.dot_dimension_numbers<[1], [0], [0], [1], [0, 0, 1, 1], [], []>} : vector<1x512xf32>, vector<512x512xf32>, vector<1x512xf32> -> vector<1x512xf32>
    %61 = vector.extract_strided_slice %60 {offsets = [0, 0], sizes = [1, 128], strides = [1, 1]} : vector<1x512xf32> to vector<1x128xf32>
    %c3_61 = arith.constant 3 : index
    %c0_62 = arith.constant 0 : index
    %c0_63 = arith.constant 0 : index
    %c0_64 = arith.constant 0 : index
    %62 = vector.load %arg4[%c3_61, %c0_62, %c0_63, %c0_64] : memref<8x4x1x128xf32, #tpu.memory_space<vmem>>, vector<1x1x1x128xf32>
    %63 = vector.shape_cast %62 : vector<1x1x1x128xf32> to vector<1x128xf32>
    %64 = vector.shape_cast %61 : vector<1x128xf32> to vector<1x1x1x128xf32>
    tpu.vector_store %arg4[%c3_61, %c0_62, %c0_63, %c0_64], %64 {strides = array<i32>} : memref<8x4x1x128xf32, #tpu.memory_space<vmem>>, vector<1x1x1x128xf32>,
    %65 = vector.extract_strided_slice %60 {offsets = [0, 128], sizes = [1, 128], strides = [1, 1]} : vector<1x512xf32> to vector<1x128xf32>
    %c3_65 = arith.constant 3 : index
    %c1_66 = arith.constant 1 : index
    %c0_67 = arith.constant 0 : index
    %c0_68 = arith.constant 0 : index
    %66 = vector.load %arg4[%c3_65, %c1_66, %c0_67, %c0_68] : memref<8x4x1x128xf32, #tpu.memory_space<vmem>>, vector<1x1x1x128xf32>
    %67 = vector.shape_cast %66 : vector<1x1x1x128xf32> to vector<1x128xf32>
    %68 = vector.shape_cast %65 : vector<1x128xf32> to vector<1x1x1x128xf32>
    tpu.vector_store %arg4[%c3_65, %c1_66, %c0_67, %c0_68], %68 {strides = array<i32>} : memref<8x4x1x128xf32, #tpu.memory_space<vmem>>, vector<1x1x1x128xf32>,
    %69 = vector.extract_strided_slice %60 {offsets = [0, 256], sizes = [1, 128], strides = [1, 1]} : vector<1x512xf32> to vector<1x128xf32>
    %c3_69 = arith.constant 3 : index
    %c2_70 = arith.constant 2 : index
    %c0_71 = arith.constant 0 : index
    %c0_72 = arith.constant 0 : index
    %70 = vector.load %arg4[%c3_69, %c2_70, %c0_71, %c0_72] : memref<8x4x1x128xf32, #tpu.memory_space<vmem>>, vector<1x1x1x128xf32>
    %71 = vector.shape_cast %70 : vector<1x1x1x128xf32> to vector<1x128xf32>
    %72 = vector.shape_cast %69 : vector<1x128xf32> to vector<1x1x1x128xf32>
    tpu.vector_store %arg4[%c3_69, %c2_70, %c0_71, %c0_72], %72 {strides = array<i32>} : memref<8x4x1x128xf32, #tpu.memory_space<vmem>>, vector<1x1x1x128xf32>,
    %73 = vector.extract_strided_slice %60 {offsets = [0, 384], sizes = [1, 128], strides = [1, 1]} : vector<1x512xf32> to vector<1x128xf32>
    %c3_73 = arith.constant 3 : index
    %c3_74 = arith.constant 3 : index
    %c0_75 = arith.constant 0 : index
    %c0_76 = arith.constant 0 : index
    %74 = vector.load %arg4[%c3_73, %c3_74, %c0_75, %c0_76] : memref<8x4x1x128xf32, #tpu.memory_space<vmem>>, vector<1x1x1x128xf32>
    %75 = vector.shape_cast %74 : vector<1x1x1x128xf32> to vector<1x128xf32>
    %76 = vector.shape_cast %73 : vector<1x128xf32> to vector<1x1x1x128xf32>
    tpu.vector_store %arg4[%c3_73, %c3_74, %c0_75, %c0_76], %76 {strides = array<i32>} : memref<8x4x1x128xf32, #tpu.memory_space<vmem>>, vector<1x1x1x128xf32>,
    %c4 = arith.constant 4 : index
    %c0_77 = arith.constant 0 : index
    %c0_78 = arith.constant 0 : index
    %77 = vector.load %arg3[%c4, %c0_77, %c0_78] : memref<8x1x512xf32, #tpu.memory_space<vmem>>, vector<1x1x512xf32>
    %78 = vector.shape_cast %77 : vector<1x1x512xf32> to vector<1x512xf32>
    %cst_79 = arith.constant dense<0.000000e+00> : vector<1x512xf32>
    %79 = tpu.matmul %78, %0, %cst_79 {dimension_numbers = #tpu.dot_dimension_numbers<[1], [0], [0], [1], [0, 0, 1, 1], [], []>} : vector<1x512xf32>, vector<512x512xf32>, vector<1x512xf32> -> vector<1x512xf32>
    %80 = vector.extract_strided_slice %79 {offsets = [0, 0], sizes = [1, 128], strides = [1, 1]} : vector<1x512xf32> to vector<1x128xf32>
    %c4_80 = arith.constant 4 : index
    %c0_81 = arith.constant 0 : index
    %c0_82 = arith.constant 0 : index
    %c0_83 = arith.constant 0 : index
    %81 = vector.load %arg4[%c4_80, %c0_81, %c0_82, %c0_83] : memref<8x4x1x128xf32, #tpu.memory_space<vmem>>, vector<1x1x1x128xf32>
    %82 = vector.shape_cast %81 : vector<1x1x1x128xf32> to vector<1x128xf32>
    %83 = vector.shape_cast %80 : vector<1x128xf32> to vector<1x1x1x128xf32>
    tpu.vector_store %arg4[%c4_80, %c0_81, %c0_82, %c0_83], %83 {strides = array<i32>} : memref<8x4x1x128xf32, #tpu.memory_space<vmem>>, vector<1x1x1x128xf32>,
    %84 = vector.extract_strided_slice %79 {offsets = [0, 128], sizes = [1, 128], strides = [1, 1]} : vector<1x512xf32> to vector<1x128xf32>
    %c4_84 = arith.constant 4 : index
    %c1_85 = arith.constant 1 : index
    %c0_86 = arith.constant 0 : index
    %c0_87 = arith.constant 0 : index
    %85 = vector.load %arg4[%c4_84, %c1_85, %c0_86, %c0_87] : memref<8x4x1x128xf32, #tpu.memory_space<vmem>>, vector<1x1x1x128xf32>
    %86 = vector.shape_cast %85 : vector<1x1x1x128xf32> to vector<1x128xf32>
    %87 = vector.shape_cast %84 : vector<1x128xf32> to vector<1x1x1x128xf32>
    tpu.vector_store %arg4[%c4_84, %c1_85, %c0_86, %c0_87], %87 {strides = array<i32>} : memref<8x4x1x128xf32, #tpu.memory_space<vmem>>, vector<1x1x1x128xf32>,
    %88 = vector.extract_strided_slice %79 {offsets = [0, 256], sizes = [1, 128], strides = [1, 1]} : vector<1x512xf32> to vector<1x128xf32>
    %c4_88 = arith.constant 4 : index
    %c2_89 = arith.constant 2 : index
    %c0_90 = arith.constant 0 : index
    %c0_91 = arith.constant 0 : index
    %89 = vector.load %arg4[%c4_88, %c2_89, %c0_90, %c0_91] : memref<8x4x1x128xf32, #tpu.memory_space<vmem>>, vector<1x1x1x128xf32>
    %90 = vector.shape_cast %89 : vector<1x1x1x128xf32> to vector<1x128xf32>
    %91 = vector.shape_cast %88 : vector<1x128xf32> to vector<1x1x1x128xf32>
    tpu.vector_store %arg4[%c4_88, %c2_89, %c0_90, %c0_91], %91 {strides = array<i32>} : memref<8x4x1x128xf32, #tpu.memory_space<vmem>>, vector<1x1x1x128xf32>,
    %92 = vector.extract_strided_slice %79 {offsets = [0, 384], sizes = [1, 128], strides = [1, 1]} : vector<1x512xf32> to vector<1x128xf32>
    %c4_92 = arith.constant 4 : index
    %c3_93 = arith.constant 3 : index
    %c0_94 = arith.constant 0 : index
    %c0_95 = arith.constant 0 : index
    %93 = vector.load %arg4[%c4_92, %c3_93, %c0_94, %c0_95] : memref<8x4x1x128xf32, #tpu.memory_space<vmem>>, vector<1x1x1x128xf32>
    %94 = vector.shape_cast %93 : vector<1x1x1x128xf32> to vector<1x128xf32>
    %95 = vector.shape_cast %92 : vector<1x128xf32> to vector<1x1x1x128xf32>
    tpu.vector_store %arg4[%c4_92, %c3_93, %c0_94, %c0_95], %95 {strides = array<i32>} : memref<8x4x1x128xf32, #tpu.memory_space<vmem>>, vector<1x1x1x128xf32>,
    %c5 = arith.constant 5 : index
    %c0_96 = arith.constant 0 : index
    %c0_97 = arith.constant 0 : index
    %96 = vector.load %arg3[%c5, %c0_96, %c0_97] : memref<8x1x512xf32, #tpu.memory_space<vmem>>, vector<1x1x512xf32>
    %97 = vector.shape_cast %96 : vector<1x1x512xf32> to vector<1x512xf32>
    %cst_98 = arith.constant dense<0.000000e+00> : vector<1x512xf32>
    %98 = tpu.matmul %97, %0, %cst_98 {dimension_numbers = #tpu.dot_dimension_numbers<[1], [0], [0], [1], [0, 0, 1, 1], [], []>} : vector<1x512xf32>, vector<512x512xf32>, vector<1x512xf32> -> vector<1x512xf32>
    %99 = vector.extract_strided_slice %98 {offsets = [0, 0], sizes = [1, 128], strides = [1, 1]} : vector<1x512xf32> to vector<1x128xf32>
    %c5_99 = arith.constant 5 : index
    %c0_100 = arith.constant 0 : index
    %c0_101 = arith.constant 0 : index
    %c0_102 = arith.constant 0 : index
    %100 = vector.load %arg4[%c5_99, %c0_100, %c0_101, %c0_102] : memref<8x4x1x128xf32, #tpu.memory_space<vmem>>, vector<1x1x1x128xf32>
    %101 = vector.shape_cast %100 : vector<1x1x1x128xf32> to vector<1x128xf32>
    %102 = vector.shape_cast %99 : vector<1x128xf32> to vector<1x1x1x128xf32>
    tpu.vector_store %arg4[%c5_99, %c0_100, %c0_101, %c0_102], %102 {strides = array<i32>} : memref<8x4x1x128xf32, #tpu.memory_space<vmem>>, vector<1x1x1x128xf32>,
    %103 = vector.extract_strided_slice %98 {offsets = [0, 128], sizes = [1, 128], strides = [1, 1]} : vector<1x512xf32> to vector<1x128xf32>
    %c5_103 = arith.constant 5 : index
    %c1_104 = arith.constant 1 : index
    %c0_105 = arith.constant 0 : index
    %c0_106 = arith.constant 0 : index
    %104 = vector.load %arg4[%c5_103, %c1_104, %c0_105, %c0_106] : memref<8x4x1x128xf32, #tpu.memory_space<vmem>>, vector<1x1x1x128xf32>
    %105 = vector.shape_cast %104 : vector<1x1x1x128xf32> to vector<1x128xf32>
    %106 = vector.shape_cast %103 : vector<1x128xf32> to vector<1x1x1x128xf32>
    tpu.vector_store %arg4[%c5_103, %c1_104, %c0_105, %c0_106], %106 {strides = array<i32>} : memref<8x4x1x128xf32, #tpu.memory_space<vmem>>, vector<1x1x1x128xf32>,
    %107 = vector.extract_strided_slice %98 {offsets = [0, 256], sizes = [1, 128], strides = [1, 1]} : vector<1x512xf32> to vector<1x128xf32>
    %c5_107 = arith.constant 5 : index
    %c2_108 = arith.constant 2 : index
    %c0_109 = arith.constant 0 : index
    %c0_110 = arith.constant 0 : index
    %108 = vector.load %arg4[%c5_107, %c2_108, %c0_109, %c0_110] : memref<8x4x1x128xf32, #tpu.memory_space<vmem>>, vector<1x1x1x128xf32>
    %109 = vector.shape_cast %108 : vector<1x1x1x128xf32> to vector<1x128xf32>
    %110 = vector.shape_cast %107 : vector<1x128xf32> to vector<1x1x1x128xf32>
    tpu.vector_store %arg4[%c5_107, %c2_108, %c0_109, %c0_110], %110 {strides = array<i32>} : memref<8x4x1x128xf32, #tpu.memory_space<vmem>>, vector<1x1x1x128xf32>,
    %111 = vector.extract_strided_slice %98 {offsets = [0, 384], sizes = [1, 128], strides = [1, 1]} : vector<1x512xf32> to vector<1x128xf32>
    %c5_111 = arith.constant 5 : index
    %c3_112 = arith.constant 3 : index
    %c0_113 = arith.constant 0 : index
    %c0_114 = arith.constant 0 : index
    %112 = vector.load %arg4[%c5_111, %c3_112, %c0_113, %c0_114] : memref<8x4x1x128xf32, #tpu.memory_space<vmem>>, vector<1x1x1x128xf32>
    %113 = vector.shape_cast %112 : vector<1x1x1x128xf32> to vector<1x128xf32>
    %114 = vector.shape_cast %111 : vector<1x128xf32> to vector<1x1x1x128xf32>
    tpu.vector_store %arg4[%c5_111, %c3_112, %c0_113, %c0_114], %114 {strides = array<i32>} : memref<8x4x1x128xf32, #tpu.memory_space<vmem>>, vector<1x1x1x128xf32>,
    %c6 = arith.constant 6 : index
    %c0_115 = arith.constant 0 : index
    %c0_116 = arith.constant 0 : index
    %115 = vector.load %arg3[%c6, %c0_115, %c0_116] : memref<8x1x512xf32, #tpu.memory_space<vmem>>, vector<1x1x512xf32>
    %116 = vector.shape_cast %115 : vector<1x1x512xf32> to vector<1x512xf32>
    %cst_117 = arith.constant dense<0.000000e+00> : vector<1x512xf32>
    %117 = tpu.matmul %116, %0, %cst_117 {dimension_numbers = #tpu.dot_dimension_numbers<[1], [0], [0], [1], [0, 0, 1, 1], [], []>} : vector<1x512xf32>, vector<512x512xf32>, vector<1x512xf32> -> vector<1x512xf32>
    %118 = vector.extract_strided_slice %117 {offsets = [0, 0], sizes = [1, 128], strides = [1, 1]} : vector<1x512xf32> to vector<1x128xf32>
    %c6_118 = arith.constant 6 : index
    %c0_119 = arith.constant 0 : index
    %c0_120 = arith.constant 0 : index
    %c0_121 = arith.constant 0 : index
    %119 = vector.load %arg4[%c6_118, %c0_119, %c0_120, %c0_121] : memref<8x4x1x128xf32, #tpu.memory_space<vmem>>, vector<1x1x1x128xf32>
    %120 = vector.shape_cast %119 : vector<1x1x1x128xf32> to vector<1x128xf32>
    %121 = vector.shape_cast %118 : vector<1x128xf32> to vector<1x1x1x128xf32>
    tpu.vector_store %arg4[%c6_118, %c0_119, %c0_120, %c0_121], %121 {strides = array<i32>} : memref<8x4x1x128xf32, #tpu.memory_space<vmem>>, vector<1x1x1x128xf32>,
    %122 = vector.extract_strided_slice %117 {offsets = [0, 128], sizes = [1, 128], strides = [1, 1]} : vector<1x512xf32> to vector<1x128xf32>
    %c6_122 = arith.constant 6 : index
    %c1_123 = arith.constant 1 : index
    %c0_124 = arith.constant 0 : index
    %c0_125 = arith.constant 0 : index
    %123 = vector.load %arg4[%c6_122, %c1_123, %c0_124, %c0_125] : memref<8x4x1x128xf32, #tpu.memory_space<vmem>>, vector<1x1x1x128xf32>
    %124 = vector.shape_cast %123 : vector<1x1x1x128xf32> to vector<1x128xf32>
    %125 = vector.shape_cast %122 : vector<1x128xf32> to vector<1x1x1x128xf32>
    tpu.vector_store %arg4[%c6_122, %c1_123, %c0_124, %c0_125], %125 {strides = array<i32>} : memref<8x4x1x128xf32, #tpu.memory_space<vmem>>, vector<1x1x1x128xf32>,
    %126 = vector.extract_strided_slice %117 {offsets = [0, 256], sizes = [1, 128], strides = [1, 1]} : vector<1x512xf32> to vector<1x128xf32>
    %c6_126 = arith.constant 6 : index
    %c2_127 = arith.constant 2 : index
    %c0_128 = arith.constant 0 : index
    %c0_129 = arith.constant 0 : index
    %127 = vector.load %arg4[%c6_126, %c2_127, %c0_128, %c0_129] : memref<8x4x1x128xf32, #tpu.memory_space<vmem>>, vector<1x1x1x128xf32>
    %128 = vector.shape_cast %127 : vector<1x1x1x128xf32> to vector<1x128xf32>
    %129 = vector.shape_cast %126 : vector<1x128xf32> to vector<1x1x1x128xf32>
    tpu.vector_store %arg4[%c6_126, %c2_127, %c0_128, %c0_129], %129 {strides = array<i32>} : memref<8x4x1x128xf32, #tpu.memory_space<vmem>>, vector<1x1x1x128xf32>,
    %130 = vector.extract_strided_slice %117 {offsets = [0, 384], sizes = [1, 128], strides = [1, 1]} : vector<1x512xf32> to vector<1x128xf32>
    %c6_130 = arith.constant 6 : index
    %c3_131 = arith.constant 3 : index
    %c0_132 = arith.constant 0 : index
    %c0_133 = arith.constant 0 : index
    %131 = vector.load %arg4[%c6_130, %c3_131, %c0_132, %c0_133] : memref<8x4x1x128xf32, #tpu.memory_space<vmem>>, vector<1x1x1x128xf32>
    %132 = vector.shape_cast %131 : vector<1x1x1x128xf32> to vector<1x128xf32>
    %133 = vector.shape_cast %130 : vector<1x128xf32> to vector<1x1x1x128xf32>
    tpu.vector_store %arg4[%c6_130, %c3_131, %c0_132, %c0_133], %133 {strides = array<i32>} : memref<8x4x1x128xf32, #tpu.memory_space<vmem>>, vector<1x1x1x128xf32>,
    %c7 = arith.constant 7 : index
    %c0_134 = arith.constant 0 : index
    %c0_135 = arith.constant 0 : index
    %134 = vector.load %arg3[%c7, %c0_134, %c0_135] : memref<8x1x512xf32, #tpu.memory_space<vmem>>, vector<1x1x512xf32>
    %135 = vector.shape_cast %134 : vector<1x1x512xf32> to vector<1x512xf32>
    %cst_136 = arith.constant dense<0.000000e+00> : vector<1x512xf32>
    %136 = tpu.matmul %135, %0, %cst_136 {dimension_numbers = #tpu.dot_dimension_numbers<[1], [0], [0], [1], [0, 0, 1, 1], [], []>} : vector<1x512xf32>, vector<512x512xf32>, vector<1x512xf32> -> vector<1x512xf32>
    %137 = vector.extract_strided_slice %136 {offsets = [0, 0], sizes = [1, 128], strides = [1, 1]} : vector<1x512xf32> to vector<1x128xf32>
    %c7_137 = arith.constant 7 : index
    %c0_138 = arith.constant 0 : index
    %c0_139 = arith.constant 0 : index
    %c0_140 = arith.constant 0 : index
    %138 = vector.load %arg4[%c7_137, %c0_138, %c0_139, %c0_140] : memref<8x4x1x128xf32, #tpu.memory_space<vmem>>, vector<1x1x1x128xf32>
    %139 = vector.shape_cast %138 : vector<1x1x1x128xf32> to vector<1x128xf32>
    %140 = vector.shape_cast %137 : vector<1x128xf32> to vector<1x1x1x128xf32>
    tpu.vector_store %arg4[%c7_137, %c0_138, %c0_139, %c0_140], %140 {strides = array<i32>} : memref<8x4x1x128xf32, #tpu.memory_space<vmem>>, vector<1x1x1x128xf32>,
    %141 = vector.extract_strided_slice %136 {offsets = [0, 128], sizes = [1, 128], strides = [1, 1]} : vector<1x512xf32> to vector<1x128xf32>
    %c7_141 = arith.constant 7 : index
    %c1_142 = arith.constant 1 : index
    %c0_143 = arith.constant 0 : index
    %c0_144 = arith.constant 0 : index
    %142 = vector.load %arg4[%c7_141, %c1_142, %c0_143, %c0_144] : memref<8x4x1x128xf32, #tpu.memory_space<vmem>>, vector<1x1x1x128xf32>
    %143 = vector.shape_cast %142 : vector<1x1x1x128xf32> to vector<1x128xf32>
    %144 = vector.shape_cast %141 : vector<1x128xf32> to vector<1x1x1x128xf32>
    tpu.vector_store %arg4[%c7_141, %c1_142, %c0_143, %c0_144], %144 {strides = array<i32>} : memref<8x4x1x128xf32, #tpu.memory_space<vmem>>, vector<1x1x1x128xf32>,
    %145 = vector.extract_strided_slice %136 {offsets = [0, 256], sizes = [1, 128], strides = [1, 1]} : vector<1x512xf32> to vector<1x128xf32>
    %c7_145 = arith.constant 7 : index
    %c2_146 = arith.constant 2 : index
    %c0_147 = arith.constant 0 : index
    %c0_148 = arith.constant 0 : index
    %146 = vector.load %arg4[%c7_145, %c2_146, %c0_147, %c0_148] : memref<8x4x1x128xf32, #tpu.memory_space<vmem>>, vector<1x1x1x128xf32>
    %147 = vector.shape_cast %146 : vector<1x1x1x128xf32> to vector<1x128xf32>
    %148 = vector.shape_cast %145 : vector<1x128xf32> to vector<1x1x1x128xf32>
    tpu.vector_store %arg4[%c7_145, %c2_146, %c0_147, %c0_148], %148 {strides = array<i32>} : memref<8x4x1x128xf32, #tpu.memory_space<vmem>>, vector<1x1x1x128xf32>,
    %149 = vector.extract_strided_slice %136 {offsets = [0, 384], sizes = [1, 128], strides = [1, 1]} : vector<1x512xf32> to vector<1x128xf32>
    %c7_149 = arith.constant 7 : index
    %c3_150 = arith.constant 3 : index
    %c0_151 = arith.constant 0 : index
    %c0_152 = arith.constant 0 : index
    %150 = vector.load %arg4[%c7_149, %c3_150, %c0_151, %c0_152] : memref<8x4x1x128xf32, #tpu.memory_space<vmem>>, vector<1x1x1x128xf32>
    %151 = vector.shape_cast %150 : vector<1x1x1x128xf32> to vector<1x128xf32>
    %152 = vector.shape_cast %149 : vector<1x128xf32> to vector<1x1x1x128xf32>
    tpu.vector_store %arg4[%c7_149, %c3_150, %c0_151, %c0_152], %152 {strides = array<i32>} : memref<8x4x1x128xf32, #tpu.memory_space<vmem>>, vector<1x1x1x128xf32>,
    return
  }
  func.func @transform_0(%arg0: i32, %arg1: i32) -> (i32, i32) {
    %c0_i32 = arith.constant 0 : i32
    %c0_i32_0 = arith.constant 0 : i32
    %c0_i32_1 = arith.constant 0 : i32
    return %c0_i32, %c0_i32_0 : i32, i32
  }
  func.func @transform_1(%arg0: i32, %arg1: i32) -> (i32, i32, i32) {
    %c0_i32 = arith.constant 0 : i32
    %c0_i32_0 = arith.constant 0 : i32
    return %arg1, %arg0, %c0_i32 : i32, i32, i32
  }
  func.func @transform_2(%arg0: i32, %arg1: i32) -> (i32, i32, i32, i32) {
    %c0_i32 = arith.constant 0 : i32
    %c0_i32_0 = arith.constant 0 : i32
    %c0_i32_1 = arith.constant 0 : i32
    return %arg1, %c0_i32, %arg0, %c0_i32_0 : i32, i32, i32, i32
  }
}

</mosaic_0001>

<llo_original>
// kernel: tpu_custom_call.1
$region0: #{tpu_custom_call.1}
  #allocation0 [shape = 'u32[]', space=smem, size = 0x4, offset = 0x4, fixed_abs, tag = 'smem constant byte address 0x4 - core index']
  #allocation1 [shape = 'u32[144,128]{1,0:T(1,128)}', space=vmem, size = 0x12000, scoped, tag = 'internal scratch']
  %s0 = inlined_call_operand.hbm [shape: f32[512,512], index: 0, kind: input, shape index: {}]
  %s1 = inlined_call_operand.hbm [shape: f32[8,1,512], index: 1, kind: input, shape index: {}]
  %s2 = inlined_call_operand.hbm [shape: f32[8,4,1,128], index: 2, kind: output, shape index: {}]
  %s3 = sld [smem:[#allocation0]]
  $region26: #{tpu_custom_call.1} parent=0
    _
  %s5 = ssub.s32 1, %s3
  %s6 = scalar_select 0, %s5, %s3
  $region1: #{tpu_custom_call.1} parent=0
    #allocation2 [shape = 'u8[1048576]{0}', space=vmem, size = 0x100000, scoped, tag = 'input window, operand 0, single buffered']
    #allocation3 [shape = 's32[1]{0}', space=sflag, size = 0x4, scoped, tag = 'scoped memory for tpu_custom_call.1']
    #allocation4 [shape = 's32[1]{0}', space=sflag, size = 0x4, scoped, tag = 'scoped memory for tpu_custom_call.1']
    #allocation5 [shape = 'u8[16384]{0}', space=vmem, size = 0x4000, scoped, tag = 'input window, operand 1, single buffered']
    #allocation6 [shape = 's32[1]{0}', space=sflag, size = 0x4, scoped, tag = 'scoped memory for tpu_custom_call.1']
    #allocation7 [shape = 'u8[16384]{0}', space=vmem, size = 0x4000, scoped, tag = 'output window, operand 0, single buffered']
    %7 = vsyncpa [#allocation3], 0
    %8 = vsyncpa [#allocation6], 0
    %9 = vsyncpa [#allocation4], 0
    // Predicated region
    $region2: #{tpu_custom_call.1} parent=1 // pred_check
      _
    $region3: #{tpu_custom_call.1} parent=1 // pred_check_branch
      %11 = sbr.rel (0) target = $region5
    $region4: #{tpu_custom_call.1} parent=1 // pred_region
      %s13 = ssub.s32 32768, 32768
      %14 = vsyncadd [#allocation3], %s13
      %s15 = sshll.u32 [#allocation2], 4
      %s16 = int_to_ptr.vmem [resolvable:$true] %s15
      %21 = dma.hbm_to_vmem [thread:$0]  %s0, 32768, %s16, [#allocation3], 512, 512, 32
    $region5: #{tpu_custom_call.1} parent=1 // pred_fallthru
      _
    // Predicated region
    $region6: #{tpu_custom_call.1} parent=1 // pred_check
      _
    $region7: #{tpu_custom_call.1} parent=1 // pred_check_branch
      %23 = sbr.rel (0) target = $region9
    $region8: #{tpu_custom_call.1} parent=1 // pred_region
      %s25 = ssub.s32 512, 512
      %26 = vsyncadd [#allocation6], %s25
      %s27 = sshll.u32 [#allocation5], 4
      %s28 = int_to_ptr.vmem [resolvable:$true] %s27
      %33 = dma.hbm_to_vmem [thread:$0]  %s1, 512, %s28, [#allocation6], 64, 64, 4
    $region9: #{tpu_custom_call.1} parent=1 // pred_fallthru
      _
    // Predicated region
    $region10: #{tpu_custom_call.1} parent=1 // pred_check
      _
    $region11: #{tpu_custom_call.1} parent=1 // pred_check_branch
      %35 = sbr.rel (0) target = $region13
    $region12: #{tpu_custom_call.1} parent=1 // pred_region
      %36 = dma.done [#allocation3], 32768
    $region13: #{tpu_custom_call.1} parent=1 // pred_fallthru
      _
    // Predicated region
    $region14: #{tpu_custom_call.1} parent=1 // pred_check
      _
    $region15: #{tpu_custom_call.1} parent=1 // pred_check_branch
      %38 = sbr.rel (0) target = $region17
    $region16: #{tpu_custom_call.1} parent=1 // pred_region
      %39 = dma.done [#allocation6], 512
    $region17: #{tpu_custom_call.1} parent=1 // pred_fallthru
      _
    %v40 = vld [vmem:[#allocation2] sm:$0xff]
    %v41 = vld [vmem:[#allocation2 + $0x8] sm:$0xff]
    %v42 = vld [vmem:[#allocation2 + $0x10] sm:$0xff]
    %v43 = vld [vmem:[#allocation2 + $0x18] sm:$0xff]
    %v44 = vld [vmem:[#allocation2 + $0x20] sm:$0xff]
    %v45 = vld [vmem:[#allocation2 + $0x28] sm:$0xff]
    %v46 = vld [vmem:[#allocation2 + $0x30] sm:$0xff]
    %v47 = vld [vmem:[#allocation2 + $0x38] sm:$0xff]
    %v48 = vld [vmem:[#allocation2 + $0x40] sm:$0xff]
    %v49 = vld [vmem:[#allocation2 + $0x48] sm:$0xff]
    %v50 = vld [vmem:[#allocation2 + $0x50] sm:$0xff]
    %v51 = vld [vmem:[#allocation2 + $0x58] sm:$0xff]
    %v52 = vld [vmem:[#allocation2 + $0x60] sm:$0xff]
    %v53 = vld [vmem:[#allocation2 + $0x68] sm:$0xff]
    %v54 = vld [vmem:[#allocation2 + $0x70] sm:$0xff]
    %v55 = vld [vmem:[#allocation2 + $0x78] sm:$0xff]
    %v56 = vld [vmem:[#allocation2 + $0x80] sm:$0xff]
    %v57 = vld [vmem:[#allocation2 + $0x88] sm:$0xff]
    %v58 = vld [vmem:[#allocation2 + $0x90] sm:$0xff]
    %v59 = vld [vmem:[#allocation2 + $0x98] sm:$0xff]
    %v60 = vld [vmem:[#allocation2 + $0xa0] sm:$0xff]
    %v61 = vld [vmem:[#allocation2 + $0xa8] sm:$0xff]
    %v62 = vld [vmem:[#allocation2 + $0xb0] sm:$0xff]
    %v63 = vld [vmem:[#allocation2 + $0xb8] sm:$0xff]
    %v64 = vld [vmem:[#allocation2 + $0xc0] sm:$0xff]
    %v65 = vld [vmem:[#allocation2 + $0xc8] sm:$0xff]
    %v66 = vld [vmem:[#allocation2 + $0xd0] sm:$0xff]
    %v67 = vld [vmem:[#allocation2 + $0xd8] sm:$0xff]
    %v68 = vld [vmem:[#allocation2 + $0xe0] sm:$0xff]
    %v69 = vld [vmem:[#allocation2 + $0xe8] sm:$0xff]
    %v70 = vld [vmem:[#allocation2 + $0xf0] sm:$0xff]
    %v71 = vld [vmem:[#allocation2 + $0xf8] sm:$0xff]
    %v72 = vld [vmem:[#allocation2 + $0x100] sm:$0xff]
    %v73 = vld [vmem:[#allocation2 + $0x108] sm:$0xff]
    %v74 = vld [vmem:[#allocation2 + $0x110] sm:$0xff]
    %v75 = vld [vmem:[#allocation2 + $0x118] sm:$0xff]
    %v76 = vld [vmem:[#allocation2 + $0x120] sm:$0xff]
    %v77 = vld [vmem:[#allocation2 + $0x128] sm:$0xff]
    %v78 = vld [vmem:[#allocation2 + $0x130] sm:$0xff]
    %v79 = vld [vmem:[#allocation2 + $0x138] sm:$0xff]
    %v80 = vld [vmem:[#allocation2 + $0x140] sm:$0xff]
    %v81 = vld [vmem:[#allocation2 + $0x148] sm:$0xff]
    %v82 = vld [vmem:[#allocation2 + $0x150] sm:$0xff]
    %v83 = vld [vmem:[#allocation2 + $0x158] sm:$0xff]
    %v84 = vld [vmem:[#allocation2 + $0x160] sm:$0xff]
    %v85 = vld [vmem:[#allocation2 + $0x168] sm:$0xff]
    %v86 = vld [vmem:[#allocation2 + $0x170] sm:$0xff]
    %v87 = vld [vmem:[#allocation2 + $0x178] sm:$0xff]
    %v88 = vld [vmem:[#allocation2 + $0x180] sm:$0xff]
    %v89 = vld [vmem:[#allocation2 + $0x188] sm:$0xff]
    %v90 = vld [vmem:[#allocation2 + $0x190] sm:$0xff]
    %v91 = vld [vmem:[#allocation2 + $0x198] sm:$0xff]
    %v92 = vld [vmem:[#allocation2 + $0x1a0] sm:$0xff]
    %v93 = vld [vmem:[#allocation2 + $0x1a8] sm:$0xff]
    %v94 = vld [vmem:[#allocation2 + $0x1b0] sm:$0xff]
    %v95 = vld [vmem:[#allocation2 + $0x1b8] sm:$0xff]
    %v96 = vld [vmem:[#allocation2 + $0x1c0] sm:$0xff]
    %v97 = vld [vmem:[#allocation2 + $0x1c8] sm:$0xff]
    %v98 = vld [vmem:[#allocation2 + $0x1d0] sm:$0xff]
    %v99 = vld [vmem:[#allocation2 + $0x1d8] sm:$0xff]
    %v100 = vld [vmem:[#allocation2 + $0x1e0] sm:$0xff]
    %v101 = vld [vmem:[#allocation2 + $0x1e8] sm:$0xff]
    %v102 = vld [vmem:[#allocation2 + $0x1f0] sm:$0xff]
    %v103 = vld [vmem:[#allocation2 + $0x1f8] sm:$0xff]
    %v104 = vld [vmem:[#allocation2 + $0x200] sm:$0xff]
    %v105 = vld [vmem:[#allocation2 + $0x208] sm:$0xff]
    %v106 = vld [vmem:[#allocation2 + $0x210] sm:$0xff]
    %v107 = vld [vmem:[#allocation2 + $0x218] sm:$0xff]
    %v108 = vld [vmem:[#allocation2 + $0x220] sm:$0xff]
    %v109 = vld [vmem:[#allocation2 + $0x228] sm:$0xff]
    %v110 = vld [vmem:[#allocation2 + $0x230] sm:$0xff]
    %v111 = vld [vmem:[#allocation2 + $0x238] sm:$0xff]
    %v112 = vld [vmem:[#allocation2 + $0x240] sm:$0xff]
    %v113 = vld [vmem:[#allocation2 + $0x248] sm:$0xff]
    %v114 = vld [vmem:[#allocation2 + $0x250] sm:$0xff]
    %v115 = vld [vmem:[#allocation2 + $0x258] sm:$0xff]
    %v116 = vld [vmem:[#allocation2 + $0x260] sm:$0xff]
    %v117 = vld [vmem:[#allocation2 + $0x268] sm:$0xff]
    %v118 = vld [vmem:[#allocation2 + $0x270] sm:$0xff]
    %v119 = vld [vmem:[#allocation2 + $0x278] sm:$0xff]
    %v120 = vld [vmem:[#allocation2 + $0x280] sm:$0xff]
    %v121 = vld [vmem:[#allocation2 + $0x288] sm:$0xff]
    %v122 = vld [vmem:[#allocation2 + $0x290] sm:$0xff]
    %v123 = vld [vmem:[#allocation2 + $0x298] sm:$0xff]
    %v124 = vld [vmem:[#allocation2 + $0x2a0] sm:$0xff]
    %v125 = vld [vmem:[#allocation2 + $0x2a8] sm:$0xff]
    %v126 = vld [vmem:[#allocation2 + $0x2b0] sm:$0xff]
    %v127 = vld [vmem:[#allocation2 + $0x2b8] sm:$0xff]
    %v128 = vld [vmem:[#allocation2 + $0x2c0] sm:$0xff]
    %v129 = vld [vmem:[#allocation2 + $0x2c8] sm:$0xff]
    %v130 = vld [vmem:[#allocation2 + $0x2d0] sm:$0xff]
    %v131 = vld [vmem:[#allocation2 + $0x2d8] sm:$0xff]
    %v132 = vld [vmem:[#allocation2 + $0x2e0] sm:$0xff]
    %v133 = vld [vmem:[#allocation2 + $0x2e8] sm:$0xff]
    %v134 = vld [vmem:[#allocation2 + $0x2f0] sm:$0xff]
    %v135 = vld [vmem:[#allocation2 + $0x2f8] sm:$0xff]
    %v136 = vld [vmem:[#allocation2 + $0x300] sm:$0xff]
    %v137 = vld [vmem:[#allocation2 + $0x308] sm:$0xff]
    %v138 = vld [vmem:[#allocation2 + $0x310] sm:$0xff]
    %v139 = vld [vmem:[#allocation2 + $0x318] sm:$0xff]
    %v140 = vld [vmem:[#allocation2 + $0x320] sm:$0xff]
    %v141 = vld [vmem:[#allocation2 + $0x328] sm:$0xff]
    %v142 = vld [vmem:[#allocation2 + $0x330] sm:$0xff]
    %v143 = vld [vmem:[#allocation2 + $0x338] sm:$0xff]
    %v144 = vld [vmem:[#allocation2 + $0x340] sm:$0xff]
    %v145 = vld [vmem:[#allocation2 + $0x348] sm:$0xff]
    %v146 = vld [vmem:[#allocation2 + $0x350] sm:$0xff]
    %v147 = vld [vmem:[#allocation2 + $0x358] sm:$0xff]
    %v148 = vld [vmem:[#allocation2 + $0x360] sm:$0xff]
    %v149 = vld [vmem:[#allocation2 + $0x368] sm:$0xff]
    %v150 = vld [vmem:[#allocation2 + $0x370] sm:$0xff]
    %v151 = vld [vmem:[#allocation2 + $0x378] sm:$0xff]
    %v152 = vld [vmem:[#allocation2 + $0x380] sm:$0xff]
    %v153 = vld [vmem:[#allocation2 + $0x388] sm:$0xff]
    %v154 = vld [vmem:[#allocation2 + $0x390] sm:$0xff]
    %v155 = vld [vmem:[#allocation2 + $0x398] sm:$0xff]
    %v156 = vld [vmem:[#allocation2 + $0x3a0] sm:$0xff]
    %v157 = vld [vmem:[#allocation2 + $0x3a8] sm:$0xff]
    %v158 = vld [vmem:[#allocation2 + $0x3b0] sm:$0xff]
    %v159 = vld [vmem:[#allocation2 + $0x3b8] sm:$0xff]
    %v160 = vld [vmem:[#allocation2 + $0x3c0] sm:$0xff]
    %v161 = vld [vmem:[#allocation2 + $0x3c8] sm:$0xff]
    %v162 = vld [vmem:[#allocation2 + $0x3d0] sm:$0xff]
    %v163 = vld [vmem:[#allocation2 + $0x3d8] sm:$0xff]
    %v164 = vld [vmem:[#allocation2 + $0x3e0] sm:$0xff]
    %v165 = vld [vmem:[#allocation2 + $0x3e8] sm:$0xff]
    %v166 = vld [vmem:[#allocation2 + $0x3f0] sm:$0xff]
    %v167 = vld [vmem:[#allocation2 + $0x3f8] sm:$0xff]
    %v168 = vld [vmem:[#allocation2 + $0x400] sm:$0xff]
    %v169 = vld [vmem:[#allocation2 + $0x408] sm:$0xff]
    %v170 = vld [vmem:[#allocation2 + $0x410] sm:$0xff]
    %v171 = vld [vmem:[#allocation2 + $0x418] sm:$0xff]
    %v172 = vld [vmem:[#allocation2 + $0x420] sm:$0xff]
    %v173 = vld [vmem:[#allocation2 + $0x428] sm:$0xff]
    %v174 = vld [vmem:[#allocation2 + $0x430] sm:$0xff]
    %v175 = vld [vmem:[#allocation2 + $0x438] sm:$0xff]
    %v176 = vld [vmem:[#allocation2 + $0x440] sm:$0xff]
    %v177 = vld [vmem:[#allocation2 + $0x448] sm:$0xff]
    %v178 = vld [vmem:[#allocation2 + $0x450] sm:$0xff]
    %v179 = vld [vmem:[#allocation2 + $0x458] sm:$0xff]
    %v180 = vld [vmem:[#allocation2 + $0x460] sm:$0xff]
    %v181 = vld [vmem:[#allocation2 + $0x468] sm:$0xff]
    %v182 = vld [vmem:[#allocation2 + $0x470] sm:$0xff]
    %v183 = vld [vmem:[#allocation2 + $0x478] sm:$0xff]
    %v184 = vld [vmem:[#allocation2 + $0x480] sm:$0xff]
    %v185 = vld [vmem:[#allocation2 + $0x488] sm:$0xff]
    %v186 = vld [vmem:[#allocation2 + $0x490] sm:$0xff]
    %v187 = vld [vmem:[#allocation2 + $0x498] sm:$0xff]
    %v188 = vld [vmem:[#allocation2 + $0x4a0] sm:$0xff]
    %v189 = vld [vmem:[#allocation2 + $0x4a8] sm:$0xff]
    %v190 = vld [vmem:[#allocation2 + $0x4b0] sm:$0xff]
    %v191 = vld [vmem:[#allocation2 + $0x4b8] sm:$0xff]
    %v192 = vld [vmem:[#allocation2 + $0x4c0] sm:$0xff]
    %v193 = vld [vmem:[#allocation2 + $0x4c8] sm:$0xff]
    %v194 = vld [vmem:[#allocation2 + $0x4d0] sm:$0xff]
    %v195 = vld [vmem:[#allocation2 + $0x4d8] sm:$0xff]
    %v196 = vld [vmem:[#allocation2 + $0x4e0] sm:$0xff]
    %v197 = vld [vmem:[#allocation2 + $0x4e8] sm:$0xff]
    %v198 = vld [vmem:[#allocation2 + $0x4f0] sm:$0xff]
    %v199 = vld [vmem:[#allocation2 + $0x4f8] sm:$0xff]
    %v200 = vld [vmem:[#allocation2 + $0x500] sm:$0xff]
    %v201 = vld [vmem:[#allocation2 + $0x508] sm:$0xff]
    %v202 = vld [vmem:[#allocation2 + $0x510] sm:$0xff]
    %v203 = vld [vmem:[#allocation2 + $0x518] sm:$0xff]
    %v204 = vld [vmem:[#allocation2 + $0x520] sm:$0xff]
    %v205 = vld [vmem:[#allocation2 + $0x528] sm:$0xff]
    %v206 = vld [vmem:[#allocation2 + $0x530] sm:$0xff]
    %v207 = vld [vmem:[#allocation2 + $0x538] sm:$0xff]
    %v208 = vld [vmem:[#allocation2 + $0x540] sm:$0xff]
    %v209 = vld [vmem:[#allocation2 + $0x548] sm:$0xff]
    %v210 = vld [vmem:[#allocation2 + $0x550] sm:$0xff]
    %v211 = vld [vmem:[#allocation2 + $0x558] sm:$0xff]
    %v212 = vld [vmem:[#allocation2 + $0x560] sm:$0xff]
    %v213 = vld [vmem:[#allocation2 + $0x568] sm:$0xff]
    %v214 = vld [vmem:[#allocation2 + $0x570] sm:$0xff]
    %v215 = vld [vmem:[#allocation2 + $0x578] sm:$0xff]
    %v216 = vld [vmem:[#allocation2 + $0x580] sm:$0xff]
    %v217 = vld [vmem:[#allocation2 + $0x588] sm:$0xff]
    %v218 = vld [vmem:[#allocation2 + $0x590] sm:$0xff]
    %v219 = vld [vmem:[#allocation2 + $0x598] sm:$0xff]
    %v220 = vld [vmem:[#allocation2 + $0x5a0] sm:$0xff]
    %v221 = vld [vmem:[#allocation2 + $0x5a8] sm:$0xff]
    %v222 = vld [vmem:[#allocation2 + $0x5b0] sm:$0xff]
    %v223 = vld [vmem:[#allocation2 + $0x5b8] sm:$0xff]
    %v224 = vld [vmem:[#allocation2 + $0x5c0] sm:$0xff]
    %v225 = vld [vmem:[#allocation2 + $0x5c8] sm:$0xff]
    %v226 = vld [vmem:[#allocation2 + $0x5d0] sm:$0xff]
    %v227 = vld [vmem:[#allocation2 + $0x5d8] sm:$0xff]
    %v228 = vld [vmem:[#allocation2 + $0x5e0] sm:$0xff]
    %v229 = vld [vmem:[#allocation2 + $0x5e8] sm:$0xff]
    %v230 = vld [vmem:[#allocation2 + $0x5f0] sm:$0xff]
    %v231 = vld [vmem:[#allocation2 + $0x5f8] sm:$0xff]
    %v232 = vld [vmem:[#allocation2 + $0x600] sm:$0xff]
    %v233 = vld [vmem:[#allocation2 + $0x608] sm:$0xff]
    %v234 = vld [vmem:[#allocation2 + $0x610] sm:$0xff]
    %v235 = vld [vmem:[#allocation2 + $0x618] sm:$0xff]
    %v236 = vld [vmem:[#allocation2 + $0x620] sm:$0xff]
    %v237 = vld [vmem:[#allocation2 + $0x628] sm:$0xff]
    %v238 = vld [vmem:[#allocation2 + $0x630] sm:$0xff]
    %v239 = vld [vmem:[#allocation2 + $0x638] sm:$0xff]
    %v240 = vld [vmem:[#allocation2 + $0x640] sm:$0xff]
    %v241 = vld [vmem:[#allocation2 + $0x648] sm:$0xff]
    %v242 = vld [vmem:[#allocation2 + $0x650] sm:$0xff]
    %v243 = vld [vmem:[#allocation2 + $0x658] sm:$0xff]
    %v244 = vld [vmem:[#allocation2 + $0x660] sm:$0xff]
    %v245 = vld [vmem:[#allocation2 + $0x668] sm:$0xff]
    %v246 = vld [vmem:[#allocation2 + $0x670] sm:$0xff]
    %v247 = vld [vmem:[#allocation2 + $0x678] sm:$0xff]
    %v248 = vld [vmem:[#allocation2 + $0x680] sm:$0xff]
    %v249 = vld [vmem:[#allocation2 + $0x688] sm:$0xff]
    %v250 = vld [vmem:[#allocation2 + $0x690] sm:$0xff]
    %v251 = vld [vmem:[#allocation2 + $0x698] sm:$0xff]
    %v252 = vld [vmem:[#allocation2 + $0x6a0] sm:$0xff]
    %v253 = vld [vmem:[#allocation2 + $0x6a8] sm:$0xff]
    %v254 = vld [vmem:[#allocation2 + $0x6b0] sm:$0xff]
    %v255 = vld [vmem:[#allocation2 + $0x6b8] sm:$0xff]
    %v256 = vld [vmem:[#allocation2 + $0x6c0] sm:$0xff]
    %v257 = vld [vmem:[#allocation2 + $0x6c8] sm:$0xff]
    %v258 = vld [vmem:[#allocation2 + $0x6d0] sm:$0xff]
    %v259 = vld [vmem:[#allocation2 + $0x6d8] sm:$0xff]
    %v260 = vld [vmem:[#allocation2 + $0x6e0] sm:$0xff]
    %v261 = vld [vmem:[#allocation2 + $0x6e8] sm:$0xff]
    %v262 = vld [vmem:[#allocation2 + $0x6f0] sm:$0xff]
    %v263 = vld [vmem:[#allocation2 + $0x6f8] sm:$0xff]
    %v264 = vld [vmem:[#allocation2 + $0x700] sm:$0xff]
    %v265 = vld [vmem:[#allocation2 + $0x708] sm:$0xff]
    %v266 = vld [vmem:[#allocation2 + $0x710] sm:$0xff]
    %v267 = vld [vmem:[#allocation2 + $0x718] sm:$0xff]
    %v268 = vld [vmem:[#allocation2 + $0x720] sm:$0xff]
    %v269 = vld [vmem:[#allocation2 + $0x728] sm:$0xff]
    %v270 = vld [vmem:[#allocation2 + $0x730] sm:$0xff]
    %v271 = vld [vmem:[#allocation2 + $0x738] sm:$0xff]
    %v272 = vld [vmem:[#allocation2 + $0x740] sm:$0xff]
    %v273 = vld [vmem:[#allocation2 + $0x748] sm:$0xff]
    %v274 = vld [vmem:[#allocation2 + $0x750] sm:$0xff]
    %v275 = vld [vmem:[#allocation2 + $0x758] sm:$0xff]
    %v276 = vld [vmem:[#allocation2 + $0x760] sm:$0xff]
    %v277 = vld [vmem:[#allocation2 + $0x768] sm:$0xff]
    %v278 = vld [vmem:[#allocation2 + $0x770] sm:$0xff]
    %v279 = vld [vmem:[#allocation2 + $0x778] sm:$0xff]
    %v280 = vld [vmem:[#allocation2 + $0x780] sm:$0xff]
    %v281 = vld [vmem:[#allocation2 + $0x788] sm:$0xff]
    %v282 = vld [vmem:[#allocation2 + $0x790] sm:$0xff]
    %v283 = vld [vmem:[#allocation2 + $0x798] sm:$0xff]
    %v284 = vld [vmem:[#allocation2 + $0x7a0] sm:$0xff]
    %v285 = vld [vmem:[#allocation2 + $0x7a8] sm:$0xff]
    %v286 = vld [vmem:[#allocation2 + $0x7b0] sm:$0xff]
    %v287 = vld [vmem:[#allocation2 + $0x7b8] sm:$0xff]
    %v288 = vld [vmem:[#allocation2 + $0x7c0] sm:$0xff]
    %v289 = vld [vmem:[#allocation2 + $0x7c8] sm:$0xff]
    %v290 = vld [vmem:[#allocation2 + $0x7d0] sm:$0xff]
    %v291 = vld [vmem:[#allocation2 + $0x7d8] sm:$0xff]
    %v292 = vld [vmem:[#allocation2 + $0x7e0] sm:$0xff]
    %v293 = vld [vmem:[#allocation2 + $0x7e8] sm:$0xff]
    %v294 = vld [vmem:[#allocation2 + $0x7f0] sm:$0xff]
    %v295 = vld [vmem:[#allocation2 + $0x7f8] sm:$0xff]
    %v296 = vld [vmem:[#allocation5] sm:$0xf]
    %v298 = vlaneseq
    %v299 = vshrl.u32 %v298, 7
    %v300 = vsub.s32 0, %v299
    %v301 = vrot.slane %v296, %v300
    %v302 = vlaneseq
    %v303 = vshrl.u32 %v302, 7
    %v304 = vsub.s32 1, %v303
    %v305 = vrot.slane %v296, %v304
    %v306 = vlaneseq
    %v307 = vshrl.u32 %v306, 7
    %v308 = vsub.s32 2, %v307
    %v309 = vrot.slane %v296, %v308
    %v310 = vlaneseq
    %v311 = vshrl.u32 %v310, 7
    %v312 = vsub.s32 3, %v311
    %v313 = vrot.slane %v296, %v312
    %318 = vmatprep.subr.mxu0 %v101
    %319 = vmatpush1.msra.mxu0 %v100
    %320 = vmatprep.subr.mxu0 %v97
    %321 = vmatpush1.msra.mxu0 %v96
    %322 = vmatprep.subr.mxu0 %v93
    %323 = vmatpush1.msra.mxu0 %v92
    %324 = vmatprep.subr.mxu0 %v89
    %325 = vmatpush1.msra.mxu0 %v88
    %326 = vmatprep.subr.mxu0 %v85
    %327 = vmatpush1.msra.mxu0 %v84
    %328 = vmatprep.subr.mxu0 %v81
    %329 = vmatpush1.msra.mxu0 %v80
    %330 = vmatprep.subr.mxu0 %v77
    %331 = vmatpush1.msra.mxu0 %v76
    %332 = vmatprep.subr.mxu0 %v73
    %333 = vmatpush1.msra.mxu0 %v72
    %334 = vmatprep.subr.mxu0 %v69
    %335 = vmatpush1.msra.mxu0 %v68
    %336 = vmatprep.subr.mxu0 %v65
    %337 = vmatpush1.msra.mxu0 %v64
    %338 = vmatprep.subr.mxu0 %v61
    %339 = vmatpush1.msra.mxu0 %v60
    %340 = vmatprep.subr.mxu0 %v57
    %341 = vmatpush1.msra.mxu0 %v56
    %342 = vmatprep.subr.mxu0 %v53
    %343 = vmatpush1.msra.mxu0 %v52
    %344 = vmatprep.subr.mxu0 %v49
    %345 = vmatpush1.msra.mxu0 %v48
    %346 = vmatprep.subr.mxu0 %v45
    %347 = vmatpush1.msra.mxu0 %v44
    %348 = vmatprep.subr.mxu0 %v41
    %349 = vmatpush1.msra.mxu0 %v40
    %350 = vmatprep.subr.mxu0 %v165
    %351 = vmatpush2.msra.mxu0 %v164
    %352 = vmatprep.subr.mxu0 %v161
    %353 = vmatpush2.msra.mxu0 %v160
    %354 = vmatprep.subr.mxu0 %v157
    %355 = vmatpush2.msra.mxu0 %v156
    %356 = vmatprep.subr.mxu0 %v153
    %357 = vmatpush2.msra.mxu0 %v152
    %358 = vmatprep.subr.mxu0 %v149
    %359 = vmatpush2.msra.mxu0 %v148
    %360 = vmatprep.subr.mxu0 %v145
    %361 = vmatpush2.msra.mxu0 %v144
    %362 = vmatprep.subr.mxu0 %v141
    %363 = vmatpush2.msra.mxu0 %v140
    %364 = vmatprep.subr.mxu0 %v137
    %365 = vmatpush2.msra.mxu0 %v136
    %366 = vmatprep.subr.mxu0 %v133
    %367 = vmatpush2.msra.mxu0 %v132
    %368 = vmatprep.subr.mxu0 %v129
    %369 = vmatpush2.msra.mxu0 %v128
    %370 = vmatprep.subr.mxu0 %v125
    %371 = vmatpush2.msra.mxu0 %v124
    %372 = vmatprep.subr.mxu0 %v121
    %373 = vmatpush2.msra.mxu0 %v120
    %374 = vmatprep.subr.mxu0 %v117
    %375 = vmatpush2.msra.mxu0 %v116
    %376 = vmatprep.subr.mxu0 %v113
    %377 = vmatpush2.msra.mxu0 %v112
    %378 = vmatprep.subr.mxu0 %v109
    %379 = vmatpush2.msra.mxu0 %v108
    %380 = vmatprep.subr.mxu0 %v105
    %381 = vmatpush2.msra.mxu0 %v104
    %382 = vmatprep.mubr.f32.mxu0 %v305
    %383 = vmatmul.mubr.f32.gmra.mxu0 %v301
    %v384 = vpop.f32.mrf.mxu0
    %v385 = vadd.f32 0.0, %v384
    %v386 = vpop.f32.mrf.mxu0
    %v387 = vadd.f32 0.0, %v386
    %388 = vdwg.mxu0
    %389 = vmatprep.subr.mxu0 %v229
    %390 = vmatpush1.msra.mxu0 %v228
    %391 = vmatprep.subr.mxu0 %v225
    %392 = vmatpush1.msra.mxu0 %v224
    %393 = vmatprep.subr.mxu0 %v221
    %394 = vmatpush1.msra.mxu0 %v220
    %395 = vmatprep.subr.mxu0 %v217
    %396 = vmatpush1.msra.mxu0 %v216
    %397 = vmatprep.subr.mxu0 %v213
    %398 = vmatpush1.msra.mxu0 %v212
    %399 = vmatprep.subr.mxu0 %v209
    %400 = vmatpush1.msra.mxu0 %v208
    %401 = vmatprep.subr.mxu0 %v205
    %402 = vmatpush1.msra.mxu0 %v204
    %403 = vmatprep.subr.mxu0 %v201
    %404 = vmatpush1.msra.mxu0 %v200
    %405 = vmatprep.subr.mxu0 %v197
    %406 = vmatpush1.msra.mxu0 %v196
    %407 = vmatprep.subr.mxu0 %v193
    %408 = vmatpush1.msra.mxu0 %v192
    %409 = vmatprep.subr.mxu0 %v189
    %410 = vmatpush1.msra.mxu0 %v188
    %411 = vmatprep.subr.mxu0 %v185
    %412 = vmatpush1.msra.mxu0 %v184
    %413 = vmatprep.subr.mxu0 %v181
    %414 = vmatpush1.msra.mxu0 %v180
    %415 = vmatprep.subr.mxu0 %v177
    %416 = vmatpush1.msra.mxu0 %v176
    %417 = vmatprep.subr.mxu0 %v173
    %418 = vmatpush1.msra.mxu0 %v172
    %419 = vmatprep.subr.mxu0 %v169
    %420 = vmatpush1.msra.mxu0 %v168
    %421 = vmatprep.subr.mxu0 %v293
    %422 = vmatpush2.msra.mxu0 %v292
    %423 = vmatprep.subr.mxu0 %v289
    %424 = vmatpush2.msra.mxu0 %v288
    %425 = vmatprep.subr.mxu0 %v285
    %426 = vmatpush2.msra.mxu0 %v284
    %427 = vmatprep.subr.mxu0 %v281
    %428 = vmatpush2.msra.mxu0 %v280
    %429 = vmatprep.subr.mxu0 %v277
    %430 = vmatpush2.msra.mxu0 %v276
    %431 = vmatprep.subr.mxu0 %v273
    %432 = vmatpush2.msra.mxu0 %v272
    %433 = vmatprep.subr.mxu0 %v269
    %434 = vmatpush2.msra.mxu0 %v268
    %435 = vmatprep.subr.mxu0 %v265
    %436 = vmatpush2.msra.mxu0 %v264
    %437 = vmatprep.subr.mxu0 %v261
    %438 = vmatpush2.msra.mxu0 %v260
    %439 = vmatprep.subr.mxu0 %v257
    %440 = vmatpush2.msra.mxu0 %v256
    %441 = vmatprep.subr.mxu0 %v253
    %442 = vmatpush2.msra.mxu0 %v252
    %443 = vmatprep.subr.mxu0 %v249
    %444 = vmatpush2.msra.mxu0 %v248
    %445 = vmatprep.subr.mxu0 %v245
    %446 = vmatpush2.msra.mxu0 %v244
    %447 = vmatprep.subr.mxu0 %v241
    %448 = vmatpush2.msra.mxu0 %v240
    %449 = vmatprep.subr.mxu0 %v237
    %450 = vmatpush2.msra.mxu0 %v236
    %451 = vmatprep.subr.mxu0 %v233
    %452 = vmatpush2.msra.mxu0 %v232
    %453 = vmatprep.mubr.f32.mxu0 %v313
    %454 = vmatmul.mubr.f32.gmra.mxu0 %v309
    %v455 = vpop.f32.mrf.mxu0
    %v456 = vadd.f32 %v385, %v455
    %v457 = vpop.f32.mrf.mxu0
    %v458 = vadd.f32 %v387, %v457
    %459 = vdwg.mxu0
    %460 = vmatprep.subr.mxu0 %v103
    %461 = vmatpush1.msra.mxu0 %v102
    %462 = vmatprep.subr.mxu0 %v99
    %463 = vmatpush1.msra.mxu0 %v98
    %464 = vmatprep.subr.mxu0 %v95
    %465 = vmatpush1.msra.mxu0 %v94
    %466 = vmatprep.subr.mxu0 %v91
    %467 = vmatpush1.msra.mxu0 %v90
    %468 = vmatprep.subr.mxu0 %v87
    %469 = vmatpush1.msra.mxu0 %v86
    %470 = vmatprep.subr.mxu0 %v83
    %471 = vmatpush1.msra.mxu0 %v82
    %472 = vmatprep.subr.mxu0 %v79
    %473 = vmatpush1.msra.mxu0 %v78
    %474 = vmatprep.subr.mxu0 %v75
    %475 = vmatpush1.msra.mxu0 %v74
    %476 = vmatprep.subr.mxu0 %v71
    %477 = vmatpush1.msra.mxu0 %v70
    %478 = vmatprep.subr.mxu0 %v67
    %479 = vmatpush1.msra.mxu0 %v66
    %480 = vmatprep.subr.mxu0 %v63
    %481 = vmatpush1.msra.mxu0 %v62
    %482 = vmatprep.subr.mxu0 %v59
    %483 = vmatpush1.msra.mxu0 %v58
    %484 = vmatprep.subr.mxu0 %v55
    %485 = vmatpush1.msra.mxu0 %v54
    %486 = vmatprep.subr.mxu0 %v51
    %487 = vmatpush1.msra.mxu0 %v50
    %488 = vmatprep.subr.mxu0 %v47
    %489 = vmatpush1.msra.mxu0 %v46
    %490 = vmatprep.subr.mxu0 %v43
    %491 = vmatpush1.msra.mxu0 %v42
    %492 = vmatprep.subr.mxu0 %v167
    %493 = vmatpush2.msra.mxu0 %v166
    %494 = vmatprep.subr.mxu0 %v163
    %495 = vmatpush2.msra.mxu0 %v162
    %496 = vmatprep.subr.mxu0 %v159
    %497 = vmatpush2.msra.mxu0 %v158
    %498 = vmatprep.subr.mxu0 %v155
    %499 = vmatpush2.msra.mxu0 %v154
    %500 = vmatprep.subr.mxu0 %v151
    %501 = vmatpush2.msra.mxu0 %v150
    %502 = vmatprep.subr.mxu0 %v147
    %503 = vmatpush2.msra.mxu0 %v146
    %504 = vmatprep.subr.mxu0 %v143
    %505 = vmatpush2.msra.mxu0 %v142
    %506 = vmatprep.subr.mxu0 %v139
    %507 = vmatpush2.msra.mxu0 %v138
    %508 = vmatprep.subr.mxu0 %v135
    %509 = vmatpush2.msra.mxu0 %v134
    %510 = vmatprep.subr.mxu0 %v131
    %511 = vmatpush2.msra.mxu0 %v130
    %512 = vmatprep.subr.mxu0 %v127
    %513 = vmatpush2.msra.mxu0 %v126
    %514 = vmatprep.subr.mxu0 %v123
    %515 = vmatpush2.msra.mxu0 %v122
    %516 = vmatprep.subr.mxu0 %v119
    %517 = vmatpush2.msra.mxu0 %v118
    %518 = vmatprep.subr.mxu0 %v115
    %519 = vmatpush2.msra.mxu0 %v114
    %520 = vmatprep.subr.mxu0 %v111
    %521 = vmatpush2.msra.mxu0 %v110
    %522 = vmatprep.subr.mxu0 %v107
    %523 = vmatpush2.msra.mxu0 %v106
    %524 = vmatprep.mubr.f32.mxu0 %v305
    %525 = vmatmul.mubr.f32.gmra.mxu0 %v301
    %v526 = vpop.f32.mrf.mxu0
    %v527 = vadd.f32 0.0, %v526
    %v528 = vpop.f32.mrf.mxu0
    %v529 = vadd.f32 0.0, %v528
    %530 = vdwg.mxu0
    %531 = vmatprep.subr.mxu0 %v231
    %532 = vmatpush1.msra.mxu0 %v230
    %533 = vmatprep.subr.mxu0 %v227
    %534 = vmatpush1.msra.mxu0 %v226
    %535 = vmatprep.subr.mxu0 %v223
    %536 = vmatpush1.msra.mxu0 %v222
    %537 = vmatprep.subr.mxu0 %v219
    %538 = vmatpush1.msra.mxu0 %v218
    %539 = vmatprep.subr.mxu0 %v215
    %540 = vmatpush1.msra.mxu0 %v214
    %541 = vmatprep.subr.mxu0 %v211
    %542 = vmatpush1.msra.mxu0 %v210
    %543 = vmatprep.subr.mxu0 %v207
    %544 = vmatpush1.msra.mxu0 %v206
    %545 = vmatprep.subr.mxu0 %v203
    %546 = vmatpush1.msra.mxu0 %v202
    %547 = vmatprep.subr.mxu0 %v199
    %548 = vmatpush1.msra.mxu0 %v198
    %549 = vmatprep.subr.mxu0 %v195
    %550 = vmatpush1.msra.mxu0 %v194
    %551 = vmatprep.subr.mxu0 %v191
    %552 = vmatpush1.msra.mxu0 %v190
    %553 = vmatprep.subr.mxu0 %v187
    %554 = vmatpush1.msra.mxu0 %v186
    %555 = vmatprep.subr.mxu0 %v183
    %556 = vmatpush1.msra.mxu0 %v182
    %557 = vmatprep.subr.mxu0 %v179
    %558 = vmatpush1.msra.mxu0 %v178
    %559 = vmatprep.subr.mxu0 %v175
    %560 = vmatpush1.msra.mxu0 %v174
    %561 = vmatprep.subr.mxu0 %v171
    %562 = vmatpush1.msra.mxu0 %v170
    %563 = vmatprep.subr.mxu0 %v295
    %564 = vmatpush2.msra.mxu0 %v294
    %565 = vmatprep.subr.mxu0 %v291
    %566 = vmatpush2.msra.mxu0 %v290
    %567 = vmatprep.subr.mxu0 %v287
    %568 = vmatpush2.msra.mxu0 %v286
    %569 = vmatprep.subr.mxu0 %v283
    %570 = vmatpush2.msra.mxu0 %v282
    %571 = vmatprep.subr.mxu0 %v279
    %572 = vmatpush2.msra.mxu0 %v278
    %573 = vmatprep.subr.mxu0 %v275
    %574 = vmatpush2.msra.mxu0 %v274
    %575 = vmatprep.subr.mxu0 %v271
    %576 = vmatpush2.msra.mxu0 %v270
    %577 = vmatprep.subr.mxu0 %v267
    %578 = vmatpush2.msra.mxu0 %v266
    %579 = vmatprep.subr.mxu0 %v263
    %580 = vmatpush2.msra.mxu0 %v262
    %581 = vmatprep.subr.mxu0 %v259
    %582 = vmatpush2.msra.mxu0 %v258
    %583 = vmatprep.subr.mxu0 %v255
    %584 = vmatpush2.msra.mxu0 %v254
    %585 = vmatprep.subr.mxu0 %v251
    %586 = vmatpush2.msra.mxu0 %v250
    %587 = vmatprep.subr.mxu0 %v247
    %588 = vmatpush2.msra.mxu0 %v246
    %589 = vmatprep.subr.mxu0 %v243
    %590 = vmatpush2.msra.mxu0 %v242
    %591 = vmatprep.subr.mxu0 %v239
    %592 = vmatpush2.msra.mxu0 %v238
    %593 = vmatprep.subr.mxu0 %v235
    %594 = vmatpush2.msra.mxu0 %v234
    %595 = vmatprep.mubr.f32.mxu0 %v313
    %596 = vmatmul.mubr.f32.gmra.mxu0 %v309
    %v597 = vpop.f32.mrf.mxu0
    %v598 = vadd.f32 %v527, %v597
    %v599 = vpop.f32.mrf.mxu0
    %v600 = vadd.f32 %v529, %v599
    %601 = vdwg.mxu0
    %602 = vst [vmem:[#allocation7] sm:$0x1] %v456
    %s603 = scalar_lea.vmem [#allocation7], 1
    %604 = vst [vmem:[%s603] sm:$0x1] %v458
    %s605 = scalar_lea.vmem [#allocation7], 2
    %606 = vst [vmem:[%s605] sm:$0x1] %v598
    %s607 = scalar_lea.vmem [#allocation7], 3
    %608 = vst [vmem:[%s607] sm:$0x1] %v600
    %s609 = scalar_lea.vmem [#allocation5], 4
    %v610 = vld [vmem:[%s609] sm:$0xf]
    %v612 = vlaneseq
    %v613 = vshrl.u32 %v612, 7
    %v614 = vsub.s32 0, %v613
    %v615 = vrot.slane %v610, %v614
    %v616 = vlaneseq
    %v617 = vshrl.u32 %v616, 7
    %v618 = vsub.s32 1, %v617
    %v619 = vrot.slane %v610, %v618
    %v620 = vlaneseq
    %v621 = vshrl.u32 %v620, 7
    %v622 = vsub.s32 2, %v621
    %v623 = vrot.slane %v610, %v622
    %v624 = vlaneseq
    %v625 = vshrl.u32 %v624, 7
    %v626 = vsub.s32 3, %v625
    %v627 = vrot.slane %v610, %v626
    %632 = vmatprep.subr.mxu0 %v101
    %633 = vmatpush1.msra.mxu0 %v100
    %634 = vmatprep.subr.mxu0 %v97
    %635 = vmatpush1.msra.mxu0 %v96
    %636 = vmatprep.subr.mxu0 %v93
    %637 = vmatpush1.msra.mxu0 %v92
    %638 = vmatprep.subr.mxu0 %v89
    %639 = vmatpush1.msra.mxu0 %v88
    %640 = vmatprep.subr.mxu0 %v85
    %641 = vmatpush1.msra.mxu0 %v84
    %642 = vmatprep.subr.mxu0 %v81
    %643 = vmatpush1.msra.mxu0 %v80
    %644 = vmatprep.subr.mxu0 %v77
    %645 = vmatpush1.msra.mxu0 %v76
    %646 = vmatprep.subr.mxu0 %v73
    %647 = vmatpush1.msra.mxu0 %v72
    %648 = vmatprep.subr.mxu0 %v69
    %649 = vmatpush1.msra.mxu0 %v68
    %650 = vmatprep.subr.mxu0 %v65
    %651 = vmatpush1.msra.mxu0 %v64
    %652 = vmatprep.subr.mxu0 %v61
    %653 = vmatpush1.msra.mxu0 %v60
    %654 = vmatprep.subr.mxu0 %v57
    %655 = vmatpush1.msra.mxu0 %v56
    %656 = vmatprep.subr.mxu0 %v53
    %657 = vmatpush1.msra.mxu0 %v52
    %658 = vmatprep.subr.mxu0 %v49
    %659 = vmatpush1.msra.mxu0 %v48
    %660 = vmatprep.subr.mxu0 %v45
    %661 = vmatpush1.msra.mxu0 %v44
    %662 = vmatprep.subr.mxu0 %v41
    %663 = vmatpush1.msra.mxu0 %v40
    %664 = vmatprep.subr.mxu0 %v165
    %665 = vmatpush2.msra.mxu0 %v164
    %666 = vmatprep.subr.mxu0 %v161
    %667 = vmatpush2.msra.mxu0 %v160
    %668 = vmatprep.subr.mxu0 %v157
    %669 = vmatpush2.msra.mxu0 %v156
    %670 = vmatprep.subr.mxu0 %v153
    %671 = vmatpush2.msra.mxu0 %v152
    %672 = vmatprep.subr.mxu0 %v149
    %673 = vmatpush2.msra.mxu0 %v148
    %674 = vmatprep.subr.mxu0 %v145
    %675 = vmatpush2.msra.mxu0 %v144
    %676 = vmatprep.subr.mxu0 %v141
    %677 = vmatpush2.msra.mxu0 %v140
    %678 = vmatprep.subr.mxu0 %v137
    %679 = vmatpush2.msra.mxu0 %v136
    %680 = vmatprep.subr.mxu0 %v133
    %681 = vmatpush2.msra.mxu0 %v132
    %682 = vmatprep.subr.mxu0 %v129
    %683 = vmatpush2.msra.mxu0 %v128
    %684 = vmatprep.subr.mxu0 %v125
    %685 = vmatpush2.msra.mxu0 %v124
    %686 = vmatprep.subr.mxu0 %v121
    %687 = vmatpush2.msra.mxu0 %v120
    %688 = vmatprep.subr.mxu0 %v117
    %689 = vmatpush2.msra.mxu0 %v116
    %690 = vmatprep.subr.mxu0 %v113
    %691 = vmatpush2.msra.mxu0 %v112
    %692 = vmatprep.subr.mxu0 %v109
    %693 = vmatpush2.msra.mxu0 %v108
    %694 = vmatprep.subr.mxu0 %v105
    %695 = vmatpush2.msra.mxu0 %v104
    %696 = vmatprep.mubr.f32.mxu0 %v619
    %697 = vmatmul.mubr.f32.gmra.mxu0 %v615
    %v698 = vpop.f32.mrf.mxu0
    %v699 = vadd.f32 0.0, %v698
    %v700 = vpop.f32.mrf.mxu0
    %v701 = vadd.f32 0.0, %v700
    %702 = vdwg.mxu0
    %703 = vmatprep.subr.mxu0 %v229
    %704 = vmatpush1.msra.mxu0 %v228
    %705 = vmatprep.subr.mxu0 %v225
    %706 = vmatpush1.msra.mxu0 %v224
    %707 = vmatprep.subr.mxu0 %v221
    %708 = vmatpush1.msra.mxu0 %v220
    %709 = vmatprep.subr.mxu0 %v217
    %710 = vmatpush1.msra.mxu0 %v216
    %711 = vmatprep.subr.mxu0 %v213
    %712 = vmatpush1.msra.mxu0 %v212
    %713 = vmatprep.subr.mxu0 %v209
    %714 = vmatpush1.msra.mxu0 %v208
    %715 = vmatprep.subr.mxu0 %v205
    %716 = vmatpush1.msra.mxu0 %v204
    %717 = vmatprep.subr.mxu0 %v201
    %718 = vmatpush1.msra.mxu0 %v200
    %719 = vmatprep.subr.mxu0 %v197
    %720 = vmatpush1.msra.mxu0 %v196
    %721 = vmatprep.subr.mxu0 %v193
    %722 = vmatpush1.msra.mxu0 %v192
    %723 = vmatprep.subr.mxu0 %v189
    %724 = vmatpush1.msra.mxu0 %v188
    %725 = vmatprep.subr.mxu0 %v185
    %726 = vmatpush1.msra.mxu0 %v184
    %727 = vmatprep.subr.mxu0 %v181
    %728 = vmatpush1.msra.mxu0 %v180
    %729 = vmatprep.subr.mxu0 %v177
    %730 = vmatpush1.msra.mxu0 %v176
    %731 = vmatprep.subr.mxu0 %v173
    %732 = vmatpush1.msra.mxu0 %v172
    %733 = vmatprep.subr.mxu0 %v169
    %734 = vmatpush1.msra.mxu0 %v168
    %735 = vmatprep.subr.mxu0 %v293
    %736 = vmatpush2.msra.mxu0 %v292
    %737 = vmatprep.subr.mxu0 %v289
    %738 = vmatpush2.msra.mxu0 %v288
    %739 = vmatprep.subr.mxu0 %v285
    %740 = vmatpush2.msra.mxu0 %v284
    %741 = vmatprep.subr.mxu0 %v281
    %742 = vmatpush2.msra.mxu0 %v280
    %743 = vmatprep.subr.mxu0 %v277
    %744 = vmatpush2.msra.mxu0 %v276
    %745 = vmatprep.subr.mxu0 %v273
    %746 = vmatpush2.msra.mxu0 %v272
    %747 = vmatprep.subr.mxu0 %v269
    %748 = vmatpush2.msra.mxu0 %v268
    %749 = vmatprep.subr.mxu0 %v265
    %750 = vmatpush2.msra.mxu0 %v264
    %751 = vmatprep.subr.mxu0 %v261
    %752 = vmatpush2.msra.mxu0 %v260
    %753 = vmatprep.subr.mxu0 %v257
    %754 = vmatpush2.msra.mxu0 %v256
    %755 = vmatprep.subr.mxu0 %v253
    %756 = vmatpush2.msra.mxu0 %v252
    %757 = vmatprep.subr.mxu0 %v249
    %758 = vmatpush2.msra.mxu0 %v248
    %759 = vmatprep.subr.mxu0 %v245
    %760 = vmatpush2.msra.mxu0 %v244
    %761 = vmatprep.subr.mxu0 %v241
    %762 = vmatpush2.msra.mxu0 %v240
    %763 = vmatprep.subr.mxu0 %v237
    %764 = vmatpush2.msra.mxu0 %v236
    %765 = vmatprep.subr.mxu0 %v233
    %766 = vmatpush2.msra.mxu0 %v232
    %767 = vmatprep.mubr.f32.mxu0 %v627
    %768 = vmatmul.mubr.f32.gmra.mxu0 %v623
    %v769 = vpop.f32.mrf.mxu0
    %v770 = vadd.f32 %v699, %v769
    %v771 = vpop.f32.mrf.mxu0
    %v772 = vadd.f32 %v701, %v771
    %773 = vdwg.mxu0
    %774 = vmatprep.subr.mxu0 %v103
    %775 = vmatpush1.msra.mxu0 %v102
    %776 = vmatprep.subr.mxu0 %v99
    %777 = vmatpush1.msra.mxu0 %v98
    %778 = vmatprep.subr.mxu0 %v95
    %779 = vmatpush1.msra.mxu0 %v94
    %780 = vmatprep.subr.mxu0 %v91
    %781 = vmatpush1.msra.mxu0 %v90
    %782 = vmatprep.subr.mxu0 %v87
    %783 = vmatpush1.msra.mxu0 %v86
    %784 = vmatprep.subr.mxu0 %v83
    %785 = vmatpush1.msra.mxu0 %v82
    %786 = vmatprep.subr.mxu0 %v79
    %787 = vmatpush1.msra.mxu0 %v78
    %788 = vmatprep.subr.mxu0 %v75
    %789 = vmatpush1.msra.mxu0 %v74
    %790 = vmatprep.subr.mxu0 %v71
    %791 = vmatpush1.msra.mxu0 %v70
    %792 = vmatprep.subr.mxu0 %v67
    %793 = vmatpush1.msra.mxu0 %v66
    %794 = vmatprep.subr.mxu0 %v63
    %795 = vmatpush1.msra.mxu0 %v62
    %796 = vmatprep.subr.mxu0 %v59
    %797 = vmatpush1.msra.mxu0 %v58
    %798 = vmatprep.subr.mxu0 %v55
    %799 = vmatpush1.msra.mxu0 %v54
    %800 = vmatprep.subr.mxu0 %v51
    %801 = vmatpush1.msra.mxu0 %v50
    %802 = vmatprep.subr.mxu0 %v47
    %803 = vmatpush1.msra.mxu0 %v46
    %804 = vmatprep.subr.mxu0 %v43
    %805 = vmatpush1.msra.mxu0 %v42
    %806 = vmatprep.subr.mxu0 %v167
    %807 = vmatpush2.msra.mxu0 %v166
    %808 = vmatprep.subr.mxu0 %v163
    %809 = vmatpush2.msra.mxu0 %v162
    %810 = vmatprep.subr.mxu0 %v159
    %811 = vmatpush2.msra.mxu0 %v158
    %812 = vmatprep.subr.mxu0 %v155
    %813 = vmatpush2.msra.mxu0 %v154
    %814 = vmatprep.subr.mxu0 %v151
    %815 = vmatpush2.msra.mxu0 %v150
    %816 = vmatprep.subr.mxu0 %v147
    %817 = vmatpush2.msra.mxu0 %v146
    %818 = vmatprep.subr.mxu0 %v143
    %819 = vmatpush2.msra.mxu0 %v142
    %820 = vmatprep.subr.mxu0 %v139
    %821 = vmatpush2.msra.mxu0 %v138
    %822 = vmatprep.subr.mxu0 %v135
    %823 = vmatpush2.msra.mxu0 %v134
    %824 = vmatprep.subr.mxu0 %v131
    %825 = vmatpush2.msra.mxu0 %v130
    %826 = vmatprep.subr.mxu0 %v127
    %827 = vmatpush2.msra.mxu0 %v126
    %828 = vmatprep.subr.mxu0 %v123
    %829 = vmatpush2.msra.mxu0 %v122
    %830 = vmatprep.subr.mxu0 %v119
    %831 = vmatpush2.msra.mxu0 %v118
    %832 = vmatprep.subr.mxu0 %v115
    %833 = vmatpush2.msra.mxu0 %v114
    %834 = vmatprep.subr.mxu0 %v111
    %835 = vmatpush2.msra.mxu0 %v110
    %836 = vmatprep.subr.mxu0 %v107
    %837 = vmatpush2.msra.mxu0 %v106
    %838 = vmatprep.mubr.f32.mxu0 %v619
    %839 = vmatmul.mubr.f32.gmra.mxu0 %v615
    %v840 = vpop.f32.mrf.mxu0
    %v841 = vadd.f32 0.0, %v840
    %v842 = vpop.f32.mrf.mxu0
    %v843 = vadd.f32 0.0, %v842
    %844 = vdwg.mxu0
    %845 = vmatprep.subr.mxu0 %v231
    %846 = vmatpush1.msra.mxu0 %v230
    %847 = vmatprep.subr.mxu0 %v227
    %848 = vmatpush1.msra.mxu0 %v226
    %849 = vmatprep.subr.mxu0 %v223
    %850 = vmatpush1.msra.mxu0 %v222
    %851 = vmatprep.subr.mxu0 %v219
    %852 = vmatpush1.msra.mxu0 %v218
    %853 = vmatprep.subr.mxu0 %v215
    %854 = vmatpush1.msra.mxu0 %v214
    %855 = vmatprep.subr.mxu0 %v211
    %856 = vmatpush1.msra.mxu0 %v210
    %857 = vmatprep.subr.mxu0 %v207
    %858 = vmatpush1.msra.mxu0 %v206
    %859 = vmatprep.subr.mxu0 %v203
    %860 = vmatpush1.msra.mxu0 %v202
    %861 = vmatprep.subr.mxu0 %v199
    %862 = vmatpush1.msra.mxu0 %v198
    %863 = vmatprep.subr.mxu0 %v195
    %864 = vmatpush1.msra.mxu0 %v194
    %865 = vmatprep.subr.mxu0 %v191
    %866 = vmatpush1.msra.mxu0 %v190
    %867 = vmatprep.subr.mxu0 %v187
    %868 = vmatpush1.msra.mxu0 %v186
    %869 = vmatprep.subr.mxu0 %v183
    %870 = vmatpush1.msra.mxu0 %v182
    %871 = vmatprep.subr.mxu0 %v179
    %872 = vmatpush1.msra.mxu0 %v178
    %873 = vmatprep.subr.mxu0 %v175
    %874 = vmatpush1.msra.mxu0 %v174
    %875 = vmatprep.subr.mxu0 %v171
    %876 = vmatpush1.msra.mxu0 %v170
    %877 = vmatprep.subr.mxu0 %v295
    %878 = vmatpush2.msra.mxu0 %v294
    %879 = vmatprep.subr.mxu0 %v291
    %880 = vmatpush2.msra.mxu0 %v290
    %881 = vmatprep.subr.mxu0 %v287
    %882 = vmatpush2.msra.mxu0 %v286
    %883 = vmatprep.subr.mxu0 %v283
    %884 = vmatpush2.msra.mxu0 %v282
    %885 = vmatprep.subr.mxu0 %v279
    %886 = vmatpush2.msra.mxu0 %v278
    %887 = vmatprep.subr.mxu0 %v275
    %888 = vmatpush2.msra.mxu0 %v274
    %889 = vmatprep.subr.mxu0 %v271
    %890 = vmatpush2.msra.mxu0 %v270
    %891 = vmatprep.subr.mxu0 %v267
    %892 = vmatpush2.msra.mxu0 %v266
    %893 = vmatprep.subr.mxu0 %v263
    %894 = vmatpush2.msra.mxu0 %v262
    %895 = vmatprep.subr.mxu0 %v259
    %896 = vmatpush2.msra.mxu0 %v258
    %897 = vmatprep.subr.mxu0 %v255
    %898 = vmatpush2.msra.mxu0 %v254
    %899 = vmatprep.subr.mxu0 %v251
    %900 = vmatpush2.msra.mxu0 %v250
    %901 = vmatprep.subr.mxu0 %v247
    %902 = vmatpush2.msra.mxu0 %v246
    %903 = vmatprep.subr.mxu0 %v243
    %904 = vmatpush2.msra.mxu0 %v242
    %905 = vmatprep.subr.mxu0 %v239
    %906 = vmatpush2.msra.mxu0 %v238
    %907 = vmatprep.subr.mxu0 %v235
    %908 = vmatpush2.msra.mxu0 %v234
    %909 = vmatprep.mubr.f32.mxu0 %v627
    %910 = vmatmul.mubr.f32.gmra.mxu0 %v623
    %v911 = vpop.f32.mrf.mxu0
    %v912 = vadd.f32 %v841, %v911
    %v913 = vpop.f32.mrf.mxu0
    %v914 = vadd.f32 %v843, %v913
    %915 = vdwg.mxu0
    %s916 = scalar_lea.vmem [#allocation7], 4
    %917 = vst [vmem:[%s916] sm:$0x1] %v770
    %s918 = scalar_lea.vmem [#allocation7], 5
    %919 = vst [vmem:[%s918] sm:$0x1] %v772
    %s920 = scalar_lea.vmem [#allocation7], 6
    %921 = vst [vmem:[%s920] sm:$0x1] %v912
    %s922 = scalar_lea.vmem [#allocation7], 7
    %923 = vst [vmem:[%s922] sm:$0x1] %v914
    %s924 = scalar_lea.vmem [#allocation5], 8
    %v925 = vld [vmem:[%s924] sm:$0xf]
    %v927 = vlaneseq
    %v928 = vshrl.u32 %v927, 7
    %v929 = vsub.s32 0, %v928
    %v930 = vrot.slane %v925, %v929
    %v931 = vlaneseq
    %v932 = vshrl.u32 %v931, 7
    %v933 = vsub.s32 1, %v932
    %v934 = vrot.slane %v925, %v933
    %v935 = vlaneseq
    %v936 = vshrl.u32 %v935, 7
    %v937 = vsub.s32 2, %v936
    %v938 = vrot.slane %v925, %v937
    %v939 = vlaneseq
    %v940 = vshrl.u32 %v939, 7
    %v941 = vsub.s32 3, %v940
    %v942 = vrot.slane %v925, %v941
    %947 = vmatprep.subr.mxu0 %v101
    %948 = vmatpush1.msra.mxu0 %v100
    %949 = vmatprep.subr.mxu0 %v97
    %950 = vmatpush1.msra.mxu0 %v96
    %951 = vmatprep.subr.mxu0 %v93
    %952 = vmatpush1.msra.mxu0 %v92
    %953 = vmatprep.subr.mxu0 %v89
    %954 = vmatpush1.msra.mxu0 %v88
    %955 = vmatprep.subr.mxu0 %v85
    %956 = vmatpush1.msra.mxu0 %v84
    %957 = vmatprep.subr.mxu0 %v81
    %958 = vmatpush1.msra.mxu0 %v80
    %959 = vmatprep.subr.mxu0 %v77
    %960 = vmatpush1.msra.mxu0 %v76
    %961 = vmatprep.subr.mxu0 %v73
    %962 = vmatpush1.msra.mxu0 %v72
    %963 = vmatprep.subr.mxu0 %v69
    %964 = vmatpush1.msra.mxu0 %v68
    %965 = vmatprep.subr.mxu0 %v65
    %966 = vmatpush1.msra.mxu0 %v64
    %967 = vmatprep.subr.mxu0 %v61
    %968 = vmatpush1.msra.mxu0 %v60
    %969 = vmatprep.subr.mxu0 %v57
    %970 = vmatpush1.msra.mxu0 %v56
    %971 = vmatprep.subr.mxu0 %v53
    %972 = vmatpush1.msra.mxu0 %v52
    %973 = vmatprep.subr.mxu0 %v49
    %974 = vmatpush1.msra.mxu0 %v48
    %975 = vmatprep.subr.mxu0 %v45
    %976 = vmatpush1.msra.mxu0 %v44
    %977 = vmatprep.subr.mxu0 %v41
    %978 = vmatpush1.msra.mxu0 %v40
    %979 = vmatprep.subr.mxu0 %v165
    %980 = vmatpush2.msra.mxu0 %v164
    %981 = vmatprep.subr.mxu0 %v161
    %982 = vmatpush2.msra.mxu0 %v160
    %983 = vmatprep.subr.mxu0 %v157
    %984 = vmatpush2.msra.mxu0 %v156
    %985 = vmatprep.subr.mxu0 %v153
    %986 = vmatpush2.msra.mxu0 %v152
    %987 = vmatprep.subr.mxu0 %v149
    %988 = vmatpush2.msra.mxu0 %v148
    %989 = vmatprep.subr.mxu0 %v145
    %990 = vmatpush2.msra.mxu0 %v144
    %991 = vmatprep.subr.mxu0 %v141
    %992 = vmatpush2.msra.mxu0 %v140
    %993 = vmatprep.subr.mxu0 %v137
    %994 = vmatpush2.msra.mxu0 %v136
    %995 = vmatprep.subr.mxu0 %v133
    %996 = vmatpush2.msra.mxu0 %v132
    %997 = vmatprep.subr.mxu0 %v129
    %998 = vmatpush2.msra.mxu0 %v128
    %999 = vmatprep.subr.mxu0 %v125
    %1000 = vmatpush2.msra.mxu0 %v124
    %1001 = vmatprep.subr.mxu0 %v121
    %1002 = vmatpush2.msra.mxu0 %v120
    %1003 = vmatprep.subr.mxu0 %v117
    %1004 = vmatpush2.msra.mxu0 %v116
    %1005 = vmatprep.subr.mxu0 %v113
    %1006 = vmatpush2.msra.mxu0 %v112
    %1007 = vmatprep.subr.mxu0 %v109
    %1008 = vmatpush2.msra.mxu0 %v108
    %1009 = vmatprep.subr.mxu0 %v105
    %1010 = vmatpush2.msra.mxu0 %v104
    %1011 = vmatprep.mubr.f32.mxu0 %v934
    %1012 = vmatmul.mubr.f32.gmra.mxu0 %v930
    %v1013 = vpop.f32.mrf.mxu0
    %v1014 = vadd.f32 0.0, %v1013
    %v1015 = vpop.f32.mrf.mxu0
    %v1016 = vadd.f32 0.0, %v1015
    %1017 = vdwg.mxu0
    %1018 = vmatprep.subr.mxu0 %v229
    %1019 = vmatpush1.msra.mxu0 %v228
    %1020 = vmatprep.subr.mxu0 %v225
    %1021 = vmatpush1.msra.mxu0 %v224
    %1022 = vmatprep.subr.mxu0 %v221
    %1023 = vmatpush1.msra.mxu0 %v220
    %1024 = vmatprep.subr.mxu0 %v217
    %1025 = vmatpush1.msra.mxu0 %v216
    %1026 = vmatprep.subr.mxu0 %v213
    %1027 = vmatpush1.msra.mxu0 %v212
    %1028 = vmatprep.subr.mxu0 %v209
    %1029 = vmatpush1.msra.mxu0 %v208
    %1030 = vmatprep.subr.mxu0 %v205
    %1031 = vmatpush1.msra.mxu0 %v204
    %1032 = vmatprep.subr.mxu0 %v201
    %1033 = vmatpush1.msra.mxu0 %v200
    %1034 = vmatprep.subr.mxu0 %v197
    %1035 = vmatpush1.msra.mxu0 %v196
    %1036 = vmatprep.subr.mxu0 %v193
    %1037 = vmatpush1.msra.mxu0 %v192
    %1038 = vmatprep.subr.mxu0 %v189
    %1039 = vmatpush1.msra.mxu0 %v188
    %1040 = vmatprep.subr.mxu0 %v185
    %1041 = vmatpush1.msra.mxu0 %v184
    %1042 = vmatprep.subr.mxu0 %v181
    %1043 = vmatpush1.msra.mxu0 %v180
    %1044 = vmatprep.subr.mxu0 %v177
    %1045 = vmatpush1.msra.mxu0 %v176
    %1046 = vmatprep.subr.mxu0 %v173
    %1047 = vmatpush1.msra.mxu0 %v172
    %1048 = vmatprep.subr.mxu0 %v169
    %1049 = vmatpush1.msra.mxu0 %v168
    %1050 = vmatprep.subr.mxu0 %v293
    %1051 = vmatpush2.msra.mxu0 %v292
    %1052 = vmatprep.subr.mxu0 %v289
    %1053 = vmatpush2.msra.mxu0 %v288
    %1054 = vmatprep.subr.mxu0 %v285
    %1055 = vmatpush2.msra.mxu0 %v284
    %1056 = vmatprep.subr.mxu0 %v281
    %1057 = vmatpush2.msra.mxu0 %v280
    %1058 = vmatprep.subr.mxu0 %v277
    %1059 = vmatpush2.msra.mxu0 %v276
    %1060 = vmatprep.subr.mxu0 %v273
    %1061 = vmatpush2.msra.mxu0 %v272
    %1062 = vmatprep.subr.mxu0 %v269
    %1063 = vmatpush2.msra.mxu0 %v268
    %1064 = vmatprep.subr.mxu0 %v265
    %1065 = vmatpush2.msra.mxu0 %v264
    %1066 = vmatprep.subr.mxu0 %v261
    %1067 = vmatpush2.msra.mxu0 %v260
    %1068 = vmatprep.subr.mxu0 %v257
    %1069 = vmatpush2.msra.mxu0 %v256
    %1070 = vmatprep.subr.mxu0 %v253
    %1071 = vmatpush2.msra.mxu0 %v252
    %1072 = vmatprep.subr.mxu0 %v249
    %1073 = vmatpush2.msra.mxu0 %v248
    %1074 = vmatprep.subr.mxu0 %v245
    %1075 = vmatpush2.msra.mxu0 %v244
    %1076 = vmatprep.subr.mxu0 %v241
    %1077 = vmatpush2.msra.mxu0 %v240
    %1078 = vmatprep.subr.mxu0 %v237
    %1079 = vmatpush2.msra.mxu0 %v236
    %1080 = vmatprep.subr.mxu0 %v233
    %1081 = vmatpush2.msra.mxu0 %v232
    %1082 = vmatprep.mubr.f32.mxu0 %v942
    %1083 = vmatmul.mubr.f32.gmra.mxu0 %v938
    %v1084 = vpop.f32.mrf.mxu0
    %v1085 = vadd.f32 %v1014, %v1084
    %v1086 = vpop.f32.mrf.mxu0
    %v1087 = vadd.f32 %v1016, %v1086
    %1088 = vdwg.mxu0
    %1089 = vmatprep.subr.mxu0 %v103
    %1090 = vmatpush1.msra.mxu0 %v102
    %1091 = vmatprep.subr.mxu0 %v99
    %1092 = vmatpush1.msra.mxu0 %v98
    %1093 = vmatprep.subr.mxu0 %v95
    %1094 = vmatpush1.msra.mxu0 %v94
    %1095 = vmatprep.subr.mxu0 %v91
    %1096 = vmatpush1.msra.mxu0 %v90
    %1097 = vmatprep.subr.mxu0 %v87
    %1098 = vmatpush1.msra.mxu0 %v86
    %1099 = vmatprep.subr.mxu0 %v83
    %1100 = vmatpush1.msra.mxu0 %v82
    %1101 = vmatprep.subr.mxu0 %v79
    %1102 = vmatpush1.msra.mxu0 %v78
    %1103 = vmatprep.subr.mxu0 %v75
    %1104 = vmatpush1.msra.mxu0 %v74
    %1105 = vmatprep.subr.mxu0 %v71
    %1106 = vmatpush1.msra.mxu0 %v70
    %1107 = vmatprep.subr.mxu0 %v67
    %1108 = vmatpush1.msra.mxu0 %v66
    %1109 = vmatprep.subr.mxu0 %v63
    %1110 = vmatpush1.msra.mxu0 %v62
    %1111 = vmatprep.subr.mxu0 %v59
    %1112 = vmatpush1.msra.mxu0 %v58
    %1113 = vmatprep.subr.mxu0 %v55
    %1114 = vmatpush1.msra.mxu0 %v54
    %1115 = vmatprep.subr.mxu0 %v51
    %1116 = vmatpush1.msra.mxu0 %v50
    %1117 = vmatprep.subr.mxu0 %v47
    %1118 = vmatpush1.msra.mxu0 %v46
    %1119 = vmatprep.subr.mxu0 %v43
    %1120 = vmatpush1.msra.mxu0 %v42
    %1121 = vmatprep.subr.mxu0 %v167
    %1122 = vmatpush2.msra.mxu0 %v166
    %1123 = vmatprep.subr.mxu0 %v163
    %1124 = vmatpush2.msra.mxu0 %v162
    %1125 = vmatprep.subr.mxu0 %v159
    %1126 = vmatpush2.msra.mxu0 %v158
    %1127 = vmatprep.subr.mxu0 %v155
    %1128 = vmatpush2.msra.mxu0 %v154
    %1129 = vmatprep.subr.mxu0 %v151
    %1130 = vmatpush2.msra.mxu0 %v150
    %1131 = vmatprep.subr.mxu0 %v147
    %1132 = vmatpush2.msra.mxu0 %v146
    %1133 = vmatprep.subr.mxu0 %v143
    %1134 = vmatpush2.msra.mxu0 %v142
    %1135 = vmatprep.subr.mxu0 %v139
    %1136 = vmatpush2.msra.mxu0 %v138
    %1137 = vmatprep.subr.mxu0 %v135
    %1138 = vmatpush2.msra.mxu0 %v134
    %1139 = vmatprep.subr.mxu0 %v131
    %1140 = vmatpush2.msra.mxu0 %v130
    %1141 = vmatprep.subr.mxu0 %v127
    %1142 = vmatpush2.msra.mxu0 %v126
    %1143 = vmatprep.subr.mxu0 %v123
    %1144 = vmatpush2.msra.mxu0 %v122
    %1145 = vmatprep.subr.mxu0 %v119
    %1146 = vmatpush2.msra.mxu0 %v118
    %1147 = vmatprep.subr.mxu0 %v115
    %1148 = vmatpush2.msra.mxu0 %v114
    %1149 = vmatprep.subr.mxu0 %v111
    %1150 = vmatpush2.msra.mxu0 %v110
    %1151 = vmatprep.subr.mxu0 %v107
    %1152 = vmatpush2.msra.mxu0 %v106
    %1153 = vmatprep.mubr.f32.mxu0 %v934
    %1154 = vmatmul.mubr.f32.gmra.mxu0 %v930
    %v1155 = vpop.f32.mrf.mxu0
    %v1156 = vadd.f32 0.0, %v1155
    %v1157 = vpop.f32.mrf.mxu0
    %v1158 = vadd.f32 0.0, %v1157
    %1159 = vdwg.mxu0
    %1160 = vmatprep.subr.mxu0 %v231
    %1161 = vmatpush1.msra.mxu0 %v230
    %1162 = vmatprep.subr.mxu0 %v227
    %1163 = vmatpush1.msra.mxu0 %v226
    %1164 = vmatprep.subr.mxu0 %v223
    %1165 = vmatpush1.msra.mxu0 %v222
    %1166 = vmatprep.subr.mxu0 %v219
    %1167 = vmatpush1.msra.mxu0 %v218
    %1168 = vmatprep.subr.mxu0 %v215
    %1169 = vmatpush1.msra.mxu0 %v214
    %1170 = vmatprep.subr.mxu0 %v211
    %1171 = vmatpush1.msra.mxu0 %v210
    %1172 = vmatprep.subr.mxu0 %v207
    %1173 = vmatpush1.msra.mxu0 %v206
    %1174 = vmatprep.subr.mxu0 %v203
    %1175 = vmatpush1.msra.mxu0 %v202
    %1176 = vmatprep.subr.mxu0 %v199
    %1177 = vmatpush1.msra.mxu0 %v198
    %1178 = vmatprep.subr.mxu0 %v195
    %1179 = vmatpush1.msra.mxu0 %v194
    %1180 = vmatprep.subr.mxu0 %v191
    %1181 = vmatpush1.msra.mxu0 %v190
    %1182 = vmatprep.subr.mxu0 %v187
    %1183 = vmatpush1.msra.mxu0 %v186
    %1184 = vmatprep.subr.mxu0 %v183
    %1185 = vmatpush1.msra.mxu0 %v182
    %1186 = vmatprep.subr.mxu0 %v179
    %1187 = vmatpush1.msra.mxu0 %v178
    %1188 = vmatprep.subr.mxu0 %v175
    %1189 = vmatpush1.msra.mxu0 %v174
    %1190 = vmatprep.subr.mxu0 %v171
    %1191 = vmatpush1.msra.mxu0 %v170
    %1192 = vmatprep.subr.mxu0 %v295
    %1193 = vmatpush2.msra.mxu0 %v294
    %1194 = vmatprep.subr.mxu0 %v291
    %1195 = vmatpush2.msra.mxu0 %v290
    %1196 = vmatprep.subr.mxu0 %v287
    %1197 = vmatpush2.msra.mxu0 %v286
    %1198 = vmatprep.subr.mxu0 %v283
    %1199 = vmatpush2.msra.mxu0 %v282
    %1200 = vmatprep.subr.mxu0 %v279
    %1201 = vmatpush2.msra.mxu0 %v278
    %1202 = vmatprep.subr.mxu0 %v275
    %1203 = vmatpush2.msra.mxu0 %v274
    %1204 = vmatprep.subr.mxu0 %v271
    %1205 = vmatpush2.msra.mxu0 %v270
    %1206 = vmatprep.subr.mxu0 %v267
    %1207 = vmatpush2.msra.mxu0 %v266
    %1208 = vmatprep.subr.mxu0 %v263
    %1209 = vmatpush2.msra.mxu0 %v262
    %1210 = vmatprep.subr.mxu0 %v259
    %1211 = vmatpush2.msra.mxu0 %v258
    %1212 = vmatprep.subr.mxu0 %v255
    %1213 = vmatpush2.msra.mxu0 %v254
    %1214 = vmatprep.subr.mxu0 %v251
    %1215 = vmatpush2.msra.mxu0 %v250
    %1216 = vmatprep.subr.mxu0 %v247
    %1217 = vmatpush2.msra.mxu0 %v246
    %1218 = vmatprep.subr.mxu0 %v243
    %1219 = vmatpush2.msra.mxu0 %v242
    %1220 = vmatprep.subr.mxu0 %v239
    %1221 = vmatpush2.msra.mxu0 %v238
    %1222 = vmatprep.subr.mxu0 %v235
    %1223 = vmatpush2.msra.mxu0 %v234
    %1224 = vmatprep.mubr.f32.mxu0 %v942
    %1225 = vmatmul.mubr.f32.gmra.mxu0 %v938
    %v1226 = vpop.f32.mrf.mxu0
    %v1227 = vadd.f32 %v1156, %v1226
    %v1228 = vpop.f32.mrf.mxu0
    %v1229 = vadd.f32 %v1158, %v1228
    %1230 = vdwg.mxu0
    %s1231 = scalar_lea.vmem [#allocation7], 8
    %1232 = vst [vmem:[%s1231] sm:$0x1] %v1085
    %s1233 = scalar_lea.vmem [#allocation7], 9
    %1234 = vst [vmem:[%s1233] sm:$0x1] %v1087
    %s1235 = scalar_lea.vmem [#allocation7], 10
    %1236 = vst [vmem:[%s1235] sm:$0x1] %v1227
    %s1237 = scalar_lea.vmem [#allocation7], 11
    %1238 = vst [vmem:[%s1237] sm:$0x1] %v1229
    %s1239 = scalar_lea.vmem [#allocation5], 12
    %v1240 = vld [vmem:[%s1239] sm:$0xf]
    %v1242 = vlaneseq
    %v1243 = vshrl.u32 %v1242, 7
    %v1244 = vsub.s32 0, %v1243
    %v1245 = vrot.slane %v1240, %v1244
    %v1246 = vlaneseq
    %v1247 = vshrl.u32 %v1246, 7
    %v1248 = vsub.s32 1, %v1247
    %v1249 = vrot.slane %v1240, %v1248
    %v1250 = vlaneseq
    %v1251 = vshrl.u32 %v1250, 7
    %v1252 = vsub.s32 2, %v1251
    %v1253 = vrot.slane %v1240, %v1252
    %v1254 = vlaneseq
    %v1255 = vshrl.u32 %v1254, 7
    %v1256 = vsub.s32 3, %v1255
    %v1257 = vrot.slane %v1240, %v1256
    %1262 = vmatprep.subr.mxu0 %v101
    %1263 = vmatpush1.msra.mxu0 %v100
    %1264 = vmatprep.subr.mxu0 %v97
    %1265 = vmatpush1.msra.mxu0 %v96
    %1266 = vmatprep.subr.mxu0 %v93
    %1267 = vmatpush1.msra.mxu0 %v92
    %1268 = vmatprep.subr.mxu0 %v89
    %1269 = vmatpush1.msra.mxu0 %v88
    %1270 = vmatprep.subr.mxu0 %v85
    %1271 = vmatpush1.msra.mxu0 %v84
    %1272 = vmatprep.subr.mxu0 %v81
    %1273 = vmatpush1.msra.mxu0 %v80
    %1274 = vmatprep.subr.mxu0 %v77
    %1275 = vmatpush1.msra.mxu0 %v76
    %1276 = vmatprep.subr.mxu0 %v73
    %1277 = vmatpush1.msra.mxu0 %v72
    %1278 = vmatprep.subr.mxu0 %v69
    %1279 = vmatpush1.msra.mxu0 %v68
    %1280 = vmatprep.subr.mxu0 %v65
    %1281 = vmatpush1.msra.mxu0 %v64
    %1282 = vmatprep.subr.mxu0 %v61
    %1283 = vmatpush1.msra.mxu0 %v60
    %1284 = vmatprep.subr.mxu0 %v57
    %1285 = vmatpush1.msra.mxu0 %v56
    %1286 = vmatprep.subr.mxu0 %v53
    %1287 = vmatpush1.msra.mxu0 %v52
    %1288 = vmatprep.subr.mxu0 %v49
    %1289 = vmatpush1.msra.mxu0 %v48
    %1290 = vmatprep.subr.mxu0 %v45
    %1291 = vmatpush1.msra.mxu0 %v44
    %1292 = vmatprep.subr.mxu0 %v41
    %1293 = vmatpush1.msra.mxu0 %v40
    %1294 = vmatprep.subr.mxu0 %v165
    %1295 = vmatpush2.msra.mxu0 %v164
    %1296 = vmatprep.subr.mxu0 %v161
    %1297 = vmatpush2.msra.mxu0 %v160
    %1298 = vmatprep.subr.mxu0 %v157
    %1299 = vmatpush2.msra.mxu0 %v156
    %1300 = vmatprep.subr.mxu0 %v153
    %1301 = vmatpush2.msra.mxu0 %v152
    %1302 = vmatprep.subr.mxu0 %v149
    %1303 = vmatpush2.msra.mxu0 %v148
    %1304 = vmatprep.subr.mxu0 %v145
    %1305 = vmatpush2.msra.mxu0 %v144
    %1306 = vmatprep.subr.mxu0 %v141
    %1307 = vmatpush2.msra.mxu0 %v140
    %1308 = vmatprep.subr.mxu0 %v137
    %1309 = vmatpush2.msra.mxu0 %v136
    %1310 = vmatprep.subr.mxu0 %v133
    %1311 = vmatpush2.msra.mxu0 %v132
    %1312 = vmatprep.subr.mxu0 %v129
    %1313 = vmatpush2.msra.mxu0 %v128
    %1314 = vmatprep.subr.mxu0 %v125
    %1315 = vmatpush2.msra.mxu0 %v124
    %1316 = vmatprep.subr.mxu0 %v121
    %1317 = vmatpush2.msra.mxu0 %v120
    %1318 = vmatprep.subr.mxu0 %v117
    %1319 = vmatpush2.msra.mxu0 %v116
    %1320 = vmatprep.subr.mxu0 %v113
    %1321 = vmatpush2.msra.mxu0 %v112
    %1322 = vmatprep.subr.mxu0 %v109
    %1323 = vmatpush2.msra.mxu0 %v108
    %1324 = vmatprep.subr.mxu0 %v105
    %1325 = vmatpush2.msra.mxu0 %v104
    %1326 = vmatprep.mubr.f32.mxu0 %v1249
    %1327 = vmatmul.mubr.f32.gmra.mxu0 %v1245
    %v1328 = vpop.f32.mrf.mxu0
    %v1329 = vadd.f32 0.0, %v1328
    %v1330 = vpop.f32.mrf.mxu0
    %v1331 = vadd.f32 0.0, %v1330
    %1332 = vdwg.mxu0
    %1333 = vmatprep.subr.mxu0 %v229
    %1334 = vmatpush1.msra.mxu0 %v228
    %1335 = vmatprep.subr.mxu0 %v225
    %1336 = vmatpush1.msra.mxu0 %v224
    %1337 = vmatprep.subr.mxu0 %v221
    %1338 = vmatpush1.msra.mxu0 %v220
    %1339 = vmatprep.subr.mxu0 %v217
    %1340 = vmatpush1.msra.mxu0 %v216
    %1341 = vmatprep.subr.mxu0 %v213
    %1342 = vmatpush1.msra.mxu0 %v212
    %1343 = vmatprep.subr.mxu0 %v209
    %1344 = vmatpush1.msra.mxu0 %v208
    %1345 = vmatprep.subr.mxu0 %v205
    %1346 = vmatpush1.msra.mxu0 %v204
    %1347 = vmatprep.subr.mxu0 %v201
    %1348 = vmatpush1.msra.mxu0 %v200
    %1349 = vmatprep.subr.mxu0 %v197
    %1350 = vmatpush1.msra.mxu0 %v196
    %1351 = vmatprep.subr.mxu0 %v193
    %1352 = vmatpush1.msra.mxu0 %v192
    %1353 = vmatprep.subr.mxu0 %v189
    %1354 = vmatpush1.msra.mxu0 %v188
    %1355 = vmatprep.subr.mxu0 %v185
    %1356 = vmatpush1.msra.mxu0 %v184
    %1357 = vmatprep.subr.mxu0 %v181
    %1358 = vmatpush1.msra.mxu0 %v180
    %1359 = vmatprep.subr.mxu0 %v177
    %1360 = vmatpush1.msra.mxu0 %v176
    %1361 = vmatprep.subr.mxu0 %v173
    %1362 = vmatpush1.msra.mxu0 %v172
    %1363 = vmatprep.subr.mxu0 %v169
    %1364 = vmatpush1.msra.mxu0 %v168
    %1365 = vmatprep.subr.mxu0 %v293
    %1366 = vmatpush2.msra.mxu0 %v292
    %1367 = vmatprep.subr.mxu0 %v289
    %1368 = vmatpush2.msra.mxu0 %v288
    %1369 = vmatprep.subr.mxu0 %v285
    %1370 = vmatpush2.msra.mxu0 %v284
    %1371 = vmatprep.subr.mxu0 %v281
    %1372 = vmatpush2.msra.mxu0 %v280
    %1373 = vmatprep.subr.mxu0 %v277
    %1374 = vmatpush2.msra.mxu0 %v276
    %1375 = vmatprep.subr.mxu0 %v273
    %1376 = vmatpush2.msra.mxu0 %v272
    %1377 = vmatprep.subr.mxu0 %v269
    %1378 = vmatpush2.msra.mxu0 %v268
    %1379 = vmatprep.subr.mxu0 %v265
    %1380 = vmatpush2.msra.mxu0 %v264
    %1381 = vmatprep.subr.mxu0 %v261
    %1382 = vmatpush2.msra.mxu0 %v260
    %1383 = vmatprep.subr.mxu0 %v257
    %1384 = vmatpush2.msra.mxu0 %v256
    %1385 = vmatprep.subr.mxu0 %v253
    %1386 = vmatpush2.msra.mxu0 %v252
    %1387 = vmatprep.subr.mxu0 %v249
    %1388 = vmatpush2.msra.mxu0 %v248
    %1389 = vmatprep.subr.mxu0 %v245
    %1390 = vmatpush2.msra.mxu0 %v244
    %1391 = vmatprep.subr.mxu0 %v241
    %1392 = vmatpush2.msra.mxu0 %v240
    %1393 = vmatprep.subr.mxu0 %v237
    %1394 = vmatpush2.msra.mxu0 %v236
    %1395 = vmatprep.subr.mxu0 %v233
    %1396 = vmatpush2.msra.mxu0 %v232
    %1397 = vmatprep.mubr.f32.mxu0 %v1257
    %1398 = vmatmul.mubr.f32.gmra.mxu0 %v1253
    %v1399 = vpop.f32.mrf.mxu0
    %v1400 = vadd.f32 %v1329, %v1399
    %v1401 = vpop.f32.mrf.mxu0
    %v1402 = vadd.f32 %v1331, %v1401
    %1403 = vdwg.mxu0
    %1404 = vmatprep.subr.mxu0 %v103
    %1405 = vmatpush1.msra.mxu0 %v102
    %1406 = vmatprep.subr.mxu0 %v99
    %1407 = vmatpush1.msra.mxu0 %v98
    %1408 = vmatprep.subr.mxu0 %v95
    %1409 = vmatpush1.msra.mxu0 %v94
    %1410 = vmatprep.subr.mxu0 %v91
    %1411 = vmatpush1.msra.mxu0 %v90
    %1412 = vmatprep.subr.mxu0 %v87
    %1413 = vmatpush1.msra.mxu0 %v86
    %1414 = vmatprep.subr.mxu0 %v83
    %1415 = vmatpush1.msra.mxu0 %v82
    %1416 = vmatprep.subr.mxu0 %v79
    %1417 = vmatpush1.msra.mxu0 %v78
    %1418 = vmatprep.subr.mxu0 %v75
    %1419 = vmatpush1.msra.mxu0 %v74
    %1420 = vmatprep.subr.mxu0 %v71
    %1421 = vmatpush1.msra.mxu0 %v70
    %1422 = vmatprep.subr.mxu0 %v67
    %1423 = vmatpush1.msra.mxu0 %v66
    %1424 = vmatprep.subr.mxu0 %v63
    %1425 = vmatpush1.msra.mxu0 %v62
    %1426 = vmatprep.subr.mxu0 %v59
    %1427 = vmatpush1.msra.mxu0 %v58
    %1428 = vmatprep.subr.mxu0 %v55
    %1429 = vmatpush1.msra.mxu0 %v54
    %1430 = vmatprep.subr.mxu0 %v51
    %1431 = vmatpush1.msra.mxu0 %v50
    %1432 = vmatprep.subr.mxu0 %v47
    %1433 = vmatpush1.msra.mxu0 %v46
    %1434 = vmatprep.subr.mxu0 %v43
    %1435 = vmatpush1.msra.mxu0 %v42
    %1436 = vmatprep.subr.mxu0 %v167
    %1437 = vmatpush2.msra.mxu0 %v166
    %1438 = vmatprep.subr.mxu0 %v163
    %1439 = vmatpush2.msra.mxu0 %v162
    %1440 = vmatprep.subr.mxu0 %v159
    %1441 = vmatpush2.msra.mxu0 %v158
    %1442 = vmatprep.subr.mxu0 %v155
    %1443 = vmatpush2.msra.mxu0 %v154
    %1444 = vmatprep.subr.mxu0 %v151
    %1445 = vmatpush2.msra.mxu0 %v150
    %1446 = vmatprep.subr.mxu0 %v147
    %1447 = vmatpush2.msra.mxu0 %v146
    %1448 = vmatprep.subr.mxu0 %v143
    %1449 = vmatpush2.msra.mxu0 %v142
    %1450 = vmatprep.subr.mxu0 %v139
    %1451 = vmatpush2.msra.mxu0 %v138
    %1452 = vmatprep.subr.mxu0 %v135
    %1453 = vmatpush2.msra.mxu0 %v134
    %1454 = vmatprep.subr.mxu0 %v131
    %1455 = vmatpush2.msra.mxu0 %v130
    %1456 = vmatprep.subr.mxu0 %v127
    %1457 = vmatpush2.msra.mxu0 %v126
    %1458 = vmatprep.subr.mxu0 %v123
    %1459 = vmatpush2.msra.mxu0 %v122
    %1460 = vmatprep.subr.mxu0 %v119
    %1461 = vmatpush2.msra.mxu0 %v118
    %1462 = vmatprep.subr.mxu0 %v115
    %1463 = vmatpush2.msra.mxu0 %v114
    %1464 = vmatprep.subr.mxu0 %v111
    %1465 = vmatpush2.msra.mxu0 %v110
    %1466 = vmatprep.subr.mxu0 %v107
    %1467 = vmatpush2.msra.mxu0 %v106
    %1468 = vmatprep.mubr.f32.mxu0 %v1249
    %1469 = vmatmul.mubr.f32.gmra.mxu0 %v1245
    %v1470 = vpop.f32.mrf.mxu0
    %v1471 = vadd.f32 0.0, %v1470
    %v1472 = vpop.f32.mrf.mxu0
    %v1473 = vadd.f32 0.0, %v1472
    %1474 = vdwg.mxu0
    %1475 = vmatprep.subr.mxu0 %v231
    %1476 = vmatpush1.msra.mxu0 %v230
    %1477 = vmatprep.subr.mxu0 %v227
    %1478 = vmatpush1.msra.mxu0 %v226
    %1479 = vmatprep.subr.mxu0 %v223
    %1480 = vmatpush1.msra.mxu0 %v222
    %1481 = vmatprep.subr.mxu0 %v219
    %1482 = vmatpush1.msra.mxu0 %v218
    %1483 = vmatprep.subr.mxu0 %v215
    %1484 = vmatpush1.msra.mxu0 %v214
    %1485 = vmatprep.subr.mxu0 %v211
    %1486 = vmatpush1.msra.mxu0 %v210
    %1487 = vmatprep.subr.mxu0 %v207
    %1488 = vmatpush1.msra.mxu0 %v206
    %1489 = vmatprep.subr.mxu0 %v203
    %1490 = vmatpush1.msra.mxu0 %v202
    %1491 = vmatprep.subr.mxu0 %v199
    %1492 = vmatpush1.msra.mxu0 %v198
    %1493 = vmatprep.subr.mxu0 %v195
    %1494 = vmatpush1.msra.mxu0 %v194
    %1495 = vmatprep.subr.mxu0 %v191
    %1496 = vmatpush1.msra.mxu0 %v190
    %1497 = vmatprep.subr.mxu0 %v187
    %1498 = vmatpush1.msra.mxu0 %v186
    %1499 = vmatprep.subr.mxu0 %v183
    %1500 = vmatpush1.msra.mxu0 %v182
    %1501 = vmatprep.subr.mxu0 %v179
    %1502 = vmatpush1.msra.mxu0 %v178
    %1503 = vmatprep.subr.mxu0 %v175
    %1504 = vmatpush1.msra.mxu0 %v174
    %1505 = vmatprep.subr.mxu0 %v171
    %1506 = vmatpush1.msra.mxu0 %v170
    %1507 = vmatprep.subr.mxu0 %v295
    %1508 = vmatpush2.msra.mxu0 %v294
    %1509 = vmatprep.subr.mxu0 %v291
    %1510 = vmatpush2.msra.mxu0 %v290
    %1511 = vmatprep.subr.mxu0 %v287
    %1512 = vmatpush2.msra.mxu0 %v286
    %1513 = vmatprep.subr.mxu0 %v283
    %1514 = vmatpush2.msra.mxu0 %v282
    %1515 = vmatprep.subr.mxu0 %v279
    %1516 = vmatpush2.msra.mxu0 %v278
    %1517 = vmatprep.subr.mxu0 %v275
    %1518 = vmatpush2.msra.mxu0 %v274
    %1519 = vmatprep.subr.mxu0 %v271
    %1520 = vmatpush2.msra.mxu0 %v270
    %1521 = vmatprep.subr.mxu0 %v267
    %1522 = vmatpush2.msra.mxu0 %v266
    %1523 = vmatprep.subr.mxu0 %v263
    %1524 = vmatpush2.msra.mxu0 %v262
    %1525 = vmatprep.subr.mxu0 %v259
    %1526 = vmatpush2.msra.mxu0 %v258
    %1527 = vmatprep.subr.mxu0 %v255
    %1528 = vmatpush2.msra.mxu0 %v254
    %1529 = vmatprep.subr.mxu0 %v251
    %1530 = vmatpush2.msra.mxu0 %v250
    %1531 = vmatprep.subr.mxu0 %v247
    %1532 = vmatpush2.msra.mxu0 %v246
    %1533 = vmatprep.subr.mxu0 %v243
    %1534 = vmatpush2.msra.mxu0 %v242
    %1535 = vmatprep.subr.mxu0 %v239
    %1536 = vmatpush2.msra.mxu0 %v238
    %1537 = vmatprep.subr.mxu0 %v235
    %1538 = vmatpush2.msra.mxu0 %v234
    %1539 = vmatprep.mubr.f32.mxu0 %v1257
    %1540 = vmatmul.mubr.f32.gmra.mxu0 %v1253
    %v1541 = vpop.f32.mrf.mxu0
    %v1542 = vadd.f32 %v1471, %v1541
    %v1543 = vpop.f32.mrf.mxu0
    %v1544 = vadd.f32 %v1473, %v1543
    %1545 = vdwg.mxu0
    %s1546 = scalar_lea.vmem [#allocation7], 12
    %1547 = vst [vmem:[%s1546] sm:$0x1] %v1400
    %s1548 = scalar_lea.vmem [#allocation7], 13
    %1549 = vst [vmem:[%s1548] sm:$0x1] %v1402
    %s1550 = scalar_lea.vmem [#allocation7], 14
    %1551 = vst [vmem:[%s1550] sm:$0x1] %v1542
    %s1552 = scalar_lea.vmem [#allocation7], 15
    %1553 = vst [vmem:[%s1552] sm:$0x1] %v1544
    %s1554 = scalar_lea.vmem [#allocation5], 16
    %v1555 = vld [vmem:[%s1554] sm:$0xf]
    %v1557 = vlaneseq
    %v1558 = vshrl.u32 %v1557, 7
    %v1559 = vsub.s32 0, %v1558
    %v1560 = vrot.slane %v1555, %v1559
    %v1561 = vlaneseq
    %v1562 = vshrl.u32 %v1561, 7
    %v1563 = vsub.s32 1, %v1562
    %v1564 = vrot.slane %v1555, %v1563
    %v1565 = vlaneseq
    %v1566 = vshrl.u32 %v1565, 7
    %v1567 = vsub.s32 2, %v1566
    %v1568 = vrot.slane %v1555, %v1567
    %v1569 = vlaneseq
    %v1570 = vshrl.u32 %v1569, 7
    %v1571 = vsub.s32 3, %v1570
    %v1572 = vrot.slane %v1555, %v1571
    %1577 = vmatprep.subr.mxu0 %v101
    %1578 = vmatpush1.msra.mxu0 %v100
    %1579 = vmatprep.subr.mxu0 %v97
    %1580 = vmatpush1.msra.mxu0 %v96
    %1581 = vmatprep.subr.mxu0 %v93
    %1582 = vmatpush1.msra.mxu0 %v92
    %1583 = vmatprep.subr.mxu0 %v89
    %1584 = vmatpush1.msra.mxu0 %v88
    %1585 = vmatprep.subr.mxu0 %v85
    %1586 = vmatpush1.msra.mxu0 %v84
    %1587 = vmatprep.subr.mxu0 %v81
    %1588 = vmatpush1.msra.mxu0 %v80
    %1589 = vmatprep.subr.mxu0 %v77
    %1590 = vmatpush1.msra.mxu0 %v76
    %1591 = vmatprep.subr.mxu0 %v73
    %1592 = vmatpush1.msra.mxu0 %v72
    %1593 = vmatprep.subr.mxu0 %v69
    %1594 = vmatpush1.msra.mxu0 %v68
    %1595 = vmatprep.subr.mxu0 %v65
    %1596 = vmatpush1.msra.mxu0 %v64
    %1597 = vmatprep.subr.mxu0 %v61
    %1598 = vmatpush1.msra.mxu0 %v60
    %1599 = vmatprep.subr.mxu0 %v57
    %1600 = vmatpush1.msra.mxu0 %v56
    %1601 = vmatprep.subr.mxu0 %v53
    %1602 = vmatpush1.msra.mxu0 %v52
    %1603 = vmatprep.subr.mxu0 %v49
    %1604 = vmatpush1.msra.mxu0 %v48
    %1605 = vmatprep.subr.mxu0 %v45
    %1606 = vmatpush1.msra.mxu0 %v44
    %1607 = vmatprep.subr.mxu0 %v41
    %1608 = vmatpush1.msra.mxu0 %v40
    %1609 = vmatprep.subr.mxu0 %v165
    %1610 = vmatpush2.msra.mxu0 %v164
    %1611 = vmatprep.subr.mxu0 %v161
    %1612 = vmatpush2.msra.mxu0 %v160
    %1613 = vmatprep.subr.mxu0 %v157
    %1614 = vmatpush2.msra.mxu0 %v156
    %1615 = vmatprep.subr.mxu0 %v153
    %1616 = vmatpush2.msra.mxu0 %v152
    %1617 = vmatprep.subr.mxu0 %v149
    %1618 = vmatpush2.msra.mxu0 %v148
    %1619 = vmatprep.subr.mxu0 %v145
    %1620 = vmatpush2.msra.mxu0 %v144
    %1621 = vmatprep.subr.mxu0 %v141
    %1622 = vmatpush2.msra.mxu0 %v140
    %1623 = vmatprep.subr.mxu0 %v137
    %1624 = vmatpush2.msra.mxu0 %v136
    %1625 = vmatprep.subr.mxu0 %v133
    %1626 = vmatpush2.msra.mxu0 %v132
    %1627 = vmatprep.subr.mxu0 %v129
    %1628 = vmatpush2.msra.mxu0 %v128
    %1629 = vmatprep.subr.mxu0 %v125
    %1630 = vmatpush2.msra.mxu0 %v124
    %1631 = vmatprep.subr.mxu0 %v121
    %1632 = vmatpush2.msra.mxu0 %v120
    %1633 = vmatprep.subr.mxu0 %v117
    %1634 = vmatpush2.msra.mxu0 %v116
    %1635 = vmatprep.subr.mxu0 %v113
    %1636 = vmatpush2.msra.mxu0 %v112
    %1637 = vmatprep.subr.mxu0 %v109
    %1638 = vmatpush2.msra.mxu0 %v108
    %1639 = vmatprep.subr.mxu0 %v105
    %1640 = vmatpush2.msra.mxu0 %v104
    %1641 = vmatprep.mubr.f32.mxu0 %v1564
    %1642 = vmatmul.mubr.f32.gmra.mxu0 %v1560
    %v1643 = vpop.f32.mrf.mxu0
    %v1644 = vadd.f32 0.0, %v1643
    %v1645 = vpop.f32.mrf.mxu0
    %v1646 = vadd.f32 0.0, %v1645
    %1647 = vdwg.mxu0
    %1648 = vmatprep.subr.mxu0 %v229
    %1649 = vmatpush1.msra.mxu0 %v228
    %1650 = vmatprep.subr.mxu0 %v225
    %1651 = vmatpush1.msra.mxu0 %v224
    %1652 = vmatprep.subr.mxu0 %v221
    %1653 = vmatpush1.msra.mxu0 %v220
    %1654 = vmatprep.subr.mxu0 %v217
    %1655 = vmatpush1.msra.mxu0 %v216
    %1656 = vmatprep.subr.mxu0 %v213
    %1657 = vmatpush1.msra.mxu0 %v212
    %1658 = vmatprep.subr.mxu0 %v209
    %1659 = vmatpush1.msra.mxu0 %v208
    %1660 = vmatprep.subr.mxu0 %v205
    %1661 = vmatpush1.msra.mxu0 %v204
    %1662 = vmatprep.subr.mxu0 %v201
    %1663 = vmatpush1.msra.mxu0 %v200
    %1664 = vmatprep.subr.mxu0 %v197
    %1665 = vmatpush1.msra.mxu0 %v196
    %1666 = vmatprep.subr.mxu0 %v193
    %1667 = vmatpush1.msra.mxu0 %v192
    %1668 = vmatprep.subr.mxu0 %v189
    %1669 = vmatpush1.msra.mxu0 %v188
    %1670 = vmatprep.subr.mxu0 %v185
    %1671 = vmatpush1.msra.mxu0 %v184
    %1672 = vmatprep.subr.mxu0 %v181
    %1673 = vmatpush1.msra.mxu0 %v180
    %1674 = vmatprep.subr.mxu0 %v177
    %1675 = vmatpush1.msra.mxu0 %v176
    %1676 = vmatprep.subr.mxu0 %v173
    %1677 = vmatpush1.msra.mxu0 %v172
    %1678 = vmatprep.subr.mxu0 %v169
    %1679 = vmatpush1.msra.mxu0 %v168
    %1680 = vmatprep.subr.mxu0 %v293
    %1681 = vmatpush2.msra.mxu0 %v292
    %1682 = vmatprep.subr.mxu0 %v289
    %1683 = vmatpush2.msra.mxu0 %v288
    %1684 = vmatprep.subr.mxu0 %v285
    %1685 = vmatpush2.msra.mxu0 %v284
    %1686 = vmatprep.subr.mxu0 %v281
    %1687 = vmatpush2.msra.mxu0 %v280
    %1688 = vmatprep.subr.mxu0 %v277
    %1689 = vmatpush2.msra.mxu0 %v276
    %1690 = vmatprep.subr.mxu0 %v273
    %1691 = vmatpush2.msra.mxu0 %v272
    %1692 = vmatprep.subr.mxu0 %v269
    %1693 = vmatpush2.msra.mxu0 %v268
    %1694 = vmatprep.subr.mxu0 %v265
    %1695 = vmatpush2.msra.mxu0 %v264
    %1696 = vmatprep.subr.mxu0 %v261
    %1697 = vmatpush2.msra.mxu0 %v260
    %1698 = vmatprep.subr.mxu0 %v257
    %1699 = vmatpush2.msra.mxu0 %v256
    %1700 = vmatprep.subr.mxu0 %v253
    %1701 = vmatpush2.msra.mxu0 %v252
    %1702 = vmatprep.subr.mxu0 %v249
    %1703 = vmatpush2.msra.mxu0 %v248
    %1704 = vmatprep.subr.mxu0 %v245
    %1705 = vmatpush2.msra.mxu0 %v244
    %1706 = vmatprep.subr.mxu0 %v241
    %1707 = vmatpush2.msra.mxu0 %v240
    %1708 = vmatprep.subr.mxu0 %v237
    %1709 = vmatpush2.msra.mxu0 %v236
    %1710 = vmatprep.subr.mxu0 %v233
    %1711 = vmatpush2.msra.mxu0 %v232
    %1712 = vmatprep.mubr.f32.mxu0 %v1572
    %1713 = vmatmul.mubr.f32.gmra.mxu0 %v1568
    %v1714 = vpop.f32.mrf.mxu0
    %v1715 = vadd.f32 %v1644, %v1714
    %v1716 = vpop.f32.mrf.mxu0
    %v1717 = vadd.f32 %v1646, %v1716
    %1718 = vdwg.mxu0
    %1719 = vmatprep.subr.mxu0 %v103
    %1720 = vmatpush1.msra.mxu0 %v102
    %1721 = vmatprep.subr.mxu0 %v99
    %1722 = vmatpush1.msra.mxu0 %v98
    %1723 = vmatprep.subr.mxu0 %v95
    %1724 = vmatpush1.msra.mxu0 %v94
    %1725 = vmatprep.subr.mxu0 %v91
    %1726 = vmatpush1.msra.mxu0 %v90
    %1727 = vmatprep.subr.mxu0 %v87
    %1728 = vmatpush1.msra.mxu0 %v86
    %1729 = vmatprep.subr.mxu0 %v83
    %1730 = vmatpush1.msra.mxu0 %v82
    %1731 = vmatprep.subr.mxu0 %v79
    %1732 = vmatpush1.msra.mxu0 %v78
    %1733 = vmatprep.subr.mxu0 %v75
    %1734 = vmatpush1.msra.mxu0 %v74
    %1735 = vmatprep.subr.mxu0 %v71
    %1736 = vmatpush1.msra.mxu0 %v70
    %1737 = vmatprep.subr.mxu0 %v67
    %1738 = vmatpush1.msra.mxu0 %v66
    %1739 = vmatprep.subr.mxu0 %v63
    %1740 = vmatpush1.msra.mxu0 %v62
    %1741 = vmatprep.subr.mxu0 %v59
    %1742 = vmatpush1.msra.mxu0 %v58
    %1743 = vmatprep.subr.mxu0 %v55
    %1744 = vmatpush1.msra.mxu0 %v54
    %1745 = vmatprep.subr.mxu0 %v51
    %1746 = vmatpush1.msra.mxu0 %v50
    %1747 = vmatprep.subr.mxu0 %v47
    %1748 = vmatpush1.msra.mxu0 %v46
    %1749 = vmatprep.subr.mxu0 %v43
    %1750 = vmatpush1.msra.mxu0 %v42
    %1751 = vmatprep.subr.mxu0 %v167
    %1752 = vmatpush2.msra.mxu0 %v166
    %1753 = vmatprep.subr.mxu0 %v163
    %1754 = vmatpush2.msra.mxu0 %v162
    %1755 = vmatprep.subr.mxu0 %v159
    %1756 = vmatpush2.msra.mxu0 %v158
    %1757 = vmatprep.subr.mxu0 %v155
    %1758 = vmatpush2.msra.mxu0 %v154
    %1759 = vmatprep.subr.mxu0 %v151
    %1760 = vmatpush2.msra.mxu0 %v150
    %1761 = vmatprep.subr.mxu0 %v147
    %1762 = vmatpush2.msra.mxu0 %v146
    %1763 = vmatprep.subr.mxu0 %v143
    %1764 = vmatpush2.msra.mxu0 %v142
    %1765 = vmatprep.subr.mxu0 %v139
    %1766 = vmatpush2.msra.mxu0 %v138
    %1767 = vmatprep.subr.mxu0 %v135
    %1768 = vmatpush2.msra.mxu0 %v134
    %1769 = vmatprep.subr.mxu0 %v131
    %1770 = vmatpush2.msra.mxu0 %v130
    %1771 = vmatprep.subr.mxu0 %v127
    %1772 = vmatpush2.msra.mxu0 %v126
    %1773 = vmatprep.subr.mxu0 %v123
    %1774 = vmatpush2.msra.mxu0 %v122
    %1775 = vmatprep.subr.mxu0 %v119
    %1776 = vmatpush2.msra.mxu0 %v118
    %1777 = vmatprep.subr.mxu0 %v115
    %1778 = vmatpush2.msra.mxu0 %v114
    %1779 = vmatprep.subr.mxu0 %v111
    %1780 = vmatpush2.msra.mxu0 %v110
    %1781 = vmatprep.subr.mxu0 %v107
    %1782 = vmatpush2.msra.mxu0 %v106
    %1783 = vmatprep.mubr.f32.mxu0 %v1564
    %1784 = vmatmul.mubr.f32.gmra.mxu0 %v1560
    %v1785 = vpop.f32.mrf.mxu0
    %v1786 = vadd.f32 0.0, %v1785
    %v1787 = vpop.f32.mrf.mxu0
    %v1788 = vadd.f32 0.0, %v1787
    %1789 = vdwg.mxu0
    %1790 = vmatprep.subr.mxu0 %v231
    %1791 = vmatpush1.msra.mxu0 %v230
    %1792 = vmatprep.subr.mxu0 %v227
    %1793 = vmatpush1.msra.mxu0 %v226
    %1794 = vmatprep.subr.mxu0 %v223
    %1795 = vmatpush1.msra.mxu0 %v222
    %1796 = vmatprep.subr.mxu0 %v219
    %1797 = vmatpush1.msra.mxu0 %v218
    %1798 = vmatprep.subr.mxu0 %v215
    %1799 = vmatpush1.msra.mxu0 %v214
    %1800 = vmatprep.subr.mxu0 %v211
    %1801 = vmatpush1.msra.mxu0 %v210
    %1802 = vmatprep.subr.mxu0 %v207
    %1803 = vmatpush1.msra.mxu0 %v206
    %1804 = vmatprep.subr.mxu0 %v203
    %1805 = vmatpush1.msra.mxu0 %v202
    %1806 = vmatprep.subr.mxu0 %v199
    %1807 = vmatpush1.msra.mxu0 %v198
    %1808 = vmatprep.subr.mxu0 %v195
    %1809 = vmatpush1.msra.mxu0 %v194
    %1810 = vmatprep.subr.mxu0 %v191
    %1811 = vmatpush1.msra.mxu0 %v190
    %1812 = vmatprep.subr.mxu0 %v187
    %1813 = vmatpush1.msra.mxu0 %v186
    %1814 = vmatprep.subr.mxu0 %v183
    %1815 = vmatpush1.msra.mxu0 %v182
    %1816 = vmatprep.subr.mxu0 %v179
    %1817 = vmatpush1.msra.mxu0 %v178
    %1818 = vmatprep.subr.mxu0 %v175
    %1819 = vmatpush1.msra.mxu0 %v174
    %1820 = vmatprep.subr.mxu0 %v171
    %1821 = vmatpush1.msra.mxu0 %v170
    %1822 = vmatprep.subr.mxu0 %v295
    %1823 = vmatpush2.msra.mxu0 %v294
    %1824 = vmatprep.subr.mxu0 %v291
    %1825 = vmatpush2.msra.mxu0 %v290
    %1826 = vmatprep.subr.mxu0 %v287
    %1827 = vmatpush2.msra.mxu0 %v286
    %1828 = vmatprep.subr.mxu0 %v283
    %1829 = vmatpush2.msra.mxu0 %v282
    %1830 = vmatprep.subr.mxu0 %v279
    %1831 = vmatpush2.msra.mxu0 %v278
    %1832 = vmatprep.subr.mxu0 %v275
    %1833 = vmatpush2.msra.mxu0 %v274
    %1834 = vmatprep.subr.mxu0 %v271
    %1835 = vmatpush2.msra.mxu0 %v270
    %1836 = vmatprep.subr.mxu0 %v267
    %1837 = vmatpush2.msra.mxu0 %v266
    %1838 = vmatprep.subr.mxu0 %v263
    %1839 = vmatpush2.msra.mxu0 %v262
    %1840 = vmatprep.subr.mxu0 %v259
    %1841 = vmatpush2.msra.mxu0 %v258
    %1842 = vmatprep.subr.mxu0 %v255
    %1843 = vmatpush2.msra.mxu0 %v254
    %1844 = vmatprep.subr.mxu0 %v251
    %1845 = vmatpush2.msra.mxu0 %v250
    %1846 = vmatprep.subr.mxu0 %v247
    %1847 = vmatpush2.msra.mxu0 %v246
    %1848 = vmatprep.subr.mxu0 %v243
    %1849 = vmatpush2.msra.mxu0 %v242
    %1850 = vmatprep.subr.mxu0 %v239
    %1851 = vmatpush2.msra.mxu0 %v238
    %1852 = vmatprep.subr.mxu0 %v235
    %1853 = vmatpush2.msra.mxu0 %v234
    %1854 = vmatprep.mubr.f32.mxu0 %v1572
    %1855 = vmatmul.mubr.f32.gmra.mxu0 %v1568
    %v1856 = vpop.f32.mrf.mxu0
    %v1857 = vadd.f32 %v1786, %v1856
    %v1858 = vpop.f32.mrf.mxu0
    %v1859 = vadd.f32 %v1788, %v1858
    %1860 = vdwg.mxu0
    %s1861 = scalar_lea.vmem [#allocation7], 16
    %1862 = vst [vmem:[%s1861] sm:$0x1] %v1715
    %s1863 = scalar_lea.vmem [#allocation7], 17
    %1864 = vst [vmem:[%s1863] sm:$0x1] %v1717
    %s1865 = scalar_lea.vmem [#allocation7], 18
    %1866 = vst [vmem:[%s1865] sm:$0x1] %v1857
    %s1867 = scalar_lea.vmem [#allocation7], 19
    %1868 = vst [vmem:[%s1867] sm:$0x1] %v1859
    %s1869 = scalar_lea.vmem [#allocation5], 20
    %v1870 = vld [vmem:[%s1869] sm:$0xf]
    %v1872 = vlaneseq
    %v1873 = vshrl.u32 %v1872, 7
    %v1874 = vsub.s32 0, %v1873
    %v1875 = vrot.slane %v1870, %v1874
    %v1876 = vlaneseq
    %v1877 = vshrl.u32 %v1876, 7
    %v1878 = vsub.s32 1, %v1877
    %v1879 = vrot.slane %v1870, %v1878
    %v1880 = vlaneseq
    %v1881 = vshrl.u32 %v1880, 7
    %v1882 = vsub.s32 2, %v1881
    %v1883 = vrot.slane %v1870, %v1882
    %v1884 = vlaneseq
    %v1885 = vshrl.u32 %v1884, 7
    %v1886 = vsub.s32 3, %v1885
    %v1887 = vrot.slane %v1870, %v1886
    %1892 = vmatprep.subr.mxu0 %v101
    %1893 = vmatpush1.msra.mxu0 %v100
    %1894 = vmatprep.subr.mxu0 %v97
    %1895 = vmatpush1.msra.mxu0 %v96
    %1896 = vmatprep.subr.mxu0 %v93
    %1897 = vmatpush1.msra.mxu0 %v92
    %1898 = vmatprep.subr.mxu0 %v89
    %1899 = vmatpush1.msra.mxu0 %v88
    %1900 = vmatprep.subr.mxu0 %v85
    %1901 = vmatpush1.msra.mxu0 %v84
    %1902 = vmatprep.subr.mxu0 %v81
    %1903 = vmatpush1.msra.mxu0 %v80
    %1904 = vmatprep.subr.mxu0 %v77
    %1905 = vmatpush1.msra.mxu0 %v76
    %1906 = vmatprep.subr.mxu0 %v73
    %1907 = vmatpush1.msra.mxu0 %v72
    %1908 = vmatprep.subr.mxu0 %v69
    %1909 = vmatpush1.msra.mxu0 %v68
    %1910 = vmatprep.subr.mxu0 %v65
    %1911 = vmatpush1.msra.mxu0 %v64
    %1912 = vmatprep.subr.mxu0 %v61
    %1913 = vmatpush1.msra.mxu0 %v60
    %1914 = vmatprep.subr.mxu0 %v57
    %1915 = vmatpush1.msra.mxu0 %v56
    %1916 = vmatprep.subr.mxu0 %v53
    %1917 = vmatpush1.msra.mxu0 %v52
    %1918 = vmatprep.subr.mxu0 %v49
    %1919 = vmatpush1.msra.mxu0 %v48
    %1920 = vmatprep.subr.mxu0 %v45
    %1921 = vmatpush1.msra.mxu0 %v44
    %1922 = vmatprep.subr.mxu0 %v41
    %1923 = vmatpush1.msra.mxu0 %v40
    %1924 = vmatprep.subr.mxu0 %v165
    %1925 = vmatpush2.msra.mxu0 %v164
    %1926 = vmatprep.subr.mxu0 %v161
    %1927 = vmatpush2.msra.mxu0 %v160
    %1928 = vmatprep.subr.mxu0 %v157
    %1929 = vmatpush2.msra.mxu0 %v156
    %1930 = vmatprep.subr.mxu0 %v153
    %1931 = vmatpush2.msra.mxu0 %v152
    %1932 = vmatprep.subr.mxu0 %v149
    %1933 = vmatpush2.msra.mxu0 %v148
    %1934 = vmatprep.subr.mxu0 %v145
    %1935 = vmatpush2.msra.mxu0 %v144
    %1936 = vmatprep.subr.mxu0 %v141
    %1937 = vmatpush2.msra.mxu0 %v140
    %1938 = vmatprep.subr.mxu0 %v137
    %1939 = vmatpush2.msra.mxu0 %v136
    %1940 = vmatprep.subr.mxu0 %v133
    %1941 = vmatpush2.msra.mxu0 %v132
    %1942 = vmatprep.subr.mxu0 %v129
    %1943 = vmatpush2.msra.mxu0 %v128
    %1944 = vmatprep.subr.mxu0 %v125
    %1945 = vmatpush2.msra.mxu0 %v124
    %1946 = vmatprep.subr.mxu0 %v121
    %1947 = vmatpush2.msra.mxu0 %v120
    %1948 = vmatprep.subr.mxu0 %v117
    %1949 = vmatpush2.msra.mxu0 %v116
    %1950 = vmatprep.subr.mxu0 %v113
    %1951 = vmatpush2.msra.mxu0 %v112
    %1952 = vmatprep.subr.mxu0 %v109
    %1953 = vmatpush2.msra.mxu0 %v108
    %1954 = vmatprep.subr.mxu0 %v105
    %1955 = vmatpush2.msra.mxu0 %v104
    %1956 = vmatprep.mubr.f32.mxu0 %v1879
    %1957 = vmatmul.mubr.f32.gmra.mxu0 %v1875
    %v1958 = vpop.f32.mrf.mxu0
    %v1959 = vadd.f32 0.0, %v1958
    %v1960 = vpop.f32.mrf.mxu0
    %v1961 = vadd.f32 0.0, %v1960
    %1962 = vdwg.mxu0
    %1963 = vmatprep.subr.mxu0 %v229
    %1964 = vmatpush1.msra.mxu0 %v228
    %1965 = vmatprep.subr.mxu0 %v225
    %1966 = vmatpush1.msra.mxu0 %v224
    %1967 = vmatprep.subr.mxu0 %v221
    %1968 = vmatpush1.msra.mxu0 %v220
    %1969 = vmatprep.subr.mxu0 %v217
    %1970 = vmatpush1.msra.mxu0 %v216
    %1971 = vmatprep.subr.mxu0 %v213
    %1972 = vmatpush1.msra.mxu0 %v212
    %1973 = vmatprep.subr.mxu0 %v209
    %1974 = vmatpush1.msra.mxu0 %v208
    %1975 = vmatprep.subr.mxu0 %v205
    %1976 = vmatpush1.msra.mxu0 %v204
    %1977 = vmatprep.subr.mxu0 %v201
    %1978 = vmatpush1.msra.mxu0 %v200
    %1979 = vmatprep.subr.mxu0 %v197
    %1980 = vmatpush1.msra.mxu0 %v196
    %1981 = vmatprep.subr.mxu0 %v193
    %1982 = vmatpush1.msra.mxu0 %v192
    %1983 = vmatprep.subr.mxu0 %v189
    %1984 = vmatpush1.msra.mxu0 %v188
    %1985 = vmatprep.subr.mxu0 %v185
    %1986 = vmatpush1.msra.mxu0 %v184
    %1987 = vmatprep.subr.mxu0 %v181
    %1988 = vmatpush1.msra.mxu0 %v180
    %1989 = vmatprep.subr.mxu0 %v177
    %1990 = vmatpush1.msra.mxu0 %v176
    %1991 = vmatprep.subr.mxu0 %v173
    %1992 = vmatpush1.msra.mxu0 %v172
    %1993 = vmatprep.subr.mxu0 %v169
    %1994 = vmatpush1.msra.mxu0 %v168
    %1995 = vmatprep.subr.mxu0 %v293
    %1996 = vmatpush2.msra.mxu0 %v292
    %1997 = vmatprep.subr.mxu0 %v289
    %1998 = vmatpush2.msra.mxu0 %v288
    %1999 = vmatprep.subr.mxu0 %v285
    %2000 = vmatpush2.msra.mxu0 %v284
    %2001 = vmatprep.subr.mxu0 %v281
    %2002 = vmatpush2.msra.mxu0 %v280
    %2003 = vmatprep.subr.mxu0 %v277
    %2004 = vmatpush2.msra.mxu0 %v276
    %2005 = vmatprep.subr.mxu0 %v273
    %2006 = vmatpush2.msra.mxu0 %v272
    %2007 = vmatprep.subr.mxu0 %v269
    %2008 = vmatpush2.msra.mxu0 %v268
    %2009 = vmatprep.subr.mxu0 %v265
    %2010 = vmatpush2.msra.mxu0 %v264
    %2011 = vmatprep.subr.mxu0 %v261
    %2012 = vmatpush2.msra.mxu0 %v260
    %2013 = vmatprep.subr.mxu0 %v257
    %2014 = vmatpush2.msra.mxu0 %v256
    %2015 = vmatprep.subr.mxu0 %v253
    %2016 = vmatpush2.msra.mxu0 %v252
    %2017 = vmatprep.subr.mxu0 %v249
    %2018 = vmatpush2.msra.mxu0 %v248
    %2019 = vmatprep.subr.mxu0 %v245
    %2020 = vmatpush2.msra.mxu0 %v244
    %2021 = vmatprep.subr.mxu0 %v241
    %2022 = vmatpush2.msra.mxu0 %v240
    %2023 = vmatprep.subr.mxu0 %v237
    %2024 = vmatpush2.msra.mxu0 %v236
    %2025 = vmatprep.subr.mxu0 %v233
    %2026 = vmatpush2.msra.mxu0 %v232
    %2027 = vmatprep.mubr.f32.mxu0 %v1887
    %2028 = vmatmul.mubr.f32.gmra.mxu0 %v1883
    %v2029 = vpop.f32.mrf.mxu0
    %v2030 = vadd.f32 %v1959, %v2029
    %v2031 = vpop.f32.mrf.mxu0
    %v2032 = vadd.f32 %v1961, %v2031
    %2033 = vdwg.mxu0
    %2034 = vmatprep.subr.mxu0 %v103
    %2035 = vmatpush1.msra.mxu0 %v102
    %2036 = vmatprep.subr.mxu0 %v99
    %2037 = vmatpush1.msra.mxu0 %v98
    %2038 = vmatprep.subr.mxu0 %v95
    %2039 = vmatpush1.msra.mxu0 %v94
    %2040 = vmatprep.subr.mxu0 %v91
    %2041 = vmatpush1.msra.mxu0 %v90
    %2042 = vmatprep.subr.mxu0 %v87
    %2043 = vmatpush1.msra.mxu0 %v86
    %2044 = vmatprep.subr.mxu0 %v83
    %2045 = vmatpush1.msra.mxu0 %v82
    %2046 = vmatprep.subr.mxu0 %v79
    %2047 = vmatpush1.msra.mxu0 %v78
    %2048 = vmatprep.subr.mxu0 %v75
    %2049 = vmatpush1.msra.mxu0 %v74
    %2050 = vmatprep.subr.mxu0 %v71
    %2051 = vmatpush1.msra.mxu0 %v70
    %2052 = vmatprep.subr.mxu0 %v67
    %2053 = vmatpush1.msra.mxu0 %v66
    %2054 = vmatprep.subr.mxu0 %v63
    %2055 = vmatpush1.msra.mxu0 %v62
    %2056 = vmatprep.subr.mxu0 %v59
    %2057 = vmatpush1.msra.mxu0 %v58
    %2058 = vmatprep.subr.mxu0 %v55
    %2059 = vmatpush1.msra.mxu0 %v54
    %2060 = vmatprep.subr.mxu0 %v51
    %2061 = vmatpush1.msra.mxu0 %v50
    %2062 = vmatprep.subr.mxu0 %v47
    %2063 = vmatpush1.msra.mxu0 %v46
    %2064 = vmatprep.subr.mxu0 %v43
    %2065 = vmatpush1.msra.mxu0 %v42
    %2066 = vmatprep.subr.mxu0 %v167
    %2067 = vmatpush2.msra.mxu0 %v166
    %2068 = vmatprep.subr.mxu0 %v163
    %2069 = vmatpush2.msra.mxu0 %v162
    %2070 = vmatprep.subr.mxu0 %v159
    %2071 = vmatpush2.msra.mxu0 %v158
    %2072 = vmatprep.subr.mxu0 %v155
    %2073 = vmatpush2.msra.mxu0 %v154
    %2074 = vmatprep.subr.mxu0 %v151
    %2075 = vmatpush2.msra.mxu0 %v150
    %2076 = vmatprep.subr.mxu0 %v147
    %2077 = vmatpush2.msra.mxu0 %v146
    %2078 = vmatprep.subr.mxu0 %v143
    %2079 = vmatpush2.msra.mxu0 %v142
    %2080 = vmatprep.subr.mxu0 %v139
    %2081 = vmatpush2.msra.mxu0 %v138
    %2082 = vmatprep.subr.mxu0 %v135
    %2083 = vmatpush2.msra.mxu0 %v134
    %2084 = vmatprep.subr.mxu0 %v131
    %2085 = vmatpush2.msra.mxu0 %v130
    %2086 = vmatprep.subr.mxu0 %v127
    %2087 = vmatpush2.msra.mxu0 %v126
    %2088 = vmatprep.subr.mxu0 %v123
    %2089 = vmatpush2.msra.mxu0 %v122
    %2090 = vmatprep.subr.mxu0 %v119
    %2091 = vmatpush2.msra.mxu0 %v118
    %2092 = vmatprep.subr.mxu0 %v115
    %2093 = vmatpush2.msra.mxu0 %v114
    %2094 = vmatprep.subr.mxu0 %v111
    %2095 = vmatpush2.msra.mxu0 %v110
    %2096 = vmatprep.subr.mxu0 %v107
    %2097 = vmatpush2.msra.mxu0 %v106
    %2098 = vmatprep.mubr.f32.mxu0 %v1879
    %2099 = vmatmul.mubr.f32.gmra.mxu0 %v1875
    %v2100 = vpop.f32.mrf.mxu0
    %v2101 = vadd.f32 0.0, %v2100
    %v2102 = vpop.f32.mrf.mxu0
    %v2103 = vadd.f32 0.0, %v2102
    %2104 = vdwg.mxu0
    %2105 = vmatprep.subr.mxu0 %v231
    %2106 = vmatpush1.msra.mxu0 %v230
    %2107 = vmatprep.subr.mxu0 %v227
    %2108 = vmatpush1.msra.mxu0 %v226
    %2109 = vmatprep.subr.mxu0 %v223
    %2110 = vmatpush1.msra.mxu0 %v222
    %2111 = vmatprep.subr.mxu0 %v219
    %2112 = vmatpush1.msra.mxu0 %v218
    %2113 = vmatprep.subr.mxu0 %v215
    %2114 = vmatpush1.msra.mxu0 %v214
    %2115 = vmatprep.subr.mxu0 %v211
    %2116 = vmatpush1.msra.mxu0 %v210
    %2117 = vmatprep.subr.mxu0 %v207
    %2118 = vmatpush1.msra.mxu0 %v206
    %2119 = vmatprep.subr.mxu0 %v203
    %2120 = vmatpush1.msra.mxu0 %v202
    %2121 = vmatprep.subr.mxu0 %v199
    %2122 = vmatpush1.msra.mxu0 %v198
    %2123 = vmatprep.subr.mxu0 %v195
    %2124 = vmatpush1.msra.mxu0 %v194
    %2125 = vmatprep.subr.mxu0 %v191
    %2126 = vmatpush1.msra.mxu0 %v190
    %2127 = vmatprep.subr.mxu0 %v187
    %2128 = vmatpush1.msra.mxu0 %v186
    %2129 = vmatprep.subr.mxu0 %v183
    %2130 = vmatpush1.msra.mxu0 %v182
    %2131 = vmatprep.subr.mxu0 %v179
    %2132 = vmatpush1.msra.mxu0 %v178
    %2133 = vmatprep.subr.mxu0 %v175
    %2134 = vmatpush1.msra.mxu0 %v174
    %2135 = vmatprep.subr.mxu0 %v171
    %2136 = vmatpush1.msra.mxu0 %v170
    %2137 = vmatprep.subr.mxu0 %v295
    %2138 = vmatpush2.msra.mxu0 %v294
    %2139 = vmatprep.subr.mxu0 %v291
    %2140 = vmatpush2.msra.mxu0 %v290
    %2141 = vmatprep.subr.mxu0 %v287
    %2142 = vmatpush2.msra.mxu0 %v286
    %2143 = vmatprep.subr.mxu0 %v283
    %2144 = vmatpush2.msra.mxu0 %v282
    %2145 = vmatprep.subr.mxu0 %v279
    %2146 = vmatpush2.msra.mxu0 %v278
    %2147 = vmatprep.subr.mxu0 %v275
    %2148 = vmatpush2.msra.mxu0 %v274
    %2149 = vmatprep.subr.mxu0 %v271
    %2150 = vmatpush2.msra.mxu0 %v270
    %2151 = vmatprep.subr.mxu0 %v267
    %2152 = vmatpush2.msra.mxu0 %v266
    %2153 = vmatprep.subr.mxu0 %v263
    %2154 = vmatpush2.msra.mxu0 %v262
    %2155 = vmatprep.subr.mxu0 %v259
    %2156 = vmatpush2.msra.mxu0 %v258
    %2157 = vmatprep.subr.mxu0 %v255
    %2158 = vmatpush2.msra.mxu0 %v254
    %2159 = vmatprep.subr.mxu0 %v251
    %2160 = vmatpush2.msra.mxu0 %v250
    %2161 = vmatprep.subr.mxu0 %v247
    %2162 = vmatpush2.msra.mxu0 %v246
    %2163 = vmatprep.subr.mxu0 %v243
    %2164 = vmatpush2.msra.mxu0 %v242
    %2165 = vmatprep.subr.mxu0 %v239
    %2166 = vmatpush2.msra.mxu0 %v238
    %2167 = vmatprep.subr.mxu0 %v235
    %2168 = vmatpush2.msra.mxu0 %v234
    %2169 = vmatprep.mubr.f32.mxu0 %v1887
    %2170 = vmatmul.mubr.f32.gmra.mxu0 %v1883
    %v2171 = vpop.f32.mrf.mxu0
    %v2172 = vadd.f32 %v2101, %v2171
    %v2173 = vpop.f32.mrf.mxu0
    %v2174 = vadd.f32 %v2103, %v2173
    %2175 = vdwg.mxu0
    %s2176 = scalar_lea.vmem [#allocation7], 20
    %2177 = vst [vmem:[%s2176] sm:$0x1] %v2030
    %s2178 = scalar_lea.vmem [#allocation7], 21
    %2179 = vst [vmem:[%s2178] sm:$0x1] %v2032
    %s2180 = scalar_lea.vmem [#allocation7], 22
    %2181 = vst [vmem:[%s2180] sm:$0x1] %v2172
    %s2182 = scalar_lea.vmem [#allocation7], 23
    %2183 = vst [vmem:[%s2182] sm:$0x1] %v2174
    %s2184 = scalar_lea.vmem [#allocation5], 24
    %v2185 = vld [vmem:[%s2184] sm:$0xf]
    %v2187 = vlaneseq
    %v2188 = vshrl.u32 %v2187, 7
    %v2189 = vsub.s32 0, %v2188
    %v2190 = vrot.slane %v2185, %v2189
    %v2191 = vlaneseq
    %v2192 = vshrl.u32 %v2191, 7
    %v2193 = vsub.s32 1, %v2192
    %v2194 = vrot.slane %v2185, %v2193
    %v2195 = vlaneseq
    %v2196 = vshrl.u32 %v2195, 7
    %v2197 = vsub.s32 2, %v2196
    %v2198 = vrot.slane %v2185, %v2197
    %v2199 = vlaneseq
    %v2200 = vshrl.u32 %v2199, 7
    %v2201 = vsub.s32 3, %v2200
    %v2202 = vrot.slane %v2185, %v2201
    %2207 = vmatprep.subr.mxu0 %v101
    %2208 = vmatpush1.msra.mxu0 %v100
    %2209 = vmatprep.subr.mxu0 %v97
    %2210 = vmatpush1.msra.mxu0 %v96
    %2211 = vmatprep.subr.mxu0 %v93
    %2212 = vmatpush1.msra.mxu0 %v92
    %2213 = vmatprep.subr.mxu0 %v89
    %2214 = vmatpush1.msra.mxu0 %v88
    %2215 = vmatprep.subr.mxu0 %v85
    %2216 = vmatpush1.msra.mxu0 %v84
    %2217 = vmatprep.subr.mxu0 %v81
    %2218 = vmatpush1.msra.mxu0 %v80
    %2219 = vmatprep.subr.mxu0 %v77
    %2220 = vmatpush1.msra.mxu0 %v76
    %2221 = vmatprep.subr.mxu0 %v73
    %2222 = vmatpush1.msra.mxu0 %v72
    %2223 = vmatprep.subr.mxu0 %v69
    %2224 = vmatpush1.msra.mxu0 %v68
    %2225 = vmatprep.subr.mxu0 %v65
    %2226 = vmatpush1.msra.mxu0 %v64
    %2227 = vmatprep.subr.mxu0 %v61
    %2228 = vmatpush1.msra.mxu0 %v60
    %2229 = vmatprep.subr.mxu0 %v57
    %2230 = vmatpush1.msra.mxu0 %v56
    %2231 = vmatprep.subr.mxu0 %v53
    %2232 = vmatpush1.msra.mxu0 %v52
    %2233 = vmatprep.subr.mxu0 %v49
    %2234 = vmatpush1.msra.mxu0 %v48
    %2235 = vmatprep.subr.mxu0 %v45
    %2236 = vmatpush1.msra.mxu0 %v44
    %2237 = vmatprep.subr.mxu0 %v41
    %2238 = vmatpush1.msra.mxu0 %v40
    %2239 = vmatprep.subr.mxu0 %v165
    %2240 = vmatpush2.msra.mxu0 %v164
    %2241 = vmatprep.subr.mxu0 %v161
    %2242 = vmatpush2.msra.mxu0 %v160
    %2243 = vmatprep.subr.mxu0 %v157
    %2244 = vmatpush2.msra.mxu0 %v156
    %2245 = vmatprep.subr.mxu0 %v153
    %2246 = vmatpush2.msra.mxu0 %v152
    %2247 = vmatprep.subr.mxu0 %v149
    %2248 = vmatpush2.msra.mxu0 %v148
    %2249 = vmatprep.subr.mxu0 %v145
    %2250 = vmatpush2.msra.mxu0 %v144
    %2251 = vmatprep.subr.mxu0 %v141
    %2252 = vmatpush2.msra.mxu0 %v140
    %2253 = vmatprep.subr.mxu0 %v137
    %2254 = vmatpush2.msra.mxu0 %v136
    %2255 = vmatprep.subr.mxu0 %v133
    %2256 = vmatpush2.msra.mxu0 %v132
    %2257 = vmatprep.subr.mxu0 %v129
    %2258 = vmatpush2.msra.mxu0 %v128
    %2259 = vmatprep.subr.mxu0 %v125
    %2260 = vmatpush2.msra.mxu0 %v124
    %2261 = vmatprep.subr.mxu0 %v121
    %2262 = vmatpush2.msra.mxu0 %v120
    %2263 = vmatprep.subr.mxu0 %v117
    %2264 = vmatpush2.msra.mxu0 %v116
    %2265 = vmatprep.subr.mxu0 %v113
    %2266 = vmatpush2.msra.mxu0 %v112
    %2267 = vmatprep.subr.mxu0 %v109
    %2268 = vmatpush2.msra.mxu0 %v108
    %2269 = vmatprep.subr.mxu0 %v105
    %2270 = vmatpush2.msra.mxu0 %v104
    %2271 = vmatprep.mubr.f32.mxu0 %v2194
    %2272 = vmatmul.mubr.f32.gmra.mxu0 %v2190
    %v2273 = vpop.f32.mrf.mxu0
    %v2274 = vadd.f32 0.0, %v2273
    %v2275 = vpop.f32.mrf.mxu0
    %v2276 = vadd.f32 0.0, %v2275
    %2277 = vdwg.mxu0
    %2278 = vmatprep.subr.mxu0 %v229
    %2279 = vmatpush1.msra.mxu0 %v228
    %2280 = vmatprep.subr.mxu0 %v225
    %2281 = vmatpush1.msra.mxu0 %v224
    %2282 = vmatprep.subr.mxu0 %v221
    %2283 = vmatpush1.msra.mxu0 %v220
    %2284 = vmatprep.subr.mxu0 %v217
    %2285 = vmatpush1.msra.mxu0 %v216
    %2286 = vmatprep.subr.mxu0 %v213
    %2287 = vmatpush1.msra.mxu0 %v212
    %2288 = vmatprep.subr.mxu0 %v209
    %2289 = vmatpush1.msra.mxu0 %v208
    %2290 = vmatprep.subr.mxu0 %v205
    %2291 = vmatpush1.msra.mxu0 %v204
    %2292 = vmatprep.subr.mxu0 %v201
    %2293 = vmatpush1.msra.mxu0 %v200
    %2294 = vmatprep.subr.mxu0 %v197
    %2295 = vmatpush1.msra.mxu0 %v196
    %2296 = vmatprep.subr.mxu0 %v193
    %2297 = vmatpush1.msra.mxu0 %v192
    %2298 = vmatprep.subr.mxu0 %v189
    %2299 = vmatpush1.msra.mxu0 %v188
    %2300 = vmatprep.subr.mxu0 %v185
    %2301 = vmatpush1.msra.mxu0 %v184
    %2302 = vmatprep.subr.mxu0 %v181
    %2303 = vmatpush1.msra.mxu0 %v180
    %2304 = vmatprep.subr.mxu0 %v177
    %2305 = vmatpush1.msra.mxu0 %v176
    %2306 = vmatprep.subr.mxu0 %v173
    %2307 = vmatpush1.msra.mxu0 %v172
    %2308 = vmatprep.subr.mxu0 %v169
    %2309 = vmatpush1.msra.mxu0 %v168
    %2310 = vmatprep.subr.mxu0 %v293
    %2311 = vmatpush2.msra.mxu0 %v292
    %2312 = vmatprep.subr.mxu0 %v289
    %2313 = vmatpush2.msra.mxu0 %v288
    %2314 = vmatprep.subr.mxu0 %v285
    %2315 = vmatpush2.msra.mxu0 %v284
    %2316 = vmatprep.subr.mxu0 %v281
    %2317 = vmatpush2.msra.mxu0 %v280
    %2318 = vmatprep.subr.mxu0 %v277
    %2319 = vmatpush2.msra.mxu0 %v276
    %2320 = vmatprep.subr.mxu0 %v273
    %2321 = vmatpush2.msra.mxu0 %v272
    %2322 = vmatprep.subr.mxu0 %v269
    %2323 = vmatpush2.msra.mxu0 %v268
    %2324 = vmatprep.subr.mxu0 %v265
    %2325 = vmatpush2.msra.mxu0 %v264
    %2326 = vmatprep.subr.mxu0 %v261
    %2327 = vmatpush2.msra.mxu0 %v260
    %2328 = vmatprep.subr.mxu0 %v257
    %2329 = vmatpush2.msra.mxu0 %v256
    %2330 = vmatprep.subr.mxu0 %v253
    %2331 = vmatpush2.msra.mxu0 %v252
    %2332 = vmatprep.subr.mxu0 %v249
    %2333 = vmatpush2.msra.mxu0 %v248
    %2334 = vmatprep.subr.mxu0 %v245
    %2335 = vmatpush2.msra.mxu0 %v244
    %2336 = vmatprep.subr.mxu0 %v241
    %2337 = vmatpush2.msra.mxu0 %v240
    %2338 = vmatprep.subr.mxu0 %v237
    %2339 = vmatpush2.msra.mxu0 %v236
    %2340 = vmatprep.subr.mxu0 %v233
    %2341 = vmatpush2.msra.mxu0 %v232
    %2342 = vmatprep.mubr.f32.mxu0 %v2202
    %2343 = vmatmul.mubr.f32.gmra.mxu0 %v2198
    %v2344 = vpop.f32.mrf.mxu0
    %v2345 = vadd.f32 %v2274, %v2344
    %v2346 = vpop.f32.mrf.mxu0
    %v2347 = vadd.f32 %v2276, %v2346
    %2348 = vdwg.mxu0
    %2349 = vmatprep.subr.mxu0 %v103
    %2350 = vmatpush1.msra.mxu0 %v102
    %2351 = vmatprep.subr.mxu0 %v99
    %2352 = vmatpush1.msra.mxu0 %v98
    %2353 = vmatprep.subr.mxu0 %v95
    %2354 = vmatpush1.msra.mxu0 %v94
    %2355 = vmatprep.subr.mxu0 %v91
    %2356 = vmatpush1.msra.mxu0 %v90
    %2357 = vmatprep.subr.mxu0 %v87
    %2358 = vmatpush1.msra.mxu0 %v86
    %2359 = vmatprep.subr.mxu0 %v83
    %2360 = vmatpush1.msra.mxu0 %v82
    %2361 = vmatprep.subr.mxu0 %v79
    %2362 = vmatpush1.msra.mxu0 %v78
    %2363 = vmatprep.subr.mxu0 %v75
    %2364 = vmatpush1.msra.mxu0 %v74
    %2365 = vmatprep.subr.mxu0 %v71
    %2366 = vmatpush1.msra.mxu0 %v70
    %2367 = vmatprep.subr.mxu0 %v67
    %2368 = vmatpush1.msra.mxu0 %v66
    %2369 = vmatprep.subr.mxu0 %v63
    %2370 = vmatpush1.msra.mxu0 %v62
    %2371 = vmatprep.subr.mxu0 %v59
    %2372 = vmatpush1.msra.mxu0 %v58
    %2373 = vmatprep.subr.mxu0 %v55
    %2374 = vmatpush1.msra.mxu0 %v54
    %2375 = vmatprep.subr.mxu0 %v51
    %2376 = vmatpush1.msra.mxu0 %v50
    %2377 = vmatprep.subr.mxu0 %v47
    %2378 = vmatpush1.msra.mxu0 %v46
    %2379 = vmatprep.subr.mxu0 %v43
    %2380 = vmatpush1.msra.mxu0 %v42
    %2381 = vmatprep.subr.mxu0 %v167
    %2382 = vmatpush2.msra.mxu0 %v166
    %2383 = vmatprep.subr.mxu0 %v163
    %2384 = vmatpush2.msra.mxu0 %v162
    %2385 = vmatprep.subr.mxu0 %v159
    %2386 = vmatpush2.msra.mxu0 %v158
    %2387 = vmatprep.subr.mxu0 %v155
    %2388 = vmatpush2.msra.mxu0 %v154
    %2389 = vmatprep.subr.mxu0 %v151
    %2390 = vmatpush2.msra.mxu0 %v150
    %2391 = vmatprep.subr.mxu0 %v147
    %2392 = vmatpush2.msra.mxu0 %v146
    %2393 = vmatprep.subr.mxu0 %v143
    %2394 = vmatpush2.msra.mxu0 %v142
    %2395 = vmatprep.subr.mxu0 %v139
    %2396 = vmatpush2.msra.mxu0 %v138
    %2397 = vmatprep.subr.mxu0 %v135
    %2398 = vmatpush2.msra.mxu0 %v134
    %2399 = vmatprep.subr.mxu0 %v131
    %2400 = vmatpush2.msra.mxu0 %v130
    %2401 = vmatprep.subr.mxu0 %v127
    %2402 = vmatpush2.msra.mxu0 %v126
    %2403 = vmatprep.subr.mxu0 %v123
    %2404 = vmatpush2.msra.mxu0 %v122
    %2405 = vmatprep.subr.mxu0 %v119
    %2406 = vmatpush2.msra.mxu0 %v118
    %2407 = vmatprep.subr.mxu0 %v115
    %2408 = vmatpush2.msra.mxu0 %v114
    %2409 = vmatprep.subr.mxu0 %v111
    %2410 = vmatpush2.msra.mxu0 %v110
    %2411 = vmatprep.subr.mxu0 %v107
    %2412 = vmatpush2.msra.mxu0 %v106
    %2413 = vmatprep.mubr.f32.mxu0 %v2194
    %2414 = vmatmul.mubr.f32.gmra.mxu0 %v2190
    %v2415 = vpop.f32.mrf.mxu0
    %v2416 = vadd.f32 0.0, %v2415
    %v2417 = vpop.f32.mrf.mxu0
    %v2418 = vadd.f32 0.0, %v2417
    %2419 = vdwg.mxu0
    %2420 = vmatprep.subr.mxu0 %v231
    %2421 = vmatpush1.msra.mxu0 %v230
    %2422 = vmatprep.subr.mxu0 %v227
    %2423 = vmatpush1.msra.mxu0 %v226
    %2424 = vmatprep.subr.mxu0 %v223
    %2425 = vmatpush1.msra.mxu0 %v222
    %2426 = vmatprep.subr.mxu0 %v219
    %2427 = vmatpush1.msra.mxu0 %v218
    %2428 = vmatprep.subr.mxu0 %v215
    %2429 = vmatpush1.msra.mxu0 %v214
    %2430 = vmatprep.subr.mxu0 %v211
    %2431 = vmatpush1.msra.mxu0 %v210
    %2432 = vmatprep.subr.mxu0 %v207
    %2433 = vmatpush1.msra.mxu0 %v206
    %2434 = vmatprep.subr.mxu0 %v203
    %2435 = vmatpush1.msra.mxu0 %v202
    %2436 = vmatprep.subr.mxu0 %v199
    %2437 = vmatpush1.msra.mxu0 %v198
    %2438 = vmatprep.subr.mxu0 %v195
    %2439 = vmatpush1.msra.mxu0 %v194
    %2440 = vmatprep.subr.mxu0 %v191
    %2441 = vmatpush1.msra.mxu0 %v190
    %2442 = vmatprep.subr.mxu0 %v187
    %2443 = vmatpush1.msra.mxu0 %v186
    %2444 = vmatprep.subr.mxu0 %v183
    %2445 = vmatpush1.msra.mxu0 %v182
    %2446 = vmatprep.subr.mxu0 %v179
    %2447 = vmatpush1.msra.mxu0 %v178
    %2448 = vmatprep.subr.mxu0 %v175
    %2449 = vmatpush1.msra.mxu0 %v174
    %2450 = vmatprep.subr.mxu0 %v171
    %2451 = vmatpush1.msra.mxu0 %v170
    %2452 = vmatprep.subr.mxu0 %v295
    %2453 = vmatpush2.msra.mxu0 %v294
    %2454 = vmatprep.subr.mxu0 %v291
    %2455 = vmatpush2.msra.mxu0 %v290
    %2456 = vmatprep.subr.mxu0 %v287
    %2457 = vmatpush2.msra.mxu0 %v286
    %2458 = vmatprep.subr.mxu0 %v283
    %2459 = vmatpush2.msra.mxu0 %v282
    %2460 = vmatprep.subr.mxu0 %v279
    %2461 = vmatpush2.msra.mxu0 %v278
    %2462 = vmatprep.subr.mxu0 %v275
    %2463 = vmatpush2.msra.mxu0 %v274
    %2464 = vmatprep.subr.mxu0 %v271
    %2465 = vmatpush2.msra.mxu0 %v270
    %2466 = vmatprep.subr.mxu0 %v267
    %2467 = vmatpush2.msra.mxu0 %v266
    %2468 = vmatprep.subr.mxu0 %v263
    %2469 = vmatpush2.msra.mxu0 %v262
    %2470 = vmatprep.subr.mxu0 %v259
    %2471 = vmatpush2.msra.mxu0 %v258
    %2472 = vmatprep.subr.mxu0 %v255
    %2473 = vmatpush2.msra.mxu0 %v254
    %2474 = vmatprep.subr.mxu0 %v251
    %2475 = vmatpush2.msra.mxu0 %v250
    %2476 = vmatprep.subr.mxu0 %v247
    %2477 = vmatpush2.msra.mxu0 %v246
    %2478 = vmatprep.subr.mxu0 %v243
    %2479 = vmatpush2.msra.mxu0 %v242
    %2480 = vmatprep.subr.mxu0 %v239
    %2481 = vmatpush2.msra.mxu0 %v238
    %2482 = vmatprep.subr.mxu0 %v235
    %2483 = vmatpush2.msra.mxu0 %v234
    %2484 = vmatprep.mubr.f32.mxu0 %v2202
    %2485 = vmatmul.mubr.f32.gmra.mxu0 %v2198
    %v2486 = vpop.f32.mrf.mxu0
    %v2487 = vadd.f32 %v2416, %v2486
    %v2488 = vpop.f32.mrf.mxu0
    %v2489 = vadd.f32 %v2418, %v2488
    %2490 = vdwg.mxu0
    %s2491 = scalar_lea.vmem [#allocation7], 24
    %2492 = vst [vmem:[%s2491] sm:$0x1] %v2345
    %s2493 = scalar_lea.vmem [#allocation7], 25
    %2494 = vst [vmem:[%s2493] sm:$0x1] %v2347
    %s2495 = scalar_lea.vmem [#allocation7], 26
    %2496 = vst [vmem:[%s2495] sm:$0x1] %v2487
    %s2497 = scalar_lea.vmem [#allocation7], 27
    %2498 = vst [vmem:[%s2497] sm:$0x1] %v2489
    %s2499 = scalar_lea.vmem [#allocation5], 28
    %v2500 = vld [vmem:[%s2499] sm:$0xf]
    %v2502 = vlaneseq
    %v2503 = vshrl.u32 %v2502, 7
    %v2504 = vsub.s32 0, %v2503
    %v2505 = vrot.slane %v2500, %v2504
    %v2506 = vlaneseq
    %v2507 = vshrl.u32 %v2506, 7
    %v2508 = vsub.s32 1, %v2507
    %v2509 = vrot.slane %v2500, %v2508
    %v2510 = vlaneseq
    %v2511 = vshrl.u32 %v2510, 7
    %v2512 = vsub.s32 2, %v2511
    %v2513 = vrot.slane %v2500, %v2512
    %v2514 = vlaneseq
    %v2515 = vshrl.u32 %v2514, 7
    %v2516 = vsub.s32 3, %v2515
    %v2517 = vrot.slane %v2500, %v2516
    %2522 = vmatprep.subr.mxu0 %v101
    %2523 = vmatpush1.msra.mxu0 %v100
    %2524 = vmatprep.subr.mxu0 %v97
    %2525 = vmatpush1.msra.mxu0 %v96
    %2526 = vmatprep.subr.mxu0 %v93
    %2527 = vmatpush1.msra.mxu0 %v92
    %2528 = vmatprep.subr.mxu0 %v89
    %2529 = vmatpush1.msra.mxu0 %v88
    %2530 = vmatprep.subr.mxu0 %v85
    %2531 = vmatpush1.msra.mxu0 %v84
    %2532 = vmatprep.subr.mxu0 %v81
    %2533 = vmatpush1.msra.mxu0 %v80
    %2534 = vmatprep.subr.mxu0 %v77
    %2535 = vmatpush1.msra.mxu0 %v76
    %2536 = vmatprep.subr.mxu0 %v73
    %2537 = vmatpush1.msra.mxu0 %v72
    %2538 = vmatprep.subr.mxu0 %v69
    %2539 = vmatpush1.msra.mxu0 %v68
    %2540 = vmatprep.subr.mxu0 %v65
    %2541 = vmatpush1.msra.mxu0 %v64
    %2542 = vmatprep.subr.mxu0 %v61
    %2543 = vmatpush1.msra.mxu0 %v60
    %2544 = vmatprep.subr.mxu0 %v57
    %2545 = vmatpush1.msra.mxu0 %v56
    %2546 = vmatprep.subr.mxu0 %v53
    %2547 = vmatpush1.msra.mxu0 %v52
    %2548 = vmatprep.subr.mxu0 %v49
    %2549 = vmatpush1.msra.mxu0 %v48
    %2550 = vmatprep.subr.mxu0 %v45
    %2551 = vmatpush1.msra.mxu0 %v44
    %2552 = vmatprep.subr.mxu0 %v41
    %2553 = vmatpush1.msra.mxu0 %v40
    %2554 = vmatprep.subr.mxu0 %v165
    %2555 = vmatpush2.msra.mxu0 %v164
    %2556 = vmatprep.subr.mxu0 %v161
    %2557 = vmatpush2.msra.mxu0 %v160
    %2558 = vmatprep.subr.mxu0 %v157
    %2559 = vmatpush2.msra.mxu0 %v156
    %2560 = vmatprep.subr.mxu0 %v153
    %2561 = vmatpush2.msra.mxu0 %v152
    %2562 = vmatprep.subr.mxu0 %v149
    %2563 = vmatpush2.msra.mxu0 %v148
    %2564 = vmatprep.subr.mxu0 %v145
    %2565 = vmatpush2.msra.mxu0 %v144
    %2566 = vmatprep.subr.mxu0 %v141
    %2567 = vmatpush2.msra.mxu0 %v140
    %2568 = vmatprep.subr.mxu0 %v137
    %2569 = vmatpush2.msra.mxu0 %v136
    %2570 = vmatprep.subr.mxu0 %v133
    %2571 = vmatpush2.msra.mxu0 %v132
    %2572 = vmatprep.subr.mxu0 %v129
    %2573 = vmatpush2.msra.mxu0 %v128
    %2574 = vmatprep.subr.mxu0 %v125
    %2575 = vmatpush2.msra.mxu0 %v124
    %2576 = vmatprep.subr.mxu0 %v121
    %2577 = vmatpush2.msra.mxu0 %v120
    %2578 = vmatprep.subr.mxu0 %v117
    %2579 = vmatpush2.msra.mxu0 %v116
    %2580 = vmatprep.subr.mxu0 %v113
    %2581 = vmatpush2.msra.mxu0 %v112
    %2582 = vmatprep.subr.mxu0 %v109
    %2583 = vmatpush2.msra.mxu0 %v108
    %2584 = vmatprep.subr.mxu0 %v105
    %2585 = vmatpush2.msra.mxu0 %v104
    %2586 = vmatprep.mubr.f32.mxu0 %v2509
    %2587 = vmatmul.mubr.f32.gmra.mxu0 %v2505
    %v2588 = vpop.f32.mrf.mxu0
    %v2589 = vadd.f32 0.0, %v2588
    %v2590 = vpop.f32.mrf.mxu0
    %v2591 = vadd.f32 0.0, %v2590
    %2592 = vdwg.mxu0
    %2593 = vmatprep.subr.mxu0 %v229
    %2594 = vmatpush1.msra.mxu0 %v228
    %2595 = vmatprep.subr.mxu0 %v225
    %2596 = vmatpush1.msra.mxu0 %v224
    %2597 = vmatprep.subr.mxu0 %v221
    %2598 = vmatpush1.msra.mxu0 %v220
    %2599 = vmatprep.subr.mxu0 %v217
    %2600 = vmatpush1.msra.mxu0 %v216
    %2601 = vmatprep.subr.mxu0 %v213
    %2602 = vmatpush1.msra.mxu0 %v212
    %2603 = vmatprep.subr.mxu0 %v209
    %2604 = vmatpush1.msra.mxu0 %v208
    %2605 = vmatprep.subr.mxu0 %v205
    %2606 = vmatpush1.msra.mxu0 %v204
    %2607 = vmatprep.subr.mxu0 %v201
    %2608 = vmatpush1.msra.mxu0 %v200
    %2609 = vmatprep.subr.mxu0 %v197
    %2610 = vmatpush1.msra.mxu0 %v196
    %2611 = vmatprep.subr.mxu0 %v193
    %2612 = vmatpush1.msra.mxu0 %v192
    %2613 = vmatprep.subr.mxu0 %v189
    %2614 = vmatpush1.msra.mxu0 %v188
    %2615 = vmatprep.subr.mxu0 %v185
    %2616 = vmatpush1.msra.mxu0 %v184
    %2617 = vmatprep.subr.mxu0 %v181
    %2618 = vmatpush1.msra.mxu0 %v180
    %2619 = vmatprep.subr.mxu0 %v177
    %2620 = vmatpush1.msra.mxu0 %v176
    %2621 = vmatprep.subr.mxu0 %v173
    %2622 = vmatpush1.msra.mxu0 %v172
    %2623 = vmatprep.subr.mxu0 %v169
    %2624 = vmatpush1.msra.mxu0 %v168
    %2625 = vmatprep.subr.mxu0 %v293
    %2626 = vmatpush2.msra.mxu0 %v292
    %2627 = vmatprep.subr.mxu0 %v289
    %2628 = vmatpush2.msra.mxu0 %v288
    %2629 = vmatprep.subr.mxu0 %v285
    %2630 = vmatpush2.msra.mxu0 %v284
    %2631 = vmatprep.subr.mxu0 %v281
    %2632 = vmatpush2.msra.mxu0 %v280
    %2633 = vmatprep.subr.mxu0 %v277
    %2634 = vmatpush2.msra.mxu0 %v276
    %2635 = vmatprep.subr.mxu0 %v273
    %2636 = vmatpush2.msra.mxu0 %v272
    %2637 = vmatprep.subr.mxu0 %v269
    %2638 = vmatpush2.msra.mxu0 %v268
    %2639 = vmatprep.subr.mxu0 %v265
    %2640 = vmatpush2.msra.mxu0 %v264
    %2641 = vmatprep.subr.mxu0 %v261
    %2642 = vmatpush2.msra.mxu0 %v260
    %2643 = vmatprep.subr.mxu0 %v257
    %2644 = vmatpush2.msra.mxu0 %v256
    %2645 = vmatprep.subr.mxu0 %v253
    %2646 = vmatpush2.msra.mxu0 %v252
    %2647 = vmatprep.subr.mxu0 %v249
    %2648 = vmatpush2.msra.mxu0 %v248
    %2649 = vmatprep.subr.mxu0 %v245
    %2650 = vmatpush2.msra.mxu0 %v244
    %2651 = vmatprep.subr.mxu0 %v241
    %2652 = vmatpush2.msra.mxu0 %v240
    %2653 = vmatprep.subr.mxu0 %v237
    %2654 = vmatpush2.msra.mxu0 %v236
    %2655 = vmatprep.subr.mxu0 %v233
    %2656 = vmatpush2.msra.mxu0 %v232
    %2657 = vmatprep.mubr.f32.mxu0 %v2517
    %2658 = vmatmul.mubr.f32.gmra.mxu0 %v2513
    %v2659 = vpop.f32.mrf.mxu0
    %v2660 = vadd.f32 %v2589, %v2659
    %v2661 = vpop.f32.mrf.mxu0
    %v2662 = vadd.f32 %v2591, %v2661
    %2663 = vdwg.mxu0
    %2664 = vmatprep.subr.mxu0 %v103
    %2665 = vmatpush1.msra.mxu0 %v102
    %2666 = vmatprep.subr.mxu0 %v99
    %2667 = vmatpush1.msra.mxu0 %v98
    %2668 = vmatprep.subr.mxu0 %v95
    %2669 = vmatpush1.msra.mxu0 %v94
    %2670 = vmatprep.subr.mxu0 %v91
    %2671 = vmatpush1.msra.mxu0 %v90
    %2672 = vmatprep.subr.mxu0 %v87
    %2673 = vmatpush1.msra.mxu0 %v86
    %2674 = vmatprep.subr.mxu0 %v83
    %2675 = vmatpush1.msra.mxu0 %v82
    %2676 = vmatprep.subr.mxu0 %v79
    %2677 = vmatpush1.msra.mxu0 %v78
    %2678 = vmatprep.subr.mxu0 %v75
    %2679 = vmatpush1.msra.mxu0 %v74
    %2680 = vmatprep.subr.mxu0 %v71
    %2681 = vmatpush1.msra.mxu0 %v70
    %2682 = vmatprep.subr.mxu0 %v67
    %2683 = vmatpush1.msra.mxu0 %v66
    %2684 = vmatprep.subr.mxu0 %v63
    %2685 = vmatpush1.msra.mxu0 %v62
    %2686 = vmatprep.subr.mxu0 %v59
    %2687 = vmatpush1.msra.mxu0 %v58
    %2688 = vmatprep.subr.mxu0 %v55
    %2689 = vmatpush1.msra.mxu0 %v54
    %2690 = vmatprep.subr.mxu0 %v51
    %2691 = vmatpush1.msra.mxu0 %v50
    %2692 = vmatprep.subr.mxu0 %v47
    %2693 = vmatpush1.msra.mxu0 %v46
    %2694 = vmatprep.subr.mxu0 %v43
    %2695 = vmatpush1.msra.mxu0 %v42
    %2696 = vmatprep.subr.mxu0 %v167
    %2697 = vmatpush2.msra.mxu0 %v166
    %2698 = vmatprep.subr.mxu0 %v163
    %2699 = vmatpush2.msra.mxu0 %v162
    %2700 = vmatprep.subr.mxu0 %v159
    %2701 = vmatpush2.msra.mxu0 %v158
    %2702 = vmatprep.subr.mxu0 %v155
    %2703 = vmatpush2.msra.mxu0 %v154
    %2704 = vmatprep.subr.mxu0 %v151
    %2705 = vmatpush2.msra.mxu0 %v150
    %2706 = vmatprep.subr.mxu0 %v147
    %2707 = vmatpush2.msra.mxu0 %v146
    %2708 = vmatprep.subr.mxu0 %v143
    %2709 = vmatpush2.msra.mxu0 %v142
    %2710 = vmatprep.subr.mxu0 %v139
    %2711 = vmatpush2.msra.mxu0 %v138
    %2712 = vmatprep.subr.mxu0 %v135
    %2713 = vmatpush2.msra.mxu0 %v134
    %2714 = vmatprep.subr.mxu0 %v131
    %2715 = vmatpush2.msra.mxu0 %v130
    %2716 = vmatprep.subr.mxu0 %v127
    %2717 = vmatpush2.msra.mxu0 %v126
    %2718 = vmatprep.subr.mxu0 %v123
    %2719 = vmatpush2.msra.mxu0 %v122
    %2720 = vmatprep.subr.mxu0 %v119
    %2721 = vmatpush2.msra.mxu0 %v118
    %2722 = vmatprep.subr.mxu0 %v115
    %2723 = vmatpush2.msra.mxu0 %v114
    %2724 = vmatprep.subr.mxu0 %v111
    %2725 = vmatpush2.msra.mxu0 %v110
    %2726 = vmatprep.subr.mxu0 %v107
    %2727 = vmatpush2.msra.mxu0 %v106
    %2728 = vmatprep.mubr.f32.mxu0 %v2509
    %2729 = vmatmul.mubr.f32.gmra.mxu0 %v2505
    %v2730 = vpop.f32.mrf.mxu0
    %v2731 = vadd.f32 0.0, %v2730
    %v2732 = vpop.f32.mrf.mxu0
    %v2733 = vadd.f32 0.0, %v2732
    %2734 = vdwg.mxu0
    %2735 = vmatprep.subr.mxu0 %v231
    %2736 = vmatpush1.msra.mxu0 %v230
    %2737 = vmatprep.subr.mxu0 %v227
    %2738 = vmatpush1.msra.mxu0 %v226
    %2739 = vmatprep.subr.mxu0 %v223
    %2740 = vmatpush1.msra.mxu0 %v222
    %2741 = vmatprep.subr.mxu0 %v219
    %2742 = vmatpush1.msra.mxu0 %v218
    %2743 = vmatprep.subr.mxu0 %v215
    %2744 = vmatpush1.msra.mxu0 %v214
    %2745 = vmatprep.subr.mxu0 %v211
    %2746 = vmatpush1.msra.mxu0 %v210
    %2747 = vmatprep.subr.mxu0 %v207
    %2748 = vmatpush1.msra.mxu0 %v206
    %2749 = vmatprep.subr.mxu0 %v203
    %2750 = vmatpush1.msra.mxu0 %v202
    %2751 = vmatprep.subr.mxu0 %v199
    %2752 = vmatpush1.msra.mxu0 %v198
    %2753 = vmatprep.subr.mxu0 %v195
    %2754 = vmatpush1.msra.mxu0 %v194
    %2755 = vmatprep.subr.mxu0 %v191
    %2756 = vmatpush1.msra.mxu0 %v190
    %2757 = vmatprep.subr.mxu0 %v187
    %2758 = vmatpush1.msra.mxu0 %v186
    %2759 = vmatprep.subr.mxu0 %v183
    %2760 = vmatpush1.msra.mxu0 %v182
    %2761 = vmatprep.subr.mxu0 %v179
    %2762 = vmatpush1.msra.mxu0 %v178
    %2763 = vmatprep.subr.mxu0 %v175
    %2764 = vmatpush1.msra.mxu0 %v174
    %2765 = vmatprep.subr.mxu0 %v171
    %2766 = vmatpush1.msra.mxu0 %v170
    %2767 = vmatprep.subr.mxu0 %v295
    %2768 = vmatpush2.msra.mxu0 %v294
    %2769 = vmatprep.subr.mxu0 %v291
    %2770 = vmatpush2.msra.mxu0 %v290
    %2771 = vmatprep.subr.mxu0 %v287
    %2772 = vmatpush2.msra.mxu0 %v286
    %2773 = vmatprep.subr.mxu0 %v283
    %2774 = vmatpush2.msra.mxu0 %v282
    %2775 = vmatprep.subr.mxu0 %v279
    %2776 = vmatpush2.msra.mxu0 %v278
    %2777 = vmatprep.subr.mxu0 %v275
    %2778 = vmatpush2.msra.mxu0 %v274
    %2779 = vmatprep.subr.mxu0 %v271
    %2780 = vmatpush2.msra.mxu0 %v270
    %2781 = vmatprep.subr.mxu0 %v267
    %2782 = vmatpush2.msra.mxu0 %v266
    %2783 = vmatprep.subr.mxu0 %v263
    %2784 = vmatpush2.msra.mxu0 %v262
    %2785 = vmatprep.subr.mxu0 %v259
    %2786 = vmatpush2.msra.mxu0 %v258
    %2787 = vmatprep.subr.mxu0 %v255
    %2788 = vmatpush2.msra.mxu0 %v254
    %2789 = vmatprep.subr.mxu0 %v251
    %2790 = vmatpush2.msra.mxu0 %v250
    %2791 = vmatprep.subr.mxu0 %v247
    %2792 = vmatpush2.msra.mxu0 %v246
    %2793 = vmatprep.subr.mxu0 %v243
    %2794 = vmatpush2.msra.mxu0 %v242
    %2795 = vmatprep.subr.mxu0 %v239
    %2796 = vmatpush2.msra.mxu0 %v238
    %2797 = vmatprep.subr.mxu0 %v235
    %2798 = vmatpush2.msra.mxu0 %v234
    %2799 = vmatprep.mubr.f32.mxu0 %v2517
    %2800 = vmatmul.mubr.f32.gmra.mxu0 %v2513
    %v2801 = vpop.f32.mrf.mxu0
    %v2802 = vadd.f32 %v2731, %v2801
    %v2803 = vpop.f32.mrf.mxu0
    %v2804 = vadd.f32 %v2733, %v2803
    %2805 = vdwg.mxu0
    %s2806 = scalar_lea.vmem [#allocation7], 28
    %2807 = vst [vmem:[%s2806] sm:$0x1] %v2660
    %s2808 = scalar_lea.vmem [#allocation7], 29
    %2809 = vst [vmem:[%s2808] sm:$0x1] %v2662
    %s2810 = scalar_lea.vmem [#allocation7], 30
    %2811 = vst [vmem:[%s2810] sm:$0x1] %v2802
    %s2812 = scalar_lea.vmem [#allocation7], 31
    %2813 = vst [vmem:[%s2812] sm:$0x1] %v2804
    // Predicated region
    $region18: #{tpu_custom_call.1} parent=1 // pred_check
      _
    $region19: #{tpu_custom_call.1} parent=1 // pred_check_branch
      %2815 = sbr.rel (0) target = $region21
    $region20: #{tpu_custom_call.1} parent=1 // pred_region
      %s2817 = ssub.s32 512, 512
      %2818 = vsyncadd [#allocation4], %s2817
      %s2819 = sshll.u32 [#allocation7], 4
      %s2820 = int_to_ptr.vmem [resolvable:$true] %s2819
      %2825 = dma.vmem_to_hbm [thread:$0]  %s2820, 512, %s2, [#allocation4], 16, 16, 1
    $region21: #{tpu_custom_call.1} parent=1 // pred_fallthru
      _
    // Predicated region
    $region22: #{tpu_custom_call.1} parent=1 // pred_check
      _
    $region23: #{tpu_custom_call.1} parent=1 // pred_check_branch
      %2827 = sbr.rel (0) target = $region25
    $region24: #{tpu_custom_call.1} parent=1 // pred_region
      %2828 = dma.done [#allocation4], 512
    $region25: #{tpu_custom_call.1} parent=1 // pred_fallthru
      _
    %2829 = vsyncpa [#allocation3], 1
    %2830 = vsyncpa [#allocation6], 1
    %2831 = vsyncpa [#allocation4], 1

// kernel: tpu_custom_call.1
$region0: #{tpu_custom_call.1}
  #allocation0 [shape = 'u32[]', space=smem, size = 0x4, offset = 0x4, fixed_abs, tag = 'smem constant byte address 0x4 - core index']
  #allocation1 [shape = 'u32[144,128]{1,0:T(1,128)}', space=vmem, size = 0x12000, scoped, tag = 'internal scratch']
  %s0 = inlined_call_operand.hbm [shape: f32[512,512], index: 0, kind: input, shape index: {}]
  %s1 = inlined_call_operand.hbm [shape: f32[8,1,512], index: 1, kind: input, shape index: {}]
  %s2 = inlined_call_operand.hbm [shape: f32[8,4,1,128], index: 2, kind: output, shape index: {}]
  %s3 = sld [smem:[#allocation0]]
  $region26: #{tpu_custom_call.1} parent=0
    _
  %s5 = ssub.s32 1, %s3
  %s6 = scalar_select 0, %s5, %s3
  $region1: #{tpu_custom_call.1} parent=0
    #allocation2 [shape = 'u8[1048576]{0}', space=vmem, size = 0x100000, scoped, tag = 'input window, operand 0, single buffered']
    #allocation3 [shape = 's32[1]{0}', space=sflag, size = 0x4, scoped, tag = 'scoped memory for tpu_custom_call.1']
    #allocation4 [shape = 's32[1]{0}', space=sflag, size = 0x4, scoped, tag = 'scoped memory for tpu_custom_call.1']
    #allocation5 [shape = 'u8[16384]{0}', space=vmem, size = 0x4000, scoped, tag = 'input window, operand 1, single buffered']
    #allocation6 [shape = 's32[1]{0}', space=sflag, size = 0x4, scoped, tag = 'scoped memory for tpu_custom_call.1']
    #allocation7 [shape = 'u8[16384]{0}', space=vmem, size = 0x4000, scoped, tag = 'output window, operand 0, single buffered']
    %7 = vsyncpa [#allocation3], 0
    %8 = vsyncpa [#allocation6], 0
    %9 = vsyncpa [#allocation4], 0
    // Predicated region
    $region2: #{tpu_custom_call.1} parent=1 // pred_check
      _
    $region3: #{tpu_custom_call.1} parent=1 // pred_check_branch
      %11 = sbr.rel (0) target = $region5
    $region4: #{tpu_custom_call.1} parent=1 // pred_region
      %s13 = ssub.s32 32768, 32768
      %14 = vsyncadd [#allocation3], %s13
      %s15 = sshll.u32 [#allocation2], 4
      %s16 = int_to_ptr.vmem [resolvable:$true] %s15
      %21 = dma.hbm_to_vmem [thread:$0]  %s0, 32768, %s16, [#allocation3], 512, 512, 32
    $region5: #{tpu_custom_call.1} parent=1 // pred_fallthru
      _
    // Predicated region
    $region6: #{tpu_custom_call.1} parent=1 // pred_check
      _
    $region7: #{tpu_custom_call.1} parent=1 // pred_check_branch
      %23 = sbr.rel (0) target = $region9
    $region8: #{tpu_custom_call.1} parent=1 // pred_region
      %s25 = ssub.s32 512, 512
      %26 = vsyncadd [#allocation6], %s25
      %s27 = sshll.u32 [#allocation5], 4
      %s28 = int_to_ptr.vmem [resolvable:$true] %s27
      %33 = dma.hbm_to_vmem [thread:$0]  %s1, 512, %s28, [#allocation6], 64, 64, 4
    $region9: #{tpu_custom_call.1} parent=1 // pred_fallthru
      _
    // Predicated region
    $region10: #{tpu_custom_call.1} parent=1 // pred_check
      _
    $region11: #{tpu_custom_call.1} parent=1 // pred_check_branch
      %35 = sbr.rel (0) target = $region13
    $region12: #{tpu_custom_call.1} parent=1 // pred_region
      %36 = dma.done [#allocation3], 32768
    $region13: #{tpu_custom_call.1} parent=1 // pred_fallthru
      _
    // Predicated region
    $region14: #{tpu_custom_call.1} parent=1 // pred_check
      _
    $region15: #{tpu_custom_call.1} parent=1 // pred_check_branch
      %38 = sbr.rel (0) target = $region17
    $region16: #{tpu_custom_call.1} parent=1 // pred_region
      %39 = dma.done [#allocation6], 512
    $region17: #{tpu_custom_call.1} parent=1 // pred_fallthru
      _
    %v40 = vld [vmem:[#allocation2] sm:$0xff]
    %v41 = vld [vmem:[#allocation2 + $0x8] sm:$0xff]
    %v42 = vld [vmem:[#allocation2 + $0x10] sm:$0xff]
    %v43 = vld [vmem:[#allocation2 + $0x18] sm:$0xff]
    %v44 = vld [vmem:[#allocation2 + $0x20] sm:$0xff]
    %v45 = vld [vmem:[#allocation2 + $0x28] sm:$0xff]
    %v46 = vld [vmem:[#allocation2 + $0x30] sm:$0xff]
    %v47 = vld [vmem:[#allocation2 + $0x38] sm:$0xff]
    %v48 = vld [vmem:[#allocation2 + $0x40] sm:$0xff]
    %v49 = vld [vmem:[#allocation2 + $0x48] sm:$0xff]
    %v50 = vld [vmem:[#allocation2 + $0x50] sm:$0xff]
    %v51 = vld [vmem:[#allocation2 + $0x58] sm:$0xff]
    %v52 = vld [vmem:[#allocation2 + $0x60] sm:$0xff]
    %v53 = vld [vmem:[#allocation2 + $0x68] sm:$0xff]
    %v54 = vld [vmem:[#allocation2 + $0x70] sm:$0xff]
    %v55 = vld [vmem:[#allocation2 + $0x78] sm:$0xff]
    %v56 = vld [vmem:[#allocation2 + $0x80] sm:$0xff]
    %v57 = vld [vmem:[#allocation2 + $0x88] sm:$0xff]
    %v58 = vld [vmem:[#allocation2 + $0x90] sm:$0xff]
    %v59 = vld [vmem:[#allocation2 + $0x98] sm:$0xff]
    %v60 = vld [vmem:[#allocation2 + $0xa0] sm:$0xff]
    %v61 = vld [vmem:[#allocation2 + $0xa8] sm:$0xff]
    %v62 = vld [vmem:[#allocation2 + $0xb0] sm:$0xff]
    %v63 = vld [vmem:[#allocation2 + $0xb8] sm:$0xff]
    %v64 = vld [vmem:[#allocation2 + $0xc0] sm:$0xff]
    %v65 = vld [vmem:[#allocation2 + $0xc8] sm:$0xff]
    %v66 = vld [vmem:[#allocation2 + $0xd0] sm:$0xff]
    %v67 = vld [vmem:[#allocation2 + $0xd8] sm:$0xff]
    %v68 = vld [vmem:[#allocation2 + $0xe0] sm:$0xff]
    %v69 = vld [vmem:[#allocation2 + $0xe8] sm:$0xff]
    %v70 = vld [vmem:[#allocation2 + $0xf0] sm:$0xff]
    %v71 = vld [vmem:[#allocation2 + $0xf8] sm:$0xff]
    %v72 = vld [vmem:[#allocation2 + $0x100] sm:$0xff]
    %v73 = vld [vmem:[#allocation2 + $0x108] sm:$0xff]
    %v74 = vld [vmem:[#allocation2 + $0x110] sm:$0xff]
    %v75 = vld [vmem:[#allocation2 + $0x118] sm:$0xff]
    %v76 = vld [vmem:[#allocation2 + $0x120] sm:$0xff]
    %v77 = vld [vmem:[#allocation2 + $0x128] sm:$0xff]
    %v78 = vld [vmem:[#allocation2 + $0x130] sm:$0xff]
    %v79 = vld [vmem:[#allocation2 + $0x138] sm:$0xff]
    %v80 = vld [vmem:[#allocation2 + $0x140] sm:$0xff]
    %v81 = vld [vmem:[#allocation2 + $0x148] sm:$0xff]
    %v82 = vld [vmem:[#allocation2 + $0x150] sm:$0xff]
    %v83 = vld [vmem:[#allocation2 + $0x158] sm:$0xff]
    %v84 = vld [vmem:[#allocation2 + $0x160] sm:$0xff]
    %v85 = vld [vmem:[#allocation2 + $0x168] sm:$0xff]
    %v86 = vld [vmem:[#allocation2 + $0x170] sm:$0xff]
    %v87 = vld [vmem:[#allocation2 + $0x178] sm:$0xff]
    %v88 = vld [vmem:[#allocation2 + $0x180] sm:$0xff]
    %v89 = vld [vmem:[#allocation2 + $0x188] sm:$0xff]
    %v90 = vld [vmem:[#allocation2 + $0x190] sm:$0xff]
    %v91 = vld [vmem:[#allocation2 + $0x198] sm:$0xff]
    %v92 = vld [vmem:[#allocation2 + $0x1a0] sm:$0xff]
    %v93 = vld [vmem:[#allocation2 + $0x1a8] sm:$0xff]
    %v94 = vld [vmem:[#allocation2 + $0x1b0] sm:$0xff]
    %v95 = vld [vmem:[#allocation2 + $0x1b8] sm:$0xff]
    %v96 = vld [vmem:[#allocation2 + $0x1c0] sm:$0xff]
    %v97 = vld [vmem:[#allocation2 + $0x1c8] sm:$0xff]
    %v98 = vld [vmem:[#allocation2 + $0x1d0] sm:$0xff]
    %v99 = vld [vmem:[#allocation2 + $0x1d8] sm:$0xff]
    %v100 = vld [vmem:[#allocation2 + $0x1e0] sm:$0xff]
    %v101 = vld [vmem:[#allocation2 + $0x1e8] sm:$0xff]
    %v102 = vld [vmem:[#allocation2 + $0x1f0] sm:$0xff]
    %v103 = vld [vmem:[#allocation2 + $0x1f8] sm:$0xff]
    %v104 = vld [vmem:[#allocation2 + $0x200] sm:$0xff]
    %v105 = vld [vmem:[#allocation2 + $0x208] sm:$0xff]
    %v106 = vld [vmem:[#allocation2 + $0x210] sm:$0xff]
    %v107 = vld [vmem:[#allocation2 + $0x218] sm:$0xff]
    %v108 = vld [vmem:[#allocation2 + $0x220] sm:$0xff]
    %v109 = vld [vmem:[#allocation2 + $0x228] sm:$0xff]
    %v110 = vld [vmem:[#allocation2 + $0x230] sm:$0xff]
    %v111 = vld [vmem:[#allocation2 + $0x238] sm:$0xff]
    %v112 = vld [vmem:[#allocation2 + $0x240] sm:$0xff]
    %v113 = vld [vmem:[#allocation2 + $0x248] sm:$0xff]
    %v114 = vld [vmem:[#allocation2 + $0x250] sm:$0xff]
    %v115 = vld [vmem:[#allocation2 + $0x258] sm:$0xff]
    %v116 = vld [vmem:[#allocation2 + $0x260] sm:$0xff]
    %v117 = vld [vmem:[#allocation2 + $0x268] sm:$0xff]
    %v118 = vld [vmem:[#allocation2 + $0x270] sm:$0xff]
    %v119 = vld [vmem:[#allocation2 + $0x278] sm:$0xff]
    %v120 = vld [vmem:[#allocation2 + $0x280] sm:$0xff]
    %v121 = vld [vmem:[#allocation2 + $0x288] sm:$0xff]
    %v122 = vld [vmem:[#allocation2 + $0x290] sm:$0xff]
    %v123 = vld [vmem:[#allocation2 + $0x298] sm:$0xff]
    %v124 = vld [vmem:[#allocation2 + $0x2a0] sm:$0xff]
    %v125 = vld [vmem:[#allocation2 + $0x2a8] sm:$0xff]
    %v126 = vld [vmem:[#allocation2 + $0x2b0] sm:$0xff]
    %v127 = vld [vmem:[#allocation2 + $0x2b8] sm:$0xff]
    %v128 = vld [vmem:[#allocation2 + $0x2c0] sm:$0xff]
    %v129 = vld [vmem:[#allocation2 + $0x2c8] sm:$0xff]
    %v130 = vld [vmem:[#allocation2 + $0x2d0] sm:$0xff]
    %v131 = vld [vmem:[#allocation2 + $0x2d8] sm:$0xff]
    %v132 = vld [vmem:[#allocation2 + $0x2e0] sm:$0xff]
    %v133 = vld [vmem:[#allocation2 + $0x2e8] sm:$0xff]
    %v134 = vld [vmem:[#allocation2 + $0x2f0] sm:$0xff]
    %v135 = vld [vmem:[#allocation2 + $0x2f8] sm:$0xff]
    %v136 = vld [vmem:[#allocation2 + $0x300] sm:$0xff]
    %v137 = vld [vmem:[#allocation2 + $0x308] sm:$0xff]
    %v138 = vld [vmem:[#allocation2 + $0x310] sm:$0xff]
    %v139 = vld [vmem:[#allocation2 + $0x318] sm:$0xff]
    %v140 = vld [vmem:[#allocation2 + $0x320] sm:$0xff]
    %v141 = vld [vmem:[#allocation2 + $0x328] sm:$0xff]
    %v142 = vld [vmem:[#allocation2 + $0x330] sm:$0xff]
    %v143 = vld [vmem:[#allocation2 + $0x338] sm:$0xff]
    %v144 = vld [vmem:[#allocation2 + $0x340] sm:$0xff]
    %v145 = vld [vmem:[#allocation2 + $0x348] sm:$0xff]
    %v146 = vld [vmem:[#allocation2 + $0x350] sm:$0xff]
    %v147 = vld [vmem:[#allocation2 + $0x358] sm:$0xff]
    %v148 = vld [vmem:[#allocation2 + $0x360] sm:$0xff]
    %v149 = vld [vmem:[#allocation2 + $0x368] sm:$0xff]
    %v150 = vld [vmem:[#allocation2 + $0x370] sm:$0xff]
    %v151 = vld [vmem:[#allocation2 + $0x378] sm:$0xff]
    %v152 = vld [vmem:[#allocation2 + $0x380] sm:$0xff]
    %v153 = vld [vmem:[#allocation2 + $0x388] sm:$0xff]
    %v154 = vld [vmem:[#allocation2 + $0x390] sm:$0xff]
    %v155 = vld [vmem:[#allocation2 + $0x398] sm:$0xff]
    %v156 = vld [vmem:[#allocation2 + $0x3a0] sm:$0xff]
    %v157 = vld [vmem:[#allocation2 + $0x3a8] sm:$0xff]
    %v158 = vld [vmem:[#allocation2 + $0x3b0] sm:$0xff]
    %v159 = vld [vmem:[#allocation2 + $0x3b8] sm:$0xff]
    %v160 = vld [vmem:[#allocation2 + $0x3c0] sm:$0xff]
    %v161 = vld [vmem:[#allocation2 + $0x3c8] sm:$0xff]
    %v162 = vld [vmem:[#allocation2 + $0x3d0] sm:$0xff]
    %v163 = vld [vmem:[#allocation2 + $0x3d8] sm:$0xff]
    %v164 = vld [vmem:[#allocation2 + $0x3e0] sm:$0xff]
    %v165 = vld [vmem:[#allocation2 + $0x3e8] sm:$0xff]
    %v166 = vld [vmem:[#allocation2 + $0x3f0] sm:$0xff]
    %v167 = vld [vmem:[#allocation2 + $0x3f8] sm:$0xff]
    %v168 = vld [vmem:[#allocation2 + $0x400] sm:$0xff]
    %v169 = vld [vmem:[#allocation2 + $0x408] sm:$0xff]
    %v170 = vld [vmem:[#allocation2 + $0x410] sm:$0xff]
    %v171 = vld [vmem:[#allocation2 + $0x418] sm:$0xff]
    %v172 = vld [vmem:[#allocation2 + $0x420] sm:$0xff]
    %v173 = vld [vmem:[#allocation2 + $0x428] sm:$0xff]
    %v174 = vld [vmem:[#allocation2 + $0x430] sm:$0xff]
    %v175 = vld [vmem:[#allocation2 + $0x438] sm:$0xff]
    %v176 = vld [vmem:[#allocation2 + $0x440] sm:$0xff]
    %v177 = vld [vmem:[#allocation2 + $0x448] sm:$0xff]
    %v178 = vld [vmem:[#allocation2 + $0x450] sm:$0xff]
    %v179 = vld [vmem:[#allocation2 + $0x458] sm:$0xff]
    %v180 = vld [vmem:[#allocation2 + $0x460] sm:$0xff]
    %v181 = vld [vmem:[#allocation2 + $0x468] sm:$0xff]
    %v182 = vld [vmem:[#allocation2 + $0x470] sm:$0xff]
    %v183 = vld [vmem:[#allocation2 + $0x478] sm:$0xff]
    %v184 = vld [vmem:[#allocation2 + $0x480] sm:$0xff]
    %v185 = vld [vmem:[#allocation2 + $0x488] sm:$0xff]
    %v186 = vld [vmem:[#allocation2 + $0x490] sm:$0xff]
    %v187 = vld [vmem:[#allocation2 + $0x498] sm:$0xff]
    %v188 = vld [vmem:[#allocation2 + $0x4a0] sm:$0xff]
    %v189 = vld [vmem:[#allocation2 + $0x4a8] sm:$0xff]
    %v190 = vld [vmem:[#allocation2 + $0x4b0] sm:$0xff]
    %v191 = vld [vmem:[#allocation2 + $0x4b8] sm:$0xff]
    %v192 = vld [vmem:[#allocation2 + $0x4c0] sm:$0xff]
    %v193 = vld [vmem:[#allocation2 + $0x4c8] sm:$0xff]
    %v194 = vld [vmem:[#allocation2 + $0x4d0] sm:$0xff]
    %v195 = vld [vmem:[#allocation2 + $0x4d8] sm:$0xff]
    %v196 = vld [vmem:[#allocation2 + $0x4e0] sm:$0xff]
    %v197 = vld [vmem:[#allocation2 + $0x4e8] sm:$0xff]
    %v198 = vld [vmem:[#allocation2 + $0x4f0] sm:$0xff]
    %v199 = vld [vmem:[#allocation2 + $0x4f8] sm:$0xff]
    %v200 = vld [vmem:[#allocation2 + $0x500] sm:$0xff]
    %v201 = vld [vmem:[#allocation2 + $0x508] sm:$0xff]
    %v202 = vld [vmem:[#allocation2 + $0x510] sm:$0xff]
    %v203 = vld [vmem:[#allocation2 + $0x518] sm:$0xff]
    %v204 = vld [vmem:[#allocation2 + $0x520] sm:$0xff]
    %v205 = vld [vmem:[#allocation2 + $0x528] sm:$0xff]
    %v206 = vld [vmem:[#allocation2 + $0x530] sm:$0xff]
    %v207 = vld [vmem:[#allocation2 + $0x538] sm:$0xff]
    %v208 = vld [vmem:[#allocation2 + $0x540] sm:$0xff]
    %v209 = vld [vmem:[#allocation2 + $0x548] sm:$0xff]
    %v210 = vld [vmem:[#allocation2 + $0x550] sm:$0xff]
    %v211 = vld [vmem:[#allocation2 + $0x558] sm:$0xff]
    %v212 = vld [vmem:[#allocation2 + $0x560] sm:$0xff]
    %v213 = vld [vmem:[#allocation2 + $0x568] sm:$0xff]
    %v214 = vld [vmem:[#allocation2 + $0x570] sm:$0xff]
    %v215 = vld [vmem:[#allocation2 + $0x578] sm:$0xff]
    %v216 = vld [vmem:[#allocation2 + $0x580] sm:$0xff]
    %v217 = vld [vmem:[#allocation2 + $0x588] sm:$0xff]
    %v218 = vld [vmem:[#allocation2 + $0x590] sm:$0xff]
    %v219 = vld [vmem:[#allocation2 + $0x598] sm:$0xff]
    %v220 = vld [vmem:[#allocation2 + $0x5a0] sm:$0xff]
    %v221 = vld [vmem:[#allocation2 + $0x5a8] sm:$0xff]
    %v222 = vld [vmem:[#allocation2 + $0x5b0] sm:$0xff]
    %v223 = vld [vmem:[#allocation2 + $0x5b8] sm:$0xff]
    %v224 = vld [vmem:[#allocation2 + $0x5c0] sm:$0xff]
    %v225 = vld [vmem:[#allocation2 + $0x5c8] sm:$0xff]
    %v226 = vld [vmem:[#allocation2 + $0x5d0] sm:$0xff]
    %v227 = vld [vmem:[#allocation2 + $0x5d8] sm:$0xff]
    %v228 = vld [vmem:[#allocation2 + $0x5e0] sm:$0xff]
    %v229 = vld [vmem:[#allocation2 + $0x5e8] sm:$0xff]
    %v230 = vld [vmem:[#allocation2 + $0x5f0] sm:$0xff]
    %v231 = vld [vmem:[#allocation2 + $0x5f8] sm:$0xff]
    %v232 = vld [vmem:[#allocation2 + $0x600] sm:$0xff]
    %v233 = vld [vmem:[#allocation2 + $0x608] sm:$0xff]
    %v234 = vld [vmem:[#allocation2 + $0x610] sm:$0xff]
    %v235 = vld [vmem:[#allocation2 + $0x618] sm:$0xff]
    %v236 = vld [vmem:[#allocation2 + $0x620] sm:$0xff]
    %v237 = vld [vmem:[#allocation2 + $0x628] sm:$0xff]
    %v238 = vld [vmem:[#allocation2 + $0x630] sm:$0xff]
    %v239 = vld [vmem:[#allocation2 + $0x638] sm:$0xff]
    %v240 = vld [vmem:[#allocation2 + $0x640] sm:$0xff]
    %v241 = vld [vmem:[#allocation2 + $0x648] sm:$0xff]
    %v242 = vld [vmem:[#allocation2 + $0x650] sm:$0xff]
    %v243 = vld [vmem:[#allocation2 + $0x658] sm:$0xff]
    %v244 = vld [vmem:[#allocation2 + $0x660] sm:$0xff]
    %v245 = vld [vmem:[#allocation2 + $0x668] sm:$0xff]
    %v246 = vld [vmem:[#allocation2 + $0x670] sm:$0xff]
    %v247 = vld [vmem:[#allocation2 + $0x678] sm:$0xff]
    %v248 = vld [vmem:[#allocation2 + $0x680] sm:$0xff]
    %v249 = vld [vmem:[#allocation2 + $0x688] sm:$0xff]
    %v250 = vld [vmem:[#allocation2 + $0x690] sm:$0xff]
    %v251 = vld [vmem:[#allocation2 + $0x698] sm:$0xff]
    %v252 = vld [vmem:[#allocation2 + $0x6a0] sm:$0xff]
    %v253 = vld [vmem:[#allocation2 + $0x6a8] sm:$0xff]
    %v254 = vld [vmem:[#allocation2 + $0x6b0] sm:$0xff]
    %v255 = vld [vmem:[#allocation2 + $0x6b8] sm:$0xff]
    %v256 = vld [vmem:[#allocation2 + $0x6c0] sm:$0xff]
    %v257 = vld [vmem:[#allocation2 + $0x6c8] sm:$0xff]
    %v258 = vld [vmem:[#allocation2 + $0x6d0] sm:$0xff]
    %v259 = vld [vmem:[#allocation2 + $0x6d8] sm:$0xff]
    %v260 = vld [vmem:[#allocation2 + $0x6e0] sm:$0xff]
    %v261 = vld [vmem:[#allocation2 + $0x6e8] sm:$0xff]
    %v262 = vld [vmem:[#allocation2 + $0x6f0] sm:$0xff]
    %v263 = vld [vmem:[#allocation2 + $0x6f8] sm:$0xff]
    %v264 = vld [vmem:[#allocation2 + $0x700] sm:$0xff]
    %v265 = vld [vmem:[#allocation2 + $0x708] sm:$0xff]
    %v266 = vld [vmem:[#allocation2 + $0x710] sm:$0xff]
    %v267 = vld [vmem:[#allocation2 + $0x718] sm:$0xff]
    %v268 = vld [vmem:[#allocation2 + $0x720] sm:$0xff]
    %v269 = vld [vmem:[#allocation2 + $0x728] sm:$0xff]
    %v270 = vld [vmem:[#allocation2 + $0x730] sm:$0xff]
    %v271 = vld [vmem:[#allocation2 + $0x738] sm:$0xff]
    %v272 = vld [vmem:[#allocation2 + $0x740] sm:$0xff]
    %v273 = vld [vmem:[#allocation2 + $0x748] sm:$0xff]
    %v274 = vld [vmem:[#allocation2 + $0x750] sm:$0xff]
    %v275 = vld [vmem:[#allocation2 + $0x758] sm:$0xff]
    %v276 = vld [vmem:[#allocation2 + $0x760] sm:$0xff]
    %v277 = vld [vmem:[#allocation2 + $0x768] sm:$0xff]
    %v278 = vld [vmem:[#allocation2 + $0x770] sm:$0xff]
    %v279 = vld [vmem:[#allocation2 + $0x778] sm:$0xff]
    %v280 = vld [vmem:[#allocation2 + $0x780] sm:$0xff]
    %v281 = vld [vmem:[#allocation2 + $0x788] sm:$0xff]
    %v282 = vld [vmem:[#allocation2 + $0x790] sm:$0xff]
    %v283 = vld [vmem:[#allocation2 + $0x798] sm:$0xff]
    %v284 = vld [vmem:[#allocation2 + $0x7a0] sm:$0xff]
    %v285 = vld [vmem:[#allocation2 + $0x7a8] sm:$0xff]
    %v286 = vld [vmem:[#allocation2 + $0x7b0] sm:$0xff]
    %v287 = vld [vmem:[#allocation2 + $0x7b8] sm:$0xff]
    %v288 = vld [vmem:[#allocation2 + $0x7c0] sm:$0xff]
    %v289 = vld [vmem:[#allocation2 + $0x7c8] sm:$0xff]
    %v290 = vld [vmem:[#allocation2 + $0x7d0] sm:$0xff]
    %v291 = vld [vmem:[#allocation2 + $0x7d8] sm:$0xff]
    %v292 = vld [vmem:[#allocation2 + $0x7e0] sm:$0xff]
    %v293 = vld [vmem:[#allocation2 + $0x7e8] sm:$0xff]
    %v294 = vld [vmem:[#allocation2 + $0x7f0] sm:$0xff]
    %v295 = vld [vmem:[#allocation2 + $0x7f8] sm:$0xff]
    %v296 = vld [vmem:[#allocation5] sm:$0xf]
    %v298 = vlaneseq
    %v299 = vshrl.u32 %v298, 7
    %v300 = vsub.s32 0, %v299
    %v301 = vrot.slane %v296, %v300
    %v302 = vlaneseq
    %v303 = vshrl.u32 %v302, 7
    %v304 = vsub.s32 1, %v303
    %v305 = vrot.slane %v296, %v304
    %v306 = vlaneseq
    %v307 = vshrl.u32 %v306, 7
    %v308 = vsub.s32 2, %v307
    %v309 = vrot.slane %v296, %v308
    %v310 = vlaneseq
    %v311 = vshrl.u32 %v310, 7
    %v312 = vsub.s32 3, %v311
    %v313 = vrot.slane %v296, %v312
    %318 = vmatprep.subr.mxu0 %v101
    %319 = vmatpush1.msra.mxu0 %v100
    %320 = vmatprep.subr.mxu0 %v97
    %321 = vmatpush1.msra.mxu0 %v96
    %322 = vmatprep.subr.mxu0 %v93
    %323 = vmatpush1.msra.mxu0 %v92
    %324 = vmatprep.subr.mxu0 %v89
    %325 = vmatpush1.msra.mxu0 %v88
    %326 = vmatprep.subr.mxu0 %v85
    %327 = vmatpush1.msra.mxu0 %v84
    %328 = vmatprep.subr.mxu0 %v81
    %329 = vmatpush1.msra.mxu0 %v80
    %330 = vmatprep.subr.mxu0 %v77
    %331 = vmatpush1.msra.mxu0 %v76
    %332 = vmatprep.subr.mxu0 %v73
    %333 = vmatpush1.msra.mxu0 %v72
    %334 = vmatprep.subr.mxu0 %v69
    %335 = vmatpush1.msra.mxu0 %v68
    %336 = vmatprep.subr.mxu0 %v65
    %337 = vmatpush1.msra.mxu0 %v64
    %338 = vmatprep.subr.mxu0 %v61
    %339 = vmatpush1.msra.mxu0 %v60
    %340 = vmatprep.subr.mxu0 %v57
    %341 = vmatpush1.msra.mxu0 %v56
    %342 = vmatprep.subr.mxu0 %v53
    %343 = vmatpush1.msra.mxu0 %v52
    %344 = vmatprep.subr.mxu0 %v49
    %345 = vmatpush1.msra.mxu0 %v48
    %346 = vmatprep.subr.mxu0 %v45
    %347 = vmatpush1.msra.mxu0 %v44
    %348 = vmatprep.subr.mxu0 %v41
    %349 = vmatpush1.msra.mxu0 %v40
    %350 = vmatprep.subr.mxu0 %v165
    %351 = vmatpush2.msra.mxu0 %v164
    %352 = vmatprep.subr.mxu0 %v161
    %353 = vmatpush2.msra.mxu0 %v160
    %354 = vmatprep.subr.mxu0 %v157
    %355 = vmatpush2.msra.mxu0 %v156
    %356 = vmatprep.subr.mxu0 %v153
    %357 = vmatpush2.msra.mxu0 %v152
    %358 = vmatprep.subr.mxu0 %v149
    %359 = vmatpush2.msra.mxu0 %v148
    %360 = vmatprep.subr.mxu0 %v145
    %361 = vmatpush2.msra.mxu0 %v144
    %362 = vmatprep.subr.mxu0 %v141
    %363 = vmatpush2.msra.mxu0 %v140
    %364 = vmatprep.subr.mxu0 %v137
    %365 = vmatpush2.msra.mxu0 %v136
    %366 = vmatprep.subr.mxu0 %v133
    %367 = vmatpush2.msra.mxu0 %v132
    %368 = vmatprep.subr.mxu0 %v129
    %369 = vmatpush2.msra.mxu0 %v128
    %370 = vmatprep.subr.mxu0 %v125
    %371 = vmatpush2.msra.mxu0 %v124
    %372 = vmatprep.subr.mxu0 %v121
    %373 = vmatpush2.msra.mxu0 %v120
    %374 = vmatprep.subr.mxu0 %v117
    %375 = vmatpush2.msra.mxu0 %v116
    %376 = vmatprep.subr.mxu0 %v113
    %377 = vmatpush2.msra.mxu0 %v112
    %378 = vmatprep.subr.mxu0 %v109
    %379 = vmatpush2.msra.mxu0 %v108
    %380 = vmatprep.subr.mxu0 %v105
    %381 = vmatpush2.msra.mxu0 %v104
    %382 = vmatprep.mubr.f32.mxu0 %v305
    %383 = vmatmul.mubr.f32.gmra.mxu0 %v301
    %v384 = vpop.f32.mrf.mxu0
    %v385 = vadd.f32 0.0, %v384
    %v386 = vpop.f32.mrf.mxu0
    %v387 = vadd.f32 0.0, %v386
    %388 = vdwg.mxu0
    %389 = vmatprep.subr.mxu0 %v229
    %390 = vmatpush1.msra.mxu0 %v228
    %391 = vmatprep.subr.mxu0 %v225
    %392 = vmatpush1.msra.mxu0 %v224
    %393 = vmatprep.subr.mxu0 %v221
    %394 = vmatpush1.msra.mxu0 %v220
    %395 = vmatprep.subr.mxu0 %v217
    %396 = vmatpush1.msra.mxu0 %v216
    %397 = vmatprep.subr.mxu0 %v213
    %398 = vmatpush1.msra.mxu0 %v212
    %399 = vmatprep.subr.mxu0 %v209
    %400 = vmatpush1.msra.mxu0 %v208
    %401 = vmatprep.subr.mxu0 %v205
    %402 = vmatpush1.msra.mxu0 %v204
    %403 = vmatprep.subr.mxu0 %v201
    %404 = vmatpush1.msra.mxu0 %v200
    %405 = vmatprep.subr.mxu0 %v197
    %406 = vmatpush1.msra.mxu0 %v196
    %407 = vmatprep.subr.mxu0 %v193
    %408 = vmatpush1.msra.mxu0 %v192
    %409 = vmatprep.subr.mxu0 %v189
    %410 = vmatpush1.msra.mxu0 %v188
    %411 = vmatprep.subr.mxu0 %v185
    %412 = vmatpush1.msra.mxu0 %v184
    %413 = vmatprep.subr.mxu0 %v181
    %414 = vmatpush1.msra.mxu0 %v180
    %415 = vmatprep.subr.mxu0 %v177
    %416 = vmatpush1.msra.mxu0 %v176
    %417 = vmatprep.subr.mxu0 %v173
    %418 = vmatpush1.msra.mxu0 %v172
    %419 = vmatprep.subr.mxu0 %v169
    %420 = vmatpush1.msra.mxu0 %v168
    %421 = vmatprep.subr.mxu0 %v293
    %422 = vmatpush2.msra.mxu0 %v292
    %423 = vmatprep.subr.mxu0 %v289
    %424 = vmatpush2.msra.mxu0 %v288
    %425 = vmatprep.subr.mxu0 %v285
    %426 = vmatpush2.msra.mxu0 %v284
    %427 = vmatprep.subr.mxu0 %v281
    %428 = vmatpush2.msra.mxu0 %v280
    %429 = vmatprep.subr.mxu0 %v277
    %430 = vmatpush2.msra.mxu0 %v276
    %431 = vmatprep.subr.mxu0 %v273
    %432 = vmatpush2.msra.mxu0 %v272
    %433 = vmatprep.subr.mxu0 %v269
    %434 = vmatpush2.msra.mxu0 %v268
    %435 = vmatprep.subr.mxu0 %v265
    %436 = vmatpush2.msra.mxu0 %v264
    %437 = vmatprep.subr.mxu0 %v261
    %438 = vmatpush2.msra.mxu0 %v260
    %439 = vmatprep.subr.mxu0 %v257
    %440 = vmatpush2.msra.mxu0 %v256
    %441 = vmatprep.subr.mxu0 %v253
    %442 = vmatpush2.msra.mxu0 %v252
    %443 = vmatprep.subr.mxu0 %v249
    %444 = vmatpush2.msra.mxu0 %v248
    %445 = vmatprep.subr.mxu0 %v245
    %446 = vmatpush2.msra.mxu0 %v244
    %447 = vmatprep.subr.mxu0 %v241
    %448 = vmatpush2.msra.mxu0 %v240
    %449 = vmatprep.subr.mxu0 %v237
    %450 = vmatpush2.msra.mxu0 %v236
    %451 = vmatprep.subr.mxu0 %v233
    %452 = vmatpush2.msra.mxu0 %v232
    %453 = vmatprep.mubr.f32.mxu0 %v313
    %454 = vmatmul.mubr.f32.gmra.mxu0 %v309
    %v455 = vpop.f32.mrf.mxu0
    %v456 = vadd.f32 %v385, %v455
    %v457 = vpop.f32.mrf.mxu0
    %v458 = vadd.f32 %v387, %v457
    %459 = vdwg.mxu0
    %460 = vmatprep.subr.mxu0 %v103
    %461 = vmatpush1.msra.mxu0 %v102
    %462 = vmatprep.subr.mxu0 %v99
    %463 = vmatpush1.msra.mxu0 %v98
    %464 = vmatprep.subr.mxu0 %v95
    %465 = vmatpush1.msra.mxu0 %v94
    %466 = vmatprep.subr.mxu0 %v91
    %467 = vmatpush1.msra.mxu0 %v90
    %468 = vmatprep.subr.mxu0 %v87
    %469 = vmatpush1.msra.mxu0 %v86
    %470 = vmatprep.subr.mxu0 %v83
    %471 = vmatpush1.msra.mxu0 %v82
    %472 = vmatprep.subr.mxu0 %v79
    %473 = vmatpush1.msra.mxu0 %v78
    %474 = vmatprep.subr.mxu0 %v75
    %475 = vmatpush1.msra.mxu0 %v74
    %476 = vmatprep.subr.mxu0 %v71
    %477 = vmatpush1.msra.mxu0 %v70
    %478 = vmatprep.subr.mxu0 %v67
    %479 = vmatpush1.msra.mxu0 %v66
    %480 = vmatprep.subr.mxu0 %v63
    %481 = vmatpush1.msra.mxu0 %v62
    %482 = vmatprep.subr.mxu0 %v59
    %483 = vmatpush1.msra.mxu0 %v58
    %484 = vmatprep.subr.mxu0 %v55
    %485 = vmatpush1.msra.mxu0 %v54
    %486 = vmatprep.subr.mxu0 %v51
    %487 = vmatpush1.msra.mxu0 %v50
    %488 = vmatprep.subr.mxu0 %v47
    %489 = vmatpush1.msra.mxu0 %v46
    %490 = vmatprep.subr.mxu0 %v43
    %491 = vmatpush1.msra.mxu0 %v42
    %492 = vmatprep.subr.mxu0 %v167
    %493 = vmatpush2.msra.mxu0 %v166
    %494 = vmatprep.subr.mxu0 %v163
    %495 = vmatpush2.msra.mxu0 %v162
    %496 = vmatprep.subr.mxu0 %v159
    %497 = vmatpush2.msra.mxu0 %v158
    %498 = vmatprep.subr.mxu0 %v155
    %499 = vmatpush2.msra.mxu0 %v154
    %500 = vmatprep.subr.mxu0 %v151
    %501 = vmatpush2.msra.mxu0 %v150
    %502 = vmatprep.subr.mxu0 %v147
    %503 = vmatpush2.msra.mxu0 %v146
    %504 = vmatprep.subr.mxu0 %v143
    %505 = vmatpush2.msra.mxu0 %v142
    %506 = vmatprep.subr.mxu0 %v139
    %507 = vmatpush2.msra.mxu0 %v138
    %508 = vmatprep.subr.mxu0 %v135
    %509 = vmatpush2.msra.mxu0 %v134
    %510 = vmatprep.subr.mxu0 %v131
    %511 = vmatpush2.msra.mxu0 %v130
    %512 = vmatprep.subr.mxu0 %v127
    %513 = vmatpush2.msra.mxu0 %v126
    %514 = vmatprep.subr.mxu0 %v123
    %515 = vmatpush2.msra.mxu0 %v122
    %516 = vmatprep.subr.mxu0 %v119
    %517 = vmatpush2.msra.mxu0 %v118
    %518 = vmatprep.subr.mxu0 %v115
    %519 = vmatpush2.msra.mxu0 %v114
    %520 = vmatprep.subr.mxu0 %v111
    %521 = vmatpush2.msra.mxu0 %v110
    %522 = vmatprep.subr.mxu0 %v107
    %523 = vmatpush2.msra.mxu0 %v106
    %524 = vmatprep.mubr.f32.mxu0 %v305
    %525 = vmatmul.mubr.f32.gmra.mxu0 %v301
    %v526 = vpop.f32.mrf.mxu0
    %v527 = vadd.f32 0.0, %v526
    %v528 = vpop.f32.mrf.mxu0
    %v529 = vadd.f32 0.0, %v528
    %530 = vdwg.mxu0
    %531 = vmatprep.subr.mxu0 %v231
    %532 = vmatpush1.msra.mxu0 %v230
    %533 = vmatprep.subr.mxu0 %v227
    %534 = vmatpush1.msra.mxu0 %v226
    %535 = vmatprep.subr.mxu0 %v223
    %536 = vmatpush1.msra.mxu0 %v222
    %537 = vmatprep.subr.mxu0 %v219
    %538 = vmatpush1.msra.mxu0 %v218
    %539 = vmatprep.subr.mxu0 %v215
    %540 = vmatpush1.msra.mxu0 %v214
    %541 = vmatprep.subr.mxu0 %v211
    %542 = vmatpush1.msra.mxu0 %v210
    %543 = vmatprep.subr.mxu0 %v207
    %544 = vmatpush1.msra.mxu0 %v206
    %545 = vmatprep.subr.mxu0 %v203
    %546 = vmatpush1.msra.mxu0 %v202
    %547 = vmatprep.subr.mxu0 %v199
    %548 = vmatpush1.msra.mxu0 %v198
    %549 = vmatprep.subr.mxu0 %v195
    %550 = vmatpush1.msra.mxu0 %v194
    %551 = vmatprep.subr.mxu0 %v191
    %552 = vmatpush1.msra.mxu0 %v190
    %553 = vmatprep.subr.mxu0 %v187
    %554 = vmatpush1.msra.mxu0 %v186
    %555 = vmatprep.subr.mxu0 %v183
    %556 = vmatpush1.msra.mxu0 %v182
    %557 = vmatprep.subr.mxu0 %v179
    %558 = vmatpush1.msra.mxu0 %v178
    %559 = vmatprep.subr.mxu0 %v175
    %560 = vmatpush1.msra.mxu0 %v174
    %561 = vmatprep.subr.mxu0 %v171
    %562 = vmatpush1.msra.mxu0 %v170
    %563 = vmatprep.subr.mxu0 %v295
    %564 = vmatpush2.msra.mxu0 %v294
    %565 = vmatprep.subr.mxu0 %v291
    %566 = vmatpush2.msra.mxu0 %v290
    %567 = vmatprep.subr.mxu0 %v287
    %568 = vmatpush2.msra.mxu0 %v286
    %569 = vmatprep.subr.mxu0 %v283
    %570 = vmatpush2.msra.mxu0 %v282
    %571 = vmatprep.subr.mxu0 %v279
    %572 = vmatpush2.msra.mxu0 %v278
    %573 = vmatprep.subr.mxu0 %v275
    %574 = vmatpush2.msra.mxu0 %v274
    %575 = vmatprep.subr.mxu0 %v271
    %576 = vmatpush2.msra.mxu0 %v270
    %577 = vmatprep.subr.mxu0 %v267
    %578 = vmatpush2.msra.mxu0 %v266
    %579 = vmatprep.subr.mxu0 %v263
    %580 = vmatpush2.msra.mxu0 %v262
    %581 = vmatprep.subr.mxu0 %v259
    %582 = vmatpush2.msra.mxu0 %v258
    %583 = vmatprep.subr.mxu0 %v255
    %584 = vmatpush2.msra.mxu0 %v254
    %585 = vmatprep.subr.mxu0 %v251
    %586 = vmatpush2.msra.mxu0 %v250
    %587 = vmatprep.subr.mxu0 %v247
    %588 = vmatpush2.msra.mxu0 %v246
    %589 = vmatprep.subr.mxu0 %v243
    %590 = vmatpush2.msra.mxu0 %v242
    %591 = vmatprep.subr.mxu0 %v239
    %592 = vmatpush2.msra.mxu0 %v238
    %593 = vmatprep.subr.mxu0 %v235
    %594 = vmatpush2.msra.mxu0 %v234
    %595 = vmatprep.mubr.f32.mxu0 %v313
    %596 = vmatmul.mubr.f32.gmra.mxu0 %v309
    %v597 = vpop.f32.mrf.mxu0
    %v598 = vadd.f32 %v527, %v597
    %v599 = vpop.f32.mrf.mxu0
    %v600 = vadd.f32 %v529, %v599
    %601 = vdwg.mxu0
    %602 = vst [vmem:[#allocation7] sm:$0x1] %v456
    %s603 = scalar_lea.vmem [#allocation7], 1
    %604 = vst [vmem:[%s603] sm:$0x1] %v458
    %s605 = scalar_lea.vmem [#allocation7], 2
    %606 = vst [vmem:[%s605] sm:$0x1] %v598
    %s607 = scalar_lea.vmem [#allocation7], 3
    %608 = vst [vmem:[%s607] sm:$0x1] %v600
    %s609 = scalar_lea.vmem [#allocation5], 4
    %v610 = vld [vmem:[%s609] sm:$0xf]
    %v612 = vlaneseq
    %v613 = vshrl.u32 %v612, 7
    %v614 = vsub.s32 0, %v613
    %v615 = vrot.slane %v610, %v614
    %v616 = vlaneseq
    %v617 = vshrl.u32 %v616, 7
    %v618 = vsub.s32 1, %v617
    %v619 = vrot.slane %v610, %v618
    %v620 = vlaneseq
    %v621 = vshrl.u32 %v620, 7
    %v622 = vsub.s32 2, %v621
    %v623 = vrot.slane %v610, %v622
    %v624 = vlaneseq
    %v625 = vshrl.u32 %v624, 7
    %v626 = vsub.s32 3, %v625
    %v627 = vrot.slane %v610, %v626
    %632 = vmatprep.subr.mxu0 %v101
    %633 = vmatpush1.msra.mxu0 %v100
    %634 = vmatprep.subr.mxu0 %v97
    %635 = vmatpush1.msra.mxu0 %v96
    %636 = vmatprep.subr.mxu0 %v93
    %637 = vmatpush1.msra.mxu0 %v92
    %638 = vmatprep.subr.mxu0 %v89
    %639 = vmatpush1.msra.mxu0 %v88
    %640 = vmatprep.subr.mxu0 %v85
    %641 = vmatpush1.msra.mxu0 %v84
    %642 = vmatprep.subr.mxu0 %v81
    %643 = vmatpush1.msra.mxu0 %v80
    %644 = vmatprep.subr.mxu0 %v77
    %645 = vmatpush1.msra.mxu0 %v76
    %646 = vmatprep.subr.mxu0 %v73
    %647 = vmatpush1.msra.mxu0 %v72
    %648 = vmatprep.subr.mxu0 %v69
    %649 = vmatpush1.msra.mxu0 %v68
    %650 = vmatprep.subr.mxu0 %v65
    %651 = vmatpush1.msra.mxu0 %v64
    %652 = vmatprep.subr.mxu0 %v61
    %653 = vmatpush1.msra.mxu0 %v60
    %654 = vmatprep.subr.mxu0 %v57
    %655 = vmatpush1.msra.mxu0 %v56
    %656 = vmatprep.subr.mxu0 %v53
    %657 = vmatpush1.msra.mxu0 %v52
    %658 = vmatprep.subr.mxu0 %v49
    %659 = vmatpush1.msra.mxu0 %v48
    %660 = vmatprep.subr.mxu0 %v45
    %661 = vmatpush1.msra.mxu0 %v44
    %662 = vmatprep.subr.mxu0 %v41
    %663 = vmatpush1.msra.mxu0 %v40
    %664 = vmatprep.subr.mxu0 %v165
    %665 = vmatpush2.msra.mxu0 %v164
    %666 = vmatprep.subr.mxu0 %v161
    %667 = vmatpush2.msra.mxu0 %v160
    %668 = vmatprep.subr.mxu0 %v157
    %669 = vmatpush2.msra.mxu0 %v156
    %670 = vmatprep.subr.mxu0 %v153
    %671 = vmatpush2.msra.mxu0 %v152
    %672 = vmatprep.subr.mxu0 %v149
    %673 = vmatpush2.msra.mxu0 %v148
    %674 = vmatprep.subr.mxu0 %v145
    %675 = vmatpush2.msra.mxu0 %v144
    %676 = vmatprep.subr.mxu0 %v141
    %677 = vmatpush2.msra.mxu0 %v140
    %678 = vmatprep.subr.mxu0 %v137
    %679 = vmatpush2.msra.mxu0 %v136
    %680 = vmatprep.subr.mxu0 %v133
    %681 = vmatpush2.msra.mxu0 %v132
    %682 = vmatprep.subr.mxu0 %v129
    %683 = vmatpush2.msra.mxu0 %v128
    %684 = vmatprep.subr.mxu0 %v125
    %685 = vmatpush2.msra.mxu0 %v124
    %686 = vmatprep.subr.mxu0 %v121
    %687 = vmatpush2.msra.mxu0 %v120
    %688 = vmatprep.subr.mxu0 %v117
    %689 = vmatpush2.msra.mxu0 %v116
    %690 = vmatprep.subr.mxu0 %v113
    %691 = vmatpush2.msra.mxu0 %v112
    %692 = vmatprep.subr.mxu0 %v109
    %693 = vmatpush2.msra.mxu0 %v108
    %694 = vmatprep.subr.mxu0 %v105
    %695 = vmatpush2.msra.mxu0 %v104
    %696 = vmatprep.mubr.f32.mxu0 %v619
    %697 = vmatmul.mubr.f32.gmra.mxu0 %v615
    %v698 = vpop.f32.mrf.mxu0
    %v699 = vadd.f32 0.0, %v698
    %v700 = vpop.f32.mrf.mxu0
    %v701 = vadd.f32 0.0, %v700
    %702 = vdwg.mxu0
    %703 = vmatprep.subr.mxu0 %v229
    %704 = vmatpush1.msra.mxu0 %v228
    %705 = vmatprep.subr.mxu0 %v225
    %706 = vmatpush1.msra.mxu0 %v224
    %707 = vmatprep.subr.mxu0 %v221
    %708 = vmatpush1.msra.mxu0 %v220
    %709 = vmatprep.subr.mxu0 %v217
    %710 = vmatpush1.msra.mxu0 %v216
    %711 = vmatprep.subr.mxu0 %v213
    %712 = vmatpush1.msra.mxu0 %v212
    %713 = vmatprep.subr.mxu0 %v209
    %714 = vmatpush1.msra.mxu0 %v208
    %715 = vmatprep.subr.mxu0 %v205
    %716 = vmatpush1.msra.mxu0 %v204
    %717 = vmatprep.subr.mxu0 %v201
    %718 = vmatpush1.msra.mxu0 %v200
    %719 = vmatprep.subr.mxu0 %v197
    %720 = vmatpush1.msra.mxu0 %v196
    %721 = vmatprep.subr.mxu0 %v193
    %722 = vmatpush1.msra.mxu0 %v192
    %723 = vmatprep.subr.mxu0 %v189
    %724 = vmatpush1.msra.mxu0 %v188
    %725 = vmatprep.subr.mxu0 %v185
    %726 = vmatpush1.msra.mxu0 %v184
    %727 = vmatprep.subr.mxu0 %v181
    %728 = vmatpush1.msra.mxu0 %v180
    %729 = vmatprep.subr.mxu0 %v177
    %730 = vmatpush1.msra.mxu0 %v176
    %731 = vmatprep.subr.mxu0 %v173
    %732 = vmatpush1.msra.mxu0 %v172
    %733 = vmatprep.subr.mxu0 %v169
    %734 = vmatpush1.msra.mxu0 %v168
    %735 = vmatprep.subr.mxu0 %v293
    %736 = vmatpush2.msra.mxu0 %v292
    %737 = vmatprep.subr.mxu0 %v289
    %738 = vmatpush2.msra.mxu0 %v288
    %739 = vmatprep.subr.mxu0 %v285
    %740 = vmatpush2.msra.mxu0 %v284
    %741 = vmatprep.subr.mxu0 %v281
    %742 = vmatpush2.msra.mxu0 %v280
    %743 = vmatprep.subr.mxu0 %v277
    %744 = vmatpush2.msra.mxu0 %v276
    %745 = vmatprep.subr.mxu0 %v273
    %746 = vmatpush2.msra.mxu0 %v272
    %747 = vmatprep.subr.mxu0 %v269
    %748 = vmatpush2.msra.mxu0 %v268
    %749 = vmatprep.subr.mxu0 %v265
    %750 = vmatpush2.msra.mxu0 %v264
    %751 = vmatprep.subr.mxu0 %v261
    %752 = vmatpush2.msra.mxu0 %v260
    %753 = vmatprep.subr.mxu0 %v257
    %754 = vmatpush2.msra.mxu0 %v256
    %755 = vmatprep.subr.mxu0 %v253
    %756 = vmatpush2.msra.mxu0 %v252
    %757 = vmatprep.subr.mxu0 %v249
    %758 = vmatpush2.msra.mxu0 %v248
    %759 = vmatprep.subr.mxu0 %v245
    %760 = vmatpush2.msra.mxu0 %v244
    %761 = vmatprep.subr.mxu0 %v241
    %762 = vmatpush2.msra.mxu0 %v240
    %763 = vmatprep.subr.mxu0 %v237
    %764 = vmatpush2.msra.mxu0 %v236
    %765 = vmatprep.subr.mxu0 %v233
    %766 = vmatpush2.msra.mxu0 %v232
    %767 = vmatprep.mubr.f32.mxu0 %v627
    %768 = vmatmul.mubr.f32.gmra.mxu0 %v623
    %v769 = vpop.f32.mrf.mxu0
    %v770 = vadd.f32 %v699, %v769
    %v771 = vpop.f32.mrf.mxu0
    %v772 = vadd.f32 %v701, %v771
    %773 = vdwg.mxu0
    %774 = vmatprep.subr.mxu0 %v103
    %775 = vmatpush1.msra.mxu0 %v102
    %776 = vmatprep.subr.mxu0 %v99
    %777 = vmatpush1.msra.mxu0 %v98
    %778 = vmatprep.subr.mxu0 %v95
    %779 = vmatpush1.msra.mxu0 %v94
    %780 = vmatprep.subr.mxu0 %v91
    %781 = vmatpush1.msra.mxu0 %v90
    %782 = vmatprep.subr.mxu0 %v87
    %783 = vmatpush1.msra.mxu0 %v86
    %784 = vmatprep.subr.mxu0 %v83
    %785 = vmatpush1.msra.mxu0 %v82
    %786 = vmatprep.subr.mxu0 %v79
    %787 = vmatpush1.msra.mxu0 %v78
    %788 = vmatprep.subr.mxu0 %v75
    %789 = vmatpush1.msra.mxu0 %v74
    %790 = vmatprep.subr.mxu0 %v71
    %791 = vmatpush1.msra.mxu0 %v70
    %792 = vmatprep.subr.mxu0 %v67
    %793 = vmatpush1.msra.mxu0 %v66
    %794 = vmatprep.subr.mxu0 %v63
    %795 = vmatpush1.msra.mxu0 %v62
    %796 = vmatprep.subr.mxu0 %v59
    %797 = vmatpush1.msra.mxu0 %v58
    %798 = vmatprep.subr.mxu0 %v55
    %799 = vmatpush1.msra.mxu0 %v54
    %800 = vmatprep.subr.mxu0 %v51
    %801 = vmatpush1.msra.mxu0 %v50
    %802 = vmatprep.subr.mxu0 %v47
    %803 = vmatpush1.msra.mxu0 %v46
    %804 = vmatprep.subr.mxu0 %v43
    %805 = vmatpush1.msra.mxu0 %v42
    %806 = vmatprep.subr.mxu0 %v167
    %807 = vmatpush2.msra.mxu0 %v166
    %808 = vmatprep.subr.mxu0 %v163
    %809 = vmatpush2.msra.mxu0 %v162
    %810 = vmatprep.subr.mxu0 %v159
    %811 = vmatpush2.msra.mxu0 %v158
    %812 = vmatprep.subr.mxu0 %v155
    %813 = vmatpush2.msra.mxu0 %v154
    %814 = vmatprep.subr.mxu0 %v151
    %815 = vmatpush2.msra.mxu0 %v150
    %816 = vmatprep.subr.mxu0 %v147
    %817 = vmatpush2.msra.mxu0 %v146
    %818 = vmatprep.subr.mxu0 %v143
    %819 = vmatpush2.msra.mxu0 %v142
    %820 = vmatprep.subr.mxu0 %v139
    %821 = vmatpush2.msra.mxu0 %v138
    %822 = vmatprep.subr.mxu0 %v135
    %823 = vmatpush2.msra.mxu0 %v134
    %824 = vmatprep.subr.mxu0 %v131
    %825 = vmatpush2.msra.mxu0 %v130
    %826 = vmatprep.subr.mxu0 %v127
    %827 = vmatpush2.msra.mxu0 %v126
    %828 = vmatprep.subr.mxu0 %v123
    %829 = vmatpush2.msra.mxu0 %v122
    %830 = vmatprep.subr.mxu0 %v119
    %831 = vmatpush2.msra.mxu0 %v118
    %832 = vmatprep.subr.mxu0 %v115
    %833 = vmatpush2.msra.mxu0 %v114
    %834 = vmatprep.subr.mxu0 %v111
    %835 = vmatpush2.msra.mxu0 %v110
    %836 = vmatprep.subr.mxu0 %v107
    %837 = vmatpush2.msra.mxu0 %v106
    %838 = vmatprep.mubr.f32.mxu0 %v619
    %839 = vmatmul.mubr.f32.gmra.mxu0 %v615
    %v840 = vpop.f32.mrf.mxu0
    %v841 = vadd.f32 0.0, %v840
    %v842 = vpop.f32.mrf.mxu0
    %v843 = vadd.f32 0.0, %v842
    %844 = vdwg.mxu0
    %845 = vmatprep.subr.mxu0 %v231
    %846 = vmatpush1.msra.mxu0 %v230
    %847 = vmatprep.subr.mxu0 %v227
    %848 = vmatpush1.msra.mxu0 %v226
    %849 = vmatprep.subr.mxu0 %v223
    %850 = vmatpush1.msra.mxu0 %v222
    %851 = vmatprep.subr.mxu0 %v219
    %852 = vmatpush1.msra.mxu0 %v218
    %853 = vmatprep.subr.mxu0 %v215
    %854 = vmatpush1.msra.mxu0 %v214
    %855 = vmatprep.subr.mxu0 %v211
    %856 = vmatpush1.msra.mxu0 %v210
    %857 = vmatprep.subr.mxu0 %v207
    %858 = vmatpush1.msra.mxu0 %v206
    %859 = vmatprep.subr.mxu0 %v203
    %860 = vmatpush1.msra.mxu0 %v202
    %861 = vmatprep.subr.mxu0 %v199
    %862 = vmatpush1.msra.mxu0 %v198
    %863 = vmatprep.subr.mxu0 %v195
    %864 = vmatpush1.msra.mxu0 %v194
    %865 = vmatprep.subr.mxu0 %v191
    %866 = vmatpush1.msra.mxu0 %v190
    %867 = vmatprep.subr.mxu0 %v187
    %868 = vmatpush1.msra.mxu0 %v186
    %869 = vmatprep.subr.mxu0 %v183
    %870 = vmatpush1.msra.mxu0 %v182
    %871 = vmatprep.subr.mxu0 %v179
    %872 = vmatpush1.msra.mxu0 %v178
    %873 = vmatprep.subr.mxu0 %v175
    %874 = vmatpush1.msra.mxu0 %v174
    %875 = vmatprep.subr.mxu0 %v171
    %876 = vmatpush1.msra.mxu0 %v170
    %877 = vmatprep.subr.mxu0 %v295
    %878 = vmatpush2.msra.mxu0 %v294
    %879 = vmatprep.subr.mxu0 %v291
    %880 = vmatpush2.msra.mxu0 %v290
    %881 = vmatprep.subr.mxu0 %v287
    %882 = vmatpush2.msra.mxu0 %v286
    %883 = vmatprep.subr.mxu0 %v283
    %884 = vmatpush2.msra.mxu0 %v282
    %885 = vmatprep.subr.mxu0 %v279
    %886 = vmatpush2.msra.mxu0 %v278
    %887 = vmatprep.subr.mxu0 %v275
    %888 = vmatpush2.msra.mxu0 %v274
    %889 = vmatprep.subr.mxu0 %v271
    %890 = vmatpush2.msra.mxu0 %v270
    %891 = vmatprep.subr.mxu0 %v267
    %892 = vmatpush2.msra.mxu0 %v266
    %893 = vmatprep.subr.mxu0 %v263
    %894 = vmatpush2.msra.mxu0 %v262
    %895 = vmatprep.subr.mxu0 %v259
    %896 = vmatpush2.msra.mxu0 %v258
    %897 = vmatprep.subr.mxu0 %v255
    %898 = vmatpush2.msra.mxu0 %v254
    %899 = vmatprep.subr.mxu0 %v251
    %900 = vmatpush2.msra.mxu0 %v250
    %901 = vmatprep.subr.mxu0 %v247
    %902 = vmatpush2.msra.mxu0 %v246
    %903 = vmatprep.subr.mxu0 %v243
    %904 = vmatpush2.msra.mxu0 %v242
    %905 = vmatprep.subr.mxu0 %v239
    %906 = vmatpush2.msra.mxu0 %v238
    %907 = vmatprep.subr.mxu0 %v235
    %908 = vmatpush2.msra.mxu0 %v234
    %909 = vmatprep.mubr.f32.mxu0 %v627
    %910 = vmatmul.mubr.f32.gmra.mxu0 %v623
    %v911 = vpop.f32.mrf.mxu0
    %v912 = vadd.f32 %v841, %v911
    %v913 = vpop.f32.mrf.mxu0
    %v914 = vadd.f32 %v843, %v913
    %915 = vdwg.mxu0
    %s916 = scalar_lea.vmem [#allocation7], 4
    %917 = vst [vmem:[%s916] sm:$0x1] %v770
    %s918 = scalar_lea.vmem [#allocation7], 5
    %919 = vst [vmem:[%s918] sm:$0x1] %v772
    %s920 = scalar_lea.vmem [#allocation7], 6
    %921 = vst [vmem:[%s920] sm:$0x1] %v912
    %s922 = scalar_lea.vmem [#allocation7], 7
    %923 = vst [vmem:[%s922] sm:$0x1] %v914
    %s924 = scalar_lea.vmem [#allocation5], 8
    %v925 = vld [vmem:[%s924] sm:$0xf]
    %v927 = vlaneseq
    %v928 = vshrl.u32 %v927, 7
    %v929 = vsub.s32 0, %v928
    %v930 = vrot.slane %v925, %v929
    %v931 = vlaneseq
    %v932 = vshrl.u32 %v931, 7
    %v933 = vsub.s32 1, %v932
    %v934 = vrot.slane %v925, %v933
    %v935 = vlaneseq
    %v936 = vshrl.u32 %v935, 7
    %v937 = vsub.s32 2, %v936
    %v938 = vrot.slane %v925, %v937
    %v939 = vlaneseq
    %v940 = vshrl.u32 %v939, 7
    %v941 = vsub.s32 3, %v940
    %v942 = vrot.slane %v925, %v941
    %947 = vmatprep.subr.mxu0 %v101
    %948 = vmatpush1.msra.mxu0 %v100
    %949 = vmatprep.subr.mxu0 %v97
    %950 = vmatpush1.msra.mxu0 %v96
    %951 = vmatprep.subr.mxu0 %v93
    %952 = vmatpush1.msra.mxu0 %v92
    %953 = vmatprep.subr.mxu0 %v89
    %954 = vmatpush1.msra.mxu0 %v88
    %955 = vmatprep.subr.mxu0 %v85
    %956 = vmatpush1.msra.mxu0 %v84
    %957 = vmatprep.subr.mxu0 %v81
    %958 = vmatpush1.msra.mxu0 %v80
    %959 = vmatprep.subr.mxu0 %v77
    %960 = vmatpush1.msra.mxu0 %v76
    %961 = vmatprep.subr.mxu0 %v73
    %962 = vmatpush1.msra.mxu0 %v72
    %963 = vmatprep.subr.mxu0 %v69
    %964 = vmatpush1.msra.mxu0 %v68
    %965 = vmatprep.subr.mxu0 %v65
    %966 = vmatpush1.msra.mxu0 %v64
    %967 = vmatprep.subr.mxu0 %v61
    %968 = vmatpush1.msra.mxu0 %v60
    %969 = vmatprep.subr.mxu0 %v57
    %970 = vmatpush1.msra.mxu0 %v56
    %971 = vmatprep.subr.mxu0 %v53
    %972 = vmatpush1.msra.mxu0 %v52
    %973 = vmatprep.subr.mxu0 %v49
    %974 = vmatpush1.msra.mxu0 %v48
    %975 = vmatprep.subr.mxu0 %v45
    %976 = vmatpush1.msra.mxu0 %v44
    %977 = vmatprep.subr.mxu0 %v41
    %978 = vmatpush1.msra.mxu0 %v40
    %979 = vmatprep.subr.mxu0 %v165
    %980 = vmatpush2.msra.mxu0 %v164
    %981 = vmatprep.subr.mxu0 %v161
    %982 = vmatpush2.msra.mxu0 %v160
    %983 = vmatprep.subr.mxu0 %v157
    %984 = vmatpush2.msra.mxu0 %v156
    %985 = vmatprep.subr.mxu0 %v153
    %986 = vmatpush2.msra.mxu0 %v152
    %987 = vmatprep.subr.mxu0 %v149
    %988 = vmatpush2.msra.mxu0 %v148
    %989 = vmatprep.subr.mxu0 %v145
    %990 = vmatpush2.msra.mxu0 %v144
    %991 = vmatprep.subr.mxu0 %v141
    %992 = vmatpush2.msra.mxu0 %v140
    %993 = vmatprep.subr.mxu0 %v137
    %994 = vmatpush2.msra.mxu0 %v136
    %995 = vmatprep.subr.mxu0 %v133
    %996 = vmatpush2.msra.mxu0 %v132
    %997 = vmatprep.subr.mxu0 %v129
    %998 = vmatpush2.msra.mxu0 %v128
    %999 = vmatprep.subr.mxu0 %v125
    %1000 = vmatpush2.msra.mxu0 %v124
    %1001 = vmatprep.subr.mxu0 %v121
    %1002 = vmatpush2.msra.mxu0 %v120
    %1003 = vmatprep.subr.mxu0 %v117
    %1004 = vmatpush2.msra.mxu0 %v116
    %1005 = vmatprep.subr.mxu0 %v113
    %1006 = vmatpush2.msra.mxu0 %v112
    %1007 = vmatprep.subr.mxu0 %v109
    %1008 = vmatpush2.msra.mxu0 %v108
    %1009 = vmatprep.subr.mxu0 %v105
    %1010 = vmatpush2.msra.mxu0 %v104
    %1011 = vmatprep.mubr.f32.mxu0 %v934
    %1012 = vmatmul.mubr.f32.gmra.mxu0 %v930
    %v1013 = vpop.f32.mrf.mxu0
    %v1014 = vadd.f32 0.0, %v1013
    %v1015 = vpop.f32.mrf.mxu0
    %v1016 = vadd.f32 0.0, %v1015
    %1017 = vdwg.mxu0
    %1018 = vmatprep.subr.mxu0 %v229
    %1019 = vmatpush1.msra.mxu0 %v228
    %1020 = vmatprep.subr.mxu0 %v225
    %1021 = vmatpush1.msra.mxu0 %v224
    %1022 = vmatprep.subr.mxu0 %v221
    %1023 = vmatpush1.msra.mxu0 %v220
    %1024 = vmatprep.subr.mxu0 %v217
    %1025 = vmatpush1.msra.mxu0 %v216
    %1026 = vmatprep.subr.mxu0 %v213
    %1027 = vmatpush1.msra.mxu0 %v212
    %1028 = vmatprep.subr.mxu0 %v209
    %1029 = vmatpush1.msra.mxu0 %v208
    %1030 = vmatprep.subr.mxu0 %v205
    %1031 = vmatpush1.msra.mxu0 %v204
    %1032 = vmatprep.subr.mxu0 %v201
    %1033 = vmatpush1.msra.mxu0 %v200
    %1034 = vmatprep.subr.mxu0 %v197
    %1035 = vmatpush1.msra.mxu0 %v196
    %1036 = vmatprep.subr.mxu0 %v193
    %1037 = vmatpush1.msra.mxu0 %v192
    %1038 = vmatprep.subr.mxu0 %v189
    %1039 = vmatpush1.msra.mxu0 %v188
    %1040 = vmatprep.subr.mxu0 %v185
    %1041 = vmatpush1.msra.mxu0 %v184
    %1042 = vmatprep.subr.mxu0 %v181
    %1043 = vmatpush1.msra.mxu0 %v180
    %1044 = vmatprep.subr.mxu0 %v177
    %1045 = vmatpush1.msra.mxu0 %v176
    %1046 = vmatprep.subr.mxu0 %v173
    %1047 = vmatpush1.msra.mxu0 %v172
    %1048 = vmatprep.subr.mxu0 %v169
    %1049 = vmatpush1.msra.mxu0 %v168
    %1050 = vmatprep.subr.mxu0 %v293
    %1051 = vmatpush2.msra.mxu0 %v292
    %1052 = vmatprep.subr.mxu0 %v289
    %1053 = vmatpush2.msra.mxu0 %v288
    %1054 = vmatprep.subr.mxu0 %v285
    %1055 = vmatpush2.msra.mxu0 %v284
    %1056 = vmatprep.subr.mxu0 %v281
    %1057 = vmatpush2.msra.mxu0 %v280
    %1058 = vmatprep.subr.mxu0 %v277
    %1059 = vmatpush2.msra.mxu0 %v276
    %1060 = vmatprep.subr.mxu0 %v273
    %1061 = vmatpush2.msra.mxu0 %v272
    %1062 = vmatprep.subr.mxu0 %v269
    %1063 = vmatpush2.msra.mxu0 %v268
    %1064 = vmatprep.subr.mxu0 %v265
    %1065 = vmatpush2.msra.mxu0 %v264
    %1066 = vmatprep.subr.mxu0 %v261
    %1067 = vmatpush2.msra.mxu0 %v260
    %1068 = vmatprep.subr.mxu0 %v257
    %1069 = vmatpush2.msra.mxu0 %v256
    %1070 = vmatprep.subr.mxu0 %v253
    %1071 = vmatpush2.msra.mxu0 %v252
    %1072 = vmatprep.subr.mxu0 %v249
    %1073 = vmatpush2.msra.mxu0 %v248
    %1074 = vmatprep.subr.mxu0 %v245
    %1075 = vmatpush2.msra.mxu0 %v244
    %1076 = vmatprep.subr.mxu0 %v241
    %1077 = vmatpush2.msra.mxu0 %v240
    %1078 = vmatprep.subr.mxu0 %v237
    %1079 = vmatpush2.msra.mxu0 %v236
    %1080 = vmatprep.subr.mxu0 %v233
    %1081 = vmatpush2.msra.mxu0 %v232
    %1082 = vmatprep.mubr.f32.mxu0 %v942
    %1083 = vmatmul.mubr.f32.gmra.mxu0 %v938
    %v1084 = vpop.f32.mrf.mxu0
    %v1085 = vadd.f32 %v1014, %v1084
    %v1086 = vpop.f32.mrf.mxu0
    %v1087 = vadd.f32 %v1016, %v1086
    %1088 = vdwg.mxu0
    %1089 = vmatprep.subr.mxu0 %v103
    %1090 = vmatpush1.msra.mxu0 %v102
    %1091 = vmatprep.subr.mxu0 %v99
    %1092 = vmatpush1.msra.mxu0 %v98
    %1093 = vmatprep.subr.mxu0 %v95
    %1094 = vmatpush1.msra.mxu0 %v94
    %1095 = vmatprep.subr.mxu0 %v91
    %1096 = vmatpush1.msra.mxu0 %v90
    %1097 = vmatprep.subr.mxu0 %v87
    %1098 = vmatpush1.msra.mxu0 %v86
    %1099 = vmatprep.subr.mxu0 %v83
    %1100 = vmatpush1.msra.mxu0 %v82
    %1101 = vmatprep.subr.mxu0 %v79
    %1102 = vmatpush1.msra.mxu0 %v78
    %1103 = vmatprep.subr.mxu0 %v75
    %1104 = vmatpush1.msra.mxu0 %v74
    %1105 = vmatprep.subr.mxu0 %v71
    %1106 = vmatpush1.msra.mxu0 %v70
    %1107 = vmatprep.subr.mxu0 %v67
    %1108 = vmatpush1.msra.mxu0 %v66
    %1109 = vmatprep.subr.mxu0 %v63
    %1110 = vmatpush1.msra.mxu0 %v62
    %1111 = vmatprep.subr.mxu0 %v59
    %1112 = vmatpush1.msra.mxu0 %v58
    %1113 = vmatprep.subr.mxu0 %v55
    %1114 = vmatpush1.msra.mxu0 %v54
    %1115 = vmatprep.subr.mxu0 %v51
    %1116 = vmatpush1.msra.mxu0 %v50
    %1117 = vmatprep.subr.mxu0 %v47
    %1118 = vmatpush1.msra.mxu0 %v46
    %1119 = vmatprep.subr.mxu0 %v43
    %1120 = vmatpush1.msra.mxu0 %v42
    %1121 = vmatprep.subr.mxu0 %v167
    %1122 = vmatpush2.msra.mxu0 %v166
    %1123 = vmatprep.subr.mxu0 %v163
    %1124 = vmatpush2.msra.mxu0 %v162
    %1125 = vmatprep.subr.mxu0 %v159
    %1126 = vmatpush2.msra.mxu0 %v158
    %1127 = vmatprep.subr.mxu0 %v155
    %1128 = vmatpush2.msra.mxu0 %v154
    %1129 = vmatprep.subr.mxu0 %v151
    %1130 = vmatpush2.msra.mxu0 %v150
    %1131 = vmatprep.subr.mxu0 %v147
    %1132 = vmatpush2.msra.mxu0 %v146
    %1133 = vmatprep.subr.mxu0 %v143
    %1134 = vmatpush2.msra.mxu0 %v142
    %1135 = vmatprep.subr.mxu0 %v139
    %1136 = vmatpush2.msra.mxu0 %v138
    %1137 = vmatprep.subr.mxu0 %v135
    %1138 = vmatpush2.msra.mxu0 %v134
    %1139 = vmatprep.subr.mxu0 %v131
    %1140 = vmatpush2.msra.mxu0 %v130
    %1141 = vmatprep.subr.mxu0 %v127
    %1142 = vmatpush2.msra.mxu0 %v126
    %1143 = vmatprep.subr.mxu0 %v123
    %1144 = vmatpush2.msra.mxu0 %v122
    %1145 = vmatprep.subr.mxu0 %v119
    %1146 = vmatpush2.msra.mxu0 %v118
    %1147 = vmatprep.subr.mxu0 %v115
    %1148 = vmatpush2.msra.mxu0 %v114
    %1149 = vmatprep.subr.mxu0 %v111
    %1150 = vmatpush2.msra.mxu0 %v110
    %1151 = vmatprep.subr.mxu0 %v107
    %1152 = vmatpush2.msra.mxu0 %v106
    %1153 = vmatprep.mubr.f32.mxu0 %v934
    %1154 = vmatmul.mubr.f32.gmra.mxu0 %v930
    %v1155 = vpop.f32.mrf.mxu0
    %v1156 = vadd.f32 0.0, %v1155
    %v1157 = vpop.f32.mrf.mxu0
    %v1158 = vadd.f32 0.0, %v1157
    %1159 = vdwg.mxu0
    %1160 = vmatprep.subr.mxu0 %v231
    %1161 = vmatpush1.msra.mxu0 %v230
    %1162 = vmatprep.subr.mxu0 %v227
    %1163 = vmatpush1.msra.mxu0 %v226
    %1164 = vmatprep.subr.mxu0 %v223
    %1165 = vmatpush1.msra.mxu0 %v222
    %1166 = vmatprep.subr.mxu0 %v219
    %1167 = vmatpush1.msra.mxu0 %v218
    %1168 = vmatprep.subr.mxu0 %v215
    %1169 = vmatpush1.msra.mxu0 %v214
    %1170 = vmatprep.subr.mxu0 %v211
    %1171 = vmatpush1.msra.mxu0 %v210
    %1172 = vmatprep.subr.mxu0 %v207
    %1173 = vmatpush1.msra.mxu0 %v206
    %1174 = vmatprep.subr.mxu0 %v203
    %1175 = vmatpush1.msra.mxu0 %v202
    %1176 = vmatprep.subr.mxu0 %v199
    %1177 = vmatpush1.msra.mxu0 %v198
    %1178 = vmatprep.subr.mxu0 %v195
    %1179 = vmatpush1.msra.mxu0 %v194
    %1180 = vmatprep.subr.mxu0 %v191
    %1181 = vmatpush1.msra.mxu0 %v190
    %1182 = vmatprep.subr.mxu0 %v187
    %1183 = vmatpush1.msra.mxu0 %v186
    %1184 = vmatprep.subr.mxu0 %v183
    %1185 = vmatpush1.msra.mxu0 %v182
    %1186 = vmatprep.subr.mxu0 %v179
    %1187 = vmatpush1.msra.mxu0 %v178
    %1188 = vmatprep.subr.mxu0 %v175
    %1189 = vmatpush1.msra.mxu0 %v174
    %1190 = vmatprep.subr.mxu0 %v171
    %1191 = vmatpush1.msra.mxu0 %v170
    %1192 = vmatprep.subr.mxu0 %v295
    %1193 = vmatpush2.msra.mxu0 %v294
    %1194 = vmatprep.subr.mxu0 %v291
    %1195 = vmatpush2.msra.mxu0 %v290
    %1196 = vmatprep.subr.mxu0 %v287
    %1197 = vmatpush2.msra.mxu0 %v286
    %1198 = vmatprep.subr.mxu0 %v283
    %1199 = vmatpush2.msra.mxu0 %v282
    %1200 = vmatprep.subr.mxu0 %v279
    %1201 = vmatpush2.msra.mxu0 %v278
    %1202 = vmatprep.subr.mxu0 %v275
    %1203 = vmatpush2.msra.mxu0 %v274
    %1204 = vmatprep.subr.mxu0 %v271
    %1205 = vmatpush2.msra.mxu0 %v270
    %1206 = vmatprep.subr.mxu0 %v267
    %1207 = vmatpush2.msra.mxu0 %v266
    %1208 = vmatprep.subr.mxu0 %v263
    %1209 = vmatpush2.msra.mxu0 %v262
    %1210 = vmatprep.subr.mxu0 %v259
    %1211 = vmatpush2.msra.mxu0 %v258
    %1212 = vmatprep.subr.mxu0 %v255
    %1213 = vmatpush2.msra.mxu0 %v254
    %1214 = vmatprep.subr.mxu0 %v251
    %1215 = vmatpush2.msra.mxu0 %v250
    %1216 = vmatprep.subr.mxu0 %v247
    %1217 = vmatpush2.msra.mxu0 %v246
    %1218 = vmatprep.subr.mxu0 %v243
    %1219 = vmatpush2.msra.mxu0 %v242
    %1220 = vmatprep.subr.mxu0 %v239
    %1221 = vmatpush2.msra.mxu0 %v238
    %1222 = vmatprep.subr.mxu0 %v235
    %1223 = vmatpush2.msra.mxu0 %v234
    %1224 = vmatprep.mubr.f32.mxu0 %v942
    %1225 = vmatmul.mubr.f32.gmra.mxu0 %v938
    %v1226 = vpop.f32.mrf.mxu0
    %v1227 = vadd.f32 %v1156, %v1226
    %v1228 = vpop.f32.mrf.mxu0
    %v1229 = vadd.f32 %v1158, %v1228
    %1230 = vdwg.mxu0
    %s1231 = scalar_lea.vmem [#allocation7], 8
    %1232 = vst [vmem:[%s1231] sm:$0x1] %v1085
    %s1233 = scalar_lea.vmem [#allocation7], 9
    %1234 = vst [vmem:[%s1233] sm:$0x1] %v1087
    %s1235 = scalar_lea.vmem [#allocation7], 10
    %1236 = vst [vmem:[%s1235] sm:$0x1] %v1227
    %s1237 = scalar_lea.vmem [#allocation7], 11
    %1238 = vst [vmem:[%s1237] sm:$0x1] %v1229
    %s1239 = scalar_lea.vmem [#allocation5], 12
    %v1240 = vld [vmem:[%s1239] sm:$0xf]
    %v1242 = vlaneseq
    %v1243 = vshrl.u32 %v1242, 7
    %v1244 = vsub.s32 0, %v1243
    %v1245 = vrot.slane %v1240, %v1244
    %v1246 = vlaneseq
    %v1247 = vshrl.u32 %v1246, 7
    %v1248 = vsub.s32 1, %v1247
    %v1249 = vrot.slane %v1240, %v1248
    %v1250 = vlaneseq
    %v1251 = vshrl.u32 %v1250, 7
    %v1252 = vsub.s32 2, %v1251
    %v1253 = vrot.slane %v1240, %v1252
    %v1254 = vlaneseq
    %v1255 = vshrl.u32 %v1254, 7
    %v1256 = vsub.s32 3, %v1255
    %v1257 = vrot.slane %v1240, %v1256
    %1262 = vmatprep.subr.mxu0 %v101
    %1263 = vmatpush1.msra.mxu0 %v100
    %1264 = vmatprep.subr.mxu0 %v97
    %1265 = vmatpush1.msra.mxu0 %v96
    %1266 = vmatprep.subr.mxu0 %v93
    %1267 = vmatpush1.msra.mxu0 %v92
    %1268 = vmatprep.subr.mxu0 %v89
    %1269 = vmatpush1.msra.mxu0 %v88
    %1270 = vmatprep.subr.mxu0 %v85
    %1271 = vmatpush1.msra.mxu0 %v84
    %1272 = vmatprep.subr.mxu0 %v81
    %1273 = vmatpush1.msra.mxu0 %v80
    %1274 = vmatprep.subr.mxu0 %v77
    %1275 = vmatpush1.msra.mxu0 %v76
    %1276 = vmatprep.subr.mxu0 %v73
    %1277 = vmatpush1.msra.mxu0 %v72
    %1278 = vmatprep.subr.mxu0 %v69
    %1279 = vmatpush1.msra.mxu0 %v68
    %1280 = vmatprep.subr.mxu0 %v65
    %1281 = vmatpush1.msra.mxu0 %v64
    %1282 = vmatprep.subr.mxu0 %v61
    %1283 = vmatpush1.msra.mxu0 %v60
    %1284 = vmatprep.subr.mxu0 %v57
    %1285 = vmatpush1.msra.mxu0 %v56
    %1286 = vmatprep.subr.mxu0 %v53
    %1287 = vmatpush1.msra.mxu0 %v52
    %1288 = vmatprep.subr.mxu0 %v49
    %1289 = vmatpush1.msra.mxu0 %v48
    %1290 = vmatprep.subr.mxu0 %v45
    %1291 = vmatpush1.msra.mxu0 %v44
    %1292 = vmatprep.subr.mxu0 %v41
    %1293 = vmatpush1.msra.mxu0 %v40
    %1294 = vmatprep.subr.mxu0 %v165
    %1295 = vmatpush2.msra.mxu0 %v164
    %1296 = vmatprep.subr.mxu0 %v161
    %1297 = vmatpush2.msra.mxu0 %v160
    %1298 = vmatprep.subr.mxu0 %v157
    %1299 = vmatpush2.msra.mxu0 %v156
    %1300 = vmatprep.subr.mxu0 %v153
    %1301 = vmatpush2.msra.mxu0 %v152
    %1302 = vmatprep.subr.mxu0 %v149
    %1303 = vmatpush2.msra.mxu0 %v148
    %1304 = vmatprep.subr.mxu0 %v145
    %1305 = vmatpush2.msra.mxu0 %v144
    %1306 = vmatprep.subr.mxu0 %v141
    %1307 = vmatpush2.msra.mxu0 %v140
    %1308 = vmatprep.subr.mxu0 %v137
    %1309 = vmatpush2.msra.mxu0 %v136
    %1310 = vmatprep.subr.mxu0 %v133
    %1311 = vmatpush2.msra.mxu0 %v132
    %1312 = vmatprep.subr.mxu0 %v129
    %1313 = vmatpush2.msra.mxu0 %v128
    %1314 = vmatprep.subr.mxu0 %v125
    %1315 = vmatpush2.msra.mxu0 %v124
    %1316 = vmatprep.subr.mxu0 %v121
    %1317 = vmatpush2.msra.mxu0 %v120
    %1318 = vmatprep.subr.mxu0 %v117
    %1319 = vmatpush2.msra.mxu0 %v116
    %1320 = vmatprep.subr.mxu0 %v113
    %1321 = vmatpush2.msra.mxu0 %v112
    %1322 = vmatprep.subr.mxu0 %v109
    %1323 = vmatpush2.msra.mxu0 %v108
    %1324 = vmatprep.subr.mxu0 %v105
    %1325 = vmatpush2.msra.mxu0 %v104
    %1326 = vmatprep.mubr.f32.mxu0 %v1249
    %1327 = vmatmul.mubr.f32.gmra.mxu0 %v1245
    %v1328 = vpop.f32.mrf.mxu0
    %v1329 = vadd.f32 0.0, %v1328
    %v1330 = vpop.f32.mrf.mxu0
    %v1331 = vadd.f32 0.0, %v1330
    %1332 = vdwg.mxu0
    %1333 = vmatprep.subr.mxu0 %v229
    %1334 = vmatpush1.msra.mxu0 %v228
    %1335 = vmatprep.subr.mxu0 %v225
    %1336 = vmatpush1.msra.mxu0 %v224
    %1337 = vmatprep.subr.mxu0 %v221
    %1338 = vmatpush1.msra.mxu0 %v220
    %1339 = vmatprep.subr.mxu0 %v217
    %1340 = vmatpush1.msra.mxu0 %v216
    %1341 = vmatprep.subr.mxu0 %v213
    %1342 = vmatpush1.msra.mxu0 %v212
    %1343 = vmatprep.subr.mxu0 %v209
    %1344 = vmatpush1.msra.mxu0 %v208
    %1345 = vmatprep.subr.mxu0 %v205
    %1346 = vmatpush1.msra.mxu0 %v204
    %1347 = vmatprep.subr.mxu0 %v201
    %1348 = vmatpush1.msra.mxu0 %v200
    %1349 = vmatprep.subr.mxu0 %v197
    %1350 = vmatpush1.msra.mxu0 %v196
    %1351 = vmatprep.subr.mxu0 %v193
    %1352 = vmatpush1.msra.mxu0 %v192
    %1353 = vmatprep.subr.mxu0 %v189
    %1354 = vmatpush1.msra.mxu0 %v188
    %1355 = vmatprep.subr.mxu0 %v185
    %1356 = vmatpush1.msra.mxu0 %v184
    %1357 = vmatprep.subr.mxu0 %v181
    %1358 = vmatpush1.msra.mxu0 %v180
    %1359 = vmatprep.subr.mxu0 %v177
    %1360 = vmatpush1.msra.mxu0 %v176
    %1361 = vmatprep.subr.mxu0 %v173
    %1362 = vmatpush1.msra.mxu0 %v172
    %1363 = vmatprep.subr.mxu0 %v169
    %1364 = vmatpush1.msra.mxu0 %v168
    %1365 = vmatprep.subr.mxu0 %v293
    %1366 = vmatpush2.msra.mxu0 %v292
    %1367 = vmatprep.subr.mxu0 %v289
    %1368 = vmatpush2.msra.mxu0 %v288
    %1369 = vmatprep.subr.mxu0 %v285
    %1370 = vmatpush2.msra.mxu0 %v284
    %1371 = vmatprep.subr.mxu0 %v281
    %1372 = vmatpush2.msra.mxu0 %v280
    %1373 = vmatprep.subr.mxu0 %v277
    %1374 = vmatpush2.msra.mxu0 %v276
    %1375 = vmatprep.subr.mxu0 %v273
    %1376 = vmatpush2.msra.mxu0 %v272
    %1377 = vmatprep.subr.mxu0 %v269
    %1378 = vmatpush2.msra.mxu0 %v268
    %1379 = vmatprep.subr.mxu0 %v265
    %1380 = vmatpush2.msra.mxu0 %v264
    %1381 = vmatprep.subr.mxu0 %v261
    %1382 = vmatpush2.msra.mxu0 %v260
    %1383 = vmatprep.subr.mxu0 %v257
    %1384 = vmatpush2.msra.mxu0 %v256
    %1385 = vmatprep.subr.mxu0 %v253
    %1386 = vmatpush2.msra.mxu0 %v252
    %1387 = vmatprep.subr.mxu0 %v249
    %1388 = vmatpush2.msra.mxu0 %v248
    %1389 = vmatprep.subr.mxu0 %v245
    %1390 = vmatpush2.msra.mxu0 %v244
    %1391 = vmatprep.subr.mxu0 %v241
    %1392 = vmatpush2.msra.mxu0 %v240
    %1393 = vmatprep.subr.mxu0 %v237
    %1394 = vmatpush2.msra.mxu0 %v236
    %1395 = vmatprep.subr.mxu0 %v233
    %1396 = vmatpush2.msra.mxu0 %v232
    %1397 = vmatprep.mubr.f32.mxu0 %v1257
    %1398 = vmatmul.mubr.f32.gmra.mxu0 %v1253
    %v1399 = vpop.f32.mrf.mxu0
    %v1400 = vadd.f32 %v1329, %v1399
    %v1401 = vpop.f32.mrf.mxu0
    %v1402 = vadd.f32 %v1331, %v1401
    %1403 = vdwg.mxu0
    %1404 = vmatprep.subr.mxu0 %v103
    %1405 = vmatpush1.msra.mxu0 %v102
    %1406 = vmatprep.subr.mxu0 %v99
    %1407 = vmatpush1.msra.mxu0 %v98
    %1408 = vmatprep.subr.mxu0 %v95
    %1409 = vmatpush1.msra.mxu0 %v94
    %1410 = vmatprep.subr.mxu0 %v91
    %1411 = vmatpush1.msra.mxu0 %v90
    %1412 = vmatprep.subr.mxu0 %v87
    %1413 = vmatpush1.msra.mxu0 %v86
    %1414 = vmatprep.subr.mxu0 %v83
    %1415 = vmatpush1.msra.mxu0 %v82
    %1416 = vmatprep.subr.mxu0 %v79
    %1417 = vmatpush1.msra.mxu0 %v78
    %1418 = vmatprep.subr.mxu0 %v75
    %1419 = vmatpush1.msra.mxu0 %v74
    %1420 = vmatprep.subr.mxu0 %v71
    %1421 = vmatpush1.msra.mxu0 %v70
    %1422 = vmatprep.subr.mxu0 %v67
    %1423 = vmatpush1.msra.mxu0 %v66
    %1424 = vmatprep.subr.mxu0 %v63
    %1425 = vmatpush1.msra.mxu0 %v62
    %1426 = vmatprep.subr.mxu0 %v59
    %1427 = vmatpush1.msra.mxu0 %v58
    %1428 = vmatprep.subr.mxu0 %v55
    %1429 = vmatpush1.msra.mxu0 %v54
    %1430 = vmatprep.subr.mxu0 %v51
    %1431 = vmatpush1.msra.mxu0 %v50
    %1432 = vmatprep.subr.mxu0 %v47
    %1433 = vmatpush1.msra.mxu0 %v46
    %1434 = vmatprep.subr.mxu0 %v43
    %1435 = vmatpush1.msra.mxu0 %v42
    %1436 = vmatprep.subr.mxu0 %v167
    %1437 = vmatpush2.msra.mxu0 %v166
    %1438 = vmatprep.subr.mxu0 %v163
    %1439 = vmatpush2.msra.mxu0 %v162
    %1440 = vmatprep.subr.mxu0 %v159
    %1441 = vmatpush2.msra.mxu0 %v158
    %1442 = vmatprep.subr.mxu0 %v155
    %1443 = vmatpush2.msra.mxu0 %v154
    %1444 = vmatprep.subr.mxu0 %v151
    %1445 = vmatpush2.msra.mxu0 %v150
    %1446 = vmatprep.subr.mxu0 %v147
    %1447 = vmatpush2.msra.mxu0 %v146
    %1448 = vmatprep.subr.mxu0 %v143
    %1449 = vmatpush2.msra.mxu0 %v142
    %1450 = vmatprep.subr.mxu0 %v139
    %1451 = vmatpush2.msra.mxu0 %v138
    %1452 = vmatprep.subr.mxu0 %v135
    %1453 = vmatpush2.msra.mxu0 %v134
    %1454 = vmatprep.subr.mxu0 %v131
    %1455 = vmatpush2.msra.mxu0 %v130
    %1456 = vmatprep.subr.mxu0 %v127
    %1457 = vmatpush2.msra.mxu0 %v126
    %1458 = vmatprep.subr.mxu0 %v123
    %1459 = vmatpush2.msra.mxu0 %v122
    %1460 = vmatprep.subr.mxu0 %v119
    %1461 = vmatpush2.msra.mxu0 %v118
    %1462 = vmatprep.subr.mxu0 %v115
    %1463 = vmatpush2.msra.mxu0 %v114
    %1464 = vmatprep.subr.mxu0 %v111
    %1465 = vmatpush2.msra.mxu0 %v110
    %1466 = vmatprep.subr.mxu0 %v107
    %1467 = vmatpush2.msra.mxu0 %v106
    %1468 = vmatprep.mubr.f32.mxu0 %v1249
    %1469 = vmatmul.mubr.f32.gmra.mxu0 %v1245
    %v1470 = vpop.f32.mrf.mxu0
    %v1471 = vadd.f32 0.0, %v1470
    %v1472 = vpop.f32.mrf.mxu0
    %v1473 = vadd.f32 0.0, %v1472
    %1474 = vdwg.mxu0
    %1475 = vmatprep.subr.mxu0 %v231
    %1476 = vmatpush1.msra.mxu0 %v230
    %1477 = vmatprep.subr.mxu0 %v227
    %1478 = vmatpush1.msra.mxu0 %v226
    %1479 = vmatprep.subr.mxu0 %v223
    %1480 = vmatpush1.msra.mxu0 %v222
    %1481 = vmatprep.subr.mxu0 %v219
    %1482 = vmatpush1.msra.mxu0 %v218
    %1483 = vmatprep.subr.mxu0 %v215
    %1484 = vmatpush1.msra.mxu0 %v214
    %1485 = vmatprep.subr.mxu0 %v211
    %1486 = vmatpush1.msra.mxu0 %v210
    %1487 = vmatprep.subr.mxu0 %v207
    %1488 = vmatpush1.msra.mxu0 %v206
    %1489 = vmatprep.subr.mxu0 %v203
    %1490 = vmatpush1.msra.mxu0 %v202
    %1491 = vmatprep.subr.mxu0 %v199
    %1492 = vmatpush1.msra.mxu0 %v198
    %1493 = vmatprep.subr.mxu0 %v195
    %1494 = vmatpush1.msra.mxu0 %v194
    %1495 = vmatprep.subr.mxu0 %v191
    %1496 = vmatpush1.msra.mxu0 %v190
    %1497 = vmatprep.subr.mxu0 %v187
    %1498 = vmatpush1.msra.mxu0 %v186
    %1499 = vmatprep.subr.mxu0 %v183
    %1500 = vmatpush1.msra.mxu0 %v182
    %1501 = vmatprep.subr.mxu0 %v179
    %1502 = vmatpush1.msra.mxu0 %v178
    %1503 = vmatprep.subr.mxu0 %v175
    %1504 = vmatpush1.msra.mxu0 %v174
    %1505 = vmatprep.subr.mxu0 %v171
    %1506 = vmatpush1.msra.mxu0 %v170
    %1507 = vmatprep.subr.mxu0 %v295
    %1508 = vmatpush2.msra.mxu0 %v294
    %1509 = vmatprep.subr.mxu0 %v291
    %1510 = vmatpush2.msra.mxu0 %v290
    %1511 = vmatprep.subr.mxu0 %v287
    %1512 = vmatpush2.msra.mxu0 %v286
    %1513 = vmatprep.subr.mxu0 %v283
    %1514 = vmatpush2.msra.mxu0 %v282
    %1515 = vmatprep.subr.mxu0 %v279
    %1516 = vmatpush2.msra.mxu0 %v278
    %1517 = vmatprep.subr.mxu0 %v275
    %1518 = vmatpush2.msra.mxu0 %v274
    %1519 = vmatprep.subr.mxu0 %v271
    %1520 = vmatpush2.msra.mxu0 %v270
    %1521 = vmatprep.subr.mxu0 %v267
    %1522 = vmatpush2.msra.mxu0 %v266
    %1523 = vmatprep.subr.mxu0 %v263
    %1524 = vmatpush2.msra.mxu0 %v262
    %1525 = vmatprep.subr.mxu0 %v259
    %1526 = vmatpush2.msra.mxu0 %v258
    %1527 = vmatprep.subr.mxu0 %v255
    %1528 = vmatpush2.msra.mxu0 %v254
    %1529 = vmatprep.subr.mxu0 %v251
    %1530 = vmatpush2.msra.mxu0 %v250
    %1531 = vmatprep.subr.mxu0 %v247
    %1532 = vmatpush2.msra.mxu0 %v246
    %1533 = vmatprep.subr.mxu0 %v243
    %1534 = vmatpush2.msra.mxu0 %v242
    %1535 = vmatprep.subr.mxu0 %v239
    %1536 = vmatpush2.msra.mxu0 %v238
    %1537 = vmatprep.subr.mxu0 %v235
    %1538 = vmatpush2.msra.mxu0 %v234
    %1539 = vmatprep.mubr.f32.mxu0 %v1257
    %1540 = vmatmul.mubr.f32.gmra.mxu0 %v1253
    %v1541 = vpop.f32.mrf.mxu0
    %v1542 = vadd.f32 %v1471, %v1541
    %v1543 = vpop.f32.mrf.mxu0
    %v1544 = vadd.f32 %v1473, %v1543
    %1545 = vdwg.mxu0
    %s1546 = scalar_lea.vmem [#allocation7], 12
    %1547 = vst [vmem:[%s1546] sm:$0x1] %v1400
    %s1548 = scalar_lea.vmem [#allocation7], 13
    %1549 = vst [vmem:[%s1548] sm:$0x1] %v1402
    %s1550 = scalar_lea.vmem [#allocation7], 14
    %1551 = vst [vmem:[%s1550] sm:$0x1] %v1542
    %s1552 = scalar_lea.vmem [#allocation7], 15
    %1553 = vst [vmem:[%s1552] sm:$0x1] %v1544
    %s1554 = scalar_lea.vmem [#allocation5], 16
    %v1555 = vld [vmem:[%s1554] sm:$0xf]
    %v1557 = vlaneseq
    %v1558 = vshrl.u32 %v1557, 7
    %v1559 = vsub.s32 0, %v1558
    %v1560 = vrot.slane %v1555, %v1559
    %v1561 = vlaneseq
    %v1562 = vshrl.u32 %v1561, 7
    %v1563 = vsub.s32 1, %v1562
    %v1564 = vrot.slane %v1555, %v1563
    %v1565 = vlaneseq
    %v1566 = vshrl.u32 %v1565, 7
    %v1567 = vsub.s32 2, %v1566
    %v1568 = vrot.slane %v1555, %v1567
    %v1569 = vlaneseq
    %v1570 = vshrl.u32 %v1569, 7
    %v1571 = vsub.s32 3, %v1570
    %v1572 = vrot.slane %v1555, %v1571
    %1577 = vmatprep.subr.mxu0 %v101
    %1578 = vmatpush1.msra.mxu0 %v100
    %1579 = vmatprep.subr.mxu0 %v97
    %1580 = vmatpush1.msra.mxu0 %v96
    %1581 = vmatprep.subr.mxu0 %v93
    %1582 = vmatpush1.msra.mxu0 %v92
    %1583 = vmatprep.subr.mxu0 %v89
    %1584 = vmatpush1.msra.mxu0 %v88
    %1585 = vmatprep.subr.mxu0 %v85
    %1586 = vmatpush1.msra.mxu0 %v84
    %1587 = vmatprep.subr.mxu0 %v81
    %1588 = vmatpush1.msra.mxu0 %v80
    %1589 = vmatprep.subr.mxu0 %v77
    %1590 = vmatpush1.msra.mxu0 %v76
    %1591 = vmatprep.subr.mxu0 %v73
    %1592 = vmatpush1.msra.mxu0 %v72
    %1593 = vmatprep.subr.mxu0 %v69
    %1594 = vmatpush1.msra.mxu0 %v68
    %1595 = vmatprep.subr.mxu0 %v65
    %1596 = vmatpush1.msra.mxu0 %v64
    %1597 = vmatprep.subr.mxu0 %v61
    %1598 = vmatpush1.msra.mxu0 %v60
    %1599 = vmatprep.subr.mxu0 %v57
    %1600 = vmatpush1.msra.mxu0 %v56
    %1601 = vmatprep.subr.mxu0 %v53
    %1602 = vmatpush1.msra.mxu0 %v52
    %1603 = vmatprep.subr.mxu0 %v49
    %1604 = vmatpush1.msra.mxu0 %v48
    %1605 = vmatprep.subr.mxu0 %v45
    %1606 = vmatpush1.msra.mxu0 %v44
    %1607 = vmatprep.subr.mxu0 %v41
    %1608 = vmatpush1.msra.mxu0 %v40
    %1609 = vmatprep.subr.mxu0 %v165
    %1610 = vmatpush2.msra.mxu0 %v164
    %1611 = vmatprep.subr.mxu0 %v161
    %1612 = vmatpush2.msra.mxu0 %v160
    %1613 = vmatprep.subr.mxu0 %v157
    %1614 = vmatpush2.msra.mxu0 %v156
    %1615 = vmatprep.subr.mxu0 %v153
    %1616 = vmatpush2.msra.mxu0 %v152
    %1617 = vmatprep.subr.mxu0 %v149
    %1618 = vmatpush2.msra.mxu0 %v148
    %1619 = vmatprep.subr.mxu0 %v145
    %1620 = vmatpush2.msra.mxu0 %v144
    %1621 = vmatprep.subr.mxu0 %v141
    %1622 = vmatpush2.msra.mxu0 %v140
    %1623 = vmatprep.subr.mxu0 %v137
    %1624 = vmatpush2.msra.mxu0 %v136
    %1625 = vmatprep.subr.mxu0 %v133
    %1626 = vmatpush2.msra.mxu0 %v132
    %1627 = vmatprep.subr.mxu0 %v129
    %1628 = vmatpush2.msra.mxu0 %v128
    %1629 = vmatprep.subr.mxu0 %v125
    %1630 = vmatpush2.msra.mxu0 %v124
    %1631 = vmatprep.subr.mxu0 %v121
    %1632 = vmatpush2.msra.mxu0 %v120
    %1633 = vmatprep.subr.mxu0 %v117
    %1634 = vmatpush2.msra.mxu0 %v116
    %1635 = vmatprep.subr.mxu0 %v113
    %1636 = vmatpush2.msra.mxu0 %v112
    %1637 = vmatprep.subr.mxu0 %v109
    %1638 = vmatpush2.msra.mxu0 %v108
    %1639 = vmatprep.subr.mxu0 %v105
    %1640 = vmatpush2.msra.mxu0 %v104
    %1641 = vmatprep.mubr.f32.mxu0 %v1564
    %1642 = vmatmul.mubr.f32.gmra.mxu0 %v1560
    %v1643 = vpop.f32.mrf.mxu0
    %v1644 = vadd.f32 0.0, %v1643
    %v1645 = vpop.f32.mrf.mxu0
    %v1646 = vadd.f32 0.0, %v1645
    %1647 = vdwg.mxu0
    %1648 = vmatprep.subr.mxu0 %v229
    %1649 = vmatpush1.msra.mxu0 %v228
    %1650 = vmatprep.subr.mxu0 %v225
    %1651 = vmatpush1.msra.mxu0 %v224
    %1652 = vmatprep.subr.mxu0 %v221
    %1653 = vmatpush1.msra.mxu0 %v220
    %1654 = vmatprep.subr.mxu0 %v217
    %1655 = vmatpush1.msra.mxu0 %v216
    %1656 = vmatprep.subr.mxu0 %v213
    %1657 = vmatpush1.msra.mxu0 %v212
    %1658 = vmatprep.subr.mxu0 %v209
    %1659 = vmatpush1.msra.mxu0 %v208
    %1660 = vmatprep.subr.mxu0 %v205
    %1661 = vmatpush1.msra.mxu0 %v204
    %1662 = vmatprep.subr.mxu0 %v201
    %1663 = vmatpush1.msra.mxu0 %v200
    %1664 = vmatprep.subr.mxu0 %v197
    %1665 = vmatpush1.msra.mxu0 %v196
    %1666 = vmatprep.subr.mxu0 %v193
    %1667 = vmatpush1.msra.mxu0 %v192
    %1668 = vmatprep.subr.mxu0 %v189
    %1669 = vmatpush1.msra.mxu0 %v188
    %1670 = vmatprep.subr.mxu0 %v185
    %1671 = vmatpush1.msra.mxu0 %v184
    %1672 = vmatprep.subr.mxu0 %v181
    %1673 = vmatpush1.msra.mxu0 %v180
    %1674 = vmatprep.subr.mxu0 %v177
    %1675 = vmatpush1.msra.mxu0 %v176
    %1676 = vmatprep.subr.mxu0 %v173
    %1677 = vmatpush1.msra.mxu0 %v172
    %1678 = vmatprep.subr.mxu0 %v169
    %1679 = vmatpush1.msra.mxu0 %v168
    %1680 = vmatprep.subr.mxu0 %v293
    %1681 = vmatpush2.msra.mxu0 %v292
    %1682 = vmatprep.subr.mxu0 %v289
    %1683 = vmatpush2.msra.mxu0 %v288
    %1684 = vmatprep.subr.mxu0 %v285
    %1685 = vmatpush2.msra.mxu0 %v284
    %1686 = vmatprep.subr.mxu0 %v281
    %1687 = vmatpush2.msra.mxu0 %v280
    %1688 = vmatprep.subr.mxu0 %v277
    %1689 = vmatpush2.msra.mxu0 %v276
    %1690 = vmatprep.subr.mxu0 %v273
    %1691 = vmatpush2.msra.mxu0 %v272
    %1692 = vmatprep.subr.mxu0 %v269
    %1693 = vmatpush2.msra.mxu0 %v268
    %1694 = vmatprep.subr.mxu0 %v265
    %1695 = vmatpush2.msra.mxu0 %v264
    %1696 = vmatprep.subr.mxu0 %v261
    %1697 = vmatpush2.msra.mxu0 %v260
    %1698 = vmatprep.subr.mxu0 %v257
    %1699 = vmatpush2.msra.mxu0 %v256
    %1700 = vmatprep.subr.mxu0 %v253
    %1701 = vmatpush2.msra.mxu0 %v252
    %1702 = vmatprep.subr.mxu0 %v249
    %1703 = vmatpush2.msra.mxu0 %v248
    %1704 = vmatprep.subr.mxu0 %v245
    %1705 = vmatpush2.msra.mxu0 %v244
    %1706 = vmatprep.subr.mxu0 %v241
    %1707 = vmatpush2.msra.mxu0 %v240
    %1708 = vmatprep.subr.mxu0 %v237
    %1709 = vmatpush2.msra.mxu0 %v236
    %1710 = vmatprep.subr.mxu0 %v233
    %1711 = vmatpush2.msra.mxu0 %v232
    %1712 = vmatprep.mubr.f32.mxu0 %v1572
    %1713 = vmatmul.mubr.f32.gmra.mxu0 %v1568
    %v1714 = vpop.f32.mrf.mxu0
    %v1715 = vadd.f32 %v1644, %v1714
    %v1716 = vpop.f32.mrf.mxu0
    %v1717 = vadd.f32 %v1646, %v1716
    %1718 = vdwg.mxu0
    %1719 = vmatprep.subr.mxu0 %v103
    %1720 = vmatpush1.msra.mxu0 %v102
    %1721 = vmatprep.subr.mxu0 %v99
    %1722 = vmatpush1.msra.mxu0 %v98
    %1723 = vmatprep.subr.mxu0 %v95
    %1724 = vmatpush1.msra.mxu0 %v94
    %1725 = vmatprep.subr.mxu0 %v91
    %1726 = vmatpush1.msra.mxu0 %v90
    %1727 = vmatprep.subr.mxu0 %v87
    %1728 = vmatpush1.msra.mxu0 %v86
    %1729 = vmatprep.subr.mxu0 %v83
    %1730 = vmatpush1.msra.mxu0 %v82
    %1731 = vmatprep.subr.mxu0 %v79
    %1732 = vmatpush1.msra.mxu0 %v78
    %1733 = vmatprep.subr.mxu0 %v75
    %1734 = vmatpush1.msra.mxu0 %v74
    %1735 = vmatprep.subr.mxu0 %v71
    %1736 = vmatpush1.msra.mxu0 %v70
    %1737 = vmatprep.subr.mxu0 %v67
    %1738 = vmatpush1.msra.mxu0 %v66
    %1739 = vmatprep.subr.mxu0 %v63
    %1740 = vmatpush1.msra.mxu0 %v62
    %1741 = vmatprep.subr.mxu0 %v59
    %1742 = vmatpush1.msra.mxu0 %v58
    %1743 = vmatprep.subr.mxu0 %v55
    %1744 = vmatpush1.msra.mxu0 %v54
    %1745 = vmatprep.subr.mxu0 %v51
    %1746 = vmatpush1.msra.mxu0 %v50
    %1747 = vmatprep.subr.mxu0 %v47
    %1748 = vmatpush1.msra.mxu0 %v46
    %1749 = vmatprep.subr.mxu0 %v43
    %1750 = vmatpush1.msra.mxu0 %v42
    %1751 = vmatprep.subr.mxu0 %v167
    %1752 = vmatpush2.msra.mxu0 %v166
    %1753 = vmatprep.subr.mxu0 %v163
    %1754 = vmatpush2.msra.mxu0 %v162
    %1755 = vmatprep.subr.mxu0 %v159
    %1756 = vmatpush2.msra.mxu0 %v158
    %1757 = vmatprep.subr.mxu0 %v155
    %1758 = vmatpush2.msra.mxu0 %v154
    %1759 = vmatprep.subr.mxu0 %v151
    %1760 = vmatpush2.msra.mxu0 %v150
    %1761 = vmatprep.subr.mxu0 %v147
    %1762 = vmatpush2.msra.mxu0 %v146
    %1763 = vmatprep.subr.mxu0 %v143
    %1764 = vmatpush2.msra.mxu0 %v142
    %1765 = vmatprep.subr.mxu0 %v139
    %1766 = vmatpush2.msra.mxu0 %v138
    %1767 = vmatprep.subr.mxu0 %v135
    %1768 = vmatpush2.msra.mxu0 %v134
    %1769 = vmatprep.subr.mxu0 %v131
    %1770 = vmatpush2.msra.mxu0 %v130
    %1771 = vmatprep.subr.mxu0 %v127
    %1772 = vmatpush2.msra.mxu0 %v126
    %1773 = vmatprep.subr.mxu0 %v123
    %1774 = vmatpush2.msra.mxu0 %v122
    %1775 = vmatprep.subr.mxu0 %v119
    %1776 = vmatpush2.msra.mxu0 %v118
    %1777 = vmatprep.subr.mxu0 %v115
    %1778 = vmatpush2.msra.mxu0 %v114
    %1779 = vmatprep.subr.mxu0 %v111
    %1780 = vmatpush2.msra.mxu0 %v110
    %1781 = vmatprep.subr.mxu0 %v107
    %1782 = vmatpush2.msra.mxu0 %v106
    %1783 = vmatprep.mubr.f32.mxu0 %v1564
    %1784 = vmatmul.mubr.f32.gmra.mxu0 %v1560
    %v1785 = vpop.f32.mrf.mxu0
    %v1786 = vadd.f32 0.0, %v1785
    %v1787 = vpop.f32.mrf.mxu0
    %v1788 = vadd.f32 0.0, %v1787
    %1789 = vdwg.mxu0
    %1790 = vmatprep.subr.mxu0 %v231
    %1791 = vmatpush1.msra.mxu0 %v230
    %1792 = vmatprep.subr.mxu0 %v227
    %1793 = vmatpush1.msra.mxu0 %v226
    %1794 = vmatprep.subr.mxu0 %v223
    %1795 = vmatpush1.msra.mxu0 %v222
    %1796 = vmatprep.subr.mxu0 %v219
    %1797 = vmatpush1.msra.mxu0 %v218
    %1798 = vmatprep.subr.mxu0 %v215
    %1799 = vmatpush1.msra.mxu0 %v214
    %1800 = vmatprep.subr.mxu0 %v211
    %1801 = vmatpush1.msra.mxu0 %v210
    %1802 = vmatprep.subr.mxu0 %v207
    %1803 = vmatpush1.msra.mxu0 %v206
    %1804 = vmatprep.subr.mxu0 %v203
    %1805 = vmatpush1.msra.mxu0 %v202
    %1806 = vmatprep.subr.mxu0 %v199
    %1807 = vmatpush1.msra.mxu0 %v198
    %1808 = vmatprep.subr.mxu0 %v195
    %1809 = vmatpush1.msra.mxu0 %v194
    %1810 = vmatprep.subr.mxu0 %v191
    %1811 = vmatpush1.msra.mxu0 %v190
    %1812 = vmatprep.subr.mxu0 %v187
    %1813 = vmatpush1.msra.mxu0 %v186
    %1814 = vmatprep.subr.mxu0 %v183
    %1815 = vmatpush1.msra.mxu0 %v182
    %1816 = vmatprep.subr.mxu0 %v179
    %1817 = vmatpush1.msra.mxu0 %v178
    %1818 = vmatprep.subr.mxu0 %v175
    %1819 = vmatpush1.msra.mxu0 %v174
    %1820 = vmatprep.subr.mxu0 %v171
    %1821 = vmatpush1.msra.mxu0 %v170
    %1822 = vmatprep.subr.mxu0 %v295
    %1823 = vmatpush2.msra.mxu0 %v294
    %1824 = vmatprep.subr.mxu0 %v291
    %1825 = vmatpush2.msra.mxu0 %v290
    %1826 = vmatprep.subr.mxu0 %v287
    %1827 = vmatpush2.msra.mxu0 %v286
    %1828 = vmatprep.subr.mxu0 %v283
    %1829 = vmatpush2.msra.mxu0 %v282
    %1830 = vmatprep.subr.mxu0 %v279
    %1831 = vmatpush2.msra.mxu0 %v278
    %1832 = vmatprep.subr.mxu0 %v275
    %1833 = vmatpush2.msra.mxu0 %v274
    %1834 = vmatprep.subr.mxu0 %v271
    %1835 = vmatpush2.msra.mxu0 %v270
    %1836 = vmatprep.subr.mxu0 %v267
    %1837 = vmatpush2.msra.mxu0 %v266
    %1838 = vmatprep.subr.mxu0 %v263
    %1839 = vmatpush2.msra.mxu0 %v262
    %1840 = vmatprep.subr.mxu0 %v259
    %1841 = vmatpush2.msra.mxu0 %v258
    %1842 = vmatprep.subr.mxu0 %v255
    %1843 = vmatpush2.msra.mxu0 %v254
    %1844 = vmatprep.subr.mxu0 %v251
    %1845 = vmatpush2.msra.mxu0 %v250
    %1846 = vmatprep.subr.mxu0 %v247
    %1847 = vmatpush2.msra.mxu0 %v246
    %1848 = vmatprep.subr.mxu0 %v243
    %1849 = vmatpush2.msra.mxu0 %v242
    %1850 = vmatprep.subr.mxu0 %v239
    %1851 = vmatpush2.msra.mxu0 %v238
    %1852 = vmatprep.subr.mxu0 %v235
    %1853 = vmatpush2.msra.mxu0 %v234
    %1854 = vmatprep.mubr.f32.mxu0 %v1572
    %1855 = vmatmul.mubr.f32.gmra.mxu0 %v1568
    %v1856 = vpop.f32.mrf.mxu0
    %v1857 = vadd.f32 %v1786, %v1856
    %v1858 = vpop.f32.mrf.mxu0
    %v1859 = vadd.f32 %v1788, %v1858
    %1860 = vdwg.mxu0
    %s1861 = scalar_lea.vmem [#allocation7], 16
    %1862 = vst [vmem:[%s1861] sm:$0x1] %v1715
    %s1863 = scalar_lea.vmem [#allocation7], 17
    %1864 = vst [vmem:[%s1863] sm:$0x1] %v1717
    %s1865 = scalar_lea.vmem [#allocation7], 18
    %1866 = vst [vmem:[%s1865] sm:$0x1] %v1857
    %s1867 = scalar_lea.vmem [#allocation7], 19
    %1868 = vst [vmem:[%s1867] sm:$0x1] %v1859
    %s1869 = scalar_lea.vmem [#allocation5], 20
    %v1870 = vld [vmem:[%s1869] sm:$0xf]
    %v1872 = vlaneseq
    %v1873 = vshrl.u32 %v1872, 7
    %v1874 = vsub.s32 0, %v1873
    %v1875 = vrot.slane %v1870, %v1874
    %v1876 = vlaneseq
    %v1877 = vshrl.u32 %v1876, 7
    %v1878 = vsub.s32 1, %v1877
    %v1879 = vrot.slane %v1870, %v1878
    %v1880 = vlaneseq
    %v1881 = vshrl.u32 %v1880, 7
    %v1882 = vsub.s32 2, %v1881
    %v1883 = vrot.slane %v1870, %v1882
    %v1884 = vlaneseq
    %v1885 = vshrl.u32 %v1884, 7
    %v1886 = vsub.s32 3, %v1885
    %v1887 = vrot.slane %v1870, %v1886
    %1892 = vmatprep.subr.mxu0 %v101
    %1893 = vmatpush1.msra.mxu0 %v100
    %1894 = vmatprep.subr.mxu0 %v97
    %1895 = vmatpush1.msra.mxu0 %v96
    %1896 = vmatprep.subr.mxu0 %v93
    %1897 = vmatpush1.msra.mxu0 %v92
    %1898 = vmatprep.subr.mxu0 %v89
    %1899 = vmatpush1.msra.mxu0 %v88
    %1900 = vmatprep.subr.mxu0 %v85
    %1901 = vmatpush1.msra.mxu0 %v84
    %1902 = vmatprep.subr.mxu0 %v81
    %1903 = vmatpush1.msra.mxu0 %v80
    %1904 = vmatprep.subr.mxu0 %v77
    %1905 = vmatpush1.msra.mxu0 %v76
    %1906 = vmatprep.subr.mxu0 %v73
    %1907 = vmatpush1.msra.mxu0 %v72
    %1908 = vmatprep.subr.mxu0 %v69
    %1909 = vmatpush1.msra.mxu0 %v68
    %1910 = vmatprep.subr.mxu0 %v65
    %1911 = vmatpush1.msra.mxu0 %v64
    %1912 = vmatprep.subr.mxu0 %v61
    %1913 = vmatpush1.msra.mxu0 %v60
    %1914 = vmatprep.subr.mxu0 %v57
    %1915 = vmatpush1.msra.mxu0 %v56
    %1916 = vmatprep.subr.mxu0 %v53
    %1917 = vmatpush1.msra.mxu0 %v52
    %1918 = vmatprep.subr.mxu0 %v49
    %1919 = vmatpush1.msra.mxu0 %v48
    %1920 = vmatprep.subr.mxu0 %v45
    %1921 = vmatpush1.msra.mxu0 %v44
    %1922 = vmatprep.subr.mxu0 %v41
    %1923 = vmatpush1.msra.mxu0 %v40
    %1924 = vmatprep.subr.mxu0 %v165
    %1925 = vmatpush2.msra.mxu0 %v164
    %1926 = vmatprep.subr.mxu0 %v161
    %1927 = vmatpush2.msra.mxu0 %v160
    %1928 = vmatprep.subr.mxu0 %v157
    %1929 = vmatpush2.msra.mxu0 %v156
    %1930 = vmatprep.subr.mxu0 %v153
    %1931 = vmatpush2.msra.mxu0 %v152
    %1932 = vmatprep.subr.mxu0 %v149
    %1933 = vmatpush2.msra.mxu0 %v148
    %1934 = vmatprep.subr.mxu0 %v145
    %1935 = vmatpush2.msra.mxu0 %v144
    %1936 = vmatprep.subr.mxu0 %v141
    %1937 = vmatpush2.msra.mxu0 %v140
    %1938 = vmatprep.subr.mxu0 %v137
    %1939 = vmatpush2.msra.mxu0 %v136
    %1940 = vmatprep.subr.mxu0 %v133
    %1941 = vmatpush2.msra.mxu0 %v132
    %1942 = vmatprep.subr.mxu0 %v129
    %1943 = vmatpush2.msra.mxu0 %v128
    %1944 = vmatprep.subr.mxu0 %v125
    %1945 = vmatpush2.msra.mxu0 %v124
    %1946 = vmatprep.subr.mxu0 %v121
    %1947 = vmatpush2.msra.mxu0 %v120
    %1948 = vmatprep.subr.mxu0 %v117
    %1949 = vmatpush2.msra.mxu0 %v116
    %1950 = vmatprep.subr.mxu0 %v113
    %1951 = vmatpush2.msra.mxu0 %v112
    %1952 = vmatprep.subr.mxu0 %v109
    %1953 = vmatpush2.msra.mxu0 %v108
    %1954 = vmatprep.subr.mxu0 %v105
    %1955 = vmatpush2.msra.mxu0 %v104
    %1956 = vmatprep.mubr.f32.mxu0 %v1879
    %1957 = vmatmul.mubr.f32.gmra.mxu0 %v1875
    %v1958 = vpop.f32.mrf.mxu0
    %v1959 = vadd.f32 0.0, %v1958
    %v1960 = vpop.f32.mrf.mxu0
    %v1961 = vadd.f32 0.0, %v1960
    %1962 = vdwg.mxu0
    %1963 = vmatprep.subr.mxu0 %v229
    %1964 = vmatpush1.msra.mxu0 %v228
    %1965 = vmatprep.subr.mxu0 %v225
    %1966 = vmatpush1.msra.mxu0 %v224
    %1967 = vmatprep.subr.mxu0 %v221
    %1968 = vmatpush1.msra.mxu0 %v220
    %1969 = vmatprep.subr.mxu0 %v217
    %1970 = vmatpush1.msra.mxu0 %v216
    %1971 = vmatprep.subr.mxu0 %v213
    %1972 = vmatpush1.msra.mxu0 %v212
    %1973 = vmatprep.subr.mxu0 %v209
    %1974 = vmatpush1.msra.mxu0 %v208
    %1975 = vmatprep.subr.mxu0 %v205
    %1976 = vmatpush1.msra.mxu0 %v204
    %1977 = vmatprep.subr.mxu0 %v201
    %1978 = vmatpush1.msra.mxu0 %v200
    %1979 = vmatprep.subr.mxu0 %v197
    %1980 = vmatpush1.msra.mxu0 %v196
    %1981 = vmatprep.subr.mxu0 %v193
    %1982 = vmatpush1.msra.mxu0 %v192
    %1983 = vmatprep.subr.mxu0 %v189
    %1984 = vmatpush1.msra.mxu0 %v188
    %1985 = vmatprep.subr.mxu0 %v185
    %1986 = vmatpush1.msra.mxu0 %v184
    %1987 = vmatprep.subr.mxu0 %v181
    %1988 = vmatpush1.msra.mxu0 %v180
    %1989 = vmatprep.subr.mxu0 %v177
    %1990 = vmatpush1.msra.mxu0 %v176
    %1991 = vmatprep.subr.mxu0 %v173
    %1992 = vmatpush1.msra.mxu0 %v172
    %1993 = vmatprep.subr.mxu0 %v169
    %1994 = vmatpush1.msra.mxu0 %v168
    %1995 = vmatprep.subr.mxu0 %v293
    %1996 = vmatpush2.msra.mxu0 %v292
    %1997 = vmatprep.subr.mxu0 %v289
    %1998 = vmatpush2.msra.mxu0 %v288
    %1999 = vmatprep.subr.mxu0 %v285
    %2000 = vmatpush2.msra.mxu0 %v284
    %2001 = vmatprep.subr.mxu0 %v281
    %2002 = vmatpush2.msra.mxu0 %v280
    %2003 = vmatprep.subr.mxu0 %v277
    %2004 = vmatpush2.msra.mxu0 %v276
    %2005 = vmatprep.subr.mxu0 %v273
    %2006 = vmatpush2.msra.mxu0 %v272
    %2007 = vmatprep.subr.mxu0 %v269
    %2008 = vmatpush2.msra.mxu0 %v268
    %2009 = vmatprep.subr.mxu0 %v265
    %2010 = vmatpush2.msra.mxu0 %v264
    %2011 = vmatprep.subr.mxu0 %v261
    %2012 = vmatpush2.msra.mxu0 %v260
    %2013 = vmatprep.subr.mxu0 %v257
    %2014 = vmatpush2.msra.mxu0 %v256
    %2015 = vmatprep.subr.mxu0 %v253
    %2016 = vmatpush2.msra.mxu0 %v252
    %2017 = vmatprep.subr.mxu0 %v249
    %2018 = vmatpush2.msra.mxu0 %v248
    %2019 = vmatprep.subr.mxu0 %v245
    %2020 = vmatpush2.msra.mxu0 %v244
    %2021 = vmatprep.subr.mxu0 %v241
    %2022 = vmatpush2.msra.mxu0 %v240
    %2023 = vmatprep.subr.mxu0 %v237
    %2024 = vmatpush2.msra.mxu0 %v236
    %2025 = vmatprep.subr.mxu0 %v233
    %2026 = vmatpush2.msra.mxu0 %v232
    %2027 = vmatprep.mubr.f32.mxu0 %v1887
    %2028 = vmatmul.mubr.f32.gmra.mxu0 %v1883
    %v2029 = vpop.f32.mrf.mxu0
    %v2030 = vadd.f32 %v1959, %v2029
    %v2031 = vpop.f32.mrf.mxu0
    %v2032 = vadd.f32 %v1961, %v2031
    %2033 = vdwg.mxu0
    %2034 = vmatprep.subr.mxu0 %v103
    %2035 = vmatpush1.msra.mxu0 %v102
    %2036 = vmatprep.subr.mxu0 %v99
    %2037 = vmatpush1.msra.mxu0 %v98
    %2038 = vmatprep.subr.mxu0 %v95
    %2039 = vmatpush1.msra.mxu0 %v94
    %2040 = vmatprep.subr.mxu0 %v91
    %2041 = vmatpush1.msra.mxu0 %v90
    %2042 = vmatprep.subr.mxu0 %v87
    %2043 = vmatpush1.msra.mxu0 %v86
    %2044 = vmatprep.subr.mxu0 %v83
    %2045 = vmatpush1.msra.mxu0 %v82
    %2046 = vmatprep.subr.mxu0 %v79
    %2047 = vmatpush1.msra.mxu0 %v78
    %2048 = vmatprep.subr.mxu0 %v75
    %2049 = vmatpush1.msra.mxu0 %v74
    %2050 = vmatprep.subr.mxu0 %v71
    %2051 = vmatpush1.msra.mxu0 %v70
    %2052 = vmatprep.subr.mxu0 %v67
    %2053 = vmatpush1.msra.mxu0 %v66
    %2054 = vmatprep.subr.mxu0 %v63
    %2055 = vmatpush1.msra.mxu0 %v62
    %2056 = vmatprep.subr.mxu0 %v59
    %2057 = vmatpush1.msra.mxu0 %v58
    %2058 = vmatprep.subr.mxu0 %v55
    %2059 = vmatpush1.msra.mxu0 %v54
    %2060 = vmatprep.subr.mxu0 %v51
    %2061 = vmatpush1.msra.mxu0 %v50
    %2062 = vmatprep.subr.mxu0 %v47
    %2063 = vmatpush1.msra.mxu0 %v46
    %2064 = vmatprep.subr.mxu0 %v43
    %2065 = vmatpush1.msra.mxu0 %v42
    %2066 = vmatprep.subr.mxu0 %v167
    %2067 = vmatpush2.msra.mxu0 %v166
    %2068 = vmatprep.subr.mxu0 %v163
    %2069 = vmatpush2.msra.mxu0 %v162
    %2070 = vmatprep.subr.mxu0 %v159
    %2071 = vmatpush2.msra.mxu0 %v158
    %2072 = vmatprep.subr.mxu0 %v155
    %2073 = vmatpush2.msra.mxu0 %v154
    %2074 = vmatprep.subr.mxu0 %v151
    %2075 = vmatpush2.msra.mxu0 %v150
    %2076 = vmatprep.subr.mxu0 %v147
    %2077 = vmatpush2.msra.mxu0 %v146
    %2078 = vmatprep.subr.mxu0 %v143
    %2079 = vmatpush2.msra.mxu0 %v142
    %2080 = vmatprep.subr.mxu0 %v139
    %2081 = vmatpush2.msra.mxu0 %v138
    %2082 = vmatprep.subr.mxu0 %v135
    %2083 = vmatpush2.msra.mxu0 %v134
    %2084 = vmatprep.subr.mxu0 %v131
    %2085 = vmatpush2.msra.mxu0 %v130
    %2086 = vmatprep.subr.mxu0 %v127
    %2087 = vmatpush2.msra.mxu0 %v126
    %2088 = vmatprep.subr.mxu0 %v123
    %2089 = vmatpush2.msra.mxu0 %v122
    %2090 = vmatprep.subr.mxu0 %v119
    %2091 = vmatpush2.msra.mxu0 %v118
    %2092 = vmatprep.subr.mxu0 %v115
    %2093 = vmatpush2.msra.mxu0 %v114
    %2094 = vmatprep.subr.mxu0 %v111
    %2095 = vmatpush2.msra.mxu0 %v110
    %2096 = vmatprep.subr.mxu0 %v107
    %2097 = vmatpush2.msra.mxu0 %v106
    %2098 = vmatprep.mubr.f32.mxu0 %v1879
    %2099 = vmatmul.mubr.f32.gmra.mxu0 %v1875
    %v2100 = vpop.f32.mrf.mxu0
    %v2101 = vadd.f32 0.0, %v2100
    %v2102 = vpop.f32.mrf.mxu0
    %v2103 = vadd.f32 0.0, %v2102
    %2104 = vdwg.mxu0
    %2105 = vmatprep.subr.mxu0 %v231
    %2106 = vmatpush1.msra.mxu0 %v230
    %2107 = vmatprep.subr.mxu0 %v227
    %2108 = vmatpush1.msra.mxu0 %v226
    %2109 = vmatprep.subr.mxu0 %v223
    %2110 = vmatpush1.msra.mxu0 %v222
    %2111 = vmatprep.subr.mxu0 %v219
    %2112 = vmatpush1.msra.mxu0 %v218
    %2113 = vmatprep.subr.mxu0 %v215
    %2114 = vmatpush1.msra.mxu0 %v214
    %2115 = vmatprep.subr.mxu0 %v211
    %2116 = vmatpush1.msra.mxu0 %v210
    %2117 = vmatprep.subr.mxu0 %v207
    %2118 = vmatpush1.msra.mxu0 %v206
    %2119 = vmatprep.subr.mxu0 %v203
    %2120 = vmatpush1.msra.mxu0 %v202
    %2121 = vmatprep.subr.mxu0 %v199
    %2122 = vmatpush1.msra.mxu0 %v198
    %2123 = vmatprep.subr.mxu0 %v195
    %2124 = vmatpush1.msra.mxu0 %v194
    %2125 = vmatprep.subr.mxu0 %v191
    %2126 = vmatpush1.msra.mxu0 %v190
    %2127 = vmatprep.subr.mxu0 %v187
    %2128 = vmatpush1.msra.mxu0 %v186
    %2129 = vmatprep.subr.mxu0 %v183
    %2130 = vmatpush1.msra.mxu0 %v182
    %2131 = vmatprep.subr.mxu0 %v179
    %2132 = vmatpush1.msra.mxu0 %v178
    %2133 = vmatprep.subr.mxu0 %v175
    %2134 = vmatpush1.msra.mxu0 %v174
    %2135 = vmatprep.subr.mxu0 %v171
    %2136 = vmatpush1.msra.mxu0 %v170
    %2137 = vmatprep.subr.mxu0 %v295
    %2138 = vmatpush2.msra.mxu0 %v294
    %2139 = vmatprep.subr.mxu0 %v291
    %2140 = vmatpush2.msra.mxu0 %v290
    %2141 = vmatprep.subr.mxu0 %v287
    %2142 = vmatpush2.msra.mxu0 %v286
    %2143 = vmatprep.subr.mxu0 %v283
    %2144 = vmatpush2.msra.mxu0 %v282
    %2145 = vmatprep.subr.mxu0 %v279
    %2146 = vmatpush2.msra.mxu0 %v278
    %2147 = vmatprep.subr.mxu0 %v275
    %2148 = vmatpush2.msra.mxu0 %v274
    %2149 = vmatprep.subr.mxu0 %v271
    %2150 = vmatpush2.msra.mxu0 %v270
    %2151 = vmatprep.subr.mxu0 %v267
    %2152 = vmatpush2.msra.mxu0 %v266
    %2153 = vmatprep.subr.mxu0 %v263
    %2154 = vmatpush2.msra.mxu0 %v262
    %2155 = vmatprep.subr.mxu0 %v259
    %2156 = vmatpush2.msra.mxu0 %v258
    %2157 = vmatprep.subr.mxu0 %v255
    %2158 = vmatpush2.msra.mxu0 %v254
    %2159 = vmatprep.subr.mxu0 %v251
    %2160 = vmatpush2.msra.mxu0 %v250
    %2161 = vmatprep.subr.mxu0 %v247
    %2162 = vmatpush2.msra.mxu0 %v246
    %2163 = vmatprep.subr.mxu0 %v243
    %2164 = vmatpush2.msra.mxu0 %v242
    %2165 = vmatprep.subr.mxu0 %v239
    %2166 = vmatpush2.msra.mxu0 %v238
    %2167 = vmatprep.subr.mxu0 %v235
    %2168 = vmatpush2.msra.mxu0 %v234
    %2169 = vmatprep.mubr.f32.mxu0 %v1887
    %2170 = vmatmul.mubr.f32.gmra.mxu0 %v1883
    %v2171 = vpop.f32.mrf.mxu0
    %v2172 = vadd.f32 %v2101, %v2171
    %v2173 = vpop.f32.mrf.mxu0
    %v2174 = vadd.f32 %v2103, %v2173
    %2175 = vdwg.mxu0
    %s2176 = scalar_lea.vmem [#allocation7], 20
    %2177 = vst [vmem:[%s2176] sm:$0x1] %v2030
    %s2178 = scalar_lea.vmem [#allocation7], 21
    %2179 = vst [vmem:[%s2178] sm:$0x1] %v2032
    %s2180 = scalar_lea.vmem [#allocation7], 22
    %2181 = vst [vmem:[%s2180] sm:$0x1] %v2172
    %s2182 = scalar_lea.vmem [#allocation7], 23
    %2183 = vst [vmem:[%s2182] sm:$0x1] %v2174
    %s2184 = scalar_lea.vmem [#allocation5], 24
    %v2185 = vld [vmem:[%s2184] sm:$0xf]
    %v2187 = vlaneseq
    %v2188 = vshrl.u32 %v2187, 7
    %v2189 = vsub.s32 0, %v2188
    %v2190 = vrot.slane %v2185, %v2189
    %v2191 = vlaneseq
    %v2192 = vshrl.u32 %v2191, 7
    %v2193 = vsub.s32 1, %v2192
    %v2194 = vrot.slane %v2185, %v2193
    %v2195 = vlaneseq
    %v2196 = vshrl.u32 %v2195, 7
    %v2197 = vsub.s32 2, %v2196
    %v2198 = vrot.slane %v2185, %v2197
    %v2199 = vlaneseq
    %v2200 = vshrl.u32 %v2199, 7
    %v2201 = vsub.s32 3, %v2200
    %v2202 = vrot.slane %v2185, %v2201
    %2207 = vmatprep.subr.mxu0 %v101
    %2208 = vmatpush1.msra.mxu0 %v100
    %2209 = vmatprep.subr.mxu0 %v97
    %2210 = vmatpush1.msra.mxu0 %v96
    %2211 = vmatprep.subr.mxu0 %v93
    %2212 = vmatpush1.msra.mxu0 %v92
    %2213 = vmatprep.subr.mxu0 %v89
    %2214 = vmatpush1.msra.mxu0 %v88
    %2215 = vmatprep.subr.mxu0 %v85
    %2216 = vmatpush1.msra.mxu0 %v84
    %2217 = vmatprep.subr.mxu0 %v81
    %2218 = vmatpush1.msra.mxu0 %v80
    %2219 = vmatprep.subr.mxu0 %v77
    %2220 = vmatpush1.msra.mxu0 %v76
    %2221 = vmatprep.subr.mxu0 %v73
    %2222 = vmatpush1.msra.mxu0 %v72
    %2223 = vmatprep.subr.mxu0 %v69
    %2224 = vmatpush1.msra.mxu0 %v68
    %2225 = vmatprep.subr.mxu0 %v65
    %2226 = vmatpush1.msra.mxu0 %v64
    %2227 = vmatprep.subr.mxu0 %v61
    %2228 = vmatpush1.msra.mxu0 %v60
    %2229 = vmatprep.subr.mxu0 %v57
    %2230 = vmatpush1.msra.mxu0 %v56
    %2231 = vmatprep.subr.mxu0 %v53
    %2232 = vmatpush1.msra.mxu0 %v52
    %2233 = vmatprep.subr.mxu0 %v49
    %2234 = vmatpush1.msra.mxu0 %v48
    %2235 = vmatprep.subr.mxu0 %v45
    %2236 = vmatpush1.msra.mxu0 %v44
    %2237 = vmatprep.subr.mxu0 %v41
    %2238 = vmatpush1.msra.mxu0 %v40
    %2239 = vmatprep.subr.mxu0 %v165
    %2240 = vmatpush2.msra.mxu0 %v164
    %2241 = vmatprep.subr.mxu0 %v161
    %2242 = vmatpush2.msra.mxu0 %v160
    %2243 = vmatprep.subr.mxu0 %v157
    %2244 = vmatpush2.msra.mxu0 %v156
    %2245 = vmatprep.subr.mxu0 %v153
    %2246 = vmatpush2.msra.mxu0 %v152
    %2247 = vmatprep.subr.mxu0 %v149
    %2248 = vmatpush2.msra.mxu0 %v148
    %2249 = vmatprep.subr.mxu0 %v145
    %2250 = vmatpush2.msra.mxu0 %v144
    %2251 = vmatprep.subr.mxu0 %v141
    %2252 = vmatpush2.msra.mxu0 %v140
    %2253 = vmatprep.subr.mxu0 %v137
    %2254 = vmatpush2.msra.mxu0 %v136
    %2255 = vmatprep.subr.mxu0 %v133
    %2256 = vmatpush2.msra.mxu0 %v132
    %2257 = vmatprep.subr.mxu0 %v129
    %2258 = vmatpush2.msra.mxu0 %v128
    %2259 = vmatprep.subr.mxu0 %v125
    %2260 = vmatpush2.msra.mxu0 %v124
    %2261 = vmatprep.subr.mxu0 %v121
    %2262 = vmatpush2.msra.mxu0 %v120
    %2263 = vmatprep.subr.mxu0 %v117
    %2264 = vmatpush2.msra.mxu0 %v116
    %2265 = vmatprep.subr.mxu0 %v113
    %2266 = vmatpush2.msra.mxu0 %v112
    %2267 = vmatprep.subr.mxu0 %v109
    %2268 = vmatpush2.msra.mxu0 %v108
    %2269 = vmatprep.subr.mxu0 %v105
    %2270 = vmatpush2.msra.mxu0 %v104
    %2271 = vmatprep.mubr.f32.mxu0 %v2194
    %2272 = vmatmul.mubr.f32.gmra.mxu0 %v2190
    %v2273 = vpop.f32.mrf.mxu0
    %v2274 = vadd.f32 0.0, %v2273
    %v2275 = vpop.f32.mrf.mxu0
    %v2276 = vadd.f32 0.0, %v2275
    %2277 = vdwg.mxu0
    %2278 = vmatprep.subr.mxu0 %v229
    %2279 = vmatpush1.msra.mxu0 %v228
    %2280 = vmatprep.subr.mxu0 %v225
    %2281 = vmatpush1.msra.mxu0 %v224
    %2282 = vmatprep.subr.mxu0 %v221
    %2283 = vmatpush1.msra.mxu0 %v220
    %2284 = vmatprep.subr.mxu0 %v217
    %2285 = vmatpush1.msra.mxu0 %v216
    %2286 = vmatprep.subr.mxu0 %v213
    %2287 = vmatpush1.msra.mxu0 %v212
    %2288 = vmatprep.subr.mxu0 %v209
    %2289 = vmatpush1.msra.mxu0 %v208
    %2290 = vmatprep.subr.mxu0 %v205
    %2291 = vmatpush1.msra.mxu0 %v204
    %2292 = vmatprep.subr.mxu0 %v201
    %2293 = vmatpush1.msra.mxu0 %v200
    %2294 = vmatprep.subr.mxu0 %v197
    %2295 = vmatpush1.msra.mxu0 %v196
    %2296 = vmatprep.subr.mxu0 %v193
    %2297 = vmatpush1.msra.mxu0 %v192
    %2298 = vmatprep.subr.mxu0 %v189
    %2299 = vmatpush1.msra.mxu0 %v188
    %2300 = vmatprep.subr.mxu0 %v185
    %2301 = vmatpush1.msra.mxu0 %v184
    %2302 = vmatprep.subr.mxu0 %v181
    %2303 = vmatpush1.msra.mxu0 %v180
    %2304 = vmatprep.subr.mxu0 %v177
    %2305 = vmatpush1.msra.mxu0 %v176
    %2306 = vmatprep.subr.mxu0 %v173
    %2307 = vmatpush1.msra.mxu0 %v172
    %2308 = vmatprep.subr.mxu0 %v169
    %2309 = vmatpush1.msra.mxu0 %v168
    %2310 = vmatprep.subr.mxu0 %v293
    %2311 = vmatpush2.msra.mxu0 %v292
    %2312 = vmatprep.subr.mxu0 %v289
    %2313 = vmatpush2.msra.mxu0 %v288
    %2314 = vmatprep.subr.mxu0 %v285
    %2315 = vmatpush2.msra.mxu0 %v284
    %2316 = vmatprep.subr.mxu0 %v281
    %2317 = vmatpush2.msra.mxu0 %v280
    %2318 = vmatprep.subr.mxu0 %v277
    %2319 = vmatpush2.msra.mxu0 %v276
    %2320 = vmatprep.subr.mxu0 %v273
    %2321 = vmatpush2.msra.mxu0 %v272
    %2322 = vmatprep.subr.mxu0 %v269
    %2323 = vmatpush2.msra.mxu0 %v268
    %2324 = vmatprep.subr.mxu0 %v265
    %2325 = vmatpush2.msra.mxu0 %v264
    %2326 = vmatprep.subr.mxu0 %v261
    %2327 = vmatpush2.msra.mxu0 %v260
    %2328 = vmatprep.subr.mxu0 %v257
    %2329 = vmatpush2.msra.mxu0 %v256
    %2330 = vmatprep.subr.mxu0 %v253
    %2331 = vmatpush2.msra.mxu0 %v252
    %2332 = vmatprep.subr.mxu0 %v249
    %2333 = vmatpush2.msra.mxu0 %v248
    %2334 = vmatprep.subr.mxu0 %v245
    %2335 = vmatpush2.msra.mxu0 %v244
    %2336 = vmatprep.subr.mxu0 %v241
    %2337 = vmatpush2.msra.mxu0 %v240
    %2338 = vmatprep.subr.mxu0 %v237
    %2339 = vmatpush2.msra.mxu0 %v236
    %2340 = vmatprep.subr.mxu0 %v233
    %2341 = vmatpush2.msra.mxu0 %v232
    %2342 = vmatprep.mubr.f32.mxu0 %v2202
    %2343 = vmatmul.mubr.f32.gmra.mxu0 %v2198
    %v2344 = vpop.f32.mrf.mxu0
    %v2345 = vadd.f32 %v2274, %v2344
    %v2346 = vpop.f32.mrf.mxu0
    %v2347 = vadd.f32 %v2276, %v2346
    %2348 = vdwg.mxu0
    %2349 = vmatprep.subr.mxu0 %v103
    %2350 = vmatpush1.msra.mxu0 %v102
    %2351 = vmatprep.subr.mxu0 %v99
    %2352 = vmatpush1.msra.mxu0 %v98
    %2353 = vmatprep.subr.mxu0 %v95
    %2354 = vmatpush1.msra.mxu0 %v94
    %2355 = vmatprep.subr.mxu0 %v91
    %2356 = vmatpush1.msra.mxu0 %v90
    %2357 = vmatprep.subr.mxu0 %v87
    %2358 = vmatpush1.msra.mxu0 %v86
    %2359 = vmatprep.subr.mxu0 %v83
    %2360 = vmatpush1.msra.mxu0 %v82
    %2361 = vmatprep.subr.mxu0 %v79
    %2362 = vmatpush1.msra.mxu0 %v78
    %2363 = vmatprep.subr.mxu0 %v75
    %2364 = vmatpush1.msra.mxu0 %v74
    %2365 = vmatprep.subr.mxu0 %v71
    %2366 = vmatpush1.msra.mxu0 %v70
    %2367 = vmatprep.subr.mxu0 %v67
    %2368 = vmatpush1.msra.mxu0 %v66
    %2369 = vmatprep.subr.mxu0 %v63
    %2370 = vmatpush1.msra.mxu0 %v62
    %2371 = vmatprep.subr.mxu0 %v59
    %2372 = vmatpush1.msra.mxu0 %v58
    %2373 = vmatprep.subr.mxu0 %v55
    %2374 = vmatpush1.msra.mxu0 %v54
    %2375 = vmatprep.subr.mxu0 %v51
    %2376 = vmatpush1.msra.mxu0 %v50
    %2377 = vmatprep.subr.mxu0 %v47
    %2378 = vmatpush1.msra.mxu0 %v46
    %2379 = vmatprep.subr.mxu0 %v43
    %2380 = vmatpush1.msra.mxu0 %v42
    %2381 = vmatprep.subr.mxu0 %v167
    %2382 = vmatpush2.msra.mxu0 %v166
    %2383 = vmatprep.subr.mxu0 %v163
    %2384 = vmatpush2.msra.mxu0 %v162
    %2385 = vmatprep.subr.mxu0 %v159
    %2386 = vmatpush2.msra.mxu0 %v158
    %2387 = vmatprep.subr.mxu0 %v155
    %2388 = vmatpush2.msra.mxu0 %v154
    %2389 = vmatprep.subr.mxu0 %v151
    %2390 = vmatpush2.msra.mxu0 %v150
    %2391 = vmatprep.subr.mxu0 %v147
    %2392 = vmatpush2.msra.mxu0 %v146
    %2393 = vmatprep.subr.mxu0 %v143
    %2394 = vmatpush2.msra.mxu0 %v142
    %2395 = vmatprep.subr.mxu0 %v139
    %2396 = vmatpush2.msra.mxu0 %v138
    %2397 = vmatprep.subr.mxu0 %v135
    %2398 = vmatpush2.msra.mxu0 %v134
    %2399 = vmatprep.subr.mxu0 %v131
    %2400 = vmatpush2.msra.mxu0 %v130
    %2401 = vmatprep.subr.mxu0 %v127
    %2402 = vmatpush2.msra.mxu0 %v126
    %2403 = vmatprep.subr.mxu0 %v123
    %2404 = vmatpush2.msra.mxu0 %v122
    %2405 = vmatprep.subr.mxu0 %v119
    %2406 = vmatpush2.msra.mxu0 %v118
    %2407 = vmatprep.subr.mxu0 %v115
    %2408 = vmatpush2.msra.mxu0 %v114
    %2409 = vmatprep.subr.mxu0 %v111
    %2410 = vmatpush2.msra.mxu0 %v110
    %2411 = vmatprep.subr.mxu0 %v107
    %2412 = vmatpush2.msra.mxu0 %v106
    %2413 = vmatprep.mubr.f32.mxu0 %v2194
    %2414 = vmatmul.mubr.f32.gmra.mxu0 %v2190
    %v2415 = vpop.f32.mrf.mxu0
    %v2416 = vadd.f32 0.0, %v2415
    %v2417 = vpop.f32.mrf.mxu0
    %v2418 = vadd.f32 0.0, %v2417
    %2419 = vdwg.mxu0
    %2420 = vmatprep.subr.mxu0 %v231
    %2421 = vmatpush1.msra.mxu0 %v230
    %2422 = vmatprep.subr.mxu0 %v227
    %2423 = vmatpush1.msra.mxu0 %v226
    %2424 = vmatprep.subr.mxu0 %v223
    %2425 = vmatpush1.msra.mxu0 %v222
    %2426 = vmatprep.subr.mxu0 %v219
    %2427 = vmatpush1.msra.mxu0 %v218
    %2428 = vmatprep.subr.mxu0 %v215
    %2429 = vmatpush1.msra.mxu0 %v214
    %2430 = vmatprep.subr.mxu0 %v211
    %2431 = vmatpush1.msra.mxu0 %v210
    %2432 = vmatprep.subr.mxu0 %v207
    %2433 = vmatpush1.msra.mxu0 %v206
    %2434 = vmatprep.subr.mxu0 %v203
    %2435 = vmatpush1.msra.mxu0 %v202
    %2436 = vmatprep.subr.mxu0 %v199
    %2437 = vmatpush1.msra.mxu0 %v198
    %2438 = vmatprep.subr.mxu0 %v195
    %2439 = vmatpush1.msra.mxu0 %v194
    %2440 = vmatprep.subr.mxu0 %v191
    %2441 = vmatpush1.msra.mxu0 %v190
    %2442 = vmatprep.subr.mxu0 %v187
    %2443 = vmatpush1.msra.mxu0 %v186
    %2444 = vmatprep.subr.mxu0 %v183
    %2445 = vmatpush1.msra.mxu0 %v182
    %2446 = vmatprep.subr.mxu0 %v179
    %2447 = vmatpush1.msra.mxu0 %v178
    %2448 = vmatprep.subr.mxu0 %v175
    %2449 = vmatpush1.msra.mxu0 %v174
    %2450 = vmatprep.subr.mxu0 %v171
    %2451 = vmatpush1.msra.mxu0 %v170
    %2452 = vmatprep.subr.mxu0 %v295
    %2453 = vmatpush2.msra.mxu0 %v294
    %2454 = vmatprep.subr.mxu0 %v291
    %2455 = vmatpush2.msra.mxu0 %v290
    %2456 = vmatprep.subr.mxu0 %v287
    %2457 = vmatpush2.msra.mxu0 %v286
    %2458 = vmatprep.subr.mxu0 %v283
    %2459 = vmatpush2.msra.mxu0 %v282
    %2460 = vmatprep.subr.mxu0 %v279
    %2461 = vmatpush2.msra.mxu0 %v278
    %2462 = vmatprep.subr.mxu0 %v275
    %2463 = vmatpush2.msra.mxu0 %v274
    %2464 = vmatprep.subr.mxu0 %v271
    %2465 = vmatpush2.msra.mxu0 %v270
    %2466 = vmatprep.subr.mxu0 %v267
    %2467 = vmatpush2.msra.mxu0 %v266
    %2468 = vmatprep.subr.mxu0 %v263
    %2469 = vmatpush2.msra.mxu0 %v262
    %2470 = vmatprep.subr.mxu0 %v259
    %2471 = vmatpush2.msra.mxu0 %v258
    %2472 = vmatprep.subr.mxu0 %v255
    %2473 = vmatpush2.msra.mxu0 %v254
    %2474 = vmatprep.subr.mxu0 %v251
    %2475 = vmatpush2.msra.mxu0 %v250
    %2476 = vmatprep.subr.mxu0 %v247
    %2477 = vmatpush2.msra.mxu0 %v246
    %2478 = vmatprep.subr.mxu0 %v243
    %2479 = vmatpush2.msra.mxu0 %v242
    %2480 = vmatprep.subr.mxu0 %v239
    %2481 = vmatpush2.msra.mxu0 %v238
    %2482 = vmatprep.subr.mxu0 %v235
    %2483 = vmatpush2.msra.mxu0 %v234
    %2484 = vmatprep.mubr.f32.mxu0 %v2202
    %2485 = vmatmul.mubr.f32.gmra.mxu0 %v2198
    %v2486 = vpop.f32.mrf.mxu0
    %v2487 = vadd.f32 %v2416, %v2486
    %v2488 = vpop.f32.mrf.mxu0
    %v2489 = vadd.f32 %v2418, %v2488
    %2490 = vdwg.mxu0
    %s2491 = scalar_lea.vmem [#allocation7], 24
    %2492 = vst [vmem:[%s2491] sm:$0x1] %v2345
    %s2493 = scalar_lea.vmem [#allocation7], 25
    %2494 = vst [vmem:[%s2493] sm:$0x1] %v2347
    %s2495 = scalar_lea.vmem [#allocation7], 26
    %2496 = vst [vmem:[%s2495] sm:$0x1] %v2487
    %s2497 = scalar_lea.vmem [#allocation7], 27
    %2498 = vst [vmem:[%s2497] sm:$0x1] %v2489
    %s2499 = scalar_lea.vmem [#allocation5], 28
    %v2500 = vld [vmem:[%s2499] sm:$0xf]
    %v2502 = vlaneseq
    %v2503 = vshrl.u32 %v2502, 7
    %v2504 = vsub.s32 0, %v2503
    %v2505 = vrot.slane %v2500, %v2504
    %v2506 = vlaneseq
    %v2507 = vshrl.u32 %v2506, 7
    %v2508 = vsub.s32 1, %v2507
    %v2509 = vrot.slane %v2500, %v2508
    %v2510 = vlaneseq
    %v2511 = vshrl.u32 %v2510, 7
    %v2512 = vsub.s32 2, %v2511
    %v2513 = vrot.slane %v2500, %v2512
    %v2514 = vlaneseq
    %v2515 = vshrl.u32 %v2514, 7
    %v2516 = vsub.s32 3, %v2515
    %v2517 = vrot.slane %v2500, %v2516
    %2522 = vmatprep.subr.mxu0 %v101
    %2523 = vmatpush1.msra.mxu0 %v100
    %2524 = vmatprep.subr.mxu0 %v97
    %2525 = vmatpush1.msra.mxu0 %v96
    %2526 = vmatprep.subr.mxu0 %v93
    %2527 = vmatpush1.msra.mxu0 %v92
    %2528 = vmatprep.subr.mxu0 %v89
    %2529 = vmatpush1.msra.mxu0 %v88
    %2530 = vmatprep.subr.mxu0 %v85
    %2531 = vmatpush1.msra.mxu0 %v84
    %2532 = vmatprep.subr.mxu0 %v81
    %2533 = vmatpush1.msra.mxu0 %v80
    %2534 = vmatprep.subr.mxu0 %v77
    %2535 = vmatpush1.msra.mxu0 %v76
    %2536 = vmatprep.subr.mxu0 %v73
    %2537 = vmatpush1.msra.mxu0 %v72
    %2538 = vmatprep.subr.mxu0 %v69
    %2539 = vmatpush1.msra.mxu0 %v68
    %2540 = vmatprep.subr.mxu0 %v65
    %2541 = vmatpush1.msra.mxu0 %v64
    %2542 = vmatprep.subr.mxu0 %v61
    %2543 = vmatpush1.msra.mxu0 %v60
    %2544 = vmatprep.subr.mxu0 %v57
    %2545 = vmatpush1.msra.mxu0 %v56
    %2546 = vmatprep.subr.mxu0 %v53
    %2547 = vmatpush1.msra.mxu0 %v52
    %2548 = vmatprep.subr.mxu0 %v49
    %2549 = vmatpush1.msra.mxu0 %v48
    %2550 = vmatprep.subr.mxu0 %v45
    %2551 = vmatpush1.msra.mxu0 %v44
    %2552 = vmatprep.subr.mxu0 %v41
    %2553 = vmatpush1.msra.mxu0 %v40
    %2554 = vmatprep.subr.mxu0 %v165
    %2555 = vmatpush2.msra.mxu0 %v164
    %2556 = vmatprep.subr.mxu0 %v161
    %2557 = vmatpush2.msra.mxu0 %v160
    %2558 = vmatprep.subr.mxu0 %v157
    %2559 = vmatpush2.msra.mxu0 %v156
    %2560 = vmatprep.subr.mxu0 %v153
    %2561 = vmatpush2.msra.mxu0 %v152
    %2562 = vmatprep.subr.mxu0 %v149
    %2563 = vmatpush2.msra.mxu0 %v148
    %2564 = vmatprep.subr.mxu0 %v145
    %2565 = vmatpush2.msra.mxu0 %v144
    %2566 = vmatprep.subr.mxu0 %v141
    %2567 = vmatpush2.msra.mxu0 %v140
    %2568 = vmatprep.subr.mxu0 %v137
    %2569 = vmatpush2.msra.mxu0 %v136
    %2570 = vmatprep.subr.mxu0 %v133
    %2571 = vmatpush2.msra.mxu0 %v132
    %2572 = vmatprep.subr.mxu0 %v129
    %2573 = vmatpush2.msra.mxu0 %v128
    %2574 = vmatprep.subr.mxu0 %v125
    %2575 = vmatpush2.msra.mxu0 %v124
    %2576 = vmatprep.subr.mxu0 %v121
    %2577 = vmatpush2.msra.mxu0 %v120
    %2578 = vmatprep.subr.mxu0 %v117
    %2579 = vmatpush2.msra.mxu0 %v116
    %2580 = vmatprep.subr.mxu0 %v113
    %2581 = vmatpush2.msra.mxu0 %v112
    %2582 = vmatprep.subr.mxu0 %v109
    %2583 = vmatpush2.msra.mxu0 %v108
    %2584 = vmatprep.subr.mxu0 %v105
    %2585 = vmatpush2.msra.mxu0 %v104
    %2586 = vmatprep.mubr.f32.mxu0 %v2509
    %2587 = vmatmul.mubr.f32.gmra.mxu0 %v2505
    %v2588 = vpop.f32.mrf.mxu0
    %v2589 = vadd.f32 0.0, %v2588
    %v2590 = vpop.f32.mrf.mxu0
    %v2591 = vadd.f32 0.0, %v2590
    %2592 = vdwg.mxu0
    %2593 = vmatprep.subr.mxu0 %v229
    %2594 = vmatpush1.msra.mxu0 %v228
    %2595 = vmatprep.subr.mxu0 %v225
    %2596 = vmatpush1.msra.mxu0 %v224
    %2597 = vmatprep.subr.mxu0 %v221
    %2598 = vmatpush1.msra.mxu0 %v220
    %2599 = vmatprep.subr.mxu0 %v217
    %2600 = vmatpush1.msra.mxu0 %v216
    %2601 = vmatprep.subr.mxu0 %v213
    %2602 = vmatpush1.msra.mxu0 %v212
    %2603 = vmatprep.subr.mxu0 %v209
    %2604 = vmatpush1.msra.mxu0 %v208
    %2605 = vmatprep.subr.mxu0 %v205
    %2606 = vmatpush1.msra.mxu0 %v204
    %2607 = vmatprep.subr.mxu0 %v201
    %2608 = vmatpush1.msra.mxu0 %v200
    %2609 = vmatprep.subr.mxu0 %v197
    %2610 = vmatpush1.msra.mxu0 %v196
    %2611 = vmatprep.subr.mxu0 %v193
    %2612 = vmatpush1.msra.mxu0 %v192
    %2613 = vmatprep.subr.mxu0 %v189
    %2614 = vmatpush1.msra.mxu0 %v188
    %2615 = vmatprep.subr.mxu0 %v185
    %2616 = vmatpush1.msra.mxu0 %v184
    %2617 = vmatprep.subr.mxu0 %v181
    %2618 = vmatpush1.msra.mxu0 %v180
    %2619 = vmatprep.subr.mxu0 %v177
    %2620 = vmatpush1.msra.mxu0 %v176
    %2621 = vmatprep.subr.mxu0 %v173
    %2622 = vmatpush1.msra.mxu0 %v172
    %2623 = vmatprep.subr.mxu0 %v169
    %2624 = vmatpush1.msra.mxu0 %v168
    %2625 = vmatprep.subr.mxu0 %v293
    %2626 = vmatpush2.msra.mxu0 %v292
    %2627 = vmatprep.subr.mxu0 %v289
    %2628 = vmatpush2.msra.mxu0 %v288
    %2629 = vmatprep.subr.mxu0 %v285
    %2630 = vmatpush2.msra.mxu0 %v284
    %2631 = vmatprep.subr.mxu0 %v281
    %2632 = vmatpush2.msra.mxu0 %v280
    %2633 = vmatprep.subr.mxu0 %v277
    %2634 = vmatpush2.msra.mxu0 %v276
    %2635 = vmatprep.subr.mxu0 %v273
    %2636 = vmatpush2.msra.mxu0 %v272
    %2637 = vmatprep.subr.mxu0 %v269
    %2638 = vmatpush2.msra.mxu0 %v268
    %2639 = vmatprep.subr.mxu0 %v265
    %2640 = vmatpush2.msra.mxu0 %v264
    %2641 = vmatprep.subr.mxu0 %v261
    %2642 = vmatpush2.msra.mxu0 %v260
    %2643 = vmatprep.subr.mxu0 %v257
    %2644 = vmatpush2.msra.mxu0 %v256
    %2645 = vmatprep.subr.mxu0 %v253
    %2646 = vmatpush2.msra.mxu0 %v252
    %2647 = vmatprep.subr.mxu0 %v249
    %2648 = vmatpush2.msra.mxu0 %v248
    %2649 = vmatprep.subr.mxu0 %v245
    %2650 = vmatpush2.msra.mxu0 %v244
    %2651 = vmatprep.subr.mxu0 %v241
    %2652 = vmatpush2.msra.mxu0 %v240
    %2653 = vmatprep.subr.mxu0 %v237
    %2654 = vmatpush2.msra.mxu0 %v236
    %2655 = vmatprep.subr.mxu0 %v233
    %2656 = vmatpush2.msra.mxu0 %v232
    %2657 = vmatprep.mubr.f32.mxu0 %v2517
    %2658 = vmatmul.mubr.f32.gmra.mxu0 %v2513
    %v2659 = vpop.f32.mrf.mxu0
    %v2660 = vadd.f32 %v2589, %v2659
    %v2661 = vpop.f32.mrf.mxu0
    %v2662 = vadd.f32 %v2591, %v2661
    %2663 = vdwg.mxu0
    %2664 = vmatprep.subr.mxu0 %v103
    %2665 = vmatpush1.msra.mxu0 %v102
    %2666 = vmatprep.subr.mxu0 %v99
    %2667 = vmatpush1.msra.mxu0 %v98
    %2668 = vmatprep.subr.mxu0 %v95
    %2669 = vmatpush1.msra.mxu0 %v94
    %2670 = vmatprep.subr.mxu0 %v91
    %2671 = vmatpush1.msra.mxu0 %v90
    %2672 = vmatprep.subr.mxu0 %v87
    %2673 = vmatpush1.msra.mxu0 %v86
    %2674 = vmatprep.subr.mxu0 %v83
    %2675 = vmatpush1.msra.mxu0 %v82
    %2676 = vmatprep.subr.mxu0 %v79
    %2677 = vmatpush1.msra.mxu0 %v78
    %2678 = vmatprep.subr.mxu0 %v75
    %2679 = vmatpush1.msra.mxu0 %v74
    %2680 = vmatprep.subr.mxu0 %v71
    %2681 = vmatpush1.msra.mxu0 %v70
    %2682 = vmatprep.subr.mxu0 %v67
    %2683 = vmatpush1.msra.mxu0 %v66
    %2684 = vmatprep.subr.mxu0 %v63
    %2685 = vmatpush1.msra.mxu0 %v62
    %2686 = vmatprep.subr.mxu0 %v59
    %2687 = vmatpush1.msra.mxu0 %v58
    %2688 = vmatprep.subr.mxu0 %v55
    %2689 = vmatpush1.msra.mxu0 %v54
    %2690 = vmatprep.subr.mxu0 %v51
    %2691 = vmatpush1.msra.mxu0 %v50
    %2692 = vmatprep.subr.mxu0 %v47
    %2693 = vmatpush1.msra.mxu0 %v46
    %2694 = vmatprep.subr.mxu0 %v43
    %2695 = vmatpush1.msra.mxu0 %v42
    %2696 = vmatprep.subr.mxu0 %v167
    %2697 = vmatpush2.msra.mxu0 %v166
    %2698 = vmatprep.subr.mxu0 %v163
    %2699 = vmatpush2.msra.mxu0 %v162
    %2700 = vmatprep.subr.mxu0 %v159
    %2701 = vmatpush2.msra.mxu0 %v158
    %2702 = vmatprep.subr.mxu0 %v155
    %2703 = vmatpush2.msra.mxu0 %v154
    %2704 = vmatprep.subr.mxu0 %v151
    %2705 = vmatpush2.msra.mxu0 %v150
    %2706 = vmatprep.subr.mxu0 %v147
    %2707 = vmatpush2.msra.mxu0 %v146
    %2708 = vmatprep.subr.mxu0 %v143
    %2709 = vmatpush2.msra.mxu0 %v142
    %2710 = vmatprep.subr.mxu0 %v139
    %2711 = vmatpush2.msra.mxu0 %v138
    %2712 = vmatprep.subr.mxu0 %v135
    %2713 = vmatpush2.msra.mxu0 %v134
    %2714 = vmatprep.subr.mxu0 %v131
    %2715 = vmatpush2.msra.mxu0 %v130
    %2716 = vmatprep.subr.mxu0 %v127
    %2717 = vmatpush2.msra.mxu0 %v126
    %2718 = vmatprep.subr.mxu0 %v123
    %2719 = vmatpush2.msra.mxu0 %v122
    %2720 = vmatprep.subr.mxu0 %v119
    %2721 = vmatpush2.msra.mxu0 %v118
    %2722 = vmatprep.subr.mxu0 %v115
    %2723 = vmatpush2.msra.mxu0 %v114
    %2724 = vmatprep.subr.mxu0 %v111
    %2725 = vmatpush2.msra.mxu0 %v110
    %2726 = vmatprep.subr.mxu0 %v107
    %2727 = vmatpush2.msra.mxu0 %v106
    %2728 = vmatprep.mubr.f32.mxu0 %v2509
    %2729 = vmatmul.mubr.f32.gmra.mxu0 %v2505
    %v2730 = vpop.f32.mrf.mxu0
    %v2731 = vadd.f32 0.0, %v2730
    %v2732 = vpop.f32.mrf.mxu0
    %v2733 = vadd.f32 0.0, %v2732
    %2734 = vdwg.mxu0
    %2735 = vmatprep.subr.mxu0 %v231
    %2736 = vmatpush1.msra.mxu0 %v230
    %2737 = vmatprep.subr.mxu0 %v227
    %2738 = vmatpush1.msra.mxu0 %v226
    %2739 = vmatprep.subr.mxu0 %v223
    %2740 = vmatpush1.msra.mxu0 %v222
    %2741 = vmatprep.subr.mxu0 %v219
    %2742 = vmatpush1.msra.mxu0 %v218
    %2743 = vmatprep.subr.mxu0 %v215
    %2744 = vmatpush1.msra.mxu0 %v214
    %2745 = vmatprep.subr.mxu0 %v211
    %2746 = vmatpush1.msra.mxu0 %v210
    %2747 = vmatprep.subr.mxu0 %v207
    %2748 = vmatpush1.msra.mxu0 %v206
    %2749 = vmatprep.subr.mxu0 %v203
    %2750 = vmatpush1.msra.mxu0 %v202
    %2751 = vmatprep.subr.mxu0 %v199
    %2752 = vmatpush1.msra.mxu0 %v198
    %2753 = vmatprep.subr.mxu0 %v195
    %2754 = vmatpush1.msra.mxu0 %v194
    %2755 = vmatprep.subr.mxu0 %v191
    %2756 = vmatpush1.msra.mxu0 %v190
    %2757 = vmatprep.subr.mxu0 %v187
    %2758 = vmatpush1.msra.mxu0 %v186
    %2759 = vmatprep.subr.mxu0 %v183
    %2760 = vmatpush1.msra.mxu0 %v182
    %2761 = vmatprep.subr.mxu0 %v179
    %2762 = vmatpush1.msra.mxu0 %v178
    %2763 = vmatprep.subr.mxu0 %v175
    %2764 = vmatpush1.msra.mxu0 %v174
    %2765 = vmatprep.subr.mxu0 %v171
    %2766 = vmatpush1.msra.mxu0 %v170
    %2767 = vmatprep.subr.mxu0 %v295
    %2768 = vmatpush2.msra.mxu0 %v294
    %2769 = vmatprep.subr.mxu0 %v291
    %2770 = vmatpush2.msra.mxu0 %v290
    %2771 = vmatprep.subr.mxu0 %v287
    %2772 = vmatpush2.msra.mxu0 %v286
    %2773 = vmatprep.subr.mxu0 %v283
    %2774 = vmatpush2.msra.mxu0 %v282
    %2775 = vmatprep.subr.mxu0 %v279
    %2776 = vmatpush2.msra.mxu0 %v278
    %2777 = vmatprep.subr.mxu0 %v275
    %2778 = vmatpush2.msra.mxu0 %v274
    %2779 = vmatprep.subr.mxu0 %v271
    %2780 = vmatpush2.msra.mxu0 %v270
    %2781 = vmatprep.subr.mxu0 %v267
    %2782 = vmatpush2.msra.mxu0 %v266
    %2783 = vmatprep.subr.mxu0 %v263
    %2784 = vmatpush2.msra.mxu0 %v262
    %2785 = vmatprep.subr.mxu0 %v259
    %2786 = vmatpush2.msra.mxu0 %v258
    %2787 = vmatprep.subr.mxu0 %v255
    %2788 = vmatpush2.msra.mxu0 %v254
    %2789 = vmatprep.subr.mxu0 %v251
    %2790 = vmatpush2.msra.mxu0 %v250
    %2791 = vmatprep.subr.mxu0 %v247
    %2792 = vmatpush2.msra.mxu0 %v246
    %2793 = vmatprep.subr.mxu0 %v243
    %2794 = vmatpush2.msra.mxu0 %v242
    %2795 = vmatprep.subr.mxu0 %v239
    %2796 = vmatpush2.msra.mxu0 %v238
    %2797 = vmatprep.subr.mxu0 %v235
    %2798 = vmatpush2.msra.mxu0 %v234
    %2799 = vmatprep.mubr.f32.mxu0 %v2517
    %2800 = vmatmul.mubr.f32.gmra.mxu0 %v2513
    %v2801 = vpop.f32.mrf.mxu0
    %v2802 = vadd.f32 %v2731, %v2801
    %v2803 = vpop.f32.mrf.mxu0
    %v2804 = vadd.f32 %v2733, %v2803
    %2805 = vdwg.mxu0
    %s2806 = scalar_lea.vmem [#allocation7], 28
    %2807 = vst [vmem:[%s2806] sm:$0x1] %v2660
    %s2808 = scalar_lea.vmem [#allocation7], 29
    %2809 = vst [vmem:[%s2808] sm:$0x1] %v2662
    %s2810 = scalar_lea.vmem [#allocation7], 30
    %2811 = vst [vmem:[%s2810] sm:$0x1] %v2802
    %s2812 = scalar_lea.vmem [#allocation7], 31
    %2813 = vst [vmem:[%s2812] sm:$0x1] %v2804
    // Predicated region
    $region18: #{tpu_custom_call.1} parent=1 // pred_check
      _
    $region19: #{tpu_custom_call.1} parent=1 // pred_check_branch
      %2815 = sbr.rel (0) target = $region21
    $region20: #{tpu_custom_call.1} parent=1 // pred_region
      %s2817 = ssub.s32 512, 512
      %2818 = vsyncadd [#allocation4], %s2817
      %s2819 = sshll.u32 [#allocation7], 4
      %s2820 = int_to_ptr.vmem [resolvable:$true] %s2819
      %2825 = dma.vmem_to_hbm [thread:$0]  %s2820, 512, %s2, [#allocation4], 16, 16, 1
    $region21: #{tpu_custom_call.1} parent=1 // pred_fallthru
      _
    // Predicated region
    $region22: #{tpu_custom_call.1} parent=1 // pred_check
      _
    $region23: #{tpu_custom_call.1} parent=1 // pred_check_branch
      %2827 = sbr.rel (0) target = $region25
    $region24: #{tpu_custom_call.1} parent=1 // pred_region
      %2828 = dma.done [#allocation4], 512
    $region25: #{tpu_custom_call.1} parent=1 // pred_fallthru
      _
    %2829 = vsyncpa [#allocation3], 1
    %2830 = vsyncpa [#allocation6], 1
    %2831 = vsyncpa [#allocation4], 1

</llo_original>
